<compile_context>
chip_gen: v6e
topology: v6e:2x2x1
jax: 0.10.0
libtpu: 0.0.40
codegen_flags: <defaults>
</compile_context>

<pallas_src>
import functools
from typing import NamedTuple

import jax
import jax.numpy as jnp
from jax import lax
from jax.experimental import pallas as pl
from jax.experimental.pallas import tpu as pltpu


CONV_CFG = [
    # (cout, kernel, stride)
    (32, 8, 4),
    (64, 4, 2),
    (64, 3, 1),
    (64, 3, 1),
    (64, 3, 1),
]
_FC_HIDDEN = 512
_LANE = 128


def _round_up(x, m):
    return ((x + m - 1) // m) * m


def _conv_out(n, k, s):
    return (n - k) // s + 1


def feature_hw(h, w):
    for _, k, s in CONV_CFG:
        h, w = _conv_out(h, k, s), _conv_out(w, k, s)
    return h, w


# ----------------------------------------------------------------------------
# Static geometry of the fused kernel (all Python ints).
# ----------------------------------------------------------------------------
class _Geom(NamedTuple):
    c_in: int
    c_s2d: int        # 16 * c_in  (space-to-depth(4) channels)
    h4: int           # space-to-depth grid height used by conv1-as-2x2
    w4: int
    hp_alloc: int     # phase-plane height (rows)
    pitch: int        # phase-plane width == row pitch of every intermediate
    plane_rows: int   # hp_alloc * pitch
    n_p: int          # rows computed per conv1 output phase
    n2: int           # rows computed for conv2 output
    n3: int
    n4: int
    ho5: int
    wo5: int


def _geometry(input_shape):
    c, h, w = input_shape
    ho, wo = h, w
    outs = []
    for (_co, k, s) in CONV_CFG:
        ho, wo = _conv_out(ho, k, s), _conv_out(wo, k, s)
        outs.append((ho, wo))
    ho1, wo1 = outs[0]
    ho5, wo5 = outs[-1]
    assert ho5 >= 1 and wo5 >= 1, "input spatial size too small for the conv stack"

    h4, w4 = ho1 + 1, wo1 + 1          # conv1 as a 2x2 stride-1 conv needs this grid
    hp = -(-h4 // 2)                   # stride-2 phase-plane height
    pitch = -(-w4 // 2)                # phase-plane width == shared row pitch

    # Minimal row counts so every (possibly over-computed) read is in bounds.
    n5 = (ho5 - 1) * pitch + wo5
    n4 = n5 + 2 * pitch + 2
    n3 = n4 + 2 * pitch + 2
    n2 = n3 + 2 * pitch + 2
    n_p = n2 + pitch + 1
    xp_rows = n_p + pitch + 1
    hp_alloc = max(hp, -(-xp_rows // pitch))
    return _Geom(c, 16 * c, h4, w4, hp_alloc, pitch, hp_alloc * pitch,
                 n_p, n2, n3, n4, ho5, wo5)


# ----------------------------------------------------------------------------
# The fused kernel: whole forward pass for one batch element per grid step.
# ----------------------------------------------------------------------------
def _fused_dqn_kernel(x_ref, w1_ref, b1_ref, w2_ref, b2_ref, w3_ref, b3_ref,
                      w4_ref, b4_ref, w5_ref, b5_ref, wf1_ref, bf1_ref,
                      wf2_ref, bf2_ref, o_ref, *, geom):
    g = geom
    bf = lambda v: v.astype(jnp.bfloat16)

    # ---- conv1 (8x8, stride 4) == 2x2 stride-1 conv on the space-to-depth(4)
    #      input; computed per output phase (r1, r2) so that conv2's stride-2
    #      reads become contiguous slices. ----
    phases = []
    for r1 in (0, 1):
        for r2 in (0, 1):
            acc = jnp.zeros((g.n_p, 32), jnp.float32)
            for q1 in (0, 1):
                for q2 in (0, 1):
                    e1, a1 = divmod(r1 + q1, 2)
                    e2, a2 = divmod(r2 + q2, 2)
                    start = (a1 * 2 + a2) * g.plane_rows + e1 * g.pitch + e2
                    blk = x_ref[start:start + g.n_p, :]
                    wq = w1_ref[(q1 * 2 + q2) * g.c_s2d:
                                (q1 * 2 + q2 + 1) * g.c_s2d, :]
                    acc = acc + jnp.dot(bf(blk), wq,
                                        preferred_element_type=jnp.float32)
            phases.append(jnp.maximum(acc + b1_ref[...], 0.0))

    # ---- conv2 (4x4, stride 2) over the four conv1 phases ----
    acc = jnp.zeros((g.n2, 64), jnp.float32)
    for r1 in (0, 1):
        for r2 in (0, 1):
            src = phases[r1 * 2 + r2]
            for q1 in (0, 1):
                for q2 in (0, 1):
                    k1, k2 = 2 * q1 + r1, 2 * q2 + r2
                    wq = w2_ref[(k1 * 4 + k2) * 32:(k1 * 4 + k2 + 1) * 32, :]
                    off = q1 * g.pitch + q2
                    acc = acc + jnp.dot(bf(src[off:off + g.n2, :]), wq,
                                        preferred_element_type=jnp.float32)
    act = jnp.maximum(acc + b2_ref[...], 0.0)

    # ---- conv3/4/5 (3x3, stride 1), all on the shared row pitch ----
    def conv3x3(src, w_ref, b_ref, rows_out):
        cin = src.shape[1]
        a = jnp.zeros((rows_out, w_ref.shape[1]), jnp.float32)
        for k1 in range(3):
            for k2 in range(3):
                wq = w_ref[(k1 * 3 + k2) * cin:(k1 * 3 + k2 + 1) * cin, :]
                off = k1 * g.pitch + k2
                a = a + jnp.dot(bf(src[off:off + rows_out, :]), wq,
                                preferred_element_type=jnp.float32)
        return jnp.maximum(a + b_ref[...], 0.0)

    act = conv3x3(act, w3_ref, b3_ref, g.n3)
    act = conv3x3(act, w4_ref, b4_ref, g.n4)
    n5 = (g.ho5 - 1) * g.pitch + g.wo5
    act = conv3x3(act, w5_ref, b5_ref, n5)

    # ---- FC head (wf1 rows were pre-permuted to (h, w, c) order) ----
    acc = jnp.zeros((1, wf1_ref.shape[1]), jnp.float32)
    idx = 0
    for h in range(g.ho5):
        for w in range(g.wo5):
            blk = act[h * g.pitch + w:h * g.pitch + w + 1, :]
            wq = wf1_ref[idx * 64:(idx + 1) * 64, :]
            acc = acc + jnp.dot(bf(blk), wq, preferred_element_type=jnp.float32)
            idx += 1
    hid = jnp.maximum(acc + bf1_ref[...], 0.0)
    out = jnp.dot(bf(hid), wf2_ref[...],
                  preferred_element_type=jnp.float32) + bf2_ref[...]
    o_ref[...] = out.astype(o_ref.dtype)      # (1, 128): lane-dense store


# ----------------------------------------------------------------------------
# One-time wrapper-side data preparation (pure layout, O(input) / O(weights)).
# ----------------------------------------------------------------------------
def _prep_input(x_nchw, geom):
    g = geom
    b, c, _h, _w = x_nchw.shape
    x = x_nchw[:, :, :4 * g.h4, :4 * g.w4]
    # space-to-depth(4): channel index becomes ri*4*C + rj*C + c
    x = x.reshape(b, c, g.h4, 4, g.w4, 4)
    x = jnp.transpose(x, (0, 2, 4, 3, 5, 1))
    x = x.reshape(b, g.h4, g.w4, g.c_s2d)
    # pad and split into the 2x2 stride phases, each flattened at `pitch`
    x = jnp.pad(x, ((0, 0), (0, 2 * g.hp_alloc - g.h4),
                    (0, 2 * g.pitch - g.w4), (0, 0)))
    x = x.reshape(b, g.hp_alloc, 2, g.pitch, 2, g.c_s2d)
    x = jnp.transpose(x, (0, 2, 4, 1, 3, 5))
    return x.reshape(b, 4 * g.plane_rows, g.c_s2d).astype(jnp.float32)


def _prep_params(params, geom):
    g = geom
    (w1, b1), (w2, b2), (w3, b3), (w4, b4), (w5, b5) = params["conv"]
    (wf1, bf1), (wf2, bf2) = params["fc"]
    c = g.c_in

    # conv1: (O,C,8,8) -> per (q1,q2) block of rows, row = r1*4C + r2*C + c
    w1p = jnp.transpose(w1, (2, 3, 1, 0)).reshape(2, 4, 2, 4, c, 32)
    w1p = jnp.transpose(w1p, (0, 2, 1, 3, 4, 5)).reshape(4 * g.c_s2d, 32)
    w2p = jnp.transpose(w2, (2, 3, 1, 0)).reshape(16 * 32, 64)
    w3p = jnp.transpose(w3, (2, 3, 1, 0)).reshape(9 * 64, 64)
    w4p = jnp.transpose(w4, (2, 3, 1, 0)).reshape(9 * 64, 64)
    w5p = jnp.transpose(w5, (2, 3, 1, 0)).reshape(9 * 64, 64)

    # fc1 rows: torch flatten order is (c, h, w); kernel consumes (h, w, c)
    wf1p = wf1.reshape(64, g.ho5, g.wo5, wf1.shape[1])
    wf1p = jnp.transpose(wf1p, (1, 2, 0, 3)).reshape(g.ho5 * g.wo5 * 64, -1)

    num_actions = wf2.shape[1]
    n_pad = _round_up(max(num_actions, 1), _LANE)
    wf2p = jnp.pad(wf2, ((0, 0), (0, n_pad - num_actions)))
    bf2p = jnp.pad(bf2, ((0, n_pad - num_actions),))

    as_bf16 = lambda a: a.astype(jnp.bfloat16)
    as_row = lambda a: a.reshape(1, -1).astype(jnp.float32)
    tensors = [as_bf16(w1p), as_row(b1), as_bf16(w2p), as_row(b2),
               as_bf16(w3p), as_row(b3), as_bf16(w4p), as_row(b4),
               as_bf16(w5p), as_row(b5), as_bf16(wf1p), as_row(bf1),
               as_bf16(wf2p), as_row(bf2p)]
    return tensors, num_actions, n_pad


# ----------------------------------------------------------------------------
# Forward pass
# ----------------------------------------------------------------------------
def cnn_dqn_forward(params, x_nchw):
    """x_nchw: (B, C, H, W) float32 -> (B, num_actions) float32."""
    b = x_nchw.shape[0]
    geom = _geometry(tuple(x_nchw.shape[1:]))
    x_prep = _prep_input(x_nchw, geom)
    w_tensors, num_actions, n_pad = _prep_params(params, geom)

    kernel = functools.partial(_fused_dqn_kernel, geom=geom)

    def _resident(arr):
        return pl.BlockSpec(arr.shape, lambda i: (0, 0))

    in_specs = [pl.BlockSpec((None,) + x_prep.shape[1:], lambda i: (i, 0, 0))]
    in_specs += [_resident(t) for t in w_tensors]

    out = pl.pallas_call(
        kernel,
        out_shape=jax.ShapeDtypeStruct((b, 1, n_pad), jnp.float32),
        grid=(b,),
        in_specs=in_specs,
        out_specs=pl.BlockSpec((None, 1, n_pad), lambda i: (i, 0, 0)),
        compiler_params=pltpu.CompilerParams(
            dimension_semantics=("parallel",)),
    )(x_prep, *w_tensors)
    return out.reshape(b, n_pad)[:, :num_actions]


# ----------------------------------------------------------------------------
# Parameters
# ----------------------------------------------------------------------------
def init_params(key, input_shape, num_actions):
    c_in, h, w = input_shape
    params = {"conv": [], "fc": []}
    cin = c_in
    for (cout, k, _s) in CONV_CFG:
        key, kw_, kb_ = jax.random.split(key, 3)
        fan_in = cin * k * k
        wgt = jax.random.normal(kw_, (cout, cin, k, k), jnp.float32) / jnp.sqrt(fan_in)
        bias = jax.random.normal(kb_, (cout,), jnp.float32) * 0.01
        params["conv"].append((wgt, bias))
        cin = cout

    ho, wo = feature_hw(h, w)
    feat = cin * ho * wo
    for (din, dout) in [(feat, _FC_HIDDEN), (_FC_HIDDEN, num_actions)]:
        key, kw_, kb_ = jax.random.split(key, 3)
        wgt = jax.random.normal(kw_, (din, dout), jnp.float32) / jnp.sqrt(din)
        bias = jax.random.normal(kb_, (dout,), jnp.float32) * 0.01
        params["fc"].append((wgt, bias))
    return params


# ----------------------------------------------------------------------------
# Pure-JAX reference with the same arithmetic (bf16 operands, f32 accumulate).
# ----------------------------------------------------------------------------
def reference_forward(params, x_nchw):
    bf = lambda a: a.astype(jnp.bfloat16)
    y = x_nchw
    for (wgt, bias), (_cout, _k, stride) in zip(params["conv"], CONV_CFG):
        y = lax.conv_general_dilated(
            bf(y), bf(wgt), (stride, stride), "VALID",
            dimension_numbers=("NCHW", "OIHW", "NCHW"),
            preferred_element_type=jnp.float32)
        y = jnp.maximum(y + bias.reshape(1, -1, 1, 1), 0.0)
    y = y.reshape(y.shape[0], -1)
    w1, b1 = params["fc"][0]
    y = jnp.maximum(jnp.dot(bf(y), bf(w1), preferred_element_type=jnp.float32) + b1, 0.0)
    w2, b2 = params["fc"][1]
    y = jnp.dot(bf(y), bf(w2), preferred_element_type=jnp.float32) + b2
    return y


if __name__ == "__main__":
    # Smallest spatial size the conv stack supports: 68 -> 16 -> 7 -> 5 -> 3 -> 1.
    input_shape = (4, 68, 68)
    num_actions = 6
    batch = 2

    key = jax.random.PRNGKey(0)
    key_p, key_x = jax.random.split(key)
    params = init_params(key_p, input_shape, num_actions)
    x = jax.random.normal(key_x, (batch,) + input_shape, jnp.float32)

    fwd = jax.jit(cnn_dqn_forward)
    out = jax.block_until_ready(fwd(params, x))
    assert out.shape == (batch, num_actions), out.shape

    ref = jax.block_until_ready(reference_forward(params, x))
    max_err = float(jnp.max(jnp.abs(out - ref)))
    assert jnp.allclose(out, ref, atol=1e-2, rtol=1e-2), ("mismatch", max_err)

    print("KERNEL_OK")
</pallas_src>

<mosaic_0001>
module attributes {stable_mosaic.version = 11 : i64} {
  func.func @_fused_dqn_kernel(%arg0: i32, %arg1: memref<1x324x64xf32, #tpu.memory_space<vmem>>, %arg2: memref<256x32xbf16, #tpu.memory_space<vmem>>, %arg3: memref<1x32xf32, #tpu.memory_space<vmem>>, %arg4: memref<512x64xbf16, #tpu.memory_space<vmem>>, %arg5: memref<1x64xf32, #tpu.memory_space<vmem>>, %arg6: memref<576x64xbf16, #tpu.memory_space<vmem>>, %arg7: memref<1x64xf32, #tpu.memory_space<vmem>>, %arg8: memref<576x64xbf16, #tpu.memory_space<vmem>>, %arg9: memref<1x64xf32, #tpu.memory_space<vmem>>, %arg10: memref<576x64xbf16, #tpu.memory_space<vmem>>, %arg11: memref<1x64xf32, #tpu.memory_space<vmem>>, %arg12: memref<64x512xbf16, #tpu.memory_space<vmem>>, %arg13: memref<1x512xf32, #tpu.memory_space<vmem>>, %arg14: memref<512x128xbf16, #tpu.memory_space<vmem>>, %arg15: memref<1x128xf32, #tpu.memory_space<vmem>>, %arg16: memref<1x1x128xf32, #tpu.memory_space<vmem>>) attributes {dimension_semantics = [#tpu.dimension_semantics<parallel>], iteration_bounds = array<i64: 2>, scalar_prefetch = 0 : i64, scratch_operands = 0 : i64, tpu.core_type = #tpu.core_type<tc>, window_params = [{transform_indices = @transform_0, window_bounds = array<i64: 1, 324, 64>}, {pipeline_mode = #tpu.pipeline_mode<synchronous>, transform_indices = @transform_1, window_bounds = array<i64: 256, 32>}, {pipeline_mode = #tpu.pipeline_mode<synchronous>, transform_indices = @transform_2, window_bounds = array<i64: 1, 32>}, {pipeline_mode = #tpu.pipeline_mode<synchronous>, transform_indices = @transform_3, window_bounds = array<i64: 512, 64>}, {pipeline_mode = #tpu.pipeline_mode<synchronous>, transform_indices = @transform_4, window_bounds = array<i64: 1, 64>}, {pipeline_mode = #tpu.pipeline_mode<synchronous>, transform_indices = @transform_5, window_bounds = array<i64: 576, 64>}, {pipeline_mode = #tpu.pipeline_mode<synchronous>, transform_indices = @transform_6, window_bounds = array<i64: 1, 64>}, {pipeline_mode = #tpu.pipeline_mode<synchronous>, transform_indices = @transform_7, window_bounds = array<i64: 576, 64>}, {pipeline_mode = #tpu.pipeline_mode<synchronous>, transform_indices = @transform_8, window_bounds = array<i64: 1, 64>}, {pipeline_mode = #tpu.pipeline_mode<synchronous>, transform_indices = @transform_9, window_bounds = array<i64: 576, 64>}, {pipeline_mode = #tpu.pipeline_mode<synchronous>, transform_indices = @transform_10, window_bounds = array<i64: 1, 64>}, {pipeline_mode = #tpu.pipeline_mode<synchronous>, transform_indices = @transform_11, window_bounds = array<i64: 64, 512>}, {pipeline_mode = #tpu.pipeline_mode<synchronous>, transform_indices = @transform_12, window_bounds = array<i64: 1, 512>}, {pipeline_mode = #tpu.pipeline_mode<synchronous>, transform_indices = @transform_13, window_bounds = array<i64: 512, 128>}, {pipeline_mode = #tpu.pipeline_mode<synchronous>, transform_indices = @transform_14, window_bounds = array<i64: 1, 128>}, {transform_indices = @transform_15, window_bounds = array<i64: 1, 1, 128>}]} {
    %cst = arith.constant 0.000000e+00 : f32
    %0 = vector.broadcast %cst : f32 to vector<71x32xf32>
    %c0 = arith.constant 0 : index
    %c0_0 = arith.constant 0 : index
    %c0_1 = arith.constant 0 : index
    %1 = vector.load %arg1[%c0, %c0_0, %c0_1] : memref<1x324x64xf32, #tpu.memory_space<vmem>>, vector<1x71x64xf32>
    %2 = vector.shape_cast %1 : vector<1x71x64xf32> to vector<71x64xf32>
    %c0_2 = arith.constant 0 : index
    %c0_3 = arith.constant 0 : index
    %3 = vector.load %arg2[%c0_2, %c0_3] : memref<256x32xbf16, #tpu.memory_space<vmem>>, vector<64x32xbf16>
    %4 = arith.truncf %2 : vector<71x64xf32> to vector<71x64xbf16>
    %cst_4 = arith.constant dense<0.000000e+00> : vector<71x32xf32>
    %5 = tpu.matmul %4, %3, %cst_4 {dimension_numbers = #tpu.dot_dimension_numbers<[1], [0], [0], [1], [0, 0, 1, 1], [], []>} : vector<71x64xbf16>, vector<64x32xbf16>, vector<71x32xf32> -> vector<71x32xf32>
    %6 = arith.addf %0, %5 : vector<71x32xf32>
    %c0_5 = arith.constant 0 : index
    %c81 = arith.constant 81 : index
    %c0_6 = arith.constant 0 : index
    %7 = vector.load %arg1[%c0_5, %c81, %c0_6] : memref<1x324x64xf32, #tpu.memory_space<vmem>>, vector<1x71x64xf32>
    %8 = vector.shape_cast %7 : vector<1x71x64xf32> to vector<71x64xf32>
    %c64 = arith.constant 64 : index
    %c0_7 = arith.constant 0 : index
    %9 = vector.load %arg2[%c64, %c0_7] : memref<256x32xbf16, #tpu.memory_space<vmem>>, vector<64x32xbf16>
    %10 = arith.truncf %8 : vector<71x64xf32> to vector<71x64xbf16>
    %cst_8 = arith.constant dense<0.000000e+00> : vector<71x32xf32>
    %11 = tpu.matmul %10, %9, %cst_8 {dimension_numbers = #tpu.dot_dimension_numbers<[1], [0], [0], [1], [0, 0, 1, 1], [], []>} : vector<71x64xbf16>, vector<64x32xbf16>, vector<71x32xf32> -> vector<71x32xf32>
    %12 = arith.addf %6, %11 : vector<71x32xf32>
    %c0_9 = arith.constant 0 : index
    %c162 = arith.constant 162 : index
    %c0_10 = arith.constant 0 : index
    %13 = vector.load %arg1[%c0_9, %c162, %c0_10] : memref<1x324x64xf32, #tpu.memory_space<vmem>>, vector<1x71x64xf32>
    %14 = vector.shape_cast %13 : vector<1x71x64xf32> to vector<71x64xf32>
    %c128 = arith.constant 128 : index
    %c0_11 = arith.constant 0 : index
    %15 = vector.load %arg2[%c128, %c0_11] : memref<256x32xbf16, #tpu.memory_space<vmem>>, vector<64x32xbf16>
    %16 = arith.truncf %14 : vector<71x64xf32> to vector<71x64xbf16>
    %cst_12 = arith.constant dense<0.000000e+00> : vector<71x32xf32>
    %17 = tpu.matmul %16, %15, %cst_12 {dimension_numbers = #tpu.dot_dimension_numbers<[1], [0], [0], [1], [0, 0, 1, 1], [], []>} : vector<71x64xbf16>, vector<64x32xbf16>, vector<71x32xf32> -> vector<71x32xf32>
    %18 = arith.addf %12, %17 : vector<71x32xf32>
    %c0_13 = arith.constant 0 : index
    %c243 = arith.constant 243 : index
    %c0_14 = arith.constant 0 : index
    %19 = vector.load %arg1[%c0_13, %c243, %c0_14] : memref<1x324x64xf32, #tpu.memory_space<vmem>>, vector<1x71x64xf32>
    %20 = vector.shape_cast %19 : vector<1x71x64xf32> to vector<71x64xf32>
    %c192 = arith.constant 192 : index
    %c0_15 = arith.constant 0 : index
    %21 = vector.load %arg2[%c192, %c0_15] : memref<256x32xbf16, #tpu.memory_space<vmem>>, vector<64x32xbf16>
    %22 = arith.truncf %20 : vector<71x64xf32> to vector<71x64xbf16>
    %cst_16 = arith.constant dense<0.000000e+00> : vector<71x32xf32>
    %23 = tpu.matmul %22, %21, %cst_16 {dimension_numbers = #tpu.dot_dimension_numbers<[1], [0], [0], [1], [0, 0, 1, 1], [], []>} : vector<71x64xbf16>, vector<64x32xbf16>, vector<71x32xf32> -> vector<71x32xf32>
    %24 = arith.addf %18, %23 : vector<71x32xf32>
    %c0_17 = arith.constant 0 : index
    %c0_18 = arith.constant 0 : index
    %25 = vector.load %arg3[%c0_17, %c0_18] : memref<1x32xf32, #tpu.memory_space<vmem>>, vector<1x32xf32>
    %26 = vector.broadcast %25 : vector<1x32xf32> to vector<71x32xf32>
    %27 = arith.addf %24, %26 : vector<71x32xf32>
    %cst_19 = arith.constant 0.000000e+00 : f32
    %28 = vector.broadcast %cst_19 : f32 to vector<71x32xf32>
    %29 = arith.maximumf %27, %28 : vector<71x32xf32>
    %cst_20 = arith.constant 0.000000e+00 : f32
    %30 = vector.broadcast %cst_20 : f32 to vector<71x32xf32>
    %c0_21 = arith.constant 0 : index
    %c81_22 = arith.constant 81 : index
    %c0_23 = arith.constant 0 : index
    %31 = vector.load %arg1[%c0_21, %c81_22, %c0_23] : memref<1x324x64xf32, #tpu.memory_space<vmem>>, vector<1x71x64xf32>
    %32 = vector.shape_cast %31 : vector<1x71x64xf32> to vector<71x64xf32>
    %c0_24 = arith.constant 0 : index
    %c0_25 = arith.constant 0 : index
    %33 = vector.load %arg2[%c0_24, %c0_25] : memref<256x32xbf16, #tpu.memory_space<vmem>>, vector<64x32xbf16>
    %34 = arith.truncf %32 : vector<71x64xf32> to vector<71x64xbf16>
    %cst_26 = arith.constant dense<0.000000e+00> : vector<71x32xf32>
    %35 = tpu.matmul %34, %33, %cst_26 {dimension_numbers = #tpu.dot_dimension_numbers<[1], [0], [0], [1], [0, 0, 1, 1], [], []>} : vector<71x64xbf16>, vector<64x32xbf16>, vector<71x32xf32> -> vector<71x32xf32>
    %36 = arith.addf %30, %35 : vector<71x32xf32>
    %c0_27 = arith.constant 0 : index
    %c1 = arith.constant 1 : index
    %c0_28 = arith.constant 0 : index
    %37 = vector.load %arg1[%c0_27, %c1, %c0_28] : memref<1x324x64xf32, #tpu.memory_space<vmem>>, vector<1x71x64xf32>
    %38 = vector.shape_cast %37 : vector<1x71x64xf32> to vector<71x64xf32>
    %c64_29 = arith.constant 64 : index
    %c0_30 = arith.constant 0 : index
    %39 = vector.load %arg2[%c64_29, %c0_30] : memref<256x32xbf16, #tpu.memory_space<vmem>>, vector<64x32xbf16>
    %40 = arith.truncf %38 : vector<71x64xf32> to vector<71x64xbf16>
    %cst_31 = arith.constant dense<0.000000e+00> : vector<71x32xf32>
    %41 = tpu.matmul %40, %39, %cst_31 {dimension_numbers = #tpu.dot_dimension_numbers<[1], [0], [0], [1], [0, 0, 1, 1], [], []>} : vector<71x64xbf16>, vector<64x32xbf16>, vector<71x32xf32> -> vector<71x32xf32>
    %42 = arith.addf %36, %41 : vector<71x32xf32>
    %c0_32 = arith.constant 0 : index
    %c243_33 = arith.constant 243 : index
    %c0_34 = arith.constant 0 : index
    %43 = vector.load %arg1[%c0_32, %c243_33, %c0_34] : memref<1x324x64xf32, #tpu.memory_space<vmem>>, vector<1x71x64xf32>
    %44 = vector.shape_cast %43 : vector<1x71x64xf32> to vector<71x64xf32>
    %c128_35 = arith.constant 128 : index
    %c0_36 = arith.constant 0 : index
    %45 = vector.load %arg2[%c128_35, %c0_36] : memref<256x32xbf16, #tpu.memory_space<vmem>>, vector<64x32xbf16>
    %46 = arith.truncf %44 : vector<71x64xf32> to vector<71x64xbf16>
    %cst_37 = arith.constant dense<0.000000e+00> : vector<71x32xf32>
    %47 = tpu.matmul %46, %45, %cst_37 {dimension_numbers = #tpu.dot_dimension_numbers<[1], [0], [0], [1], [0, 0, 1, 1], [], []>} : vector<71x64xbf16>, vector<64x32xbf16>, vector<71x32xf32> -> vector<71x32xf32>
    %48 = arith.addf %42, %47 : vector<71x32xf32>
    %c0_38 = arith.constant 0 : index
    %c163 = arith.constant 163 : index
    %c0_39 = arith.constant 0 : index
    %49 = vector.load %arg1[%c0_38, %c163, %c0_39] : memref<1x324x64xf32, #tpu.memory_space<vmem>>, vector<1x71x64xf32>
    %50 = vector.shape_cast %49 : vector<1x71x64xf32> to vector<71x64xf32>
    %c192_40 = arith.constant 192 : index
    %c0_41 = arith.constant 0 : index
    %51 = vector.load %arg2[%c192_40, %c0_41] : memref<256x32xbf16, #tpu.memory_space<vmem>>, vector<64x32xbf16>
    %52 = arith.truncf %50 : vector<71x64xf32> to vector<71x64xbf16>
    %cst_42 = arith.constant dense<0.000000e+00> : vector<71x32xf32>
    %53 = tpu.matmul %52, %51, %cst_42 {dimension_numbers = #tpu.dot_dimension_numbers<[1], [0], [0], [1], [0, 0, 1, 1], [], []>} : vector<71x64xbf16>, vector<64x32xbf16>, vector<71x32xf32> -> vector<71x32xf32>
    %54 = arith.addf %48, %53 : vector<71x32xf32>
    %c0_43 = arith.constant 0 : index
    %c0_44 = arith.constant 0 : index
    %55 = vector.load %arg3[%c0_43, %c0_44] : memref<1x32xf32, #tpu.memory_space<vmem>>, vector<1x32xf32>
    %56 = vector.broadcast %55 : vector<1x32xf32> to vector<71x32xf32>
    %57 = arith.addf %54, %56 : vector<71x32xf32>
    %cst_45 = arith.constant 0.000000e+00 : f32
    %58 = vector.broadcast %cst_45 : f32 to vector<71x32xf32>
    %59 = arith.maximumf %57, %58 : vector<71x32xf32>
    %cst_46 = arith.constant 0.000000e+00 : f32
    %60 = vector.broadcast %cst_46 : f32 to vector<71x32xf32>
    %c0_47 = arith.constant 0 : index
    %c162_48 = arith.constant 162 : index
    %c0_49 = arith.constant 0 : index
    %61 = vector.load %arg1[%c0_47, %c162_48, %c0_49] : memref<1x324x64xf32, #tpu.memory_space<vmem>>, vector<1x71x64xf32>
    %62 = vector.shape_cast %61 : vector<1x71x64xf32> to vector<71x64xf32>
    %c0_50 = arith.constant 0 : index
    %c0_51 = arith.constant 0 : index
    %63 = vector.load %arg2[%c0_50, %c0_51] : memref<256x32xbf16, #tpu.memory_space<vmem>>, vector<64x32xbf16>
    %64 = arith.truncf %62 : vector<71x64xf32> to vector<71x64xbf16>
    %cst_52 = arith.constant dense<0.000000e+00> : vector<71x32xf32>
    %65 = tpu.matmul %64, %63, %cst_52 {dimension_numbers = #tpu.dot_dimension_numbers<[1], [0], [0], [1], [0, 0, 1, 1], [], []>} : vector<71x64xbf16>, vector<64x32xbf16>, vector<71x32xf32> -> vector<71x32xf32>
    %66 = arith.addf %60, %65 : vector<71x32xf32>
    %c0_53 = arith.constant 0 : index
    %c243_54 = arith.constant 243 : index
    %c0_55 = arith.constant 0 : index
    %67 = vector.load %arg1[%c0_53, %c243_54, %c0_55] : memref<1x324x64xf32, #tpu.memory_space<vmem>>, vector<1x71x64xf32>
    %68 = vector.shape_cast %67 : vector<1x71x64xf32> to vector<71x64xf32>
    %c64_56 = arith.constant 64 : index
    %c0_57 = arith.constant 0 : index
    %69 = vector.load %arg2[%c64_56, %c0_57] : memref<256x32xbf16, #tpu.memory_space<vmem>>, vector<64x32xbf16>
    %70 = arith.truncf %68 : vector<71x64xf32> to vector<71x64xbf16>
    %cst_58 = arith.constant dense<0.000000e+00> : vector<71x32xf32>
    %71 = tpu.matmul %70, %69, %cst_58 {dimension_numbers = #tpu.dot_dimension_numbers<[1], [0], [0], [1], [0, 0, 1, 1], [], []>} : vector<71x64xbf16>, vector<64x32xbf16>, vector<71x32xf32> -> vector<71x32xf32>
    %72 = arith.addf %66, %71 : vector<71x32xf32>
    %c0_59 = arith.constant 0 : index
    %c9 = arith.constant 9 : index
    %c0_60 = arith.constant 0 : index
    %73 = vector.load %arg1[%c0_59, %c9, %c0_60] : memref<1x324x64xf32, #tpu.memory_space<vmem>>, vector<1x71x64xf32>
    %74 = vector.shape_cast %73 : vector<1x71x64xf32> to vector<71x64xf32>
    %c128_61 = arith.constant 128 : index
    %c0_62 = arith.constant 0 : index
    %75 = vector.load %arg2[%c128_61, %c0_62] : memref<256x32xbf16, #tpu.memory_space<vmem>>, vector<64x32xbf16>
    %76 = arith.truncf %74 : vector<71x64xf32> to vector<71x64xbf16>
    %cst_63 = arith.constant dense<0.000000e+00> : vector<71x32xf32>
    %77 = tpu.matmul %76, %75, %cst_63 {dimension_numbers = #tpu.dot_dimension_numbers<[1], [0], [0], [1], [0, 0, 1, 1], [], []>} : vector<71x64xbf16>, vector<64x32xbf16>, vector<71x32xf32> -> vector<71x32xf32>
    %78 = arith.addf %72, %77 : vector<71x32xf32>
    %c0_64 = arith.constant 0 : index
    %c90 = arith.constant 90 : index
    %c0_65 = arith.constant 0 : index
    %79 = vector.load %arg1[%c0_64, %c90, %c0_65] : memref<1x324x64xf32, #tpu.memory_space<vmem>>, vector<1x71x64xf32>
    %80 = vector.shape_cast %79 : vector<1x71x64xf32> to vector<71x64xf32>
    %c192_66 = arith.constant 192 : index
    %c0_67 = arith.constant 0 : index
    %81 = vector.load %arg2[%c192_66, %c0_67] : memref<256x32xbf16, #tpu.memory_space<vmem>>, vector<64x32xbf16>
    %82 = arith.truncf %80 : vector<71x64xf32> to vector<71x64xbf16>
    %cst_68 = arith.constant dense<0.000000e+00> : vector<71x32xf32>
    %83 = tpu.matmul %82, %81, %cst_68 {dimension_numbers = #tpu.dot_dimension_numbers<[1], [0], [0], [1], [0, 0, 1, 1], [], []>} : vector<71x64xbf16>, vector<64x32xbf16>, vector<71x32xf32> -> vector<71x32xf32>
    %84 = arith.addf %78, %83 : vector<71x32xf32>
    %c0_69 = arith.constant 0 : index
    %c0_70 = arith.constant 0 : index
    %85 = vector.load %arg3[%c0_69, %c0_70] : memref<1x32xf32, #tpu.memory_space<vmem>>, vector<1x32xf32>
    %86 = vector.broadcast %85 : vector<1x32xf32> to vector<71x32xf32>
    %87 = arith.addf %84, %86 : vector<71x32xf32>
    %cst_71 = arith.constant 0.000000e+00 : f32
    %88 = vector.broadcast %cst_71 : f32 to vector<71x32xf32>
    %89 = arith.maximumf %87, %88 : vector<71x32xf32>
    %cst_72 = arith.constant 0.000000e+00 : f32
    %90 = vector.broadcast %cst_72 : f32 to vector<71x32xf32>
    %c0_73 = arith.constant 0 : index
    %c243_74 = arith.constant 243 : index
    %c0_75 = arith.constant 0 : index
    %91 = vector.load %arg1[%c0_73, %c243_74, %c0_75] : memref<1x324x64xf32, #tpu.memory_space<vmem>>, vector<1x71x64xf32>
    %92 = vector.shape_cast %91 : vector<1x71x64xf32> to vector<71x64xf32>
    %c0_76 = arith.constant 0 : index
    %c0_77 = arith.constant 0 : index
    %93 = vector.load %arg2[%c0_76, %c0_77] : memref<256x32xbf16, #tpu.memory_space<vmem>>, vector<64x32xbf16>
    %94 = arith.truncf %92 : vector<71x64xf32> to vector<71x64xbf16>
    %cst_78 = arith.constant dense<0.000000e+00> : vector<71x32xf32>
    %95 = tpu.matmul %94, %93, %cst_78 {dimension_numbers = #tpu.dot_dimension_numbers<[1], [0], [0], [1], [0, 0, 1, 1], [], []>} : vector<71x64xbf16>, vector<64x32xbf16>, vector<71x32xf32> -> vector<71x32xf32>
    %96 = arith.addf %90, %95 : vector<71x32xf32>
    %c0_79 = arith.constant 0 : index
    %c163_80 = arith.constant 163 : index
    %c0_81 = arith.constant 0 : index
    %97 = vector.load %arg1[%c0_79, %c163_80, %c0_81] : memref<1x324x64xf32, #tpu.memory_space<vmem>>, vector<1x71x64xf32>
    %98 = vector.shape_cast %97 : vector<1x71x64xf32> to vector<71x64xf32>
    %c64_82 = arith.constant 64 : index
    %c0_83 = arith.constant 0 : index
    %99 = vector.load %arg2[%c64_82, %c0_83] : memref<256x32xbf16, #tpu.memory_space<vmem>>, vector<64x32xbf16>
    %100 = arith.truncf %98 : vector<71x64xf32> to vector<71x64xbf16>
    %cst_84 = arith.constant dense<0.000000e+00> : vector<71x32xf32>
    %101 = tpu.matmul %100, %99, %cst_84 {dimension_numbers = #tpu.dot_dimension_numbers<[1], [0], [0], [1], [0, 0, 1, 1], [], []>} : vector<71x64xbf16>, vector<64x32xbf16>, vector<71x32xf32> -> vector<71x32xf32>
    %102 = arith.addf %96, %101 : vector<71x32xf32>
    %c0_85 = arith.constant 0 : index
    %c90_86 = arith.constant 90 : index
    %c0_87 = arith.constant 0 : index
    %103 = vector.load %arg1[%c0_85, %c90_86, %c0_87] : memref<1x324x64xf32, #tpu.memory_space<vmem>>, vector<1x71x64xf32>
    %104 = vector.shape_cast %103 : vector<1x71x64xf32> to vector<71x64xf32>
    %c128_88 = arith.constant 128 : index
    %c0_89 = arith.constant 0 : index
    %105 = vector.load %arg2[%c128_88, %c0_89] : memref<256x32xbf16, #tpu.memory_space<vmem>>, vector<64x32xbf16>
    %106 = arith.truncf %104 : vector<71x64xf32> to vector<71x64xbf16>
    %cst_90 = arith.constant dense<0.000000e+00> : vector<71x32xf32>
    %107 = tpu.matmul %106, %105, %cst_90 {dimension_numbers = #tpu.dot_dimension_numbers<[1], [0], [0], [1], [0, 0, 1, 1], [], []>} : vector<71x64xbf16>, vector<64x32xbf16>, vector<71x32xf32> -> vector<71x32xf32>
    %108 = arith.addf %102, %107 : vector<71x32xf32>
    %c0_91 = arith.constant 0 : index
    %c10 = arith.constant 10 : index
    %c0_92 = arith.constant 0 : index
    %109 = vector.load %arg1[%c0_91, %c10, %c0_92] : memref<1x324x64xf32, #tpu.memory_space<vmem>>, vector<1x71x64xf32>
    %110 = vector.shape_cast %109 : vector<1x71x64xf32> to vector<71x64xf32>
    %c192_93 = arith.constant 192 : index
    %c0_94 = arith.constant 0 : index
    %111 = vector.load %arg2[%c192_93, %c0_94] : memref<256x32xbf16, #tpu.memory_space<vmem>>, vector<64x32xbf16>
    %112 = arith.truncf %110 : vector<71x64xf32> to vector<71x64xbf16>
    %cst_95 = arith.constant dense<0.000000e+00> : vector<71x32xf32>
    %113 = tpu.matmul %112, %111, %cst_95 {dimension_numbers = #tpu.dot_dimension_numbers<[1], [0], [0], [1], [0, 0, 1, 1], [], []>} : vector<71x64xbf16>, vector<64x32xbf16>, vector<71x32xf32> -> vector<71x32xf32>
    %114 = arith.addf %108, %113 : vector<71x32xf32>
    %c0_96 = arith.constant 0 : index
    %c0_97 = arith.constant 0 : index
    %115 = vector.load %arg3[%c0_96, %c0_97] : memref<1x32xf32, #tpu.memory_space<vmem>>, vector<1x32xf32>
    %116 = vector.broadcast %115 : vector<1x32xf32> to vector<71x32xf32>
    %117 = arith.addf %114, %116 : vector<71x32xf32>
    %cst_98 = arith.constant 0.000000e+00 : f32
    %118 = vector.broadcast %cst_98 : f32 to vector<71x32xf32>
    %119 = arith.maximumf %117, %118 : vector<71x32xf32>
    %cst_99 = arith.constant 0.000000e+00 : f32
    %120 = vector.broadcast %cst_99 : f32 to vector<61x64xf32>
    %c0_100 = arith.constant 0 : index
    %c0_101 = arith.constant 0 : index
    %121 = vector.load %arg4[%c0_100, %c0_101] : memref<512x64xbf16, #tpu.memory_space<vmem>>, vector<32x64xbf16>
    %122 = vector.extract_strided_slice %29 {offsets = [0, 0], sizes = [61, 32], strides = [1, 1]} : vector<71x32xf32> to vector<61x32xf32>
    %123 = arith.truncf %122 : vector<61x32xf32> to vector<61x32xbf16>
    %cst_102 = arith.constant dense<0.000000e+00> : vector<61x64xf32>
    %124 = tpu.matmul %123, %121, %cst_102 {dimension_numbers = #tpu.dot_dimension_numbers<[1], [0], [0], [1], [0, 0, 1, 1], [], []>} : vector<61x32xbf16>, vector<32x64xbf16>, vector<61x64xf32> -> vector<61x64xf32>
    %125 = arith.addf %120, %124 : vector<61x64xf32>
    %c64_103 = arith.constant 64 : index
    %c0_104 = arith.constant 0 : index
    %126 = vector.load %arg4[%c64_103, %c0_104] : memref<512x64xbf16, #tpu.memory_space<vmem>>, vector<32x64xbf16>
    %127 = vector.extract_strided_slice %29 {offsets = [1, 0], sizes = [61, 32], strides = [1, 1]} : vector<71x32xf32> to vector<61x32xf32>
    %128 = arith.truncf %127 : vector<61x32xf32> to vector<61x32xbf16>
    %cst_105 = arith.constant dense<0.000000e+00> : vector<61x64xf32>
    %129 = tpu.matmul %128, %126, %cst_105 {dimension_numbers = #tpu.dot_dimension_numbers<[1], [0], [0], [1], [0, 0, 1, 1], [], []>} : vector<61x32xbf16>, vector<32x64xbf16>, vector<61x64xf32> -> vector<61x64xf32>
    %130 = arith.addf %125, %129 : vector<61x64xf32>
    %c256 = arith.constant 256 : index
    %c0_106 = arith.constant 0 : index
    %131 = vector.load %arg4[%c256, %c0_106] : memref<512x64xbf16, #tpu.memory_space<vmem>>, vector<32x64xbf16>
    %132 = vector.extract_strided_slice %29 {offsets = [9, 0], sizes = [61, 32], strides = [1, 1]} : vector<71x32xf32> to vector<61x32xf32>
    %133 = arith.truncf %132 : vector<61x32xf32> to vector<61x32xbf16>
    %cst_107 = arith.constant dense<0.000000e+00> : vector<61x64xf32>
    %134 = tpu.matmul %133, %131, %cst_107 {dimension_numbers = #tpu.dot_dimension_numbers<[1], [0], [0], [1], [0, 0, 1, 1], [], []>} : vector<61x32xbf16>, vector<32x64xbf16>, vector<61x64xf32> -> vector<61x64xf32>
    %135 = arith.addf %130, %134 : vector<61x64xf32>
    %c320 = arith.constant 320 : index
    %c0_108 = arith.constant 0 : index
    %136 = vector.load %arg4[%c320, %c0_108] : memref<512x64xbf16, #tpu.memory_space<vmem>>, vector<32x64xbf16>
    %137 = vector.extract_strided_slice %29 {offsets = [10, 0], sizes = [61, 32], strides = [1, 1]} : vector<71x32xf32> to vector<61x32xf32>
    %138 = arith.truncf %137 : vector<61x32xf32> to vector<61x32xbf16>
    %cst_109 = arith.constant dense<0.000000e+00> : vector<61x64xf32>
    %139 = tpu.matmul %138, %136, %cst_109 {dimension_numbers = #tpu.dot_dimension_numbers<[1], [0], [0], [1], [0, 0, 1, 1], [], []>} : vector<61x32xbf16>, vector<32x64xbf16>, vector<61x64xf32> -> vector<61x64xf32>
    %140 = arith.addf %135, %139 : vector<61x64xf32>
    %c32 = arith.constant 32 : index
    %c0_110 = arith.constant 0 : index
    %141 = vector.load %arg4[%c32, %c0_110] : memref<512x64xbf16, #tpu.memory_space<vmem>>, vector<32x64xbf16>
    %142 = vector.extract_strided_slice %59 {offsets = [0, 0], sizes = [61, 32], strides = [1, 1]} : vector<71x32xf32> to vector<61x32xf32>
    %143 = arith.truncf %142 : vector<61x32xf32> to vector<61x32xbf16>
    %cst_111 = arith.constant dense<0.000000e+00> : vector<61x64xf32>
    %144 = tpu.matmul %143, %141, %cst_111 {dimension_numbers = #tpu.dot_dimension_numbers<[1], [0], [0], [1], [0, 0, 1, 1], [], []>} : vector<61x32xbf16>, vector<32x64xbf16>, vector<61x64xf32> -> vector<61x64xf32>
    %145 = arith.addf %140, %144 : vector<61x64xf32>
    %c96 = arith.constant 96 : index
    %c0_112 = arith.constant 0 : index
    %146 = vector.load %arg4[%c96, %c0_112] : memref<512x64xbf16, #tpu.memory_space<vmem>>, vector<32x64xbf16>
    %147 = vector.extract_strided_slice %59 {offsets = [1, 0], sizes = [61, 32], strides = [1, 1]} : vector<71x32xf32> to vector<61x32xf32>
    %148 = arith.truncf %147 : vector<61x32xf32> to vector<61x32xbf16>
    %cst_113 = arith.constant dense<0.000000e+00> : vector<61x64xf32>
    %149 = tpu.matmul %148, %146, %cst_113 {dimension_numbers = #tpu.dot_dimension_numbers<[1], [0], [0], [1], [0, 0, 1, 1], [], []>} : vector<61x32xbf16>, vector<32x64xbf16>, vector<61x64xf32> -> vector<61x64xf32>
    %150 = arith.addf %145, %149 : vector<61x64xf32>
    %c288 = arith.constant 288 : index
    %c0_114 = arith.constant 0 : index
    %151 = vector.load %arg4[%c288, %c0_114] : memref<512x64xbf16, #tpu.memory_space<vmem>>, vector<32x64xbf16>
    %152 = vector.extract_strided_slice %59 {offsets = [9, 0], sizes = [61, 32], strides = [1, 1]} : vector<71x32xf32> to vector<61x32xf32>
    %153 = arith.truncf %152 : vector<61x32xf32> to vector<61x32xbf16>
    %cst_115 = arith.constant dense<0.000000e+00> : vector<61x64xf32>
    %154 = tpu.matmul %153, %151, %cst_115 {dimension_numbers = #tpu.dot_dimension_numbers<[1], [0], [0], [1], [0, 0, 1, 1], [], []>} : vector<61x32xbf16>, vector<32x64xbf16>, vector<61x64xf32> -> vector<61x64xf32>
    %155 = arith.addf %150, %154 : vector<61x64xf32>
    %c352 = arith.constant 352 : index
    %c0_116 = arith.constant 0 : index
    %156 = vector.load %arg4[%c352, %c0_116] : memref<512x64xbf16, #tpu.memory_space<vmem>>, vector<32x64xbf16>
    %157 = vector.extract_strided_slice %59 {offsets = [10, 0], sizes = [61, 32], strides = [1, 1]} : vector<71x32xf32> to vector<61x32xf32>
    %158 = arith.truncf %157 : vector<61x32xf32> to vector<61x32xbf16>
    %cst_117 = arith.constant dense<0.000000e+00> : vector<61x64xf32>
    %159 = tpu.matmul %158, %156, %cst_117 {dimension_numbers = #tpu.dot_dimension_numbers<[1], [0], [0], [1], [0, 0, 1, 1], [], []>} : vector<61x32xbf16>, vector<32x64xbf16>, vector<61x64xf32> -> vector<61x64xf32>
    %160 = arith.addf %155, %159 : vector<61x64xf32>
    %c128_118 = arith.constant 128 : index
    %c0_119 = arith.constant 0 : index
    %161 = vector.load %arg4[%c128_118, %c0_119] : memref<512x64xbf16, #tpu.memory_space<vmem>>, vector<32x64xbf16>
    %162 = vector.extract_strided_slice %89 {offsets = [0, 0], sizes = [61, 32], strides = [1, 1]} : vector<71x32xf32> to vector<61x32xf32>
    %163 = arith.truncf %162 : vector<61x32xf32> to vector<61x32xbf16>
    %cst_120 = arith.constant dense<0.000000e+00> : vector<61x64xf32>
    %164 = tpu.matmul %163, %161, %cst_120 {dimension_numbers = #tpu.dot_dimension_numbers<[1], [0], [0], [1], [0, 0, 1, 1], [], []>} : vector<61x32xbf16>, vector<32x64xbf16>, vector<61x64xf32> -> vector<61x64xf32>
    %165 = arith.addf %160, %164 : vector<61x64xf32>
    %c192_121 = arith.constant 192 : index
    %c0_122 = arith.constant 0 : index
    %166 = vector.load %arg4[%c192_121, %c0_122] : memref<512x64xbf16, #tpu.memory_space<vmem>>, vector<32x64xbf16>
    %167 = vector.extract_strided_slice %89 {offsets = [1, 0], sizes = [61, 32], strides = [1, 1]} : vector<71x32xf32> to vector<61x32xf32>
    %168 = arith.truncf %167 : vector<61x32xf32> to vector<61x32xbf16>
    %cst_123 = arith.constant dense<0.000000e+00> : vector<61x64xf32>
    %169 = tpu.matmul %168, %166, %cst_123 {dimension_numbers = #tpu.dot_dimension_numbers<[1], [0], [0], [1], [0, 0, 1, 1], [], []>} : vector<61x32xbf16>, vector<32x64xbf16>, vector<61x64xf32> -> vector<61x64xf32>
    %170 = arith.addf %165, %169 : vector<61x64xf32>
    %c384 = arith.constant 384 : index
    %c0_124 = arith.constant 0 : index
    %171 = vector.load %arg4[%c384, %c0_124] : memref<512x64xbf16, #tpu.memory_space<vmem>>, vector<32x64xbf16>
    %172 = vector.extract_strided_slice %89 {offsets = [9, 0], sizes = [61, 32], strides = [1, 1]} : vector<71x32xf32> to vector<61x32xf32>
    %173 = arith.truncf %172 : vector<61x32xf32> to vector<61x32xbf16>
    %cst_125 = arith.constant dense<0.000000e+00> : vector<61x64xf32>
    %174 = tpu.matmul %173, %171, %cst_125 {dimension_numbers = #tpu.dot_dimension_numbers<[1], [0], [0], [1], [0, 0, 1, 1], [], []>} : vector<61x32xbf16>, vector<32x64xbf16>, vector<61x64xf32> -> vector<61x64xf32>
    %175 = arith.addf %170, %174 : vector<61x64xf32>
    %c448 = arith.constant 448 : index
    %c0_126 = arith.constant 0 : index
    %176 = vector.load %arg4[%c448, %c0_126] : memref<512x64xbf16, #tpu.memory_space<vmem>>, vector<32x64xbf16>
    %177 = vector.extract_strided_slice %89 {offsets = [10, 0], sizes = [61, 32], strides = [1, 1]} : vector<71x32xf32> to vector<61x32xf32>
    %178 = arith.truncf %177 : vector<61x32xf32> to vector<61x32xbf16>
    %cst_127 = arith.constant dense<0.000000e+00> : vector<61x64xf32>
    %179 = tpu.matmul %178, %176, %cst_127 {dimension_numbers = #tpu.dot_dimension_numbers<[1], [0], [0], [1], [0, 0, 1, 1], [], []>} : vector<61x32xbf16>, vector<32x64xbf16>, vector<61x64xf32> -> vector<61x64xf32>
    %180 = arith.addf %175, %179 : vector<61x64xf32>
    %c160 = arith.constant 160 : index
    %c0_128 = arith.constant 0 : index
    %181 = vector.load %arg4[%c160, %c0_128] : memref<512x64xbf16, #tpu.memory_space<vmem>>, vector<32x64xbf16>
    %182 = vector.extract_strided_slice %119 {offsets = [0, 0], sizes = [61, 32], strides = [1, 1]} : vector<71x32xf32> to vector<61x32xf32>
    %183 = arith.truncf %182 : vector<61x32xf32> to vector<61x32xbf16>
    %cst_129 = arith.constant dense<0.000000e+00> : vector<61x64xf32>
    %184 = tpu.matmul %183, %181, %cst_129 {dimension_numbers = #tpu.dot_dimension_numbers<[1], [0], [0], [1], [0, 0, 1, 1], [], []>} : vector<61x32xbf16>, vector<32x64xbf16>, vector<61x64xf32> -> vector<61x64xf32>
    %185 = arith.addf %180, %184 : vector<61x64xf32>
    %c224 = arith.constant 224 : index
    %c0_130 = arith.constant 0 : index
    %186 = vector.load %arg4[%c224, %c0_130] : memref<512x64xbf16, #tpu.memory_space<vmem>>, vector<32x64xbf16>
    %187 = vector.extract_strided_slice %119 {offsets = [1, 0], sizes = [61, 32], strides = [1, 1]} : vector<71x32xf32> to vector<61x32xf32>
    %188 = arith.truncf %187 : vector<61x32xf32> to vector<61x32xbf16>
    %cst_131 = arith.constant dense<0.000000e+00> : vector<61x64xf32>
    %189 = tpu.matmul %188, %186, %cst_131 {dimension_numbers = #tpu.dot_dimension_numbers<[1], [0], [0], [1], [0, 0, 1, 1], [], []>} : vector<61x32xbf16>, vector<32x64xbf16>, vector<61x64xf32> -> vector<61x64xf32>
    %190 = arith.addf %185, %189 : vector<61x64xf32>
    %c416 = arith.constant 416 : index
    %c0_132 = arith.constant 0 : index
    %191 = vector.load %arg4[%c416, %c0_132] : memref<512x64xbf16, #tpu.memory_space<vmem>>, vector<32x64xbf16>
    %192 = vector.extract_strided_slice %119 {offsets = [9, 0], sizes = [61, 32], strides = [1, 1]} : vector<71x32xf32> to vector<61x32xf32>
    %193 = arith.truncf %192 : vector<61x32xf32> to vector<61x32xbf16>
    %cst_133 = arith.constant dense<0.000000e+00> : vector<61x64xf32>
    %194 = tpu.matmul %193, %191, %cst_133 {dimension_numbers = #tpu.dot_dimension_numbers<[1], [0], [0], [1], [0, 0, 1, 1], [], []>} : vector<61x32xbf16>, vector<32x64xbf16>, vector<61x64xf32> -> vector<61x64xf32>
    %195 = arith.addf %190, %194 : vector<61x64xf32>
    %c480 = arith.constant 480 : index
    %c0_134 = arith.constant 0 : index
    %196 = vector.load %arg4[%c480, %c0_134] : memref<512x64xbf16, #tpu.memory_space<vmem>>, vector<32x64xbf16>
    %197 = vector.extract_strided_slice %119 {offsets = [10, 0], sizes = [61, 32], strides = [1, 1]} : vector<71x32xf32> to vector<61x32xf32>
    %198 = arith.truncf %197 : vector<61x32xf32> to vector<61x32xbf16>
    %cst_135 = arith.constant dense<0.000000e+00> : vector<61x64xf32>
    %199 = tpu.matmul %198, %196, %cst_135 {dimension_numbers = #tpu.dot_dimension_numbers<[1], [0], [0], [1], [0, 0, 1, 1], [], []>} : vector<61x32xbf16>, vector<32x64xbf16>, vector<61x64xf32> -> vector<61x64xf32>
    %200 = arith.addf %195, %199 : vector<61x64xf32>
    %c0_136 = arith.constant 0 : index
    %c0_137 = arith.constant 0 : index
    %201 = vector.load %arg5[%c0_136, %c0_137] : memref<1x64xf32, #tpu.memory_space<vmem>>, vector<1x64xf32>
    %202 = vector.broadcast %201 : vector<1x64xf32> to vector<61x64xf32>
    %203 = arith.addf %200, %202 : vector<61x64xf32>
    %cst_138 = arith.constant 0.000000e+00 : f32
    %204 = vector.broadcast %cst_138 : f32 to vector<61x64xf32>
    %205 = arith.maximumf %203, %204 : vector<61x64xf32>
    %cst_139 = arith.constant 0.000000e+00 : f32
    %206 = vector.broadcast %cst_139 : f32 to vector<41x64xf32>
    %c0_140 = arith.constant 0 : index
    %c0_141 = arith.constant 0 : index
    %207 = vector.load %arg6[%c0_140, %c0_141] : memref<576x64xbf16, #tpu.memory_space<vmem>>, vector<64x64xbf16>
    %208 = vector.extract_strided_slice %205 {offsets = [0, 0], sizes = [41, 64], strides = [1, 1]} : vector<61x64xf32> to vector<41x64xf32>
    %209 = arith.truncf %208 : vector<41x64xf32> to vector<41x64xbf16>
    %cst_142 = arith.constant dense<0.000000e+00> : vector<41x64xf32>
    %210 = tpu.matmul %209, %207, %cst_142 {dimension_numbers = #tpu.dot_dimension_numbers<[1], [0], [0], [1], [0, 0, 1, 1], [], []>} : vector<41x64xbf16>, vector<64x64xbf16>, vector<41x64xf32> -> vector<41x64xf32>
    %211 = arith.addf %206, %210 : vector<41x64xf32>
    %c64_143 = arith.constant 64 : index
    %c0_144 = arith.constant 0 : index
    %212 = vector.load %arg6[%c64_143, %c0_144] : memref<576x64xbf16, #tpu.memory_space<vmem>>, vector<64x64xbf16>
    %213 = vector.extract_strided_slice %205 {offsets = [1, 0], sizes = [41, 64], strides = [1, 1]} : vector<61x64xf32> to vector<41x64xf32>
    %214 = arith.truncf %213 : vector<41x64xf32> to vector<41x64xbf16>
    %cst_145 = arith.constant dense<0.000000e+00> : vector<41x64xf32>
    %215 = tpu.matmul %214, %212, %cst_145 {dimension_numbers = #tpu.dot_dimension_numbers<[1], [0], [0], [1], [0, 0, 1, 1], [], []>} : vector<41x64xbf16>, vector<64x64xbf16>, vector<41x64xf32> -> vector<41x64xf32>
    %216 = arith.addf %211, %215 : vector<41x64xf32>
    %c128_146 = arith.constant 128 : index
    %c0_147 = arith.constant 0 : index
    %217 = vector.load %arg6[%c128_146, %c0_147] : memref<576x64xbf16, #tpu.memory_space<vmem>>, vector<64x64xbf16>
    %218 = vector.extract_strided_slice %205 {offsets = [2, 0], sizes = [41, 64], strides = [1, 1]} : vector<61x64xf32> to vector<41x64xf32>
    %219 = arith.truncf %218 : vector<41x64xf32> to vector<41x64xbf16>
    %cst_148 = arith.constant dense<0.000000e+00> : vector<41x64xf32>
    %220 = tpu.matmul %219, %217, %cst_148 {dimension_numbers = #tpu.dot_dimension_numbers<[1], [0], [0], [1], [0, 0, 1, 1], [], []>} : vector<41x64xbf16>, vector<64x64xbf16>, vector<41x64xf32> -> vector<41x64xf32>
    %221 = arith.addf %216, %220 : vector<41x64xf32>
    %c192_149 = arith.constant 192 : index
    %c0_150 = arith.constant 0 : index
    %222 = vector.load %arg6[%c192_149, %c0_150] : memref<576x64xbf16, #tpu.memory_space<vmem>>, vector<64x64xbf16>
    %223 = vector.extract_strided_slice %205 {offsets = [9, 0], sizes = [41, 64], strides = [1, 1]} : vector<61x64xf32> to vector<41x64xf32>
    %224 = arith.truncf %223 : vector<41x64xf32> to vector<41x64xbf16>
    %cst_151 = arith.constant dense<0.000000e+00> : vector<41x64xf32>
    %225 = tpu.matmul %224, %222, %cst_151 {dimension_numbers = #tpu.dot_dimension_numbers<[1], [0], [0], [1], [0, 0, 1, 1], [], []>} : vector<41x64xbf16>, vector<64x64xbf16>, vector<41x64xf32> -> vector<41x64xf32>
    %226 = arith.addf %221, %225 : vector<41x64xf32>
    %c256_152 = arith.constant 256 : index
    %c0_153 = arith.constant 0 : index
    %227 = vector.load %arg6[%c256_152, %c0_153] : memref<576x64xbf16, #tpu.memory_space<vmem>>, vector<64x64xbf16>
    %228 = vector.extract_strided_slice %205 {offsets = [10, 0], sizes = [41, 64], strides = [1, 1]} : vector<61x64xf32> to vector<41x64xf32>
    %229 = arith.truncf %228 : vector<41x64xf32> to vector<41x64xbf16>
    %cst_154 = arith.constant dense<0.000000e+00> : vector<41x64xf32>
    %230 = tpu.matmul %229, %227, %cst_154 {dimension_numbers = #tpu.dot_dimension_numbers<[1], [0], [0], [1], [0, 0, 1, 1], [], []>} : vector<41x64xbf16>, vector<64x64xbf16>, vector<41x64xf32> -> vector<41x64xf32>
    %231 = arith.addf %226, %230 : vector<41x64xf32>
    %c320_155 = arith.constant 320 : index
    %c0_156 = arith.constant 0 : index
    %232 = vector.load %arg6[%c320_155, %c0_156] : memref<576x64xbf16, #tpu.memory_space<vmem>>, vector<64x64xbf16>
    %233 = vector.extract_strided_slice %205 {offsets = [11, 0], sizes = [41, 64], strides = [1, 1]} : vector<61x64xf32> to vector<41x64xf32>
    %234 = arith.truncf %233 : vector<41x64xf32> to vector<41x64xbf16>
    %cst_157 = arith.constant dense<0.000000e+00> : vector<41x64xf32>
    %235 = tpu.matmul %234, %232, %cst_157 {dimension_numbers = #tpu.dot_dimension_numbers<[1], [0], [0], [1], [0, 0, 1, 1], [], []>} : vector<41x64xbf16>, vector<64x64xbf16>, vector<41x64xf32> -> vector<41x64xf32>
    %236 = arith.addf %231, %235 : vector<41x64xf32>
    %c384_158 = arith.constant 384 : index
    %c0_159 = arith.constant 0 : index
    %237 = vector.load %arg6[%c384_158, %c0_159] : memref<576x64xbf16, #tpu.memory_space<vmem>>, vector<64x64xbf16>
    %238 = vector.extract_strided_slice %205 {offsets = [18, 0], sizes = [41, 64], strides = [1, 1]} : vector<61x64xf32> to vector<41x64xf32>
    %239 = arith.truncf %238 : vector<41x64xf32> to vector<41x64xbf16>
    %cst_160 = arith.constant dense<0.000000e+00> : vector<41x64xf32>
    %240 = tpu.matmul %239, %237, %cst_160 {dimension_numbers = #tpu.dot_dimension_numbers<[1], [0], [0], [1], [0, 0, 1, 1], [], []>} : vector<41x64xbf16>, vector<64x64xbf16>, vector<41x64xf32> -> vector<41x64xf32>
    %241 = arith.addf %236, %240 : vector<41x64xf32>
    %c448_161 = arith.constant 448 : index
    %c0_162 = arith.constant 0 : index
    %242 = vector.load %arg6[%c448_161, %c0_162] : memref<576x64xbf16, #tpu.memory_space<vmem>>, vector<64x64xbf16>
    %243 = vector.extract_strided_slice %205 {offsets = [19, 0], sizes = [41, 64], strides = [1, 1]} : vector<61x64xf32> to vector<41x64xf32>
    %244 = arith.truncf %243 : vector<41x64xf32> to vector<41x64xbf16>
    %cst_163 = arith.constant dense<0.000000e+00> : vector<41x64xf32>
    %245 = tpu.matmul %244, %242, %cst_163 {dimension_numbers = #tpu.dot_dimension_numbers<[1], [0], [0], [1], [0, 0, 1, 1], [], []>} : vector<41x64xbf16>, vector<64x64xbf16>, vector<41x64xf32> -> vector<41x64xf32>
    %246 = arith.addf %241, %245 : vector<41x64xf32>
    %c512 = arith.constant 512 : index
    %c0_164 = arith.constant 0 : index
    %247 = vector.load %arg6[%c512, %c0_164] : memref<576x64xbf16, #tpu.memory_space<vmem>>, vector<64x64xbf16>
    %248 = vector.extract_strided_slice %205 {offsets = [20, 0], sizes = [41, 64], strides = [1, 1]} : vector<61x64xf32> to vector<41x64xf32>
    %249 = arith.truncf %248 : vector<41x64xf32> to vector<41x64xbf16>
    %cst_165 = arith.constant dense<0.000000e+00> : vector<41x64xf32>
    %250 = tpu.matmul %249, %247, %cst_165 {dimension_numbers = #tpu.dot_dimension_numbers<[1], [0], [0], [1], [0, 0, 1, 1], [], []>} : vector<41x64xbf16>, vector<64x64xbf16>, vector<41x64xf32> -> vector<41x64xf32>
    %251 = arith.addf %246, %250 : vector<41x64xf32>
    %c0_166 = arith.constant 0 : index
    %c0_167 = arith.constant 0 : index
    %252 = vector.load %arg7[%c0_166, %c0_167] : memref<1x64xf32, #tpu.memory_space<vmem>>, vector<1x64xf32>
    %253 = vector.broadcast %252 : vector<1x64xf32> to vector<41x64xf32>
    %254 = arith.addf %251, %253 : vector<41x64xf32>
    %cst_168 = arith.constant 0.000000e+00 : f32
    %255 = vector.broadcast %cst_168 : f32 to vector<41x64xf32>
    %256 = arith.maximumf %254, %255 : vector<41x64xf32>
    %cst_169 = arith.constant 0.000000e+00 : f32
    %257 = vector.broadcast %cst_169 : f32 to vector<21x64xf32>
    %c0_170 = arith.constant 0 : index
    %c0_171 = arith.constant 0 : index
    %258 = vector.load %arg8[%c0_170, %c0_171] : memref<576x64xbf16, #tpu.memory_space<vmem>>, vector<64x64xbf16>
    %259 = vector.extract_strided_slice %256 {offsets = [0, 0], sizes = [21, 64], strides = [1, 1]} : vector<41x64xf32> to vector<21x64xf32>
    %260 = arith.truncf %259 : vector<21x64xf32> to vector<21x64xbf16>
    %cst_172 = arith.constant dense<0.000000e+00> : vector<21x64xf32>
    %261 = tpu.matmul %260, %258, %cst_172 {dimension_numbers = #tpu.dot_dimension_numbers<[1], [0], [0], [1], [0, 0, 1, 1], [], []>} : vector<21x64xbf16>, vector<64x64xbf16>, vector<21x64xf32> -> vector<21x64xf32>
    %262 = arith.addf %257, %261 : vector<21x64xf32>
    %c64_173 = arith.constant 64 : index
    %c0_174 = arith.constant 0 : index
    %263 = vector.load %arg8[%c64_173, %c0_174] : memref<576x64xbf16, #tpu.memory_space<vmem>>, vector<64x64xbf16>
    %264 = vector.extract_strided_slice %256 {offsets = [1, 0], sizes = [21, 64], strides = [1, 1]} : vector<41x64xf32> to vector<21x64xf32>
    %265 = arith.truncf %264 : vector<21x64xf32> to vector<21x64xbf16>
    %cst_175 = arith.constant dense<0.000000e+00> : vector<21x64xf32>
    %266 = tpu.matmul %265, %263, %cst_175 {dimension_numbers = #tpu.dot_dimension_numbers<[1], [0], [0], [1], [0, 0, 1, 1], [], []>} : vector<21x64xbf16>, vector<64x64xbf16>, vector<21x64xf32> -> vector<21x64xf32>
    %267 = arith.addf %262, %266 : vector<21x64xf32>
    %c128_176 = arith.constant 128 : index
    %c0_177 = arith.constant 0 : index
    %268 = vector.load %arg8[%c128_176, %c0_177] : memref<576x64xbf16, #tpu.memory_space<vmem>>, vector<64x64xbf16>
    %269 = vector.extract_strided_slice %256 {offsets = [2, 0], sizes = [21, 64], strides = [1, 1]} : vector<41x64xf32> to vector<21x64xf32>
    %270 = arith.truncf %269 : vector<21x64xf32> to vector<21x64xbf16>
    %cst_178 = arith.constant dense<0.000000e+00> : vector<21x64xf32>
    %271 = tpu.matmul %270, %268, %cst_178 {dimension_numbers = #tpu.dot_dimension_numbers<[1], [0], [0], [1], [0, 0, 1, 1], [], []>} : vector<21x64xbf16>, vector<64x64xbf16>, vector<21x64xf32> -> vector<21x64xf32>
    %272 = arith.addf %267, %271 : vector<21x64xf32>
    %c192_179 = arith.constant 192 : index
    %c0_180 = arith.constant 0 : index
    %273 = vector.load %arg8[%c192_179, %c0_180] : memref<576x64xbf16, #tpu.memory_space<vmem>>, vector<64x64xbf16>
    %274 = vector.extract_strided_slice %256 {offsets = [9, 0], sizes = [21, 64], strides = [1, 1]} : vector<41x64xf32> to vector<21x64xf32>
    %275 = arith.truncf %274 : vector<21x64xf32> to vector<21x64xbf16>
    %cst_181 = arith.constant dense<0.000000e+00> : vector<21x64xf32>
    %276 = tpu.matmul %275, %273, %cst_181 {dimension_numbers = #tpu.dot_dimension_numbers<[1], [0], [0], [1], [0, 0, 1, 1], [], []>} : vector<21x64xbf16>, vector<64x64xbf16>, vector<21x64xf32> -> vector<21x64xf32>
    %277 = arith.addf %272, %276 : vector<21x64xf32>
    %c256_182 = arith.constant 256 : index
    %c0_183 = arith.constant 0 : index
    %278 = vector.load %arg8[%c256_182, %c0_183] : memref<576x64xbf16, #tpu.memory_space<vmem>>, vector<64x64xbf16>
    %279 = vector.extract_strided_slice %256 {offsets = [10, 0], sizes = [21, 64], strides = [1, 1]} : vector<41x64xf32> to vector<21x64xf32>
    %280 = arith.truncf %279 : vector<21x64xf32> to vector<21x64xbf16>
    %cst_184 = arith.constant dense<0.000000e+00> : vector<21x64xf32>
    %281 = tpu.matmul %280, %278, %cst_184 {dimension_numbers = #tpu.dot_dimension_numbers<[1], [0], [0], [1], [0, 0, 1, 1], [], []>} : vector<21x64xbf16>, vector<64x64xbf16>, vector<21x64xf32> -> vector<21x64xf32>
    %282 = arith.addf %277, %281 : vector<21x64xf32>
    %c320_185 = arith.constant 320 : index
    %c0_186 = arith.constant 0 : index
    %283 = vector.load %arg8[%c320_185, %c0_186] : memref<576x64xbf16, #tpu.memory_space<vmem>>, vector<64x64xbf16>
    %284 = vector.extract_strided_slice %256 {offsets = [11, 0], sizes = [21, 64], strides = [1, 1]} : vector<41x64xf32> to vector<21x64xf32>
    %285 = arith.truncf %284 : vector<21x64xf32> to vector<21x64xbf16>
    %cst_187 = arith.constant dense<0.000000e+00> : vector<21x64xf32>
    %286 = tpu.matmul %285, %283, %cst_187 {dimension_numbers = #tpu.dot_dimension_numbers<[1], [0], [0], [1], [0, 0, 1, 1], [], []>} : vector<21x64xbf16>, vector<64x64xbf16>, vector<21x64xf32> -> vector<21x64xf32>
    %287 = arith.addf %282, %286 : vector<21x64xf32>
    %c384_188 = arith.constant 384 : index
    %c0_189 = arith.constant 0 : index
    %288 = vector.load %arg8[%c384_188, %c0_189] : memref<576x64xbf16, #tpu.memory_space<vmem>>, vector<64x64xbf16>
    %289 = vector.extract_strided_slice %256 {offsets = [18, 0], sizes = [21, 64], strides = [1, 1]} : vector<41x64xf32> to vector<21x64xf32>
    %290 = arith.truncf %289 : vector<21x64xf32> to vector<21x64xbf16>
    %cst_190 = arith.constant dense<0.000000e+00> : vector<21x64xf32>
    %291 = tpu.matmul %290, %288, %cst_190 {dimension_numbers = #tpu.dot_dimension_numbers<[1], [0], [0], [1], [0, 0, 1, 1], [], []>} : vector<21x64xbf16>, vector<64x64xbf16>, vector<21x64xf32> -> vector<21x64xf32>
    %292 = arith.addf %287, %291 : vector<21x64xf32>
    %c448_191 = arith.constant 448 : index
    %c0_192 = arith.constant 0 : index
    %293 = vector.load %arg8[%c448_191, %c0_192] : memref<576x64xbf16, #tpu.memory_space<vmem>>, vector<64x64xbf16>
    %294 = vector.extract_strided_slice %256 {offsets = [19, 0], sizes = [21, 64], strides = [1, 1]} : vector<41x64xf32> to vector<21x64xf32>
    %295 = arith.truncf %294 : vector<21x64xf32> to vector<21x64xbf16>
    %cst_193 = arith.constant dense<0.000000e+00> : vector<21x64xf32>
    %296 = tpu.matmul %295, %293, %cst_193 {dimension_numbers = #tpu.dot_dimension_numbers<[1], [0], [0], [1], [0, 0, 1, 1], [], []>} : vector<21x64xbf16>, vector<64x64xbf16>, vector<21x64xf32> -> vector<21x64xf32>
    %297 = arith.addf %292, %296 : vector<21x64xf32>
    %c512_194 = arith.constant 512 : index
    %c0_195 = arith.constant 0 : index
    %298 = vector.load %arg8[%c512_194, %c0_195] : memref<576x64xbf16, #tpu.memory_space<vmem>>, vector<64x64xbf16>
    %299 = vector.extract_strided_slice %256 {offsets = [20, 0], sizes = [21, 64], strides = [1, 1]} : vector<41x64xf32> to vector<21x64xf32>
    %300 = arith.truncf %299 : vector<21x64xf32> to vector<21x64xbf16>
    %cst_196 = arith.constant dense<0.000000e+00> : vector<21x64xf32>
    %301 = tpu.matmul %300, %298, %cst_196 {dimension_numbers = #tpu.dot_dimension_numbers<[1], [0], [0], [1], [0, 0, 1, 1], [], []>} : vector<21x64xbf16>, vector<64x64xbf16>, vector<21x64xf32> -> vector<21x64xf32>
    %302 = arith.addf %297, %301 : vector<21x64xf32>
    %c0_197 = arith.constant 0 : index
    %c0_198 = arith.constant 0 : index
    %303 = vector.load %arg9[%c0_197, %c0_198] : memref<1x64xf32, #tpu.memory_space<vmem>>, vector<1x64xf32>
    %304 = vector.broadcast %303 : vector<1x64xf32> to vector<21x64xf32>
    %305 = arith.addf %302, %304 : vector<21x64xf32>
    %cst_199 = arith.constant 0.000000e+00 : f32
    %306 = vector.broadcast %cst_199 : f32 to vector<21x64xf32>
    %307 = arith.maximumf %305, %306 : vector<21x64xf32>
    %cst_200 = arith.constant 0.000000e+00 : f32
    %308 = vector.broadcast %cst_200 : f32 to vector<1x64xf32>
    %c0_201 = arith.constant 0 : index
    %c0_202 = arith.constant 0 : index
    %309 = vector.load %arg10[%c0_201, %c0_202] : memref<576x64xbf16, #tpu.memory_space<vmem>>, vector<64x64xbf16>
    %310 = vector.extract_strided_slice %307 {offsets = [0, 0], sizes = [1, 64], strides = [1, 1]} : vector<21x64xf32> to vector<1x64xf32>
    %311 = arith.truncf %310 : vector<1x64xf32> to vector<1x64xbf16>
    %cst_203 = arith.constant dense<0.000000e+00> : vector<1x64xf32>
    %312 = tpu.matmul %311, %309, %cst_203 {dimension_numbers = #tpu.dot_dimension_numbers<[1], [0], [0], [1], [0, 0, 1, 1], [], []>} : vector<1x64xbf16>, vector<64x64xbf16>, vector<1x64xf32> -> vector<1x64xf32>
    %313 = arith.addf %308, %312 : vector<1x64xf32>
    %c64_204 = arith.constant 64 : index
    %c0_205 = arith.constant 0 : index
    %314 = vector.load %arg10[%c64_204, %c0_205] : memref<576x64xbf16, #tpu.memory_space<vmem>>, vector<64x64xbf16>
    %315 = vector.extract_strided_slice %307 {offsets = [1, 0], sizes = [1, 64], strides = [1, 1]} : vector<21x64xf32> to vector<1x64xf32>
    %316 = arith.truncf %315 : vector<1x64xf32> to vector<1x64xbf16>
    %cst_206 = arith.constant dense<0.000000e+00> : vector<1x64xf32>
    %317 = tpu.matmul %316, %314, %cst_206 {dimension_numbers = #tpu.dot_dimension_numbers<[1], [0], [0], [1], [0, 0, 1, 1], [], []>} : vector<1x64xbf16>, vector<64x64xbf16>, vector<1x64xf32> -> vector<1x64xf32>
    %318 = arith.addf %313, %317 : vector<1x64xf32>
    %c128_207 = arith.constant 128 : index
    %c0_208 = arith.constant 0 : index
    %319 = vector.load %arg10[%c128_207, %c0_208] : memref<576x64xbf16, #tpu.memory_space<vmem>>, vector<64x64xbf16>
    %320 = vector.extract_strided_slice %307 {offsets = [2, 0], sizes = [1, 64], strides = [1, 1]} : vector<21x64xf32> to vector<1x64xf32>
    %321 = arith.truncf %320 : vector<1x64xf32> to vector<1x64xbf16>
    %cst_209 = arith.constant dense<0.000000e+00> : vector<1x64xf32>
    %322 = tpu.matmul %321, %319, %cst_209 {dimension_numbers = #tpu.dot_dimension_numbers<[1], [0], [0], [1], [0, 0, 1, 1], [], []>} : vector<1x64xbf16>, vector<64x64xbf16>, vector<1x64xf32> -> vector<1x64xf32>
    %323 = arith.addf %318, %322 : vector<1x64xf32>
    %c192_210 = arith.constant 192 : index
    %c0_211 = arith.constant 0 : index
    %324 = vector.load %arg10[%c192_210, %c0_211] : memref<576x64xbf16, #tpu.memory_space<vmem>>, vector<64x64xbf16>
    %325 = vector.extract_strided_slice %307 {offsets = [9, 0], sizes = [1, 64], strides = [1, 1]} : vector<21x64xf32> to vector<1x64xf32>
    %326 = arith.truncf %325 : vector<1x64xf32> to vector<1x64xbf16>
    %cst_212 = arith.constant dense<0.000000e+00> : vector<1x64xf32>
    %327 = tpu.matmul %326, %324, %cst_212 {dimension_numbers = #tpu.dot_dimension_numbers<[1], [0], [0], [1], [0, 0, 1, 1], [], []>} : vector<1x64xbf16>, vector<64x64xbf16>, vector<1x64xf32> -> vector<1x64xf32>
    %328 = arith.addf %323, %327 : vector<1x64xf32>
    %c256_213 = arith.constant 256 : index
    %c0_214 = arith.constant 0 : index
    %329 = vector.load %arg10[%c256_213, %c0_214] : memref<576x64xbf16, #tpu.memory_space<vmem>>, vector<64x64xbf16>
    %330 = vector.extract_strided_slice %307 {offsets = [10, 0], sizes = [1, 64], strides = [1, 1]} : vector<21x64xf32> to vector<1x64xf32>
    %331 = arith.truncf %330 : vector<1x64xf32> to vector<1x64xbf16>
    %cst_215 = arith.constant dense<0.000000e+00> : vector<1x64xf32>
    %332 = tpu.matmul %331, %329, %cst_215 {dimension_numbers = #tpu.dot_dimension_numbers<[1], [0], [0], [1], [0, 0, 1, 1], [], []>} : vector<1x64xbf16>, vector<64x64xbf16>, vector<1x64xf32> -> vector<1x64xf32>
    %333 = arith.addf %328, %332 : vector<1x64xf32>
    %c320_216 = arith.constant 320 : index
    %c0_217 = arith.constant 0 : index
    %334 = vector.load %arg10[%c320_216, %c0_217] : memref<576x64xbf16, #tpu.memory_space<vmem>>, vector<64x64xbf16>
    %335 = vector.extract_strided_slice %307 {offsets = [11, 0], sizes = [1, 64], strides = [1, 1]} : vector<21x64xf32> to vector<1x64xf32>
    %336 = arith.truncf %335 : vector<1x64xf32> to vector<1x64xbf16>
    %cst_218 = arith.constant dense<0.000000e+00> : vector<1x64xf32>
    %337 = tpu.matmul %336, %334, %cst_218 {dimension_numbers = #tpu.dot_dimension_numbers<[1], [0], [0], [1], [0, 0, 1, 1], [], []>} : vector<1x64xbf16>, vector<64x64xbf16>, vector<1x64xf32> -> vector<1x64xf32>
    %338 = arith.addf %333, %337 : vector<1x64xf32>
    %c384_219 = arith.constant 384 : index
    %c0_220 = arith.constant 0 : index
    %339 = vector.load %arg10[%c384_219, %c0_220] : memref<576x64xbf16, #tpu.memory_space<vmem>>, vector<64x64xbf16>
    %340 = vector.extract_strided_slice %307 {offsets = [18, 0], sizes = [1, 64], strides = [1, 1]} : vector<21x64xf32> to vector<1x64xf32>
    %341 = arith.truncf %340 : vector<1x64xf32> to vector<1x64xbf16>
    %cst_221 = arith.constant dense<0.000000e+00> : vector<1x64xf32>
    %342 = tpu.matmul %341, %339, %cst_221 {dimension_numbers = #tpu.dot_dimension_numbers<[1], [0], [0], [1], [0, 0, 1, 1], [], []>} : vector<1x64xbf16>, vector<64x64xbf16>, vector<1x64xf32> -> vector<1x64xf32>
    %343 = arith.addf %338, %342 : vector<1x64xf32>
    %c448_222 = arith.constant 448 : index
    %c0_223 = arith.constant 0 : index
    %344 = vector.load %arg10[%c448_222, %c0_223] : memref<576x64xbf16, #tpu.memory_space<vmem>>, vector<64x64xbf16>
    %345 = vector.extract_strided_slice %307 {offsets = [19, 0], sizes = [1, 64], strides = [1, 1]} : vector<21x64xf32> to vector<1x64xf32>
    %346 = arith.truncf %345 : vector<1x64xf32> to vector<1x64xbf16>
    %cst_224 = arith.constant dense<0.000000e+00> : vector<1x64xf32>
    %347 = tpu.matmul %346, %344, %cst_224 {dimension_numbers = #tpu.dot_dimension_numbers<[1], [0], [0], [1], [0, 0, 1, 1], [], []>} : vector<1x64xbf16>, vector<64x64xbf16>, vector<1x64xf32> -> vector<1x64xf32>
    %348 = arith.addf %343, %347 : vector<1x64xf32>
    %c512_225 = arith.constant 512 : index
    %c0_226 = arith.constant 0 : index
    %349 = vector.load %arg10[%c512_225, %c0_226] : memref<576x64xbf16, #tpu.memory_space<vmem>>, vector<64x64xbf16>
    %350 = vector.extract_strided_slice %307 {offsets = [20, 0], sizes = [1, 64], strides = [1, 1]} : vector<21x64xf32> to vector<1x64xf32>
    %351 = arith.truncf %350 : vector<1x64xf32> to vector<1x64xbf16>
    %cst_227 = arith.constant dense<0.000000e+00> : vector<1x64xf32>
    %352 = tpu.matmul %351, %349, %cst_227 {dimension_numbers = #tpu.dot_dimension_numbers<[1], [0], [0], [1], [0, 0, 1, 1], [], []>} : vector<1x64xbf16>, vector<64x64xbf16>, vector<1x64xf32> -> vector<1x64xf32>
    %353 = arith.addf %348, %352 : vector<1x64xf32>
    %c0_228 = arith.constant 0 : index
    %c0_229 = arith.constant 0 : index
    %354 = vector.load %arg11[%c0_228, %c0_229] : memref<1x64xf32, #tpu.memory_space<vmem>>, vector<1x64xf32>
    %355 = arith.addf %353, %354 : vector<1x64xf32>
    %cst_230 = arith.constant 0.000000e+00 : f32
    %356 = vector.broadcast %cst_230 : f32 to vector<1x64xf32>
    %357 = arith.maximumf %355, %356 : vector<1x64xf32>
    %cst_231 = arith.constant 0.000000e+00 : f32
    %358 = vector.broadcast %cst_231 : f32 to vector<1x512xf32>
    %c0_232 = arith.constant 0 : index
    %c0_233 = arith.constant 0 : index
    %359 = vector.load %arg12[%c0_232, %c0_233] : memref<64x512xbf16, #tpu.memory_space<vmem>>, vector<64x512xbf16>
    %360 = arith.truncf %357 : vector<1x64xf32> to vector<1x64xbf16>
    %cst_234 = arith.constant dense<0.000000e+00> : vector<1x512xf32>
    %361 = tpu.matmul %360, %359, %cst_234 {dimension_numbers = #tpu.dot_dimension_numbers<[1], [0], [0], [1], [0, 0, 1, 1], [], []>} : vector<1x64xbf16>, vector<64x512xbf16>, vector<1x512xf32> -> vector<1x512xf32>
    %362 = arith.addf %358, %361 : vector<1x512xf32>
    %c0_235 = arith.constant 0 : index
    %c0_236 = arith.constant 0 : index
    %363 = vector.load %arg13[%c0_235, %c0_236] : memref<1x512xf32, #tpu.memory_space<vmem>>, vector<1x512xf32>
    %364 = arith.addf %362, %363 : vector<1x512xf32>
    %cst_237 = arith.constant 0.000000e+00 : f32
    %365 = vector.broadcast %cst_237 : f32 to vector<1x512xf32>
    %366 = arith.maximumf %364, %365 : vector<1x512xf32>
    %367 = arith.truncf %366 : vector<1x512xf32> to vector<1x512xbf16>
    %c0_238 = arith.constant 0 : index
    %c0_239 = arith.constant 0 : index
    %368 = vector.load %arg14[%c0_238, %c0_239] : memref<512x128xbf16, #tpu.memory_space<vmem>>, vector<512x128xbf16>
    %cst_240 = arith.constant dense<0.000000e+00> : vector<1x128xf32>
    %369 = tpu.matmul %367, %368, %cst_240 {dimension_numbers = #tpu.dot_dimension_numbers<[1], [0], [0], [1], [0, 0, 1, 1], [], []>} : vector<1x512xbf16>, vector<512x128xbf16>, vector<1x128xf32> -> vector<1x128xf32>
    %c0_241 = arith.constant 0 : index
    %c0_242 = arith.constant 0 : index
    %370 = vector.load %arg15[%c0_241, %c0_242] : memref<1x128xf32, #tpu.memory_space<vmem>>, vector<1x128xf32>
    %371 = arith.addf %369, %370 : vector<1x128xf32>
    %c0_243 = arith.constant 0 : index
    %c0_244 = arith.constant 0 : index
    %c0_245 = arith.constant 0 : index
    %372 = vector.load %arg16[%c0_243, %c0_244, %c0_245] : memref<1x1x128xf32, #tpu.memory_space<vmem>>, vector<1x1x128xf32>
    %373 = vector.shape_cast %372 : vector<1x1x128xf32> to vector<1x128xf32>
    %374 = vector.shape_cast %371 : vector<1x128xf32> to vector<1x1x128xf32>
    tpu.vector_store %arg16[%c0_243, %c0_244, %c0_245], %374 {strides = array<i32>} : memref<1x1x128xf32, #tpu.memory_space<vmem>>, vector<1x1x128xf32>,
    return
  }
  func.func @transform_0(%arg0: i32) -> (i32, i32, i32) {
    %c0_i32 = arith.constant 0 : i32
    %c0_i32_0 = arith.constant 0 : i32
    %c0_i32_1 = arith.constant 0 : i32
    return %arg0, %c0_i32, %c0_i32_0 : i32, i32, i32
  }
  func.func @transform_1(%arg0: i32) -> (i32, i32) {
    %c0_i32 = arith.constant 0 : i32
    %c0_i32_0 = arith.constant 0 : i32
    %c0_i32_1 = arith.constant 0 : i32
    return %c0_i32, %c0_i32_0 : i32, i32
  }
  func.func @transform_2(%arg0: i32) -> (i32, i32) {
    %c0_i32 = arith.constant 0 : i32
    %c0_i32_0 = arith.constant 0 : i32
    %c0_i32_1 = arith.constant 0 : i32
    return %c0_i32, %c0_i32_0 : i32, i32
  }
  func.func @transform_3(%arg0: i32) -> (i32, i32) {
    %c0_i32 = arith.constant 0 : i32
    %c0_i32_0 = arith.constant 0 : i32
    %c0_i32_1 = arith.constant 0 : i32
    return %c0_i32, %c0_i32_0 : i32, i32
  }
  func.func @transform_4(%arg0: i32) -> (i32, i32) {
    %c0_i32 = arith.constant 0 : i32
    %c0_i32_0 = arith.constant 0 : i32
    %c0_i32_1 = arith.constant 0 : i32
    return %c0_i32, %c0_i32_0 : i32, i32
  }
  func.func @transform_5(%arg0: i32) -> (i32, i32) {
    %c0_i32 = arith.constant 0 : i32
    %c0_i32_0 = arith.constant 0 : i32
    %c0_i32_1 = arith.constant 0 : i32
    return %c0_i32, %c0_i32_0 : i32, i32
  }
  func.func @transform_6(%arg0: i32) -> (i32, i32) {
    %c0_i32 = arith.constant 0 : i32
    %c0_i32_0 = arith.constant 0 : i32
    %c0_i32_1 = arith.constant 0 : i32
    return %c0_i32, %c0_i32_0 : i32, i32
  }
  func.func @transform_7(%arg0: i32) -> (i32, i32) {
    %c0_i32 = arith.constant 0 : i32
    %c0_i32_0 = arith.constant 0 : i32
    %c0_i32_1 = arith.constant 0 : i32
    return %c0_i32, %c0_i32_0 : i32, i32
  }
  func.func @transform_8(%arg0: i32) -> (i32, i32) {
    %c0_i32 = arith.constant 0 : i32
    %c0_i32_0 = arith.constant 0 : i32
    %c0_i32_1 = arith.constant 0 : i32
    return %c0_i32, %c0_i32_0 : i32, i32
  }
  func.func @transform_9(%arg0: i32) -> (i32, i32) {
    %c0_i32 = arith.constant 0 : i32
    %c0_i32_0 = arith.constant 0 : i32
    %c0_i32_1 = arith.constant 0 : i32
    return %c0_i32, %c0_i32_0 : i32, i32
  }
  func.func @transform_10(%arg0: i32) -> (i32, i32) {
    %c0_i32 = arith.constant 0 : i32
    %c0_i32_0 = arith.constant 0 : i32
    %c0_i32_1 = arith.constant 0 : i32
    return %c0_i32, %c0_i32_0 : i32, i32
  }
  func.func @transform_11(%arg0: i32) -> (i32, i32) {
    %c0_i32 = arith.constant 0 : i32
    %c0_i32_0 = arith.constant 0 : i32
    %c0_i32_1 = arith.constant 0 : i32
    return %c0_i32, %c0_i32_0 : i32, i32
  }
  func.func @transform_12(%arg0: i32) -> (i32, i32) {
    %c0_i32 = arith.constant 0 : i32
    %c0_i32_0 = arith.constant 0 : i32
    %c0_i32_1 = arith.constant 0 : i32
    return %c0_i32, %c0_i32_0 : i32, i32
  }
  func.func @transform_13(%arg0: i32) -> (i32, i32) {
    %c0_i32 = arith.constant 0 : i32
    %c0_i32_0 = arith.constant 0 : i32
    %c0_i32_1 = arith.constant 0 : i32
    return %c0_i32, %c0_i32_0 : i32, i32
  }
  func.func @transform_14(%arg0: i32) -> (i32, i32) {
    %c0_i32 = arith.constant 0 : i32
    %c0_i32_0 = arith.constant 0 : i32
    %c0_i32_1 = arith.constant 0 : i32
    return %c0_i32, %c0_i32_0 : i32, i32
  }
  func.func @transform_15(%arg0: i32) -> (i32, i32, i32) {
    %c0_i32 = arith.constant 0 : i32
    %c0_i32_0 = arith.constant 0 : i32
    %c0_i32_1 = arith.constant 0 : i32
    return %arg0, %c0_i32, %c0_i32_0 : i32, i32, i32
  }
}

</mosaic_0001>

<llo_original>
// kernel: cnn_dqn_forward.1
$region0: #{cnn_dqn_forward.1}
  #allocation0 [shape = 'u32[]', space=smem, size = 0x4, offset = 0x4, fixed_abs, tag = 'smem constant byte address 0x4 - core index']
  #allocation1 [shape = 'u32[144,128]{1,0:T(1,128)}', space=vmem, size = 0x12000, scoped, tag = 'internal scratch']
  %s0 = inlined_call_operand.vmem [shape: f32[2,324,64], index: 0, kind: input, shape index: {}]
  %s1 = inlined_call_operand.vmem [shape: bf16[256,32], index: 1, kind: input, shape index: {}]
  %s2 = inlined_call_operand.vmem [shape: f32[1,32], index: 2, kind: input, shape index: {}]
  %s3 = inlined_call_operand.vmem [shape: bf16[512,64], index: 3, kind: input, shape index: {}]
  %s4 = inlined_call_operand.vmem [shape: f32[1,64], index: 4, kind: input, shape index: {}]
  %s5 = inlined_call_operand.vmem [shape: bf16[576,64], index: 5, kind: input, shape index: {}]
  %s6 = inlined_call_operand.vmem [shape: f32[1,64], index: 6, kind: input, shape index: {}]
  %s7 = inlined_call_operand.vmem [shape: bf16[576,64], index: 7, kind: input, shape index: {}]
  %s8 = inlined_call_operand.vmem [shape: f32[1,64], index: 8, kind: input, shape index: {}]
  %s9 = inlined_call_operand.vmem [shape: bf16[576,64], index: 9, kind: input, shape index: {}]
  %s10 = inlined_call_operand.vmem [shape: f32[1,64], index: 10, kind: input, shape index: {}]
  %s11 = inlined_call_operand.vmem [shape: bf16[64,512], index: 11, kind: input, shape index: {}]
  %s12 = inlined_call_operand.vmem [shape: f32[1,512], index: 12, kind: input, shape index: {}]
  %s13 = inlined_call_operand.vmem [shape: bf16[512,128], index: 13, kind: input, shape index: {}]
  %s14 = inlined_call_operand.vmem [shape: f32[1,128], index: 14, kind: input, shape index: {}]
  %s15 = inlined_call_operand.hbm [shape: f32[2,1,128], index: 15, kind: output, shape index: {}]
  %s16 = sld [smem:[#allocation0]]
  $region93: #{cnn_dqn_forward.1} parent=0
    _
  %s18 = ssub.s32 1, %s16
  %s19 = scalar_select 0, %s18, %s16
  $region1: #{cnn_dqn_forward.1} parent=0
    #allocation2 [shape = 'u8[1024]{0}', space=vmem, size = 0x400, scoped, tag = 'output window, operand 0']
    #allocation3 [shape = 's32[2]{0}', space=sflag, size = 0x8, scoped, tag = 'scoped memory for cnn_dqn_forward.1']
    %20 = vsyncpa [#allocation3], 0
    %s21 = scalar_lea.sflag [#allocation3], 1
    %22 = vsyncpa %s21, 0
    loop: start=0, step=1, limit=4
    $region2: #{cnn_dqn_forward.1} parent=1 // loop_pre_header
      _
    $region3: #{cnn_dqn_forward.1} parent=1 // loop_header
      %s24 = sphi 0, %s28
      %p25 = scmp.ge.s32.totalorder %s24, 4
      %s34 = sphi 0, %s36
      %s37 = sphi 0, %s34
      %s38 = sphi 0, %s37
      %s54 = sphi 0, %s38
      %s58 = sphi 0, %s58
      %s60 = sphi 0, %s58
      %s61 = sphi 0, %s60
      %s75 = sphi 0, %s61
      %s79 = sphi 0, %s79
      %s81 = sphi 0, %s79
      %s82 = sphi 0, %s81
      %s96 = sphi 0, %s82
      %s100 = sphi 0, %s100
      %s102 = sphi 0, %s100
      %s103 = sphi 0, %s102
      %s117 = sphi 0, %s103
      %s121 = sphi 0, %s121
      %s123 = sphi 0, %s121
      %s124 = sphi 0, %s123
      %s138 = sphi 0, %s124
      %s142 = sphi 0, %s142
      %s144 = sphi 0, %s142
      %s145 = sphi 0, %s144
      %s159 = sphi 0, %s145
      %s163 = sphi 0, %s163
      %s165 = sphi 0, %s163
      %s166 = sphi 0, %s165
      %s180 = sphi 0, %s166
      %s184 = sphi 0, %s184
      %s186 = sphi 0, %s184
      %s187 = sphi 0, %s186
      %s201 = sphi 0, %s187
      %s205 = sphi 0, %s205
      %s207 = sphi 0, %s205
      %s208 = sphi 0, %s207
      %s222 = sphi 0, %s208
      %s226 = sphi 0, %s226
      %s228 = sphi 0, %s226
      %s229 = sphi 0, %s228
      %s243 = sphi 0, %s229
      %s247 = sphi 0, %s247
      %s249 = sphi 0, %s247
      %s250 = sphi 0, %s249
      %s264 = sphi 0, %s250
      %s268 = sphi 0, %s268
      %s270 = sphi 0, %s268
      %s271 = sphi 0, %s270
      %s285 = sphi 0, %s271
      %s289 = sphi 0, %s289
      %s291 = sphi 0, %s289
      %s292 = sphi 0, %s291
      %s306 = sphi 0, %s292
      %s310 = sphi 0, %s310
      %s312 = sphi 0, %s310
      %s313 = sphi 0, %s312
      %s327 = sphi 0, %s313
      %s331 = sphi 0, %s331
      %s333 = sphi 0, %s331
      %s334 = sphi 0, %s333
      %s348 = sphi 0, %s334
      %s354 = sphi 0, %s356
      %s357 = sphi 0, %s354
      %s358 = sphi 0, %s357
      %s374 = sphi 0, %s358
    $region4: #{cnn_dqn_forward.1} parent=1 // loop_header_branch
      %27 = sbr.rel (%p25) target = $region8
    $region5: #{cnn_dqn_forward.1} parent=1 // loop_body
      %s29 = ssub.s32 %s24, 1
      %s30 = ssub.s32 %s24, 2
      %s31 = sadd.s32 %s24, 1
      %s32 = ssub.s32 %s24, %s31
      %p33 = scmp.eq.s32.totalorder %s32, 0
      %s35 = sadd.s32 %s34, 1
      %s36 = scalar_select %p33, %s34, %s35
      %p39 = pneg %p33
      %p40 = scmp.eq.s32.totalorder %s24, 1
      %p41 = por %p39, %p40
      %p42 = scmp.ne.s32.totalorder %s34, %s37
      %p43 = scmp.eq.s32.totalorder %s24, 0
      %p44 = por %p42, %p43
      %p45 = scmp.ne.s32.totalorder %s34, %s37
      %p46 = scmp.eq.s32.totalorder %s29, 1
      %p47 = por %p45, %p46
      %p48 = scmp.ne.s32.totalorder %s37, %s38
      %p49 = scmp.eq.s32.totalorder %s29, 0
      %p50 = por %p48, %p49
      %p51 = scmp.ne.s32.totalorder %s37, %s38
      %p52 = scmp.eq.s32.totalorder %s30, 1
      %p53 = por %p51, %p52
      %p55 = scmp.ne.s32.totalorder %s38, %s54
      %p56 = scmp.eq.s32.totalorder %s30, 0
      %p57 = por %p55, %p56
      %s59 = sadd.s32 %s58, 1
      %p62 = scmp.eq.s32.totalorder %s24, 1
      %p63 = scmp.ne.s32.totalorder %s58, %s60
      %p64 = scmp.eq.s32.totalorder %s24, 0
      %p65 = por %p63, %p64
      %p66 = scmp.ne.s32.totalorder %s58, %s60
      %p67 = scmp.eq.s32.totalorder %s29, 1
      %p68 = por %p66, %p67
      %p69 = scmp.ne.s32.totalorder %s60, %s61
      %p70 = scmp.eq.s32.totalorder %s29, 0
      %p71 = por %p69, %p70
      %p72 = scmp.ne.s32.totalorder %s60, %s61
      %p73 = scmp.eq.s32.totalorder %s30, 1
      %p74 = por %p72, %p73
      %p76 = scmp.ne.s32.totalorder %s61, %s75
      %p77 = scmp.eq.s32.totalorder %s30, 0
      %p78 = por %p76, %p77
      %s80 = sadd.s32 %s79, 1
      %p83 = scmp.eq.s32.totalorder %s24, 1
      %p84 = scmp.ne.s32.totalorder %s79, %s81
      %p85 = scmp.eq.s32.totalorder %s24, 0
      %p86 = por %p84, %p85
      %p87 = scmp.ne.s32.totalorder %s79, %s81
      %p88 = scmp.eq.s32.totalorder %s29, 1
      %p89 = por %p87, %p88
      %p90 = scmp.ne.s32.totalorder %s81, %s82
      %p91 = scmp.eq.s32.totalorder %s29, 0
      %p92 = por %p90, %p91
      %p93 = scmp.ne.s32.totalorder %s81, %s82
      %p94 = scmp.eq.s32.totalorder %s30, 1
      %p95 = por %p93, %p94
      %p97 = scmp.ne.s32.totalorder %s82, %s96
      %p98 = scmp.eq.s32.totalorder %s30, 0
      %p99 = por %p97, %p98
      %s101 = sadd.s32 %s100, 1
      %p104 = scmp.eq.s32.totalorder %s24, 1
      %p105 = scmp.ne.s32.totalorder %s100, %s102
      %p106 = scmp.eq.s32.totalorder %s24, 0
      %p107 = por %p105, %p106
      %p108 = scmp.ne.s32.totalorder %s100, %s102
      %p109 = scmp.eq.s32.totalorder %s29, 1
      %p110 = por %p108, %p109
      %p111 = scmp.ne.s32.totalorder %s102, %s103
      %p112 = scmp.eq.s32.totalorder %s29, 0
      %p113 = por %p111, %p112
      %p114 = scmp.ne.s32.totalorder %s102, %s103
      %p115 = scmp.eq.s32.totalorder %s30, 1
      %p116 = por %p114, %p115
      %p118 = scmp.ne.s32.totalorder %s103, %s117
      %p119 = scmp.eq.s32.totalorder %s30, 0
      %p120 = por %p118, %p119
      %s122 = sadd.s32 %s121, 1
      %p125 = scmp.eq.s32.totalorder %s24, 1
      %p126 = scmp.ne.s32.totalorder %s121, %s123
      %p127 = scmp.eq.s32.totalorder %s24, 0
      %p128 = por %p126, %p127
      %p129 = scmp.ne.s32.totalorder %s121, %s123
      %p130 = scmp.eq.s32.totalorder %s29, 1
      %p131 = por %p129, %p130
      %p132 = scmp.ne.s32.totalorder %s123, %s124
      %p133 = scmp.eq.s32.totalorder %s29, 0
      %p134 = por %p132, %p133
      %p135 = scmp.ne.s32.totalorder %s123, %s124
      %p136 = scmp.eq.s32.totalorder %s30, 1
      %p137 = por %p135, %p136
      %p139 = scmp.ne.s32.totalorder %s124, %s138
      %p140 = scmp.eq.s32.totalorder %s30, 0
      %p141 = por %p139, %p140
      %s143 = sadd.s32 %s142, 1
      %p146 = scmp.eq.s32.totalorder %s24, 1
      %p147 = scmp.ne.s32.totalorder %s142, %s144
      %p148 = scmp.eq.s32.totalorder %s24, 0
      %p149 = por %p147, %p148
      %p150 = scmp.ne.s32.totalorder %s142, %s144
      %p151 = scmp.eq.s32.totalorder %s29, 1
      %p152 = por %p150, %p151
      %p153 = scmp.ne.s32.totalorder %s144, %s145
      %p154 = scmp.eq.s32.totalorder %s29, 0
      %p155 = por %p153, %p154
      %p156 = scmp.ne.s32.totalorder %s144, %s145
      %p157 = scmp.eq.s32.totalorder %s30, 1
      %p158 = por %p156, %p157
      %p160 = scmp.ne.s32.totalorder %s145, %s159
      %p161 = scmp.eq.s32.totalorder %s30, 0
      %p162 = por %p160, %p161
      %s164 = sadd.s32 %s163, 1
      %p167 = scmp.eq.s32.totalorder %s24, 1
      %p168 = scmp.ne.s32.totalorder %s163, %s165
      %p169 = scmp.eq.s32.totalorder %s24, 0
      %p170 = por %p168, %p169
      %p171 = scmp.ne.s32.totalorder %s163, %s165
      %p172 = scmp.eq.s32.totalorder %s29, 1
      %p173 = por %p171, %p172
      %p174 = scmp.ne.s32.totalorder %s165, %s166
      %p175 = scmp.eq.s32.totalorder %s29, 0
      %p176 = por %p174, %p175
      %p177 = scmp.ne.s32.totalorder %s165, %s166
      %p178 = scmp.eq.s32.totalorder %s30, 1
      %p179 = por %p177, %p178
      %p181 = scmp.ne.s32.totalorder %s166, %s180
      %p182 = scmp.eq.s32.totalorder %s30, 0
      %p183 = por %p181, %p182
      %s185 = sadd.s32 %s184, 1
      %p188 = scmp.eq.s32.totalorder %s24, 1
      %p189 = scmp.ne.s32.totalorder %s184, %s186
      %p190 = scmp.eq.s32.totalorder %s24, 0
      %p191 = por %p189, %p190
      %p192 = scmp.ne.s32.totalorder %s184, %s186
      %p193 = scmp.eq.s32.totalorder %s29, 1
      %p194 = por %p192, %p193
      %p195 = scmp.ne.s32.totalorder %s186, %s187
      %p196 = scmp.eq.s32.totalorder %s29, 0
      %p197 = por %p195, %p196
      %p198 = scmp.ne.s32.totalorder %s186, %s187
      %p199 = scmp.eq.s32.totalorder %s30, 1
      %p200 = por %p198, %p199
      %p202 = scmp.ne.s32.totalorder %s187, %s201
      %p203 = scmp.eq.s32.totalorder %s30, 0
      %p204 = por %p202, %p203
      %s206 = sadd.s32 %s205, 1
      %p209 = scmp.eq.s32.totalorder %s24, 1
      %p210 = scmp.ne.s32.totalorder %s205, %s207
      %p211 = scmp.eq.s32.totalorder %s24, 0
      %p212 = por %p210, %p211
      %p213 = scmp.ne.s32.totalorder %s205, %s207
      %p214 = scmp.eq.s32.totalorder %s29, 1
      %p215 = por %p213, %p214
      %p216 = scmp.ne.s32.totalorder %s207, %s208
      %p217 = scmp.eq.s32.totalorder %s29, 0
      %p218 = por %p216, %p217
      %p219 = scmp.ne.s32.totalorder %s207, %s208
      %p220 = scmp.eq.s32.totalorder %s30, 1
      %p221 = por %p219, %p220
      %p223 = scmp.ne.s32.totalorder %s208, %s222
      %p224 = scmp.eq.s32.totalorder %s30, 0
      %p225 = por %p223, %p224
      %s227 = sadd.s32 %s226, 1
      %p230 = scmp.eq.s32.totalorder %s24, 1
      %p231 = scmp.ne.s32.totalorder %s226, %s228
      %p232 = scmp.eq.s32.totalorder %s24, 0
      %p233 = por %p231, %p232
      %p234 = scmp.ne.s32.totalorder %s226, %s228
      %p235 = scmp.eq.s32.totalorder %s29, 1
      %p236 = por %p234, %p235
      %p237 = scmp.ne.s32.totalorder %s228, %s229
      %p238 = scmp.eq.s32.totalorder %s29, 0
      %p239 = por %p237, %p238
      %p240 = scmp.ne.s32.totalorder %s228, %s229
      %p241 = scmp.eq.s32.totalorder %s30, 1
      %p242 = por %p240, %p241
      %p244 = scmp.ne.s32.totalorder %s229, %s243
      %p245 = scmp.eq.s32.totalorder %s30, 0
      %p246 = por %p244, %p245
      %s248 = sadd.s32 %s247, 1
      %p251 = scmp.eq.s32.totalorder %s24, 1
      %p252 = scmp.ne.s32.totalorder %s247, %s249
      %p253 = scmp.eq.s32.totalorder %s24, 0
      %p254 = por %p252, %p253
      %p255 = scmp.ne.s32.totalorder %s247, %s249
      %p256 = scmp.eq.s32.totalorder %s29, 1
      %p257 = por %p255, %p256
      %p258 = scmp.ne.s32.totalorder %s249, %s250
      %p259 = scmp.eq.s32.totalorder %s29, 0
      %p260 = por %p258, %p259
      %p261 = scmp.ne.s32.totalorder %s249, %s250
      %p262 = scmp.eq.s32.totalorder %s30, 1
      %p263 = por %p261, %p262
      %p265 = scmp.ne.s32.totalorder %s250, %s264
      %p266 = scmp.eq.s32.totalorder %s30, 0
      %p267 = por %p265, %p266
      %s269 = sadd.s32 %s268, 1
      %p272 = scmp.eq.s32.totalorder %s24, 1
      %p273 = scmp.ne.s32.totalorder %s268, %s270
      %p274 = scmp.eq.s32.totalorder %s24, 0
      %p275 = por %p273, %p274
      %p276 = scmp.ne.s32.totalorder %s268, %s270
      %p277 = scmp.eq.s32.totalorder %s29, 1
      %p278 = por %p276, %p277
      %p279 = scmp.ne.s32.totalorder %s270, %s271
      %p280 = scmp.eq.s32.totalorder %s29, 0
      %p281 = por %p279, %p280
      %p282 = scmp.ne.s32.totalorder %s270, %s271
      %p283 = scmp.eq.s32.totalorder %s30, 1
      %p284 = por %p282, %p283
      %p286 = scmp.ne.s32.totalorder %s271, %s285
      %p287 = scmp.eq.s32.totalorder %s30, 0
      %p288 = por %p286, %p287
      %s290 = sadd.s32 %s289, 1
      %p293 = scmp.eq.s32.totalorder %s24, 1
      %p294 = scmp.ne.s32.totalorder %s289, %s291
      %p295 = scmp.eq.s32.totalorder %s24, 0
      %p296 = por %p294, %p295
      %p297 = scmp.ne.s32.totalorder %s289, %s291
      %p298 = scmp.eq.s32.totalorder %s29, 1
      %p299 = por %p297, %p298
      %p300 = scmp.ne.s32.totalorder %s291, %s292
      %p301 = scmp.eq.s32.totalorder %s29, 0
      %p302 = por %p300, %p301
      %p303 = scmp.ne.s32.totalorder %s291, %s292
      %p304 = scmp.eq.s32.totalorder %s30, 1
      %p305 = por %p303, %p304
      %p307 = scmp.ne.s32.totalorder %s292, %s306
      %p308 = scmp.eq.s32.totalorder %s30, 0
      %p309 = por %p307, %p308
      %s311 = sadd.s32 %s310, 1
      %p314 = scmp.eq.s32.totalorder %s24, 1
      %p315 = scmp.ne.s32.totalorder %s310, %s312
      %p316 = scmp.eq.s32.totalorder %s24, 0
      %p317 = por %p315, %p316
      %p318 = scmp.ne.s32.totalorder %s310, %s312
      %p319 = scmp.eq.s32.totalorder %s29, 1
      %p320 = por %p318, %p319
      %p321 = scmp.ne.s32.totalorder %s312, %s313
      %p322 = scmp.eq.s32.totalorder %s29, 0
      %p323 = por %p321, %p322
      %p324 = scmp.ne.s32.totalorder %s312, %s313
      %p325 = scmp.eq.s32.totalorder %s30, 1
      %p326 = por %p324, %p325
      %p328 = scmp.ne.s32.totalorder %s313, %s327
      %p329 = scmp.eq.s32.totalorder %s30, 0
      %p330 = por %p328, %p329
      %s332 = sadd.s32 %s331, 1
      %p335 = scmp.eq.s32.totalorder %s24, 1
      %p336 = scmp.ne.s32.totalorder %s331, %s333
      %p337 = scmp.eq.s32.totalorder %s24, 0
      %p338 = por %p336, %p337
      %p339 = scmp.ne.s32.totalorder %s331, %s333
      %p340 = scmp.eq.s32.totalorder %s29, 1
      %p341 = por %p339, %p340
      %p342 = scmp.ne.s32.totalorder %s333, %s334
      %p343 = scmp.eq.s32.totalorder %s29, 0
      %p344 = por %p342, %p343
      %p345 = scmp.ne.s32.totalorder %s333, %s334
      %p346 = scmp.eq.s32.totalorder %s30, 1
      %p347 = por %p345, %p346
      %p349 = scmp.ne.s32.totalorder %s334, %s348
      %p350 = scmp.eq.s32.totalorder %s30, 0
      %p351 = por %p349, %p350
      %s352 = ssub.s32 %s24, %s31
      %p353 = scmp.eq.s32.totalorder %s352, 0
      %s355 = sadd.s32 %s354, 1
      %s356 = scalar_select %p353, %s354, %s355
      %p359 = pneg %p353
      %p360 = scmp.eq.s32.totalorder %s24, 1
      %p361 = por %p359, %p360
      %p362 = scmp.ne.s32.totalorder %s354, %s357
      %p363 = scmp.eq.s32.totalorder %s24, 0
      %p364 = por %p362, %p363
      %p365 = scmp.ne.s32.totalorder %s354, %s357
      %p366 = scmp.eq.s32.totalorder %s29, 1
      %p367 = por %p365, %p366
      %p368 = scmp.ne.s32.totalorder %s357, %s358
      %p369 = scmp.eq.s32.totalorder %s29, 0
      %p370 = por %p368, %p369
      %p371 = scmp.ne.s32.totalorder %s357, %s358
      %p372 = scmp.eq.s32.totalorder %s30, 1
      %p373 = por %p371, %p372
      %p375 = scmp.ne.s32.totalorder %s358, %s374
      %p376 = scmp.eq.s32.totalorder %s30, 0
      %p377 = por %p375, %p376
      %p378 = scmp.le.s32.totalorder 1, %s24
      %p379 = scmp.lt.s32.totalorder %s24, 3
      %p380 = pnand %p378, %p379
      %p381 = pneg %p380
      // Predicated region
      $region9: #{cnn_dqn_forward.1} parent=5 // pred_check
        _
      $region10: #{cnn_dqn_forward.1} parent=5 // pred_check_branch
        %383 = sbr.rel (%p380) target = $region12
      $region11: #{cnn_dqn_forward.1} parent=5 // pred_region
        %s384 = ssub.s32 %s24, 1
        // Predicated region
        $region13: #{cnn_dqn_forward.1} parent=11 // pred_check
          %p385 = pneg %p71
        $region14: #{cnn_dqn_forward.1} parent=11 // pred_check_branch
          %387 = sbr.rel (%p385) target = $region16
        $region15: #{cnn_dqn_forward.1} parent=11 // pred_region
          _
        $region16: #{cnn_dqn_forward.1} parent=11 // pred_fallthru
          _
        // Predicated region
        $region17: #{cnn_dqn_forward.1} parent=11 // pred_check
          %p388 = pneg %p92
        $region18: #{cnn_dqn_forward.1} parent=11 // pred_check_branch
          %390 = sbr.rel (%p388) target = $region20
        $region19: #{cnn_dqn_forward.1} parent=11 // pred_region
          _
        $region20: #{cnn_dqn_forward.1} parent=11 // pred_fallthru
          _
        // Predicated region
        $region21: #{cnn_dqn_forward.1} parent=11 // pred_check
          %p391 = pneg %p113
        $region22: #{cnn_dqn_forward.1} parent=11 // pred_check_branch
          %393 = sbr.rel (%p391) target = $region24
        $region23: #{cnn_dqn_forward.1} parent=11 // pred_region
          _
        $region24: #{cnn_dqn_forward.1} parent=11 // pred_fallthru
          _
        // Predicated region
        $region25: #{cnn_dqn_forward.1} parent=11 // pred_check
          %p394 = pneg %p134
        $region26: #{cnn_dqn_forward.1} parent=11 // pred_check_branch
          %396 = sbr.rel (%p394) target = $region28
        $region27: #{cnn_dqn_forward.1} parent=11 // pred_region
          _
        $region28: #{cnn_dqn_forward.1} parent=11 // pred_fallthru
          _
        // Predicated region
        $region29: #{cnn_dqn_forward.1} parent=11 // pred_check
          %p397 = pneg %p155
        $region30: #{cnn_dqn_forward.1} parent=11 // pred_check_branch
          %399 = sbr.rel (%p397) target = $region32
        $region31: #{cnn_dqn_forward.1} parent=11 // pred_region
          _
        $region32: #{cnn_dqn_forward.1} parent=11 // pred_fallthru
          _
        // Predicated region
        $region33: #{cnn_dqn_forward.1} parent=11 // pred_check
          %p400 = pneg %p176
        $region34: #{cnn_dqn_forward.1} parent=11 // pred_check_branch
          %402 = sbr.rel (%p400) target = $region36
        $region35: #{cnn_dqn_forward.1} parent=11 // pred_region
          _
        $region36: #{cnn_dqn_forward.1} parent=11 // pred_fallthru
          _
        // Predicated region
        $region37: #{cnn_dqn_forward.1} parent=11 // pred_check
          %p403 = pneg %p197
        $region38: #{cnn_dqn_forward.1} parent=11 // pred_check_branch
          %405 = sbr.rel (%p403) target = $region40
        $region39: #{cnn_dqn_forward.1} parent=11 // pred_region
          _
        $region40: #{cnn_dqn_forward.1} parent=11 // pred_fallthru
          _
        // Predicated region
        $region41: #{cnn_dqn_forward.1} parent=11 // pred_check
          %p406 = pneg %p218
        $region42: #{cnn_dqn_forward.1} parent=11 // pred_check_branch
          %408 = sbr.rel (%p406) target = $region44
        $region43: #{cnn_dqn_forward.1} parent=11 // pred_region
          _
        $region44: #{cnn_dqn_forward.1} parent=11 // pred_fallthru
          _
        // Predicated region
        $region45: #{cnn_dqn_forward.1} parent=11 // pred_check
          %p409 = pneg %p239
        $region46: #{cnn_dqn_forward.1} parent=11 // pred_check_branch
          %411 = sbr.rel (%p409) target = $region48
        $region47: #{cnn_dqn_forward.1} parent=11 // pred_region
          _
        $region48: #{cnn_dqn_forward.1} parent=11 // pred_fallthru
          _
        // Predicated region
        $region49: #{cnn_dqn_forward.1} parent=11 // pred_check
          %p412 = pneg %p260
        $region50: #{cnn_dqn_forward.1} parent=11 // pred_check_branch
          %414 = sbr.rel (%p412) target = $region52
        $region51: #{cnn_dqn_forward.1} parent=11 // pred_region
          _
        $region52: #{cnn_dqn_forward.1} parent=11 // pred_fallthru
          _
        // Predicated region
        $region53: #{cnn_dqn_forward.1} parent=11 // pred_check
          %p415 = pneg %p281
        $region54: #{cnn_dqn_forward.1} parent=11 // pred_check_branch
          %417 = sbr.rel (%p415) target = $region56
        $region55: #{cnn_dqn_forward.1} parent=11 // pred_region
          _
        $region56: #{cnn_dqn_forward.1} parent=11 // pred_fallthru
          _
        // Predicated region
        $region57: #{cnn_dqn_forward.1} parent=11 // pred_check
          %p418 = pneg %p302
        $region58: #{cnn_dqn_forward.1} parent=11 // pred_check_branch
          %420 = sbr.rel (%p418) target = $region60
        $region59: #{cnn_dqn_forward.1} parent=11 // pred_region
          _
        $region60: #{cnn_dqn_forward.1} parent=11 // pred_fallthru
          _
        // Predicated region
        $region61: #{cnn_dqn_forward.1} parent=11 // pred_check
          %p421 = pneg %p323
        $region62: #{cnn_dqn_forward.1} parent=11 // pred_check_branch
          %423 = sbr.rel (%p421) target = $region64
        $region63: #{cnn_dqn_forward.1} parent=11 // pred_region
          _
        $region64: #{cnn_dqn_forward.1} parent=11 // pred_fallthru
          _
        // Predicated region
        $region65: #{cnn_dqn_forward.1} parent=11 // pred_check
          %p424 = pneg %p344
        $region66: #{cnn_dqn_forward.1} parent=11 // pred_check_branch
          %426 = sbr.rel (%p424) target = $region68
        $region67: #{cnn_dqn_forward.1} parent=11 // pred_region
          _
        $region68: #{cnn_dqn_forward.1} parent=11 // pred_fallthru
          _
      $region12: #{cnn_dqn_forward.1} parent=5 // pred_fallthru
        _
      %p427 = scmp.lt.s32.totalorder %s24, 2
      // Predicated region
      $region69: #{cnn_dqn_forward.1} parent=5 // pred_check
        %p428 = pneg %p427
      $region70: #{cnn_dqn_forward.1} parent=5 // pred_check_branch
        %430 = sbr.rel (%p428) target = $region72
      $region71: #{cnn_dqn_forward.1} parent=5 // pred_region
        // Predicated region
        $region73: #{cnn_dqn_forward.1} parent=71 // pred_check
          %p431 = pneg %p44
        $region74: #{cnn_dqn_forward.1} parent=71 // pred_check_branch
          %433 = sbr.rel (%p431) target = $region76
        $region75: #{cnn_dqn_forward.1} parent=71 // pred_region
          %p434 = scmp.lt.s32.totalorder %s24, 1
          %s435 = scalar_select %p434, %s24, 1
          %s436 = smul.addr %s435, 41
          %s437 = smul.addr %s436, 8
          %s438 = scalar_lea.vmem %s0, %s437
        $region76: #{cnn_dqn_forward.1} parent=71 // pred_fallthru
          _
      $region72: #{cnn_dqn_forward.1} parent=5 // pred_fallthru
        _
      %p439 = scmp.le.s32.totalorder 1, %s24
      %p440 = scmp.lt.s32.totalorder %s24, 3
      %p441 = pnand %p439, %p440
      %p442 = pneg %p441
      // Predicated region
      $region77: #{cnn_dqn_forward.1} parent=5 // pred_check
        _
      $region78: #{cnn_dqn_forward.1} parent=5 // pred_check_branch
        %444 = sbr.rel (%p441) target = $region80
      $region79: #{cnn_dqn_forward.1} parent=5 // pred_region
        %s445 = ssub.s32 %s24, 1
        %p446 = scmp.lt.s32.totalorder %s29, 1
        %s447 = scalar_select %p446, %s29, 1
        %s448 = smul.addr %s447, 41
        %s449 = smul.addr %s448, 8
        %s450 = scalar_lea.vmem %s0, %s449
        %p451 = pneg %p50
        %p452 = pneg %p47
        %p453 = pneg %p71
        %p454 = pneg %p68
        %p455 = pneg %p92
        %p456 = pneg %p89
        %p457 = pneg %p113
        %p458 = pneg %p110
        %p459 = pneg %p134
        %p460 = pneg %p131
        %p461 = pneg %p155
        %p462 = pneg %p152
        %p463 = pneg %p176
        %p464 = pneg %p173
        %p465 = pneg %p197
        %p466 = pneg %p194
        %p467 = pneg %p218
        %p468 = pneg %p215
        %p469 = pneg %p239
        %p470 = pneg %p236
        %p471 = pneg %p260
        %p472 = pneg %p257
        %p473 = pneg %p281
        %p474 = pneg %p278
        %p475 = pneg %p302
        %p476 = pneg %p299
        %p477 = pneg %p323
        %p478 = pneg %p320
        %p479 = pneg %p344
        %p480 = pneg %p341
        %p481 = pneg %p370
        %p482 = pneg %p367
        %s483 = sand.u32 %s357, 1
        %s484 = scalar_lea.sflag [#allocation3], %s483
        %s485 = sand.u32 %s357, 1
        %s486 = scalar_lea.vmem [#allocation2], %s485
        %p487 = scmp.lt.s32.totalorder %s29, 1
        %s488 = scalar_select %p487, %s29, 1
        %s489 = smul.addr %s488, 41
        %s490 = smul.addr %s489, 8
        %s491 = scalar_lea.vmem %s0, %s490
        %v493 = vld [vmem:[%s491] sm:$0xff]
        %v494 = vld [vmem:[%s491 + $0x8] sm:$0xff]
        %v495 = vld [vmem:[%s491 + $0x10] sm:$0xff]
        %v496 = vld [vmem:[%s491 + $0x18] sm:$0xff]
        %v497 = vld [vmem:[%s491 + $0x20] sm:$0xff]
        %v498 = vld [vmem:[%s491 + $0x28] sm:$0xff]
        %v499 = vld [vmem:[%s491 + $0x30] sm:$0xff]
        %v500 = vld [vmem:[%s491 + $0x38] sm:$0xff]
        %v501 = vld [vmem:[%s491 + $0x40] sm:$0x7f]
        %v502 = vld [vmem:[%s1] sm:$0xf]
        %v503 = vld [vmem:[%s1 + $0x4] sm:$0xf]
        %v504 = vld [vmem:[%s1 + $0x8] sm:$0xf]
        %v505 = vld [vmem:[%s1 + $0xc] sm:$0xf]
        %v506 = vld [vmem:[%s1 + $0x10] sm:$0xf]
        %v507 = vld [vmem:[%s1 + $0x14] sm:$0xf]
        %v508 = vld [vmem:[%s1 + $0x18] sm:$0xf]
        %v509 = vld [vmem:[%s1 + $0x1c] sm:$0xf]
        %v510 = vpack.c.bf16 %v494, %v493
        %v511 = vpack.c.bf16 %v496, %v495
        %v512 = vpack.c.bf16 %v498, %v497
        %v513 = vpack.c.bf16 %v500, %v499
        %v514 = vpack.c.bf16 %v501, %v501
        %v515 = vld [vmem:[%s491 + $0x51] sm:$0xff]
        %v516 = vld [vmem:[%s491 + $0x59] sm:$0xff]
        %v517 = vld [vmem:[%s491 + $0x61] sm:$0xff]
        %v518 = vld [vmem:[%s491 + $0x69] sm:$0xff]
        %v519 = vld [vmem:[%s491 + $0x71] sm:$0xff]
        %v520 = vld [vmem:[%s491 + $0x79] sm:$0xff]
        %v521 = vld [vmem:[%s491 + $0x81] sm:$0xff]
        %v522 = vld [vmem:[%s491 + $0x89] sm:$0xff]
        %v523 = vld [vmem:[%s491 + $0x91] sm:$0x7f]
        %v524 = vld [vmem:[%s1 + $0x20] sm:$0xf]
        %v525 = vld [vmem:[%s1 + $0x24] sm:$0xf]
        %v526 = vld [vmem:[%s1 + $0x28] sm:$0xf]
        %v527 = vld [vmem:[%s1 + $0x2c] sm:$0xf]
        %v528 = vld [vmem:[%s1 + $0x30] sm:$0xf]
        %v529 = vld [vmem:[%s1 + $0x34] sm:$0xf]
        %v530 = vld [vmem:[%s1 + $0x38] sm:$0xf]
        %v531 = vld [vmem:[%s1 + $0x3c] sm:$0xf]
        %v532 = vpack.c.bf16 %v516, %v515
        %v533 = vpack.c.bf16 %v518, %v517
        %v534 = vpack.c.bf16 %v520, %v519
        %v535 = vpack.c.bf16 %v522, %v521
        %v536 = vpack.c.bf16 %v523, %v523
        %v545 = vunpack.c.l.b16 %v524
        %v546 = vunpack.c.l.b16 %v525
        %v547 = vunpack.c.l.b16 %v526
        %v548 = vunpack.c.l.b16 %v527
        %v549 = vunpack.c.l.b16 %v528
        %v550 = vunpack.c.l.b16 %v529
        %v551 = vunpack.c.l.b16 %v530
        %v552 = vunpack.c.l.b16 %v531
        %v553 = vpack.c.b16 %v546, %v545
        %v554 = vpack.c.b16 %v548, %v547
        %v555 = vpack.c.b16 %v550, %v549
        %v556 = vpack.c.b16 %v552, %v551
        %vm561 = vcmask 523264
        %v563 = vsel %vm561, %v532, 0
        %v566 = vsel %vm561, %v533, 0
        %v569 = vsel %vm561, %v534, 0
        %v572 = vsel %vm561, %v535, 0
        %v575 = vsel %vm561, %v536, 0
        %577 = vmatprep.subr.bf16.mxu0 0
        %578 = vmatpush1.bf16.msra.mxu0 0
        %579 = vmatprep.subr.bf16.mxu0 0
        %580 = vmatpush1.bf16.msra.mxu0 0
        %581 = vmatprep.subr.bf16.mxu0 0
        %582 = vmatpush1.bf16.msra.mxu0 0
        %583 = vmatprep.subr.bf16.mxu0 0
        %584 = vmatpush1.bf16.msra.mxu0 0
        %585 = vmatprep.subr.bf16.mxu0 0
        %586 = vmatpush1.bf16.msra.mxu0 %v556
        %587 = vmatprep.subr.bf16.mxu0 0
        %588 = vmatpush1.bf16.msra.mxu0 %v555
        %589 = vmatprep.subr.bf16.mxu0 0
        %590 = vmatpush1.bf16.msra.mxu0 %v554
        %591 = vmatprep.subr.bf16.mxu0 0
        %592 = vmatpush1.bf16.msra.mxu0 %v553
        %593 = vmatprep.subr.bf16.mxu0 0
        %594 = vmatpush2.bf16.msra.mxu0 0
        %595 = vmatprep.subr.bf16.mxu0 0
        %596 = vmatpush2.bf16.msra.mxu0 0
        %597 = vmatprep.subr.bf16.mxu0 0
        %598 = vmatpush2.bf16.msra.mxu0 0
        %599 = vmatprep.subr.bf16.mxu0 0
        %600 = vmatpush2.bf16.msra.mxu0 0
        %601 = vmatprep.subr.bf16.mxu0 0
        %602 = vmatpush2.bf16.msra.mxu0 0
        %603 = vmatprep.subr.bf16.mxu0 0
        %604 = vmatpush2.bf16.msra.mxu0 0
        %605 = vmatprep.subr.bf16.mxu0 0
        %606 = vmatpush2.bf16.msra.mxu0 0
        %607 = vmatprep.subr.bf16.mxu0 0
        %608 = vmatpush2.bf16.msra.mxu0 0
        %609 = vmatprep.mubr.bf16.mxu0 0
        %610 = vmatmul.mubr.bf16.gmra.mxu0 %v563
        %v611 = vpop.f32.mrf.mxu0
        %v612 = vadd.f32 0.0, %v611
        %v613 = vpop.f32.mrf.mxu0
        %v614 = vpop.f32.mrf.mxu0
        %v615 = vadd.f32 0.0, %v614
        %v616 = vpop.f32.mrf.mxu0
        %617 = vmatprep.mubr.bf16.mxu0 0
        %618 = vmatmul.mubr.bf16.gmra.mxu0 %v566
        %v619 = vpop.f32.mrf.mxu0
        %v620 = vadd.f32 0.0, %v619
        %v621 = vpop.f32.mrf.mxu0
        %v622 = vpop.f32.mrf.mxu0
        %v623 = vadd.f32 0.0, %v622
        %v624 = vpop.f32.mrf.mxu0
        %625 = vmatprep.mubr.bf16.mxu0 0
        %626 = vmatmul.mubr.bf16.gmra.mxu0 %v569
        %v627 = vpop.f32.mrf.mxu0
        %v628 = vadd.f32 0.0, %v627
        %v629 = vpop.f32.mrf.mxu0
        %v630 = vpop.f32.mrf.mxu0
        %v631 = vadd.f32 0.0, %v630
        %v632 = vpop.f32.mrf.mxu0
        %633 = vmatprep.mubr.bf16.mxu0 0
        %634 = vmatmul.mubr.bf16.gmra.mxu0 %v572
        %v635 = vpop.f32.mrf.mxu0
        %v636 = vadd.f32 0.0, %v635
        %v637 = vpop.f32.mrf.mxu0
        %v638 = vpop.f32.mrf.mxu0
        %v639 = vadd.f32 0.0, %v638
        %v640 = vpop.f32.mrf.mxu0
        %641 = vmatprep.mubr.bf16.mxu0 0
        %642 = vmatmul.mubr.bf16.gmra.mxu0 %v575
        %v643 = vpop.f32.mrf.mxu0
        %v644 = vadd.f32 0.0, %v643
        %v645 = vpop.f32.mrf.mxu0
        %v646 = vpop.f32.mrf.mxu0
        %v647 = vpop.f32.mrf.mxu0
        %648 = vdwg.mxu0
        %v657 = vunpack.c.l.b16 %v502
        %v658 = vunpack.c.l.b16 %v503
        %v659 = vunpack.c.l.b16 %v504
        %v660 = vunpack.c.l.b16 %v505
        %v661 = vunpack.c.l.b16 %v506
        %v662 = vunpack.c.l.b16 %v507
        %v663 = vunpack.c.l.b16 %v508
        %v664 = vunpack.c.l.b16 %v509
        %v665 = vpack.c.b16 %v658, %v657
        %v666 = vpack.c.b16 %v660, %v659
        %v667 = vpack.c.b16 %v662, %v661
        %v668 = vpack.c.b16 %v664, %v663
        %v674 = vsel %vm561, %v510, 0
        %v677 = vsel %vm561, %v511, 0
        %v680 = vsel %vm561, %v512, 0
        %v683 = vsel %vm561, %v513, 0
        %v686 = vsel %vm561, %v514, 0
        %688 = vmatprep.subr.bf16.mxu0 0
        %689 = vmatpush1.bf16.msra.mxu0 0
        %690 = vmatprep.subr.bf16.mxu0 0
        %691 = vmatpush1.bf16.msra.mxu0 0
        %692 = vmatprep.subr.bf16.mxu0 0
        %693 = vmatpush1.bf16.msra.mxu0 0
        %694 = vmatprep.subr.bf16.mxu0 0
        %695 = vmatpush1.bf16.msra.mxu0 0
        %696 = vmatprep.subr.bf16.mxu0 0
        %697 = vmatpush1.bf16.msra.mxu0 %v668
        %698 = vmatprep.subr.bf16.mxu0 0
        %699 = vmatpush1.bf16.msra.mxu0 %v667
        %700 = vmatprep.subr.bf16.mxu0 0
        %701 = vmatpush1.bf16.msra.mxu0 %v666
        %702 = vmatprep.subr.bf16.mxu0 0
        %703 = vmatpush1.bf16.msra.mxu0 %v665
        %704 = vmatprep.subr.bf16.mxu0 0
        %705 = vmatpush2.bf16.msra.mxu0 0
        %706 = vmatprep.subr.bf16.mxu0 0
        %707 = vmatpush2.bf16.msra.mxu0 0
        %708 = vmatprep.subr.bf16.mxu0 0
        %709 = vmatpush2.bf16.msra.mxu0 0
        %710 = vmatprep.subr.bf16.mxu0 0
        %711 = vmatpush2.bf16.msra.mxu0 0
        %712 = vmatprep.subr.bf16.mxu0 0
        %713 = vmatpush2.bf16.msra.mxu0 0
        %714 = vmatprep.subr.bf16.mxu0 0
        %715 = vmatpush2.bf16.msra.mxu0 0
        %716 = vmatprep.subr.bf16.mxu0 0
        %717 = vmatpush2.bf16.msra.mxu0 0
        %718 = vmatprep.subr.bf16.mxu0 0
        %719 = vmatpush2.bf16.msra.mxu0 0
        %720 = vmatprep.mubr.bf16.mxu0 0
        %721 = vmatmul.mubr.bf16.gmra.mxu0 %v674
        %v722 = vpop.f32.mrf.mxu0
        %v723 = vadd.f32 %v612, %v722
        %v724 = vpop.f32.mrf.mxu0
        %v725 = vpop.f32.mrf.mxu0
        %v726 = vadd.f32 %v615, %v725
        %v727 = vpop.f32.mrf.mxu0
        %728 = vmatprep.mubr.bf16.mxu0 0
        %729 = vmatmul.mubr.bf16.gmra.mxu0 %v677
        %v730 = vpop.f32.mrf.mxu0
        %v731 = vadd.f32 %v620, %v730
        %v732 = vpop.f32.mrf.mxu0
        %v733 = vpop.f32.mrf.mxu0
        %v734 = vadd.f32 %v623, %v733
        %v735 = vpop.f32.mrf.mxu0
        %736 = vmatprep.mubr.bf16.mxu0 0
        %737 = vmatmul.mubr.bf16.gmra.mxu0 %v680
        %v738 = vpop.f32.mrf.mxu0
        %v739 = vadd.f32 %v628, %v738
        %v740 = vpop.f32.mrf.mxu0
        %v741 = vpop.f32.mrf.mxu0
        %v742 = vadd.f32 %v631, %v741
        %v743 = vpop.f32.mrf.mxu0
        %744 = vmatprep.mubr.bf16.mxu0 0
        %745 = vmatmul.mubr.bf16.gmra.mxu0 %v683
        %v746 = vpop.f32.mrf.mxu0
        %v747 = vadd.f32 %v636, %v746
        %v748 = vpop.f32.mrf.mxu0
        %v749 = vpop.f32.mrf.mxu0
        %v750 = vadd.f32 %v639, %v749
        %v751 = vpop.f32.mrf.mxu0
        %752 = vmatprep.mubr.bf16.mxu0 0
        %753 = vmatmul.mubr.bf16.gmra.mxu0 %v686
        %v754 = vpop.f32.mrf.mxu0
        %v755 = vadd.f32 %v644, %v754
        %v756 = vpop.f32.mrf.mxu0
        %v757 = vpop.f32.mrf.mxu0
        %v758 = vpop.f32.mrf.mxu0
        %759 = vdwg.mxu0
        %v760 = vld [vmem:[%s491 + $0xa2] sm:$0xff]
        %v761 = vld [vmem:[%s491 + $0xaa] sm:$0xff]
        %v762 = vld [vmem:[%s491 + $0xb2] sm:$0xff]
        %v763 = vld [vmem:[%s491 + $0xba] sm:$0xff]
        %v764 = vld [vmem:[%s491 + $0xc2] sm:$0xff]
        %v765 = vld [vmem:[%s491 + $0xca] sm:$0xff]
        %v766 = vld [vmem:[%s491 + $0xd2] sm:$0xff]
        %v767 = vld [vmem:[%s491 + $0xda] sm:$0xff]
        %v768 = vld [vmem:[%s491 + $0xe2] sm:$0x7f]
        %v769 = vld [vmem:[%s1 + $0x40] sm:$0xf]
        %v770 = vld [vmem:[%s1 + $0x44] sm:$0xf]
        %v771 = vld [vmem:[%s1 + $0x48] sm:$0xf]
        %v772 = vld [vmem:[%s1 + $0x4c] sm:$0xf]
        %v773 = vld [vmem:[%s1 + $0x50] sm:$0xf]
        %v774 = vld [vmem:[%s1 + $0x54] sm:$0xf]
        %v775 = vld [vmem:[%s1 + $0x58] sm:$0xf]
        %v776 = vld [vmem:[%s1 + $0x5c] sm:$0xf]
        %v777 = vpack.c.bf16 %v761, %v760
        %v778 = vpack.c.bf16 %v763, %v762
        %v779 = vpack.c.bf16 %v765, %v764
        %v780 = vpack.c.bf16 %v767, %v766
        %v781 = vpack.c.bf16 %v768, %v768
        %v790 = vunpack.c.l.b16 %v769
        %v791 = vunpack.c.l.b16 %v770
        %v792 = vunpack.c.l.b16 %v771
        %v793 = vunpack.c.l.b16 %v772
        %v794 = vunpack.c.l.b16 %v773
        %v795 = vunpack.c.l.b16 %v774
        %v796 = vunpack.c.l.b16 %v775
        %v797 = vunpack.c.l.b16 %v776
        %v798 = vpack.c.b16 %v791, %v790
        %v799 = vpack.c.b16 %v793, %v792
        %v800 = vpack.c.b16 %v795, %v794
        %v801 = vpack.c.b16 %v797, %v796
        %v807 = vsel %vm561, %v777, 0
        %v810 = vsel %vm561, %v778, 0
        %v813 = vsel %vm561, %v779, 0
        %v816 = vsel %vm561, %v780, 0
        %v819 = vsel %vm561, %v781, 0
        %821 = vmatprep.subr.bf16.mxu0 0
        %822 = vmatpush1.bf16.msra.mxu0 0
        %823 = vmatprep.subr.bf16.mxu0 0
        %824 = vmatpush1.bf16.msra.mxu0 0
        %825 = vmatprep.subr.bf16.mxu0 0
        %826 = vmatpush1.bf16.msra.mxu0 0
        %827 = vmatprep.subr.bf16.mxu0 0
        %828 = vmatpush1.bf16.msra.mxu0 0
        %829 = vmatprep.subr.bf16.mxu0 0
        %830 = vmatpush1.bf16.msra.mxu0 %v801
        %831 = vmatprep.subr.bf16.mxu0 0
        %832 = vmatpush1.bf16.msra.mxu0 %v800
        %833 = vmatprep.subr.bf16.mxu0 0
        %834 = vmatpush1.bf16.msra.mxu0 %v799
        %835 = vmatprep.subr.bf16.mxu0 0
        %836 = vmatpush1.bf16.msra.mxu0 %v798
        %837 = vmatprep.subr.bf16.mxu0 0
        %838 = vmatpush2.bf16.msra.mxu0 0
        %839 = vmatprep.subr.bf16.mxu0 0
        %840 = vmatpush2.bf16.msra.mxu0 0
        %841 = vmatprep.subr.bf16.mxu0 0
        %842 = vmatpush2.bf16.msra.mxu0 0
        %843 = vmatprep.subr.bf16.mxu0 0
        %844 = vmatpush2.bf16.msra.mxu0 0
        %845 = vmatprep.subr.bf16.mxu0 0
        %846 = vmatpush2.bf16.msra.mxu0 0
        %847 = vmatprep.subr.bf16.mxu0 0
        %848 = vmatpush2.bf16.msra.mxu0 0
        %849 = vmatprep.subr.bf16.mxu0 0
        %850 = vmatpush2.bf16.msra.mxu0 0
        %851 = vmatprep.subr.bf16.mxu0 0
        %852 = vmatpush2.bf16.msra.mxu0 0
        %853 = vmatprep.mubr.bf16.mxu0 0
        %854 = vmatmul.mubr.bf16.gmra.mxu0 %v807
        %v855 = vpop.f32.mrf.mxu0
        %v856 = vadd.f32 0.0, %v855
        %v857 = vpop.f32.mrf.mxu0
        %v858 = vpop.f32.mrf.mxu0
        %v859 = vadd.f32 0.0, %v858
        %v860 = vpop.f32.mrf.mxu0
        %861 = vmatprep.mubr.bf16.mxu0 0
        %862 = vmatmul.mubr.bf16.gmra.mxu0 %v810
        %v863 = vpop.f32.mrf.mxu0
        %v864 = vadd.f32 0.0, %v863
        %v865 = vpop.f32.mrf.mxu0
        %v866 = vpop.f32.mrf.mxu0
        %v867 = vadd.f32 0.0, %v866
        %v868 = vpop.f32.mrf.mxu0
        %869 = vmatprep.mubr.bf16.mxu0 0
        %870 = vmatmul.mubr.bf16.gmra.mxu0 %v813
        %v871 = vpop.f32.mrf.mxu0
        %v872 = vadd.f32 0.0, %v871
        %v873 = vpop.f32.mrf.mxu0
        %v874 = vpop.f32.mrf.mxu0
        %v875 = vadd.f32 0.0, %v874
        %v876 = vpop.f32.mrf.mxu0
        %877 = vmatprep.mubr.bf16.mxu0 0
        %878 = vmatmul.mubr.bf16.gmra.mxu0 %v816
        %v879 = vpop.f32.mrf.mxu0
        %v880 = vadd.f32 0.0, %v879
        %v881 = vpop.f32.mrf.mxu0
        %v882 = vpop.f32.mrf.mxu0
        %v883 = vadd.f32 0.0, %v882
        %v884 = vpop.f32.mrf.mxu0
        %885 = vmatprep.mubr.bf16.mxu0 0
        %886 = vmatmul.mubr.bf16.gmra.mxu0 %v819
        %v887 = vpop.f32.mrf.mxu0
        %v888 = vadd.f32 0.0, %v887
        %v889 = vpop.f32.mrf.mxu0
        %v890 = vpop.f32.mrf.mxu0
        %v891 = vpop.f32.mrf.mxu0
        %892 = vdwg.mxu0
        %v893 = vadd.f32 %v723, %v856
        %v894 = vadd.f32 %v726, %v859
        %v895 = vadd.f32 %v731, %v864
        %v896 = vadd.f32 %v734, %v867
        %v897 = vadd.f32 %v739, %v872
        %v898 = vadd.f32 %v742, %v875
        %v899 = vadd.f32 %v747, %v880
        %v900 = vadd.f32 %v750, %v883
        %v901 = vadd.f32 %v755, %v888
        %v902 = vld [vmem:[%s491 + $0xf3] sm:$0xff]
        %v903 = vld [vmem:[%s491 + $0xfb] sm:$0xff]
        %v904 = vld [vmem:[%s491 + $0x103] sm:$0xff]
        %v905 = vld [vmem:[%s491 + $0x10b] sm:$0xff]
        %v906 = vld [vmem:[%s491 + $0x113] sm:$0xff]
        %v907 = vld [vmem:[%s491 + $0x11b] sm:$0xff]
        %v908 = vld [vmem:[%s491 + $0x123] sm:$0xff]
        %v909 = vld [vmem:[%s491 + $0x12b] sm:$0xff]
        %v910 = vld [vmem:[%s491 + $0x133] sm:$0x7f]
        %v911 = vld [vmem:[%s1 + $0x60] sm:$0xf]
        %v912 = vld [vmem:[%s1 + $0x64] sm:$0xf]
        %v913 = vld [vmem:[%s1 + $0x68] sm:$0xf]
        %v914 = vld [vmem:[%s1 + $0x6c] sm:$0xf]
        %v915 = vld [vmem:[%s1 + $0x70] sm:$0xf]
        %v916 = vld [vmem:[%s1 + $0x74] sm:$0xf]
        %v917 = vld [vmem:[%s1 + $0x78] sm:$0xf]
        %v918 = vld [vmem:[%s1 + $0x7c] sm:$0xf]
        %v919 = vpack.c.bf16 %v903, %v902
        %v920 = vpack.c.bf16 %v905, %v904
        %v921 = vpack.c.bf16 %v907, %v906
        %v922 = vpack.c.bf16 %v909, %v908
        %v923 = vpack.c.bf16 %v910, %v910
        %v932 = vunpack.c.l.b16 %v911
        %v933 = vunpack.c.l.b16 %v912
        %v934 = vunpack.c.l.b16 %v913
        %v935 = vunpack.c.l.b16 %v914
        %v936 = vunpack.c.l.b16 %v915
        %v937 = vunpack.c.l.b16 %v916
        %v938 = vunpack.c.l.b16 %v917
        %v939 = vunpack.c.l.b16 %v918
        %v940 = vpack.c.b16 %v933, %v932
        %v941 = vpack.c.b16 %v935, %v934
        %v942 = vpack.c.b16 %v937, %v936
        %v943 = vpack.c.b16 %v939, %v938
        %v949 = vsel %vm561, %v919, 0
        %v952 = vsel %vm561, %v920, 0
        %v955 = vsel %vm561, %v921, 0
        %v958 = vsel %vm561, %v922, 0
        %v961 = vsel %vm561, %v923, 0
        %963 = vmatprep.subr.bf16.mxu0 0
        %964 = vmatpush1.bf16.msra.mxu0 0
        %965 = vmatprep.subr.bf16.mxu0 0
        %966 = vmatpush1.bf16.msra.mxu0 0
        %967 = vmatprep.subr.bf16.mxu0 0
        %968 = vmatpush1.bf16.msra.mxu0 0
        %969 = vmatprep.subr.bf16.mxu0 0
        %970 = vmatpush1.bf16.msra.mxu0 0
        %971 = vmatprep.subr.bf16.mxu0 0
        %972 = vmatpush1.bf16.msra.mxu0 %v943
        %973 = vmatprep.subr.bf16.mxu0 0
        %974 = vmatpush1.bf16.msra.mxu0 %v942
        %975 = vmatprep.subr.bf16.mxu0 0
        %976 = vmatpush1.bf16.msra.mxu0 %v941
        %977 = vmatprep.subr.bf16.mxu0 0
        %978 = vmatpush1.bf16.msra.mxu0 %v940
        %979 = vmatprep.subr.bf16.mxu0 0
        %980 = vmatpush2.bf16.msra.mxu0 0
        %981 = vmatprep.subr.bf16.mxu0 0
        %982 = vmatpush2.bf16.msra.mxu0 0
        %983 = vmatprep.subr.bf16.mxu0 0
        %984 = vmatpush2.bf16.msra.mxu0 0
        %985 = vmatprep.subr.bf16.mxu0 0
        %986 = vmatpush2.bf16.msra.mxu0 0
        %987 = vmatprep.subr.bf16.mxu0 0
        %988 = vmatpush2.bf16.msra.mxu0 0
        %989 = vmatprep.subr.bf16.mxu0 0
        %990 = vmatpush2.bf16.msra.mxu0 0
        %991 = vmatprep.subr.bf16.mxu0 0
        %992 = vmatpush2.bf16.msra.mxu0 0
        %993 = vmatprep.subr.bf16.mxu0 0
        %994 = vmatpush2.bf16.msra.mxu0 0
        %995 = vmatprep.mubr.bf16.mxu0 0
        %996 = vmatmul.mubr.bf16.gmra.mxu0 %v949
        %v997 = vpop.f32.mrf.mxu0
        %v998 = vadd.f32 0.0, %v997
        %v999 = vpop.f32.mrf.mxu0
        %v1000 = vpop.f32.mrf.mxu0
        %v1001 = vadd.f32 0.0, %v1000
        %v1002 = vpop.f32.mrf.mxu0
        %1003 = vmatprep.mubr.bf16.mxu0 0
        %1004 = vmatmul.mubr.bf16.gmra.mxu0 %v952
        %v1005 = vpop.f32.mrf.mxu0
        %v1006 = vadd.f32 0.0, %v1005
        %v1007 = vpop.f32.mrf.mxu0
        %v1008 = vpop.f32.mrf.mxu0
        %v1009 = vadd.f32 0.0, %v1008
        %v1010 = vpop.f32.mrf.mxu0
        %1011 = vmatprep.mubr.bf16.mxu0 0
        %1012 = vmatmul.mubr.bf16.gmra.mxu0 %v955
        %v1013 = vpop.f32.mrf.mxu0
        %v1014 = vadd.f32 0.0, %v1013
        %v1015 = vpop.f32.mrf.mxu0
        %v1016 = vpop.f32.mrf.mxu0
        %v1017 = vadd.f32 0.0, %v1016
        %v1018 = vpop.f32.mrf.mxu0
        %1019 = vmatprep.mubr.bf16.mxu0 0
        %1020 = vmatmul.mubr.bf16.gmra.mxu0 %v958
        %v1021 = vpop.f32.mrf.mxu0
        %v1022 = vadd.f32 0.0, %v1021
        %v1023 = vpop.f32.mrf.mxu0
        %v1024 = vpop.f32.mrf.mxu0
        %v1025 = vadd.f32 0.0, %v1024
        %v1026 = vpop.f32.mrf.mxu0
        %1027 = vmatprep.mubr.bf16.mxu0 0
        %1028 = vmatmul.mubr.bf16.gmra.mxu0 %v961
        %v1029 = vpop.f32.mrf.mxu0
        %v1030 = vadd.f32 0.0, %v1029
        %v1031 = vpop.f32.mrf.mxu0
        %v1032 = vpop.f32.mrf.mxu0
        %v1033 = vpop.f32.mrf.mxu0
        %1034 = vdwg.mxu0
        %v1035 = vadd.f32 %v893, %v998
        %v1036 = vadd.f32 %v894, %v1001
        %v1037 = vadd.f32 %v895, %v1006
        %v1038 = vadd.f32 %v896, %v1009
        %v1039 = vadd.f32 %v897, %v1014
        %v1040 = vadd.f32 %v898, %v1017
        %v1041 = vadd.f32 %v899, %v1022
        %v1042 = vadd.f32 %v900, %v1025
        %v1043 = vadd.f32 %v901, %v1030
        %v1044 = vld [vmem:[%s2] sm:$0x1]
        %v1046 = vlaneseq
        %v1047 = vshrl.u32 %v1046, 7
        %v1048 = vsub.s32 0, %v1047
        %v1049 = vrot.slane %v1044, %v1048
        %v1051 = vadd.f32 %v1035, %v1049
        %v1052 = vadd.f32 %v1036, %v1049
        %v1053 = vadd.f32 %v1037, %v1049
        %v1054 = vadd.f32 %v1038, %v1049
        %v1055 = vadd.f32 %v1039, %v1049
        %v1056 = vadd.f32 %v1040, %v1049
        %v1057 = vadd.f32 %v1041, %v1049
        %v1058 = vadd.f32 %v1042, %v1049
        %v1059 = vadd.f32 %v1043, %v1049
        %v1060 = vmax.f32 %v1051, 0.0
        %v1061 = vmax.f32 %v1052, 0.0
        %v1062 = vmax.f32 %v1053, 0.0
        %v1063 = vmax.f32 %v1054, 0.0
        %v1064 = vmax.f32 %v1055, 0.0
        %v1065 = vmax.f32 %v1056, 0.0
        %v1066 = vmax.f32 %v1057, 0.0
        %v1067 = vmax.f32 %v1058, 0.0
        %v1068 = vmax.f32 %v1059, 0.0
        %v1069 = vld [vmem:[%s491 + $0x1] sm:$0xff]
        %v1070 = vld [vmem:[%s491 + $0x9] sm:$0xff]
        %v1071 = vld [vmem:[%s491 + $0x11] sm:$0xff]
        %v1072 = vld [vmem:[%s491 + $0x19] sm:$0xff]
        %v1073 = vld [vmem:[%s491 + $0x21] sm:$0xff]
        %v1074 = vld [vmem:[%s491 + $0x29] sm:$0xff]
        %v1075 = vld [vmem:[%s491 + $0x31] sm:$0xff]
        %v1076 = vld [vmem:[%s491 + $0x39] sm:$0xff]
        %v1077 = vld [vmem:[%s491 + $0x41] sm:$0x7f]
        %v1078 = vpack.c.bf16 %v1070, %v1069
        %v1079 = vpack.c.bf16 %v1072, %v1071
        %v1080 = vpack.c.bf16 %v1074, %v1073
        %v1081 = vpack.c.bf16 %v1076, %v1075
        %v1082 = vpack.c.bf16 %v1077, %v1077
        %v1084 = vsel %vm561, %v1078, 0
        %v1087 = vsel %vm561, %v1079, 0
        %v1090 = vsel %vm561, %v1080, 0
        %v1093 = vsel %vm561, %v1081, 0
        %v1096 = vsel %vm561, %v1082, 0
        %1098 = vmatprep.subr.bf16.mxu0 0
        %1099 = vmatpush1.bf16.msra.mxu0 0
        %1100 = vmatprep.subr.bf16.mxu0 0
        %1101 = vmatpush1.bf16.msra.mxu0 0
        %1102 = vmatprep.subr.bf16.mxu0 0
        %1103 = vmatpush1.bf16.msra.mxu0 0
        %1104 = vmatprep.subr.bf16.mxu0 0
        %1105 = vmatpush1.bf16.msra.mxu0 0
        %1106 = vmatprep.subr.bf16.mxu0 0
        %1107 = vmatpush1.bf16.msra.mxu0 %v556
        %1108 = vmatprep.subr.bf16.mxu0 0
        %1109 = vmatpush1.bf16.msra.mxu0 %v555
        %1110 = vmatprep.subr.bf16.mxu0 0
        %1111 = vmatpush1.bf16.msra.mxu0 %v554
        %1112 = vmatprep.subr.bf16.mxu0 0
        %1113 = vmatpush1.bf16.msra.mxu0 %v553
        %1114 = vmatprep.subr.bf16.mxu0 0
        %1115 = vmatpush2.bf16.msra.mxu0 0
        %1116 = vmatprep.subr.bf16.mxu0 0
        %1117 = vmatpush2.bf16.msra.mxu0 0
        %1118 = vmatprep.subr.bf16.mxu0 0
        %1119 = vmatpush2.bf16.msra.mxu0 0
        %1120 = vmatprep.subr.bf16.mxu0 0
        %1121 = vmatpush2.bf16.msra.mxu0 0
        %1122 = vmatprep.subr.bf16.mxu0 0
        %1123 = vmatpush2.bf16.msra.mxu0 0
        %1124 = vmatprep.subr.bf16.mxu0 0
        %1125 = vmatpush2.bf16.msra.mxu0 0
        %1126 = vmatprep.subr.bf16.mxu0 0
        %1127 = vmatpush2.bf16.msra.mxu0 0
        %1128 = vmatprep.subr.bf16.mxu0 0
        %1129 = vmatpush2.bf16.msra.mxu0 0
        %1130 = vmatprep.mubr.bf16.mxu0 0
        %1131 = vmatmul.mubr.bf16.gmra.mxu0 %v1084
        %v1132 = vpop.f32.mrf.mxu0
        %v1133 = vadd.f32 0.0, %v1132
        %v1134 = vpop.f32.mrf.mxu0
        %v1135 = vpop.f32.mrf.mxu0
        %v1136 = vadd.f32 0.0, %v1135
        %v1137 = vpop.f32.mrf.mxu0
        %1138 = vmatprep.mubr.bf16.mxu0 0
        %1139 = vmatmul.mubr.bf16.gmra.mxu0 %v1087
        %v1140 = vpop.f32.mrf.mxu0
        %v1141 = vadd.f32 0.0, %v1140
        %v1142 = vpop.f32.mrf.mxu0
        %v1143 = vpop.f32.mrf.mxu0
        %v1144 = vadd.f32 0.0, %v1143
        %v1145 = vpop.f32.mrf.mxu0
        %1146 = vmatprep.mubr.bf16.mxu0 0
        %1147 = vmatmul.mubr.bf16.gmra.mxu0 %v1090
        %v1148 = vpop.f32.mrf.mxu0
        %v1149 = vadd.f32 0.0, %v1148
        %v1150 = vpop.f32.mrf.mxu0
        %v1151 = vpop.f32.mrf.mxu0
        %v1152 = vadd.f32 0.0, %v1151
        %v1153 = vpop.f32.mrf.mxu0
        %1154 = vmatprep.mubr.bf16.mxu0 0
        %1155 = vmatmul.mubr.bf16.gmra.mxu0 %v1093
        %v1156 = vpop.f32.mrf.mxu0
        %v1157 = vadd.f32 0.0, %v1156
        %v1158 = vpop.f32.mrf.mxu0
        %v1159 = vpop.f32.mrf.mxu0
        %v1160 = vadd.f32 0.0, %v1159
        %v1161 = vpop.f32.mrf.mxu0
        %1162 = vmatprep.mubr.bf16.mxu0 0
        %1163 = vmatmul.mubr.bf16.gmra.mxu0 %v1096
        %v1164 = vpop.f32.mrf.mxu0
        %v1165 = vadd.f32 0.0, %v1164
        %v1166 = vpop.f32.mrf.mxu0
        %v1167 = vpop.f32.mrf.mxu0
        %v1168 = vpop.f32.mrf.mxu0
        %1169 = vdwg.mxu0
        %1170 = vmatprep.subr.bf16.mxu0 0
        %1171 = vmatpush1.bf16.msra.mxu0 0
        %1172 = vmatprep.subr.bf16.mxu0 0
        %1173 = vmatpush1.bf16.msra.mxu0 0
        %1174 = vmatprep.subr.bf16.mxu0 0
        %1175 = vmatpush1.bf16.msra.mxu0 0
        %1176 = vmatprep.subr.bf16.mxu0 0
        %1177 = vmatpush1.bf16.msra.mxu0 0
        %1178 = vmatprep.subr.bf16.mxu0 0
        %1179 = vmatpush1.bf16.msra.mxu0 %v668
        %1180 = vmatprep.subr.bf16.mxu0 0
        %1181 = vmatpush1.bf16.msra.mxu0 %v667
        %1182 = vmatprep.subr.bf16.mxu0 0
        %1183 = vmatpush1.bf16.msra.mxu0 %v666
        %1184 = vmatprep.subr.bf16.mxu0 0
        %1185 = vmatpush1.bf16.msra.mxu0 %v665
        %1186 = vmatprep.subr.bf16.mxu0 0
        %1187 = vmatpush2.bf16.msra.mxu0 0
        %1188 = vmatprep.subr.bf16.mxu0 0
        %1189 = vmatpush2.bf16.msra.mxu0 0
        %1190 = vmatprep.subr.bf16.mxu0 0
        %1191 = vmatpush2.bf16.msra.mxu0 0
        %1192 = vmatprep.subr.bf16.mxu0 0
        %1193 = vmatpush2.bf16.msra.mxu0 0
        %1194 = vmatprep.subr.bf16.mxu0 0
        %1195 = vmatpush2.bf16.msra.mxu0 0
        %1196 = vmatprep.subr.bf16.mxu0 0
        %1197 = vmatpush2.bf16.msra.mxu0 0
        %1198 = vmatprep.subr.bf16.mxu0 0
        %1199 = vmatpush2.bf16.msra.mxu0 0
        %1200 = vmatprep.subr.bf16.mxu0 0
        %1201 = vmatpush2.bf16.msra.mxu0 0
        %1202 = vmatprep.mubr.bf16.mxu0 0
        %1203 = vmatmul.mubr.bf16.gmra.mxu0 %v563
        %v1204 = vpop.f32.mrf.mxu0
        %v1205 = vadd.f32 %v1133, %v1204
        %v1206 = vpop.f32.mrf.mxu0
        %v1207 = vpop.f32.mrf.mxu0
        %v1208 = vadd.f32 %v1136, %v1207
        %v1209 = vpop.f32.mrf.mxu0
        %1210 = vmatprep.mubr.bf16.mxu0 0
        %1211 = vmatmul.mubr.bf16.gmra.mxu0 %v566
        %v1212 = vpop.f32.mrf.mxu0
        %v1213 = vadd.f32 %v1141, %v1212
        %v1214 = vpop.f32.mrf.mxu0
        %v1215 = vpop.f32.mrf.mxu0
        %v1216 = vadd.f32 %v1144, %v1215
        %v1217 = vpop.f32.mrf.mxu0
        %1218 = vmatprep.mubr.bf16.mxu0 0
        %1219 = vmatmul.mubr.bf16.gmra.mxu0 %v569
        %v1220 = vpop.f32.mrf.mxu0
        %v1221 = vadd.f32 %v1149, %v1220
        %v1222 = vpop.f32.mrf.mxu0
        %v1223 = vpop.f32.mrf.mxu0
        %v1224 = vadd.f32 %v1152, %v1223
        %v1225 = vpop.f32.mrf.mxu0
        %1226 = vmatprep.mubr.bf16.mxu0 0
        %1227 = vmatmul.mubr.bf16.gmra.mxu0 %v572
        %v1228 = vpop.f32.mrf.mxu0
        %v1229 = vadd.f32 %v1157, %v1228
        %v1230 = vpop.f32.mrf.mxu0
        %v1231 = vpop.f32.mrf.mxu0
        %v1232 = vadd.f32 %v1160, %v1231
        %v1233 = vpop.f32.mrf.mxu0
        %1234 = vmatprep.mubr.bf16.mxu0 0
        %1235 = vmatmul.mubr.bf16.gmra.mxu0 %v575
        %v1236 = vpop.f32.mrf.mxu0
        %v1237 = vadd.f32 %v1165, %v1236
        %v1238 = vpop.f32.mrf.mxu0
        %v1239 = vpop.f32.mrf.mxu0
        %v1240 = vpop.f32.mrf.mxu0
        %1241 = vdwg.mxu0
        %1242 = vmatprep.subr.bf16.mxu0 0
        %1243 = vmatpush1.bf16.msra.mxu0 0
        %1244 = vmatprep.subr.bf16.mxu0 0
        %1245 = vmatpush1.bf16.msra.mxu0 0
        %1246 = vmatprep.subr.bf16.mxu0 0
        %1247 = vmatpush1.bf16.msra.mxu0 0
        %1248 = vmatprep.subr.bf16.mxu0 0
        %1249 = vmatpush1.bf16.msra.mxu0 0
        %1250 = vmatprep.subr.bf16.mxu0 0
        %1251 = vmatpush1.bf16.msra.mxu0 %v801
        %1252 = vmatprep.subr.bf16.mxu0 0
        %1253 = vmatpush1.bf16.msra.mxu0 %v800
        %1254 = vmatprep.subr.bf16.mxu0 0
        %1255 = vmatpush1.bf16.msra.mxu0 %v799
        %1256 = vmatprep.subr.bf16.mxu0 0
        %1257 = vmatpush1.bf16.msra.mxu0 %v798
        %1258 = vmatprep.subr.bf16.mxu0 0
        %1259 = vmatpush2.bf16.msra.mxu0 0
        %1260 = vmatprep.subr.bf16.mxu0 0
        %1261 = vmatpush2.bf16.msra.mxu0 0
        %1262 = vmatprep.subr.bf16.mxu0 0
        %1263 = vmatpush2.bf16.msra.mxu0 0
        %1264 = vmatprep.subr.bf16.mxu0 0
        %1265 = vmatpush2.bf16.msra.mxu0 0
        %1266 = vmatprep.subr.bf16.mxu0 0
        %1267 = vmatpush2.bf16.msra.mxu0 0
        %1268 = vmatprep.subr.bf16.mxu0 0
        %1269 = vmatpush2.bf16.msra.mxu0 0
        %1270 = vmatprep.subr.bf16.mxu0 0
        %1271 = vmatpush2.bf16.msra.mxu0 0
        %1272 = vmatprep.subr.bf16.mxu0 0
        %1273 = vmatpush2.bf16.msra.mxu0 0
        %1274 = vmatprep.mubr.bf16.mxu0 0
        %1275 = vmatmul.mubr.bf16.gmra.mxu0 %v949
        %v1276 = vpop.f32.mrf.mxu0
        %v1277 = vadd.f32 0.0, %v1276
        %v1278 = vpop.f32.mrf.mxu0
        %v1279 = vpop.f32.mrf.mxu0
        %v1280 = vadd.f32 0.0, %v1279
        %v1281 = vpop.f32.mrf.mxu0
        %1282 = vmatprep.mubr.bf16.mxu0 0
        %1283 = vmatmul.mubr.bf16.gmra.mxu0 %v952
        %v1284 = vpop.f32.mrf.mxu0
        %v1285 = vadd.f32 0.0, %v1284
        %v1286 = vpop.f32.mrf.mxu0
        %v1287 = vpop.f32.mrf.mxu0
        %v1288 = vadd.f32 0.0, %v1287
        %v1289 = vpop.f32.mrf.mxu0
        %1290 = vmatprep.mubr.bf16.mxu0 0
        %1291 = vmatmul.mubr.bf16.gmra.mxu0 %v955
        %v1292 = vpop.f32.mrf.mxu0
        %v1293 = vadd.f32 0.0, %v1292
        %v1294 = vpop.f32.mrf.mxu0
        %v1295 = vpop.f32.mrf.mxu0
        %v1296 = vadd.f32 0.0, %v1295
        %v1297 = vpop.f32.mrf.mxu0
        %1298 = vmatprep.mubr.bf16.mxu0 0
        %1299 = vmatmul.mubr.bf16.gmra.mxu0 %v958
        %v1300 = vpop.f32.mrf.mxu0
        %v1301 = vadd.f32 0.0, %v1300
        %v1302 = vpop.f32.mrf.mxu0
        %v1303 = vpop.f32.mrf.mxu0
        %v1304 = vadd.f32 0.0, %v1303
        %v1305 = vpop.f32.mrf.mxu0
        %1306 = vmatprep.mubr.bf16.mxu0 0
        %1307 = vmatmul.mubr.bf16.gmra.mxu0 %v961
        %v1308 = vpop.f32.mrf.mxu0
        %v1309 = vadd.f32 0.0, %v1308
        %v1310 = vpop.f32.mrf.mxu0
        %v1311 = vpop.f32.mrf.mxu0
        %v1312 = vpop.f32.mrf.mxu0
        %1313 = vdwg.mxu0
        %v1314 = vadd.f32 %v1205, %v1277
        %v1315 = vadd.f32 %v1208, %v1280
        %v1316 = vadd.f32 %v1213, %v1285
        %v1317 = vadd.f32 %v1216, %v1288
        %v1318 = vadd.f32 %v1221, %v1293
        %v1319 = vadd.f32 %v1224, %v1296
        %v1320 = vadd.f32 %v1229, %v1301
        %v1321 = vadd.f32 %v1232, %v1304
        %v1322 = vadd.f32 %v1237, %v1309
        %v1323 = vld [vmem:[%s491 + $0xa3] sm:$0xff]
        %v1324 = vld [vmem:[%s491 + $0xab] sm:$0xff]
        %v1325 = vld [vmem:[%s491 + $0xb3] sm:$0xff]
        %v1326 = vld [vmem:[%s491 + $0xbb] sm:$0xff]
        %v1327 = vld [vmem:[%s491 + $0xc3] sm:$0xff]
        %v1328 = vld [vmem:[%s491 + $0xcb] sm:$0xff]
        %v1329 = vld [vmem:[%s491 + $0xd3] sm:$0xff]
        %v1330 = vld [vmem:[%s491 + $0xdb] sm:$0xff]
        %v1331 = vld [vmem:[%s491 + $0xe3] sm:$0x7f]
        %v1332 = vpack.c.bf16 %v1324, %v1323
        %v1333 = vpack.c.bf16 %v1326, %v1325
        %v1334 = vpack.c.bf16 %v1328, %v1327
        %v1335 = vpack.c.bf16 %v1330, %v1329
        %v1336 = vpack.c.bf16 %v1331, %v1331
        %v1338 = vsel %vm561, %v1332, 0
        %v1341 = vsel %vm561, %v1333, 0
        %v1344 = vsel %vm561, %v1334, 0
        %v1347 = vsel %vm561, %v1335, 0
        %v1350 = vsel %vm561, %v1336, 0
        %1352 = vmatprep.subr.bf16.mxu0 0
        %1353 = vmatpush1.bf16.msra.mxu0 0
        %1354 = vmatprep.subr.bf16.mxu0 0
        %1355 = vmatpush1.bf16.msra.mxu0 0
        %1356 = vmatprep.subr.bf16.mxu0 0
        %1357 = vmatpush1.bf16.msra.mxu0 0
        %1358 = vmatprep.subr.bf16.mxu0 0
        %1359 = vmatpush1.bf16.msra.mxu0 0
        %1360 = vmatprep.subr.bf16.mxu0 0
        %1361 = vmatpush1.bf16.msra.mxu0 %v943
        %1362 = vmatprep.subr.bf16.mxu0 0
        %1363 = vmatpush1.bf16.msra.mxu0 %v942
        %1364 = vmatprep.subr.bf16.mxu0 0
        %1365 = vmatpush1.bf16.msra.mxu0 %v941
        %1366 = vmatprep.subr.bf16.mxu0 0
        %1367 = vmatpush1.bf16.msra.mxu0 %v940
        %1368 = vmatprep.subr.bf16.mxu0 0
        %1369 = vmatpush2.bf16.msra.mxu0 0
        %1370 = vmatprep.subr.bf16.mxu0 0
        %1371 = vmatpush2.bf16.msra.mxu0 0
        %1372 = vmatprep.subr.bf16.mxu0 0
        %1373 = vmatpush2.bf16.msra.mxu0 0
        %1374 = vmatprep.subr.bf16.mxu0 0
        %1375 = vmatpush2.bf16.msra.mxu0 0
        %1376 = vmatprep.subr.bf16.mxu0 0
        %1377 = vmatpush2.bf16.msra.mxu0 0
        %1378 = vmatprep.subr.bf16.mxu0 0
        %1379 = vmatpush2.bf16.msra.mxu0 0
        %1380 = vmatprep.subr.bf16.mxu0 0
        %1381 = vmatpush2.bf16.msra.mxu0 0
        %1382 = vmatprep.subr.bf16.mxu0 0
        %1383 = vmatpush2.bf16.msra.mxu0 0
        %1384 = vmatprep.mubr.bf16.mxu0 0
        %1385 = vmatmul.mubr.bf16.gmra.mxu0 %v1338
        %v1386 = vpop.f32.mrf.mxu0
        %v1387 = vadd.f32 0.0, %v1386
        %v1388 = vpop.f32.mrf.mxu0
        %v1389 = vpop.f32.mrf.mxu0
        %v1390 = vadd.f32 0.0, %v1389
        %v1391 = vpop.f32.mrf.mxu0
        %1392 = vmatprep.mubr.bf16.mxu0 0
        %1393 = vmatmul.mubr.bf16.gmra.mxu0 %v1341
        %v1394 = vpop.f32.mrf.mxu0
        %v1395 = vadd.f32 0.0, %v1394
        %v1396 = vpop.f32.mrf.mxu0
        %v1397 = vpop.f32.mrf.mxu0
        %v1398 = vadd.f32 0.0, %v1397
        %v1399 = vpop.f32.mrf.mxu0
        %1400 = vmatprep.mubr.bf16.mxu0 0
        %1401 = vmatmul.mubr.bf16.gmra.mxu0 %v1344
        %v1402 = vpop.f32.mrf.mxu0
        %v1403 = vadd.f32 0.0, %v1402
        %v1404 = vpop.f32.mrf.mxu0
        %v1405 = vpop.f32.mrf.mxu0
        %v1406 = vadd.f32 0.0, %v1405
        %v1407 = vpop.f32.mrf.mxu0
        %1408 = vmatprep.mubr.bf16.mxu0 0
        %1409 = vmatmul.mubr.bf16.gmra.mxu0 %v1347
        %v1410 = vpop.f32.mrf.mxu0
        %v1411 = vadd.f32 0.0, %v1410
        %v1412 = vpop.f32.mrf.mxu0
        %v1413 = vpop.f32.mrf.mxu0
        %v1414 = vadd.f32 0.0, %v1413
        %v1415 = vpop.f32.mrf.mxu0
        %1416 = vmatprep.mubr.bf16.mxu0 0
        %1417 = vmatmul.mubr.bf16.gmra.mxu0 %v1350
        %v1418 = vpop.f32.mrf.mxu0
        %v1419 = vadd.f32 0.0, %v1418
        %v1420 = vpop.f32.mrf.mxu0
        %v1421 = vpop.f32.mrf.mxu0
        %v1422 = vpop.f32.mrf.mxu0
        %1423 = vdwg.mxu0
        %v1424 = vadd.f32 %v1314, %v1387
        %v1425 = vadd.f32 %v1315, %v1390
        %v1426 = vadd.f32 %v1316, %v1395
        %v1427 = vadd.f32 %v1317, %v1398
        %v1428 = vadd.f32 %v1318, %v1403
        %v1429 = vadd.f32 %v1319, %v1406
        %v1430 = vadd.f32 %v1320, %v1411
        %v1431 = vadd.f32 %v1321, %v1414
        %v1432 = vadd.f32 %v1322, %v1419
        %v1433 = vadd.f32 %v1424, %v1049
        %v1434 = vadd.f32 %v1425, %v1049
        %v1435 = vadd.f32 %v1426, %v1049
        %v1436 = vadd.f32 %v1427, %v1049
        %v1437 = vadd.f32 %v1428, %v1049
        %v1438 = vadd.f32 %v1429, %v1049
        %v1439 = vadd.f32 %v1430, %v1049
        %v1440 = vadd.f32 %v1431, %v1049
        %v1441 = vadd.f32 %v1432, %v1049
        %v1442 = vmax.f32 %v1433, 0.0
        %v1443 = vmax.f32 %v1434, 0.0
        %v1444 = vmax.f32 %v1435, 0.0
        %v1445 = vmax.f32 %v1436, 0.0
        %v1446 = vmax.f32 %v1437, 0.0
        %v1447 = vmax.f32 %v1438, 0.0
        %v1448 = vmax.f32 %v1439, 0.0
        %v1449 = vmax.f32 %v1440, 0.0
        %v1450 = vmax.f32 %v1441, 0.0
        %1451 = vmatprep.subr.bf16.mxu0 0
        %1452 = vmatpush1.bf16.msra.mxu0 0
        %1453 = vmatprep.subr.bf16.mxu0 0
        %1454 = vmatpush1.bf16.msra.mxu0 0
        %1455 = vmatprep.subr.bf16.mxu0 0
        %1456 = vmatpush1.bf16.msra.mxu0 0
        %1457 = vmatprep.subr.bf16.mxu0 0
        %1458 = vmatpush1.bf16.msra.mxu0 0
        %1459 = vmatprep.subr.bf16.mxu0 0
        %1460 = vmatpush1.bf16.msra.mxu0 %v556
        %1461 = vmatprep.subr.bf16.mxu0 0
        %1462 = vmatpush1.bf16.msra.mxu0 %v555
        %1463 = vmatprep.subr.bf16.mxu0 0
        %1464 = vmatpush1.bf16.msra.mxu0 %v554
        %1465 = vmatprep.subr.bf16.mxu0 0
        %1466 = vmatpush1.bf16.msra.mxu0 %v553
        %1467 = vmatprep.subr.bf16.mxu0 0
        %1468 = vmatpush2.bf16.msra.mxu0 0
        %1469 = vmatprep.subr.bf16.mxu0 0
        %1470 = vmatpush2.bf16.msra.mxu0 0
        %1471 = vmatprep.subr.bf16.mxu0 0
        %1472 = vmatpush2.bf16.msra.mxu0 0
        %1473 = vmatprep.subr.bf16.mxu0 0
        %1474 = vmatpush2.bf16.msra.mxu0 0
        %1475 = vmatprep.subr.bf16.mxu0 0
        %1476 = vmatpush2.bf16.msra.mxu0 0
        %1477 = vmatprep.subr.bf16.mxu0 0
        %1478 = vmatpush2.bf16.msra.mxu0 0
        %1479 = vmatprep.subr.bf16.mxu0 0
        %1480 = vmatpush2.bf16.msra.mxu0 0
        %1481 = vmatprep.subr.bf16.mxu0 0
        %1482 = vmatpush2.bf16.msra.mxu0 0
        %1483 = vmatprep.mubr.bf16.mxu0 0
        %1484 = vmatmul.mubr.bf16.gmra.mxu0 %v949
        %v1485 = vpop.f32.mrf.mxu0
        %v1486 = vadd.f32 0.0, %v1485
        %v1487 = vpop.f32.mrf.mxu0
        %v1488 = vpop.f32.mrf.mxu0
        %v1489 = vadd.f32 0.0, %v1488
        %v1490 = vpop.f32.mrf.mxu0
        %1491 = vmatprep.mubr.bf16.mxu0 0
        %1492 = vmatmul.mubr.bf16.gmra.mxu0 %v952
        %v1493 = vpop.f32.mrf.mxu0
        %v1494 = vadd.f32 0.0, %v1493
        %v1495 = vpop.f32.mrf.mxu0
        %v1496 = vpop.f32.mrf.mxu0
        %v1497 = vadd.f32 0.0, %v1496
        %v1498 = vpop.f32.mrf.mxu0
        %1499 = vmatprep.mubr.bf16.mxu0 0
        %1500 = vmatmul.mubr.bf16.gmra.mxu0 %v955
        %v1501 = vpop.f32.mrf.mxu0
        %v1502 = vadd.f32 0.0, %v1501
        %v1503 = vpop.f32.mrf.mxu0
        %v1504 = vpop.f32.mrf.mxu0
        %v1505 = vadd.f32 0.0, %v1504
        %v1506 = vpop.f32.mrf.mxu0
        %1507 = vmatprep.mubr.bf16.mxu0 0
        %1508 = vmatmul.mubr.bf16.gmra.mxu0 %v958
        %v1509 = vpop.f32.mrf.mxu0
        %v1510 = vadd.f32 0.0, %v1509
        %v1511 = vpop.f32.mrf.mxu0
        %v1512 = vpop.f32.mrf.mxu0
        %v1513 = vadd.f32 0.0, %v1512
        %v1514 = vpop.f32.mrf.mxu0
        %1515 = vmatprep.mubr.bf16.mxu0 0
        %1516 = vmatmul.mubr.bf16.gmra.mxu0 %v961
        %v1517 = vpop.f32.mrf.mxu0
        %v1518 = vadd.f32 0.0, %v1517
        %v1519 = vpop.f32.mrf.mxu0
        %v1520 = vpop.f32.mrf.mxu0
        %v1521 = vpop.f32.mrf.mxu0
        %1522 = vdwg.mxu0
        %1523 = vmatprep.subr.bf16.mxu0 0
        %1524 = vmatpush1.bf16.msra.mxu0 0
        %1525 = vmatprep.subr.bf16.mxu0 0
        %1526 = vmatpush1.bf16.msra.mxu0 0
        %1527 = vmatprep.subr.bf16.mxu0 0
        %1528 = vmatpush1.bf16.msra.mxu0 0
        %1529 = vmatprep.subr.bf16.mxu0 0
        %1530 = vmatpush1.bf16.msra.mxu0 0
        %1531 = vmatprep.subr.bf16.mxu0 0
        %1532 = vmatpush1.bf16.msra.mxu0 %v668
        %1533 = vmatprep.subr.bf16.mxu0 0
        %1534 = vmatpush1.bf16.msra.mxu0 %v667
        %1535 = vmatprep.subr.bf16.mxu0 0
        %1536 = vmatpush1.bf16.msra.mxu0 %v666
        %1537 = vmatprep.subr.bf16.mxu0 0
        %1538 = vmatpush1.bf16.msra.mxu0 %v665
        %1539 = vmatprep.subr.bf16.mxu0 0
        %1540 = vmatpush2.bf16.msra.mxu0 0
        %1541 = vmatprep.subr.bf16.mxu0 0
        %1542 = vmatpush2.bf16.msra.mxu0 0
        %1543 = vmatprep.subr.bf16.mxu0 0
        %1544 = vmatpush2.bf16.msra.mxu0 0
        %1545 = vmatprep.subr.bf16.mxu0 0
        %1546 = vmatpush2.bf16.msra.mxu0 0
        %1547 = vmatprep.subr.bf16.mxu0 0
        %1548 = vmatpush2.bf16.msra.mxu0 0
        %1549 = vmatprep.subr.bf16.mxu0 0
        %1550 = vmatpush2.bf16.msra.mxu0 0
        %1551 = vmatprep.subr.bf16.mxu0 0
        %1552 = vmatpush2.bf16.msra.mxu0 0
        %1553 = vmatprep.subr.bf16.mxu0 0
        %1554 = vmatpush2.bf16.msra.mxu0 0
        %1555 = vmatprep.mubr.bf16.mxu0 0
        %1556 = vmatmul.mubr.bf16.gmra.mxu0 %v807
        %v1557 = vpop.f32.mrf.mxu0
        %v1558 = vadd.f32 %v1486, %v1557
        %v1559 = vpop.f32.mrf.mxu0
        %v1560 = vpop.f32.mrf.mxu0
        %v1561 = vadd.f32 %v1489, %v1560
        %v1562 = vpop.f32.mrf.mxu0
        %1563 = vmatprep.mubr.bf16.mxu0 0
        %1564 = vmatmul.mubr.bf16.gmra.mxu0 %v810
        %v1565 = vpop.f32.mrf.mxu0
        %v1566 = vadd.f32 %v1494, %v1565
        %v1567 = vpop.f32.mrf.mxu0
        %v1568 = vpop.f32.mrf.mxu0
        %v1569 = vadd.f32 %v1497, %v1568
        %v1570 = vpop.f32.mrf.mxu0
        %1571 = vmatprep.mubr.bf16.mxu0 0
        %1572 = vmatmul.mubr.bf16.gmra.mxu0 %v813
        %v1573 = vpop.f32.mrf.mxu0
        %v1574 = vadd.f32 %v1502, %v1573
        %v1575 = vpop.f32.mrf.mxu0
        %v1576 = vpop.f32.mrf.mxu0
        %v1577 = vadd.f32 %v1505, %v1576
        %v1578 = vpop.f32.mrf.mxu0
        %1579 = vmatprep.mubr.bf16.mxu0 0
        %1580 = vmatmul.mubr.bf16.gmra.mxu0 %v816
        %v1581 = vpop.f32.mrf.mxu0
        %v1582 = vadd.f32 %v1510, %v1581
        %v1583 = vpop.f32.mrf.mxu0
        %v1584 = vpop.f32.mrf.mxu0
        %v1585 = vadd.f32 %v1513, %v1584
        %v1586 = vpop.f32.mrf.mxu0
        %1587 = vmatprep.mubr.bf16.mxu0 0
        %1588 = vmatmul.mubr.bf16.gmra.mxu0 %v819
        %v1589 = vpop.f32.mrf.mxu0
        %v1590 = vadd.f32 %v1518, %v1589
        %v1591 = vpop.f32.mrf.mxu0
        %v1592 = vpop.f32.mrf.mxu0
        %v1593 = vpop.f32.mrf.mxu0
        %1594 = vdwg.mxu0
        %v1595 = vld [vmem:[%s491 + $0x9] sm:$0xff]
        %v1596 = vld [vmem:[%s491 + $0x11] sm:$0xff]
        %v1597 = vld [vmem:[%s491 + $0x19] sm:$0xff]
        %v1598 = vld [vmem:[%s491 + $0x21] sm:$0xff]
        %v1599 = vld [vmem:[%s491 + $0x29] sm:$0xff]
        %v1600 = vld [vmem:[%s491 + $0x31] sm:$0xff]
        %v1601 = vld [vmem:[%s491 + $0x39] sm:$0xff]
        %v1602 = vld [vmem:[%s491 + $0x41] sm:$0xff]
        %v1603 = vld [vmem:[%s491 + $0x49] sm:$0x7f]
        %v1604 = vpack.c.bf16 %v1596, %v1595
        %v1605 = vpack.c.bf16 %v1598, %v1597
        %v1606 = vpack.c.bf16 %v1600, %v1599
        %v1607 = vpack.c.bf16 %v1602, %v1601
        %v1608 = vpack.c.bf16 %v1603, %v1603
        %v1610 = vsel %vm561, %v1604, 0
        %v1613 = vsel %vm561, %v1605, 0
        %v1616 = vsel %vm561, %v1606, 0
        %v1619 = vsel %vm561, %v1607, 0
        %v1622 = vsel %vm561, %v1608, 0
        %1624 = vmatprep.subr.bf16.mxu0 0
        %1625 = vmatpush1.bf16.msra.mxu0 0
        %1626 = vmatprep.subr.bf16.mxu0 0
        %1627 = vmatpush1.bf16.msra.mxu0 0
        %1628 = vmatprep.subr.bf16.mxu0 0
        %1629 = vmatpush1.bf16.msra.mxu0 0
        %1630 = vmatprep.subr.bf16.mxu0 0
        %1631 = vmatpush1.bf16.msra.mxu0 0
        %1632 = vmatprep.subr.bf16.mxu0 0
        %1633 = vmatpush1.bf16.msra.mxu0 %v801
        %1634 = vmatprep.subr.bf16.mxu0 0
        %1635 = vmatpush1.bf16.msra.mxu0 %v800
        %1636 = vmatprep.subr.bf16.mxu0 0
        %1637 = vmatpush1.bf16.msra.mxu0 %v799
        %1638 = vmatprep.subr.bf16.mxu0 0
        %1639 = vmatpush1.bf16.msra.mxu0 %v798
        %1640 = vmatprep.subr.bf16.mxu0 0
        %1641 = vmatpush2.bf16.msra.mxu0 0
        %1642 = vmatprep.subr.bf16.mxu0 0
        %1643 = vmatpush2.bf16.msra.mxu0 0
        %1644 = vmatprep.subr.bf16.mxu0 0
        %1645 = vmatpush2.bf16.msra.mxu0 0
        %1646 = vmatprep.subr.bf16.mxu0 0
        %1647 = vmatpush2.bf16.msra.mxu0 0
        %1648 = vmatprep.subr.bf16.mxu0 0
        %1649 = vmatpush2.bf16.msra.mxu0 0
        %1650 = vmatprep.subr.bf16.mxu0 0
        %1651 = vmatpush2.bf16.msra.mxu0 0
        %1652 = vmatprep.subr.bf16.mxu0 0
        %1653 = vmatpush2.bf16.msra.mxu0 0
        %1654 = vmatprep.subr.bf16.mxu0 0
        %1655 = vmatpush2.bf16.msra.mxu0 0
        %1656 = vmatprep.mubr.bf16.mxu0 0
        %1657 = vmatmul.mubr.bf16.gmra.mxu0 %v1610
        %v1658 = vpop.f32.mrf.mxu0
        %v1659 = vadd.f32 0.0, %v1658
        %v1660 = vpop.f32.mrf.mxu0
        %v1661 = vpop.f32.mrf.mxu0
        %v1662 = vadd.f32 0.0, %v1661
        %v1663 = vpop.f32.mrf.mxu0
        %1664 = vmatprep.mubr.bf16.mxu0 0
        %1665 = vmatmul.mubr.bf16.gmra.mxu0 %v1613
        %v1666 = vpop.f32.mrf.mxu0
        %v1667 = vadd.f32 0.0, %v1666
        %v1668 = vpop.f32.mrf.mxu0
        %v1669 = vpop.f32.mrf.mxu0
        %v1670 = vadd.f32 0.0, %v1669
        %v1671 = vpop.f32.mrf.mxu0
        %1672 = vmatprep.mubr.bf16.mxu0 0
        %1673 = vmatmul.mubr.bf16.gmra.mxu0 %v1616
        %v1674 = vpop.f32.mrf.mxu0
        %v1675 = vadd.f32 0.0, %v1674
        %v1676 = vpop.f32.mrf.mxu0
        %v1677 = vpop.f32.mrf.mxu0
        %v1678 = vadd.f32 0.0, %v1677
        %v1679 = vpop.f32.mrf.mxu0
        %1680 = vmatprep.mubr.bf16.mxu0 0
        %1681 = vmatmul.mubr.bf16.gmra.mxu0 %v1619
        %v1682 = vpop.f32.mrf.mxu0
        %v1683 = vadd.f32 0.0, %v1682
        %v1684 = vpop.f32.mrf.mxu0
        %v1685 = vpop.f32.mrf.mxu0
        %v1686 = vadd.f32 0.0, %v1685
        %v1687 = vpop.f32.mrf.mxu0
        %1688 = vmatprep.mubr.bf16.mxu0 0
        %1689 = vmatmul.mubr.bf16.gmra.mxu0 %v1622
        %v1690 = vpop.f32.mrf.mxu0
        %v1691 = vadd.f32 0.0, %v1690
        %v1692 = vpop.f32.mrf.mxu0
        %v1693 = vpop.f32.mrf.mxu0
        %v1694 = vpop.f32.mrf.mxu0
        %1695 = vdwg.mxu0
        %v1696 = vadd.f32 %v1558, %v1659
        %v1697 = vadd.f32 %v1561, %v1662
        %v1698 = vadd.f32 %v1566, %v1667
        %v1699 = vadd.f32 %v1569, %v1670
        %v1700 = vadd.f32 %v1574, %v1675
        %v1701 = vadd.f32 %v1577, %v1678
        %v1702 = vadd.f32 %v1582, %v1683
        %v1703 = vadd.f32 %v1585, %v1686
        %v1704 = vadd.f32 %v1590, %v1691
        %v1705 = vld [vmem:[%s491 + $0x5a] sm:$0xff]
        %v1706 = vld [vmem:[%s491 + $0x62] sm:$0xff]
        %v1707 = vld [vmem:[%s491 + $0x6a] sm:$0xff]
        %v1708 = vld [vmem:[%s491 + $0x72] sm:$0xff]
        %v1709 = vld [vmem:[%s491 + $0x7a] sm:$0xff]
        %v1710 = vld [vmem:[%s491 + $0x82] sm:$0xff]
        %v1711 = vld [vmem:[%s491 + $0x8a] sm:$0xff]
        %v1712 = vld [vmem:[%s491 + $0x92] sm:$0xff]
        %v1713 = vld [vmem:[%s491 + $0x9a] sm:$0x7f]
        %v1714 = vpack.c.bf16 %v1706, %v1705
        %v1715 = vpack.c.bf16 %v1708, %v1707
        %v1716 = vpack.c.bf16 %v1710, %v1709
        %v1717 = vpack.c.bf16 %v1712, %v1711
        %v1718 = vpack.c.bf16 %v1713, %v1713
        %v1720 = vsel %vm561, %v1714, 0
        %v1723 = vsel %vm561, %v1715, 0
        %v1726 = vsel %vm561, %v1716, 0
        %v1729 = vsel %vm561, %v1717, 0
        %v1732 = vsel %vm561, %v1718, 0
        %1734 = vmatprep.subr.bf16.mxu0 0
        %1735 = vmatpush1.bf16.msra.mxu0 0
        %1736 = vmatprep.subr.bf16.mxu0 0
        %1737 = vmatpush1.bf16.msra.mxu0 0
        %1738 = vmatprep.subr.bf16.mxu0 0
        %1739 = vmatpush1.bf16.msra.mxu0 0
        %1740 = vmatprep.subr.bf16.mxu0 0
        %1741 = vmatpush1.bf16.msra.mxu0 0
        %1742 = vmatprep.subr.bf16.mxu0 0
        %1743 = vmatpush1.bf16.msra.mxu0 %v943
        %1744 = vmatprep.subr.bf16.mxu0 0
        %1745 = vmatpush1.bf16.msra.mxu0 %v942
        %1746 = vmatprep.subr.bf16.mxu0 0
        %1747 = vmatpush1.bf16.msra.mxu0 %v941
        %1748 = vmatprep.subr.bf16.mxu0 0
        %1749 = vmatpush1.bf16.msra.mxu0 %v940
        %1750 = vmatprep.subr.bf16.mxu0 0
        %1751 = vmatpush2.bf16.msra.mxu0 0
        %1752 = vmatprep.subr.bf16.mxu0 0
        %1753 = vmatpush2.bf16.msra.mxu0 0
        %1754 = vmatprep.subr.bf16.mxu0 0
        %1755 = vmatpush2.bf16.msra.mxu0 0
        %1756 = vmatprep.subr.bf16.mxu0 0
        %1757 = vmatpush2.bf16.msra.mxu0 0
        %1758 = vmatprep.subr.bf16.mxu0 0
        %1759 = vmatpush2.bf16.msra.mxu0 0
        %1760 = vmatprep.subr.bf16.mxu0 0
        %1761 = vmatpush2.bf16.msra.mxu0 0
        %1762 = vmatprep.subr.bf16.mxu0 0
        %1763 = vmatpush2.bf16.msra.mxu0 0
        %1764 = vmatprep.subr.bf16.mxu0 0
        %1765 = vmatpush2.bf16.msra.mxu0 0
        %1766 = vmatprep.mubr.bf16.mxu0 0
        %1767 = vmatmul.mubr.bf16.gmra.mxu0 %v1720
        %v1768 = vpop.f32.mrf.mxu0
        %v1769 = vadd.f32 0.0, %v1768
        %v1770 = vpop.f32.mrf.mxu0
        %v1771 = vpop.f32.mrf.mxu0
        %v1772 = vadd.f32 0.0, %v1771
        %v1773 = vpop.f32.mrf.mxu0
        %1774 = vmatprep.mubr.bf16.mxu0 0
        %1775 = vmatmul.mubr.bf16.gmra.mxu0 %v1723
        %v1776 = vpop.f32.mrf.mxu0
        %v1777 = vadd.f32 0.0, %v1776
        %v1778 = vpop.f32.mrf.mxu0
        %v1779 = vpop.f32.mrf.mxu0
        %v1780 = vadd.f32 0.0, %v1779
        %v1781 = vpop.f32.mrf.mxu0
        %1782 = vmatprep.mubr.bf16.mxu0 0
        %1783 = vmatmul.mubr.bf16.gmra.mxu0 %v1726
        %v1784 = vpop.f32.mrf.mxu0
        %v1785 = vadd.f32 0.0, %v1784
        %v1786 = vpop.f32.mrf.mxu0
        %v1787 = vpop.f32.mrf.mxu0
        %v1788 = vadd.f32 0.0, %v1787
        %v1789 = vpop.f32.mrf.mxu0
        %1790 = vmatprep.mubr.bf16.mxu0 0
        %1791 = vmatmul.mubr.bf16.gmra.mxu0 %v1729
        %v1792 = vpop.f32.mrf.mxu0
        %v1793 = vadd.f32 0.0, %v1792
        %v1794 = vpop.f32.mrf.mxu0
        %v1795 = vpop.f32.mrf.mxu0
        %v1796 = vadd.f32 0.0, %v1795
        %v1797 = vpop.f32.mrf.mxu0
        %1798 = vmatprep.mubr.bf16.mxu0 0
        %1799 = vmatmul.mubr.bf16.gmra.mxu0 %v1732
        %v1800 = vpop.f32.mrf.mxu0
        %v1801 = vadd.f32 0.0, %v1800
        %v1802 = vpop.f32.mrf.mxu0
        %v1803 = vpop.f32.mrf.mxu0
        %v1804 = vpop.f32.mrf.mxu0
        %1805 = vdwg.mxu0
        %v1806 = vadd.f32 %v1696, %v1769
        %v1807 = vadd.f32 %v1697, %v1772
        %v1808 = vadd.f32 %v1698, %v1777
        %v1809 = vadd.f32 %v1699, %v1780
        %v1810 = vadd.f32 %v1700, %v1785
        %v1811 = vadd.f32 %v1701, %v1788
        %v1812 = vadd.f32 %v1702, %v1793
        %v1813 = vadd.f32 %v1703, %v1796
        %v1814 = vadd.f32 %v1704, %v1801
        %v1815 = vadd.f32 %v1806, %v1049
        %v1816 = vadd.f32 %v1807, %v1049
        %v1817 = vadd.f32 %v1808, %v1049
        %v1818 = vadd.f32 %v1809, %v1049
        %v1819 = vadd.f32 %v1810, %v1049
        %v1820 = vadd.f32 %v1811, %v1049
        %v1821 = vadd.f32 %v1812, %v1049
        %v1822 = vadd.f32 %v1813, %v1049
        %v1823 = vadd.f32 %v1814, %v1049
        %v1824 = vmax.f32 %v1815, 0.0
        %v1825 = vmax.f32 %v1816, 0.0
        %v1826 = vmax.f32 %v1817, 0.0
        %v1827 = vmax.f32 %v1818, 0.0
        %v1828 = vmax.f32 %v1819, 0.0
        %v1829 = vmax.f32 %v1820, 0.0
        %v1830 = vmax.f32 %v1821, 0.0
        %v1831 = vmax.f32 %v1822, 0.0
        %v1832 = vmax.f32 %v1823, 0.0
        %1833 = vmatprep.subr.bf16.mxu0 0
        %1834 = vmatpush1.bf16.msra.mxu0 0
        %1835 = vmatprep.subr.bf16.mxu0 0
        %1836 = vmatpush1.bf16.msra.mxu0 0
        %1837 = vmatprep.subr.bf16.mxu0 0
        %1838 = vmatpush1.bf16.msra.mxu0 0
        %1839 = vmatprep.subr.bf16.mxu0 0
        %1840 = vmatpush1.bf16.msra.mxu0 0
        %1841 = vmatprep.subr.bf16.mxu0 0
        %1842 = vmatpush1.bf16.msra.mxu0 %v556
        %1843 = vmatprep.subr.bf16.mxu0 0
        %1844 = vmatpush1.bf16.msra.mxu0 %v555
        %1845 = vmatprep.subr.bf16.mxu0 0
        %1846 = vmatpush1.bf16.msra.mxu0 %v554
        %1847 = vmatprep.subr.bf16.mxu0 0
        %1848 = vmatpush1.bf16.msra.mxu0 %v553
        %1849 = vmatprep.subr.bf16.mxu0 0
        %1850 = vmatpush2.bf16.msra.mxu0 0
        %1851 = vmatprep.subr.bf16.mxu0 0
        %1852 = vmatpush2.bf16.msra.mxu0 0
        %1853 = vmatprep.subr.bf16.mxu0 0
        %1854 = vmatpush2.bf16.msra.mxu0 0
        %1855 = vmatprep.subr.bf16.mxu0 0
        %1856 = vmatpush2.bf16.msra.mxu0 0
        %1857 = vmatprep.subr.bf16.mxu0 0
        %1858 = vmatpush2.bf16.msra.mxu0 0
        %1859 = vmatprep.subr.bf16.mxu0 0
        %1860 = vmatpush2.bf16.msra.mxu0 0
        %1861 = vmatprep.subr.bf16.mxu0 0
        %1862 = vmatpush2.bf16.msra.mxu0 0
        %1863 = vmatprep.subr.bf16.mxu0 0
        %1864 = vmatpush2.bf16.msra.mxu0 0
        %1865 = vmatprep.mubr.bf16.mxu0 0
        %1866 = vmatmul.mubr.bf16.gmra.mxu0 %v1338
        %v1867 = vpop.f32.mrf.mxu0
        %v1868 = vadd.f32 0.0, %v1867
        %v1869 = vpop.f32.mrf.mxu0
        %v1870 = vpop.f32.mrf.mxu0
        %v1871 = vadd.f32 0.0, %v1870
        %v1872 = vpop.f32.mrf.mxu0
        %1873 = vmatprep.mubr.bf16.mxu0 0
        %1874 = vmatmul.mubr.bf16.gmra.mxu0 %v1341
        %v1875 = vpop.f32.mrf.mxu0
        %v1876 = vadd.f32 0.0, %v1875
        %v1877 = vpop.f32.mrf.mxu0
        %v1878 = vpop.f32.mrf.mxu0
        %v1879 = vadd.f32 0.0, %v1878
        %v1880 = vpop.f32.mrf.mxu0
        %1881 = vmatprep.mubr.bf16.mxu0 0
        %1882 = vmatmul.mubr.bf16.gmra.mxu0 %v1344
        %v1883 = vpop.f32.mrf.mxu0
        %v1884 = vadd.f32 0.0, %v1883
        %v1885 = vpop.f32.mrf.mxu0
        %v1886 = vpop.f32.mrf.mxu0
        %v1887 = vadd.f32 0.0, %v1886
        %v1888 = vpop.f32.mrf.mxu0
        %1889 = vmatprep.mubr.bf16.mxu0 0
        %1890 = vmatmul.mubr.bf16.gmra.mxu0 %v1347
        %v1891 = vpop.f32.mrf.mxu0
        %v1892 = vadd.f32 0.0, %v1891
        %v1893 = vpop.f32.mrf.mxu0
        %v1894 = vpop.f32.mrf.mxu0
        %v1895 = vadd.f32 0.0, %v1894
        %v1896 = vpop.f32.mrf.mxu0
        %1897 = vmatprep.mubr.bf16.mxu0 0
        %1898 = vmatmul.mubr.bf16.gmra.mxu0 %v1350
        %v1899 = vpop.f32.mrf.mxu0
        %v1900 = vadd.f32 0.0, %v1899
        %v1901 = vpop.f32.mrf.mxu0
        %v1902 = vpop.f32.mrf.mxu0
        %v1903 = vpop.f32.mrf.mxu0
        %1904 = vdwg.mxu0
        %1905 = vmatprep.subr.bf16.mxu0 0
        %1906 = vmatpush1.bf16.msra.mxu0 0
        %1907 = vmatprep.subr.bf16.mxu0 0
        %1908 = vmatpush1.bf16.msra.mxu0 0
        %1909 = vmatprep.subr.bf16.mxu0 0
        %1910 = vmatpush1.bf16.msra.mxu0 0
        %1911 = vmatprep.subr.bf16.mxu0 0
        %1912 = vmatpush1.bf16.msra.mxu0 0
        %1913 = vmatprep.subr.bf16.mxu0 0
        %1914 = vmatpush1.bf16.msra.mxu0 %v668
        %1915 = vmatprep.subr.bf16.mxu0 0
        %1916 = vmatpush1.bf16.msra.mxu0 %v667
        %1917 = vmatprep.subr.bf16.mxu0 0
        %1918 = vmatpush1.bf16.msra.mxu0 %v666
        %1919 = vmatprep.subr.bf16.mxu0 0
        %1920 = vmatpush1.bf16.msra.mxu0 %v665
        %1921 = vmatprep.subr.bf16.mxu0 0
        %1922 = vmatpush2.bf16.msra.mxu0 0
        %1923 = vmatprep.subr.bf16.mxu0 0
        %1924 = vmatpush2.bf16.msra.mxu0 0
        %1925 = vmatprep.subr.bf16.mxu0 0
        %1926 = vmatpush2.bf16.msra.mxu0 0
        %1927 = vmatprep.subr.bf16.mxu0 0
        %1928 = vmatpush2.bf16.msra.mxu0 0
        %1929 = vmatprep.subr.bf16.mxu0 0
        %1930 = vmatpush2.bf16.msra.mxu0 0
        %1931 = vmatprep.subr.bf16.mxu0 0
        %1932 = vmatpush2.bf16.msra.mxu0 0
        %1933 = vmatprep.subr.bf16.mxu0 0
        %1934 = vmatpush2.bf16.msra.mxu0 0
        %1935 = vmatprep.subr.bf16.mxu0 0
        %1936 = vmatpush2.bf16.msra.mxu0 0
        %1937 = vmatprep.mubr.bf16.mxu0 0
        %1938 = vmatmul.mubr.bf16.gmra.mxu0 %v949
        %v1939 = vpop.f32.mrf.mxu0
        %v1940 = vadd.f32 %v1868, %v1939
        %v1941 = vpop.f32.mrf.mxu0
        %v1942 = vpop.f32.mrf.mxu0
        %v1943 = vadd.f32 %v1871, %v1942
        %v1944 = vpop.f32.mrf.mxu0
        %1945 = vmatprep.mubr.bf16.mxu0 0
        %1946 = vmatmul.mubr.bf16.gmra.mxu0 %v952
        %v1947 = vpop.f32.mrf.mxu0
        %v1948 = vadd.f32 %v1876, %v1947
        %v1949 = vpop.f32.mrf.mxu0
        %v1950 = vpop.f32.mrf.mxu0
        %v1951 = vadd.f32 %v1879, %v1950
        %v1952 = vpop.f32.mrf.mxu0
        %1953 = vmatprep.mubr.bf16.mxu0 0
        %1954 = vmatmul.mubr.bf16.gmra.mxu0 %v955
        %v1955 = vpop.f32.mrf.mxu0
        %v1956 = vadd.f32 %v1884, %v1955
        %v1957 = vpop.f32.mrf.mxu0
        %v1958 = vpop.f32.mrf.mxu0
        %v1959 = vadd.f32 %v1887, %v1958
        %v1960 = vpop.f32.mrf.mxu0
        %1961 = vmatprep.mubr.bf16.mxu0 0
        %1962 = vmatmul.mubr.bf16.gmra.mxu0 %v958
        %v1963 = vpop.f32.mrf.mxu0
        %v1964 = vadd.f32 %v1892, %v1963
        %v1965 = vpop.f32.mrf.mxu0
        %v1966 = vpop.f32.mrf.mxu0
        %v1967 = vadd.f32 %v1895, %v1966
        %v1968 = vpop.f32.mrf.mxu0
        %1969 = vmatprep.mubr.bf16.mxu0 0
        %1970 = vmatmul.mubr.bf16.gmra.mxu0 %v961
        %v1971 = vpop.f32.mrf.mxu0
        %v1972 = vadd.f32 %v1900, %v1971
        %v1973 = vpop.f32.mrf.mxu0
        %v1974 = vpop.f32.mrf.mxu0
        %v1975 = vpop.f32.mrf.mxu0
        %1976 = vdwg.mxu0
        %1977 = vmatprep.subr.bf16.mxu0 0
        %1978 = vmatpush1.bf16.msra.mxu0 0
        %1979 = vmatprep.subr.bf16.mxu0 0
        %1980 = vmatpush1.bf16.msra.mxu0 0
        %1981 = vmatprep.subr.bf16.mxu0 0
        %1982 = vmatpush1.bf16.msra.mxu0 0
        %1983 = vmatprep.subr.bf16.mxu0 0
        %1984 = vmatpush1.bf16.msra.mxu0 0
        %1985 = vmatprep.subr.bf16.mxu0 0
        %1986 = vmatpush1.bf16.msra.mxu0 %v801
        %1987 = vmatprep.subr.bf16.mxu0 0
        %1988 = vmatpush1.bf16.msra.mxu0 %v800
        %1989 = vmatprep.subr.bf16.mxu0 0
        %1990 = vmatpush1.bf16.msra.mxu0 %v799
        %1991 = vmatprep.subr.bf16.mxu0 0
        %1992 = vmatpush1.bf16.msra.mxu0 %v798
        %1993 = vmatprep.subr.bf16.mxu0 0
        %1994 = vmatpush2.bf16.msra.mxu0 0
        %1995 = vmatprep.subr.bf16.mxu0 0
        %1996 = vmatpush2.bf16.msra.mxu0 0
        %1997 = vmatprep.subr.bf16.mxu0 0
        %1998 = vmatpush2.bf16.msra.mxu0 0
        %1999 = vmatprep.subr.bf16.mxu0 0
        %2000 = vmatpush2.bf16.msra.mxu0 0
        %2001 = vmatprep.subr.bf16.mxu0 0
        %2002 = vmatpush2.bf16.msra.mxu0 0
        %2003 = vmatprep.subr.bf16.mxu0 0
        %2004 = vmatpush2.bf16.msra.mxu0 0
        %2005 = vmatprep.subr.bf16.mxu0 0
        %2006 = vmatpush2.bf16.msra.mxu0 0
        %2007 = vmatprep.subr.bf16.mxu0 0
        %2008 = vmatpush2.bf16.msra.mxu0 0
        %2009 = vmatprep.mubr.bf16.mxu0 0
        %2010 = vmatmul.mubr.bf16.gmra.mxu0 %v1720
        %v2011 = vpop.f32.mrf.mxu0
        %v2012 = vadd.f32 0.0, %v2011
        %v2013 = vpop.f32.mrf.mxu0
        %v2014 = vpop.f32.mrf.mxu0
        %v2015 = vadd.f32 0.0, %v2014
        %v2016 = vpop.f32.mrf.mxu0
        %2017 = vmatprep.mubr.bf16.mxu0 0
        %2018 = vmatmul.mubr.bf16.gmra.mxu0 %v1723
        %v2019 = vpop.f32.mrf.mxu0
        %v2020 = vadd.f32 0.0, %v2019
        %v2021 = vpop.f32.mrf.mxu0
        %v2022 = vpop.f32.mrf.mxu0
        %v2023 = vadd.f32 0.0, %v2022
        %v2024 = vpop.f32.mrf.mxu0
        %2025 = vmatprep.mubr.bf16.mxu0 0
        %2026 = vmatmul.mubr.bf16.gmra.mxu0 %v1726
        %v2027 = vpop.f32.mrf.mxu0
        %v2028 = vadd.f32 0.0, %v2027
        %v2029 = vpop.f32.mrf.mxu0
        %v2030 = vpop.f32.mrf.mxu0
        %v2031 = vadd.f32 0.0, %v2030
        %v2032 = vpop.f32.mrf.mxu0
        %2033 = vmatprep.mubr.bf16.mxu0 0
        %2034 = vmatmul.mubr.bf16.gmra.mxu0 %v1729
        %v2035 = vpop.f32.mrf.mxu0
        %v2036 = vadd.f32 0.0, %v2035
        %v2037 = vpop.f32.mrf.mxu0
        %v2038 = vpop.f32.mrf.mxu0
        %v2039 = vadd.f32 0.0, %v2038
        %v2040 = vpop.f32.mrf.mxu0
        %2041 = vmatprep.mubr.bf16.mxu0 0
        %2042 = vmatmul.mubr.bf16.gmra.mxu0 %v1732
        %v2043 = vpop.f32.mrf.mxu0
        %v2044 = vadd.f32 0.0, %v2043
        %v2045 = vpop.f32.mrf.mxu0
        %v2046 = vpop.f32.mrf.mxu0
        %v2047 = vpop.f32.mrf.mxu0
        %2048 = vdwg.mxu0
        %v2049 = vadd.f32 %v1940, %v2012
        %v2050 = vadd.f32 %v1943, %v2015
        %v2051 = vadd.f32 %v1948, %v2020
        %v2052 = vadd.f32 %v1951, %v2023
        %v2053 = vadd.f32 %v1956, %v2028
        %v2054 = vadd.f32 %v1959, %v2031
        %v2055 = vadd.f32 %v1964, %v2036
        %v2056 = vadd.f32 %v1967, %v2039
        %v2057 = vadd.f32 %v1972, %v2044
        %v2058 = vld [vmem:[%s491 + $0xa] sm:$0xff]
        %v2059 = vld [vmem:[%s491 + $0x12] sm:$0xff]
        %v2060 = vld [vmem:[%s491 + $0x1a] sm:$0xff]
        %v2061 = vld [vmem:[%s491 + $0x22] sm:$0xff]
        %v2062 = vld [vmem:[%s491 + $0x2a] sm:$0xff]
        %v2063 = vld [vmem:[%s491 + $0x32] sm:$0xff]
        %v2064 = vld [vmem:[%s491 + $0x3a] sm:$0xff]
        %v2065 = vld [vmem:[%s491 + $0x42] sm:$0xff]
        %v2066 = vld [vmem:[%s491 + $0x4a] sm:$0x7f]
        %v2067 = vpack.c.bf16 %v2059, %v2058
        %v2068 = vpack.c.bf16 %v2061, %v2060
        %v2069 = vpack.c.bf16 %v2063, %v2062
        %v2070 = vpack.c.bf16 %v2065, %v2064
        %v2071 = vpack.c.bf16 %v2066, %v2066
        %v2073 = vsel %vm561, %v2067, 0
        %v2076 = vsel %vm561, %v2068, 0
        %v2079 = vsel %vm561, %v2069, 0
        %v2082 = vsel %vm561, %v2070, 0
        %v2085 = vsel %vm561, %v2071, 0
        %2087 = vmatprep.subr.bf16.mxu0 0
        %2088 = vmatpush1.bf16.msra.mxu0 0
        %2089 = vmatprep.subr.bf16.mxu0 0
        %2090 = vmatpush1.bf16.msra.mxu0 0
        %2091 = vmatprep.subr.bf16.mxu0 0
        %2092 = vmatpush1.bf16.msra.mxu0 0
        %2093 = vmatprep.subr.bf16.mxu0 0
        %2094 = vmatpush1.bf16.msra.mxu0 0
        %2095 = vmatprep.subr.bf16.mxu0 0
        %2096 = vmatpush1.bf16.msra.mxu0 %v943
        %2097 = vmatprep.subr.bf16.mxu0 0
        %2098 = vmatpush1.bf16.msra.mxu0 %v942
        %2099 = vmatprep.subr.bf16.mxu0 0
        %2100 = vmatpush1.bf16.msra.mxu0 %v941
        %2101 = vmatprep.subr.bf16.mxu0 0
        %2102 = vmatpush1.bf16.msra.mxu0 %v940
        %2103 = vmatprep.subr.bf16.mxu0 0
        %2104 = vmatpush2.bf16.msra.mxu0 0
        %2105 = vmatprep.subr.bf16.mxu0 0
        %2106 = vmatpush2.bf16.msra.mxu0 0
        %2107 = vmatprep.subr.bf16.mxu0 0
        %2108 = vmatpush2.bf16.msra.mxu0 0
        %2109 = vmatprep.subr.bf16.mxu0 0
        %2110 = vmatpush2.bf16.msra.mxu0 0
        %2111 = vmatprep.subr.bf16.mxu0 0
        %2112 = vmatpush2.bf16.msra.mxu0 0
        %2113 = vmatprep.subr.bf16.mxu0 0
        %2114 = vmatpush2.bf16.msra.mxu0 0
        %2115 = vmatprep.subr.bf16.mxu0 0
        %2116 = vmatpush2.bf16.msra.mxu0 0
        %2117 = vmatprep.subr.bf16.mxu0 0
        %2118 = vmatpush2.bf16.msra.mxu0 0
        %2119 = vmatprep.mubr.bf16.mxu0 0
        %2120 = vmatmul.mubr.bf16.gmra.mxu0 %v2073
        %v2121 = vpop.f32.mrf.mxu0
        %v2122 = vadd.f32 0.0, %v2121
        %v2123 = vpop.f32.mrf.mxu0
        %v2124 = vpop.f32.mrf.mxu0
        %v2125 = vadd.f32 0.0, %v2124
        %v2126 = vpop.f32.mrf.mxu0
        %2127 = vmatprep.mubr.bf16.mxu0 0
        %2128 = vmatmul.mubr.bf16.gmra.mxu0 %v2076
        %v2129 = vpop.f32.mrf.mxu0
        %v2130 = vadd.f32 0.0, %v2129
        %v2131 = vpop.f32.mrf.mxu0
        %v2132 = vpop.f32.mrf.mxu0
        %v2133 = vadd.f32 0.0, %v2132
        %v2134 = vpop.f32.mrf.mxu0
        %2135 = vmatprep.mubr.bf16.mxu0 0
        %2136 = vmatmul.mubr.bf16.gmra.mxu0 %v2079
        %v2137 = vpop.f32.mrf.mxu0
        %v2138 = vadd.f32 0.0, %v2137
        %v2139 = vpop.f32.mrf.mxu0
        %v2140 = vpop.f32.mrf.mxu0
        %v2141 = vadd.f32 0.0, %v2140
        %v2142 = vpop.f32.mrf.mxu0
        %2143 = vmatprep.mubr.bf16.mxu0 0
        %2144 = vmatmul.mubr.bf16.gmra.mxu0 %v2082
        %v2145 = vpop.f32.mrf.mxu0
        %v2146 = vadd.f32 0.0, %v2145
        %v2147 = vpop.f32.mrf.mxu0
        %v2148 = vpop.f32.mrf.mxu0
        %v2149 = vadd.f32 0.0, %v2148
        %v2150 = vpop.f32.mrf.mxu0
        %2151 = vmatprep.mubr.bf16.mxu0 0
        %2152 = vmatmul.mubr.bf16.gmra.mxu0 %v2085
        %v2153 = vpop.f32.mrf.mxu0
        %v2154 = vadd.f32 0.0, %v2153
        %v2155 = vpop.f32.mrf.mxu0
        %v2156 = vpop.f32.mrf.mxu0
        %v2157 = vpop.f32.mrf.mxu0
        %2158 = vdwg.mxu0
        %v2159 = vadd.f32 %v2049, %v2122
        %v2160 = vadd.f32 %v2050, %v2125
        %v2161 = vadd.f32 %v2051, %v2130
        %v2162 = vadd.f32 %v2052, %v2133
        %v2163 = vadd.f32 %v2053, %v2138
        %v2164 = vadd.f32 %v2054, %v2141
        %v2165 = vadd.f32 %v2055, %v2146
        %v2166 = vadd.f32 %v2056, %v2149
        %v2167 = vadd.f32 %v2057, %v2154
        %v2168 = vadd.f32 %v2159, %v1049
        %v2169 = vadd.f32 %v2160, %v1049
        %v2170 = vadd.f32 %v2161, %v1049
        %v2171 = vadd.f32 %v2162, %v1049
        %v2172 = vadd.f32 %v2163, %v1049
        %v2173 = vadd.f32 %v2164, %v1049
        %v2174 = vadd.f32 %v2165, %v1049
        %v2175 = vadd.f32 %v2166, %v1049
        %v2176 = vadd.f32 %v2167, %v1049
        %v2177 = vmax.f32 %v2168, 0.0
        %v2178 = vmax.f32 %v2169, 0.0
        %v2179 = vmax.f32 %v2170, 0.0
        %v2180 = vmax.f32 %v2171, 0.0
        %v2181 = vmax.f32 %v2172, 0.0
        %v2182 = vmax.f32 %v2173, 0.0
        %v2183 = vmax.f32 %v2174, 0.0
        %v2184 = vmax.f32 %v2175, 0.0
        %v2185 = vmax.f32 %v2176, 0.0
        %v2186 = vld [vmem:[%s3] sm:$0xf]
        %v2187 = vld [vmem:[%s3 + $0x4] sm:$0xf]
        %v2188 = vld [vmem:[%s3 + $0x8] sm:$0xf]
        %v2189 = vld [vmem:[%s3 + $0xc] sm:$0xf]
        %v2190 = vpack.c.bf16 %v1061, %v1060
        %v2191 = vpack.c.bf16 %v1063, %v1062
        %v2192 = vpack.c.bf16 %v1065, %v1064
        %v2193 = vpack.c.bf16 %v1067, %v1066
        %v2194 = vld [vmem:[%s3 + $0x20] sm:$0xf]
        %v2195 = vld [vmem:[%s3 + $0x24] sm:$0xf]
        %v2196 = vld [vmem:[%s3 + $0x28] sm:$0xf]
        %v2197 = vld [vmem:[%s3 + $0x2c] sm:$0xf]
        %vm2198 = vsmask.f32 7424
        %v2200 = vshrl.u32 %v2190, 16
        %v2202 = vshll.u32 %v2190, 16
        %v2204 = vrot.slane %v2202, 1
        %v2205 = vor.u32 %v2200, %v2204
        %v2207 = vshll.u32 %v2191, 16
        %v2209 = vrot.slane %v2207, 1
        %v2210 = vsel %vm2198, %v2205, %v2209
        %v2211 = vshrl.u32 %v2191, 16
        %v2213 = vor.u32 %v2211, %v2209
        %v2215 = vshll.u32 %v2192, 16
        %v2217 = vrot.slane %v2215, 1
        %v2218 = vsel %vm2198, %v2213, %v2217
        %v2219 = vshrl.u32 %v2192, 16
        %v2221 = vor.u32 %v2219, %v2217
        %v2223 = vshll.u32 %v2193, 16
        %v2225 = vrot.slane %v2223, 1
        %v2226 = vsel %vm2198, %v2221, %v2225
        %v2227 = vshrl.u32 %v2193, 16
        %v2229 = vor.u32 %v2227, %v2225
        %v2234 = vunpack.c.l.b16 %v2194
        %v2235 = vunpack.c.l.b16 %v2195
        %v2236 = vunpack.c.l.b16 %v2196
        %v2237 = vunpack.c.l.b16 %v2197
        %v2238 = vpack.c.b16 %v2235, %v2234
        %v2239 = vpack.c.b16 %v2237, %v2236
        %vm2242 = vcmask 261120
        %v2244 = vsel %vm2242, %v2210, 0
        %v2247 = vsel %vm2242, %v2218, 0
        %v2250 = vsel %vm2242, %v2226, 0
        %v2253 = vsel %vm2242, %v2229, 0
        %2255 = vmatprep.subr.bf16.mxu0 0
        %2256 = vmatpush1.bf16.msra.mxu0 0
        %2257 = vmatprep.subr.bf16.mxu0 0
        %2258 = vmatpush1.bf16.msra.mxu0 0
        %2259 = vmatprep.subr.bf16.mxu0 0
        %2260 = vmatpush1.bf16.msra.mxu0 0
        %2261 = vmatprep.subr.bf16.mxu0 0
        %2262 = vmatpush1.bf16.msra.mxu0 0
        %2263 = vmatprep.subr.bf16.mxu0 0
        %2264 = vmatpush1.bf16.msra.mxu0 0
        %2265 = vmatprep.subr.bf16.mxu0 0
        %2266 = vmatpush1.bf16.msra.mxu0 0
        %2267 = vmatprep.subr.bf16.mxu0 0
        %2268 = vmatpush1.bf16.msra.mxu0 %v2239
        %2269 = vmatprep.subr.bf16.mxu0 0
        %2270 = vmatpush1.bf16.msra.mxu0 %v2238
        %2271 = vmatprep.subr.bf16.mxu0 0
        %2272 = vmatpush2.bf16.msra.mxu0 0
        %2273 = vmatprep.subr.bf16.mxu0 0
        %2274 = vmatpush2.bf16.msra.mxu0 0
        %2275 = vmatprep.subr.bf16.mxu0 0
        %2276 = vmatpush2.bf16.msra.mxu0 0
        %2277 = vmatprep.subr.bf16.mxu0 0
        %2278 = vmatpush2.bf16.msra.mxu0 0
        %2279 = vmatprep.subr.bf16.mxu0 0
        %2280 = vmatpush2.bf16.msra.mxu0 0
        %2281 = vmatprep.subr.bf16.mxu0 0
        %2282 = vmatpush2.bf16.msra.mxu0 0
        %2283 = vmatprep.subr.bf16.mxu0 0
        %2284 = vmatpush2.bf16.msra.mxu0 0
        %2285 = vmatprep.subr.bf16.mxu0 0
        %2286 = vmatpush2.bf16.msra.mxu0 0
        %2287 = vmatprep.mubr.bf16.mxu0 0
        %2288 = vmatmul.mubr.bf16.gmra.mxu0 %v2244
        %v2289 = vpop.f32.mrf.mxu0
        %v2290 = vadd.f32 0.0, %v2289
        %v2291 = vpop.f32.mrf.mxu0
        %v2292 = vpop.f32.mrf.mxu0
        %v2293 = vadd.f32 0.0, %v2292
        %v2294 = vpop.f32.mrf.mxu0
        %2295 = vmatprep.mubr.bf16.mxu0 0
        %2296 = vmatmul.mubr.bf16.gmra.mxu0 %v2247
        %v2297 = vpop.f32.mrf.mxu0
        %v2298 = vadd.f32 0.0, %v2297
        %v2299 = vpop.f32.mrf.mxu0
        %v2300 = vpop.f32.mrf.mxu0
        %v2301 = vadd.f32 0.0, %v2300
        %v2302 = vpop.f32.mrf.mxu0
        %2303 = vmatprep.mubr.bf16.mxu0 0
        %2304 = vmatmul.mubr.bf16.gmra.mxu0 %v2250
        %v2305 = vpop.f32.mrf.mxu0
        %v2306 = vadd.f32 0.0, %v2305
        %v2307 = vpop.f32.mrf.mxu0
        %v2308 = vpop.f32.mrf.mxu0
        %v2309 = vadd.f32 0.0, %v2308
        %v2310 = vpop.f32.mrf.mxu0
        %2311 = vmatprep.mubr.bf16.mxu0 0
        %2312 = vmatmul.mubr.bf16.gmra.mxu0 %v2253
        %v2313 = vpop.f32.mrf.mxu0
        %v2314 = vadd.f32 0.0, %v2313
        %v2315 = vpop.f32.mrf.mxu0
        %v2316 = vpop.f32.mrf.mxu0
        %v2317 = vadd.f32 0.0, %v2316
        %v2318 = vpop.f32.mrf.mxu0
        %2319 = vdwg.mxu0
        %v2324 = vunpack.c.l.b16 %v2186
        %v2325 = vunpack.c.l.b16 %v2187
        %v2326 = vunpack.c.l.b16 %v2188
        %v2327 = vunpack.c.l.b16 %v2189
        %v2328 = vpack.c.b16 %v2325, %v2324
        %v2329 = vpack.c.b16 %v2327, %v2326
        %v2332 = vsel %vm2242, %v2190, 0
        %v2334 = vsel %vm2242, %v2191, 0
        %v2336 = vsel %vm2242, %v2192, 0
        %v2338 = vsel %vm2242, %v2193, 0
        %2340 = vmatprep.subr.bf16.mxu0 0
        %2341 = vmatpush1.bf16.msra.mxu0 0
        %2342 = vmatprep.subr.bf16.mxu0 0
        %2343 = vmatpush1.bf16.msra.mxu0 0
        %2344 = vmatprep.subr.bf16.mxu0 0
        %2345 = vmatpush1.bf16.msra.mxu0 0
        %2346 = vmatprep.subr.bf16.mxu0 0
        %2347 = vmatpush1.bf16.msra.mxu0 0
        %2348 = vmatprep.subr.bf16.mxu0 0
        %2349 = vmatpush1.bf16.msra.mxu0 0
        %2350 = vmatprep.subr.bf16.mxu0 0
        %2351 = vmatpush1.bf16.msra.mxu0 0
        %2352 = vmatprep.subr.bf16.mxu0 0
        %2353 = vmatpush1.bf16.msra.mxu0 %v2329
        %2354 = vmatprep.subr.bf16.mxu0 0
        %2355 = vmatpush1.bf16.msra.mxu0 %v2328
        %2356 = vmatprep.subr.bf16.mxu0 0
        %2357 = vmatpush2.bf16.msra.mxu0 0
        %2358 = vmatprep.subr.bf16.mxu0 0
        %2359 = vmatpush2.bf16.msra.mxu0 0
        %2360 = vmatprep.subr.bf16.mxu0 0
        %2361 = vmatpush2.bf16.msra.mxu0 0
        %2362 = vmatprep.subr.bf16.mxu0 0
        %2363 = vmatpush2.bf16.msra.mxu0 0
        %2364 = vmatprep.subr.bf16.mxu0 0
        %2365 = vmatpush2.bf16.msra.mxu0 0
        %2366 = vmatprep.subr.bf16.mxu0 0
        %2367 = vmatpush2.bf16.msra.mxu0 0
        %2368 = vmatprep.subr.bf16.mxu0 0
        %2369 = vmatpush2.bf16.msra.mxu0 0
        %2370 = vmatprep.subr.bf16.mxu0 0
        %2371 = vmatpush2.bf16.msra.mxu0 0
        %2372 = vmatprep.mubr.bf16.mxu0 0
        %2373 = vmatmul.mubr.bf16.gmra.mxu0 %v2332
        %v2374 = vpop.f32.mrf.mxu0
        %v2375 = vadd.f32 %v2290, %v2374
        %v2376 = vpop.f32.mrf.mxu0
        %v2377 = vpop.f32.mrf.mxu0
        %v2378 = vadd.f32 %v2293, %v2377
        %v2379 = vpop.f32.mrf.mxu0
        %2380 = vmatprep.mubr.bf16.mxu0 0
        %2381 = vmatmul.mubr.bf16.gmra.mxu0 %v2334
        %v2382 = vpop.f32.mrf.mxu0
        %v2383 = vadd.f32 %v2298, %v2382
        %v2384 = vpop.f32.mrf.mxu0
        %v2385 = vpop.f32.mrf.mxu0
        %v2386 = vadd.f32 %v2301, %v2385
        %v2387 = vpop.f32.mrf.mxu0
        %2388 = vmatprep.mubr.bf16.mxu0 0
        %2389 = vmatmul.mubr.bf16.gmra.mxu0 %v2336
        %v2390 = vpop.f32.mrf.mxu0
        %v2391 = vadd.f32 %v2306, %v2390
        %v2392 = vpop.f32.mrf.mxu0
        %v2393 = vpop.f32.mrf.mxu0
        %v2394 = vadd.f32 %v2309, %v2393
        %v2395 = vpop.f32.mrf.mxu0
        %2396 = vmatprep.mubr.bf16.mxu0 0
        %2397 = vmatmul.mubr.bf16.gmra.mxu0 %v2338
        %v2398 = vpop.f32.mrf.mxu0
        %v2399 = vadd.f32 %v2314, %v2398
        %v2400 = vpop.f32.mrf.mxu0
        %v2401 = vpop.f32.mrf.mxu0
        %v2402 = vadd.f32 %v2317, %v2401
        %v2403 = vpop.f32.mrf.mxu0
        %2404 = vdwg.mxu0
        %v2405 = vld [vmem:[%s3 + $0x80] sm:$0xf]
        %v2406 = vld [vmem:[%s3 + $0x84] sm:$0xf]
        %v2407 = vld [vmem:[%s3 + $0x88] sm:$0xf]
        %v2408 = vld [vmem:[%s3 + $0x8c] sm:$0xf]
        %v2409 = vpack.c.bf16 %v1062, %v1061
        %v2410 = vpack.c.bf16 %v1064, %v1063
        %v2411 = vpack.c.bf16 %v1066, %v1065
        %v2412 = vpack.c.bf16 %v1068, %v1067
        %v2414 = vshrl.u32 %v2409, 16
        %v2416 = vshll.u32 %v2409, 16
        %v2418 = vrot.slane %v2416, 1
        %v2419 = vor.u32 %v2414, %v2418
        %v2421 = vshll.u32 %v2410, 16
        %v2423 = vrot.slane %v2421, 1
        %v2424 = vsel %vm2198, %v2419, %v2423
        %v2425 = vshrl.u32 %v2410, 16
        %v2427 = vor.u32 %v2425, %v2423
        %v2429 = vshll.u32 %v2411, 16
        %v2431 = vrot.slane %v2429, 1
        %v2432 = vsel %vm2198, %v2427, %v2431
        %v2433 = vshrl.u32 %v2411, 16
        %v2435 = vor.u32 %v2433, %v2431
        %v2437 = vshll.u32 %v2412, 16
        %v2439 = vrot.slane %v2437, 1
        %v2440 = vsel %vm2198, %v2435, %v2439
        %v2441 = vshrl.u32 %v2412, 16
        %v2443 = vor.u32 %v2441, %v2439
        %v2448 = vunpack.c.l.b16 %v2405
        %v2449 = vunpack.c.l.b16 %v2406
        %v2450 = vunpack.c.l.b16 %v2407
        %v2451 = vunpack.c.l.b16 %v2408
        %v2452 = vpack.c.b16 %v2449, %v2448
        %v2453 = vpack.c.b16 %v2451, %v2450
        %v2457 = vsel %vm2242, %v2424, 0
        %v2460 = vsel %vm2242, %v2432, 0
        %v2463 = vsel %vm2242, %v2440, 0
        %v2466 = vsel %vm2242, %v2443, 0
        %2468 = vmatprep.subr.bf16.mxu0 0
        %2469 = vmatpush1.bf16.msra.mxu0 0
        %2470 = vmatprep.subr.bf16.mxu0 0
        %2471 = vmatpush1.bf16.msra.mxu0 0
        %2472 = vmatprep.subr.bf16.mxu0 0
        %2473 = vmatpush1.bf16.msra.mxu0 0
        %2474 = vmatprep.subr.bf16.mxu0 0
        %2475 = vmatpush1.bf16.msra.mxu0 0
        %2476 = vmatprep.subr.bf16.mxu0 0
        %2477 = vmatpush1.bf16.msra.mxu0 0
        %2478 = vmatprep.subr.bf16.mxu0 0
        %2479 = vmatpush1.bf16.msra.mxu0 0
        %2480 = vmatprep.subr.bf16.mxu0 0
        %2481 = vmatpush1.bf16.msra.mxu0 %v2453
        %2482 = vmatprep.subr.bf16.mxu0 0
        %2483 = vmatpush1.bf16.msra.mxu0 %v2452
        %2484 = vmatprep.subr.bf16.mxu0 0
        %2485 = vmatpush2.bf16.msra.mxu0 0
        %2486 = vmatprep.subr.bf16.mxu0 0
        %2487 = vmatpush2.bf16.msra.mxu0 0
        %2488 = vmatprep.subr.bf16.mxu0 0
        %2489 = vmatpush2.bf16.msra.mxu0 0
        %2490 = vmatprep.subr.bf16.mxu0 0
        %2491 = vmatpush2.bf16.msra.mxu0 0
        %2492 = vmatprep.subr.bf16.mxu0 0
        %2493 = vmatpush2.bf16.msra.mxu0 0
        %2494 = vmatprep.subr.bf16.mxu0 0
        %2495 = vmatpush2.bf16.msra.mxu0 0
        %2496 = vmatprep.subr.bf16.mxu0 0
        %2497 = vmatpush2.bf16.msra.mxu0 0
        %2498 = vmatprep.subr.bf16.mxu0 0
        %2499 = vmatpush2.bf16.msra.mxu0 0
        %2500 = vmatprep.mubr.bf16.mxu0 0
        %2501 = vmatmul.mubr.bf16.gmra.mxu0 %v2457
        %v2502 = vpop.f32.mrf.mxu0
        %v2503 = vadd.f32 0.0, %v2502
        %v2504 = vpop.f32.mrf.mxu0
        %v2505 = vpop.f32.mrf.mxu0
        %v2506 = vadd.f32 0.0, %v2505
        %v2507 = vpop.f32.mrf.mxu0
        %2508 = vmatprep.mubr.bf16.mxu0 0
        %2509 = vmatmul.mubr.bf16.gmra.mxu0 %v2460
        %v2510 = vpop.f32.mrf.mxu0
        %v2511 = vadd.f32 0.0, %v2510
        %v2512 = vpop.f32.mrf.mxu0
        %v2513 = vpop.f32.mrf.mxu0
        %v2514 = vadd.f32 0.0, %v2513
        %v2515 = vpop.f32.mrf.mxu0
        %2516 = vmatprep.mubr.bf16.mxu0 0
        %2517 = vmatmul.mubr.bf16.gmra.mxu0 %v2463
        %v2518 = vpop.f32.mrf.mxu0
        %v2519 = vadd.f32 0.0, %v2518
        %v2520 = vpop.f32.mrf.mxu0
        %v2521 = vpop.f32.mrf.mxu0
        %v2522 = vadd.f32 0.0, %v2521
        %v2523 = vpop.f32.mrf.mxu0
        %2524 = vmatprep.mubr.bf16.mxu0 0
        %2525 = vmatmul.mubr.bf16.gmra.mxu0 %v2466
        %v2526 = vpop.f32.mrf.mxu0
        %v2527 = vadd.f32 0.0, %v2526
        %v2528 = vpop.f32.mrf.mxu0
        %v2529 = vpop.f32.mrf.mxu0
        %v2530 = vadd.f32 0.0, %v2529
        %v2531 = vpop.f32.mrf.mxu0
        %2532 = vdwg.mxu0
        %v2533 = vadd.f32 %v2375, %v2503
        %v2534 = vadd.f32 %v2378, %v2506
        %v2535 = vadd.f32 %v2383, %v2511
        %v2536 = vadd.f32 %v2386, %v2514
        %v2537 = vadd.f32 %v2391, %v2519
        %v2538 = vadd.f32 %v2394, %v2522
        %v2539 = vadd.f32 %v2399, %v2527
        %v2540 = vadd.f32 %v2402, %v2530
        %v2541 = vld [vmem:[%s3 + $0xa0] sm:$0xf]
        %v2542 = vld [vmem:[%s3 + $0xa4] sm:$0xf]
        %v2543 = vld [vmem:[%s3 + $0xa8] sm:$0xf]
        %v2544 = vld [vmem:[%s3 + $0xac] sm:$0xf]
        %vm2549 = vcmask 1046528
        %v2550 = vrot.slane %v2409, 1
        %v2551 = vrot.slane %v2410, 1
        %v2552 = vsel %vm2549, %v2550, %v2551
        %v2553 = vrot.slane %v2411, 1
        %v2554 = vsel %vm2549, %v2551, %v2553
        %v2555 = vrot.slane %v2412, 1
        %v2556 = vsel %vm2549, %v2553, %v2555
        %v2561 = vunpack.c.l.b16 %v2541
        %v2562 = vunpack.c.l.b16 %v2542
        %v2563 = vunpack.c.l.b16 %v2543
        %v2564 = vunpack.c.l.b16 %v2544
        %v2565 = vpack.c.b16 %v2562, %v2561
        %v2566 = vpack.c.b16 %v2564, %v2563
        %v2570 = vsel %vm2242, %v2552, 0
        %v2573 = vsel %vm2242, %v2554, 0
        %v2576 = vsel %vm2242, %v2556, 0
        %v2579 = vsel %vm2242, %v2555, 0
        %2581 = vmatprep.subr.bf16.mxu0 0
        %2582 = vmatpush1.bf16.msra.mxu0 0
        %2583 = vmatprep.subr.bf16.mxu0 0
        %2584 = vmatpush1.bf16.msra.mxu0 0
        %2585 = vmatprep.subr.bf16.mxu0 0
        %2586 = vmatpush1.bf16.msra.mxu0 0
        %2587 = vmatprep.subr.bf16.mxu0 0
        %2588 = vmatpush1.bf16.msra.mxu0 0
        %2589 = vmatprep.subr.bf16.mxu0 0
        %2590 = vmatpush1.bf16.msra.mxu0 0
        %2591 = vmatprep.subr.bf16.mxu0 0
        %2592 = vmatpush1.bf16.msra.mxu0 0
        %2593 = vmatprep.subr.bf16.mxu0 0
        %2594 = vmatpush1.bf16.msra.mxu0 %v2566
        %2595 = vmatprep.subr.bf16.mxu0 0
        %2596 = vmatpush1.bf16.msra.mxu0 %v2565
        %2597 = vmatprep.subr.bf16.mxu0 0
        %2598 = vmatpush2.bf16.msra.mxu0 0
        %2599 = vmatprep.subr.bf16.mxu0 0
        %2600 = vmatpush2.bf16.msra.mxu0 0
        %2601 = vmatprep.subr.bf16.mxu0 0
        %2602 = vmatpush2.bf16.msra.mxu0 0
        %2603 = vmatprep.subr.bf16.mxu0 0
        %2604 = vmatpush2.bf16.msra.mxu0 0
        %2605 = vmatprep.subr.bf16.mxu0 0
        %2606 = vmatpush2.bf16.msra.mxu0 0
        %2607 = vmatprep.subr.bf16.mxu0 0
        %2608 = vmatpush2.bf16.msra.mxu0 0
        %2609 = vmatprep.subr.bf16.mxu0 0
        %2610 = vmatpush2.bf16.msra.mxu0 0
        %2611 = vmatprep.subr.bf16.mxu0 0
        %2612 = vmatpush2.bf16.msra.mxu0 0
        %2613 = vmatprep.mubr.bf16.mxu0 0
        %2614 = vmatmul.mubr.bf16.gmra.mxu0 %v2570
        %v2615 = vpop.f32.mrf.mxu0
        %v2616 = vadd.f32 0.0, %v2615
        %v2617 = vpop.f32.mrf.mxu0
        %v2618 = vpop.f32.mrf.mxu0
        %v2619 = vadd.f32 0.0, %v2618
        %v2620 = vpop.f32.mrf.mxu0
        %2621 = vmatprep.mubr.bf16.mxu0 0
        %2622 = vmatmul.mubr.bf16.gmra.mxu0 %v2573
        %v2623 = vpop.f32.mrf.mxu0
        %v2624 = vadd.f32 0.0, %v2623
        %v2625 = vpop.f32.mrf.mxu0
        %v2626 = vpop.f32.mrf.mxu0
        %v2627 = vadd.f32 0.0, %v2626
        %v2628 = vpop.f32.mrf.mxu0
        %2629 = vmatprep.mubr.bf16.mxu0 0
        %2630 = vmatmul.mubr.bf16.gmra.mxu0 %v2576
        %v2631 = vpop.f32.mrf.mxu0
        %v2632 = vadd.f32 0.0, %v2631
        %v2633 = vpop.f32.mrf.mxu0
        %v2634 = vpop.f32.mrf.mxu0
        %v2635 = vadd.f32 0.0, %v2634
        %v2636 = vpop.f32.mrf.mxu0
        %2637 = vmatprep.mubr.bf16.mxu0 0
        %2638 = vmatmul.mubr.bf16.gmra.mxu0 %v2579
        %v2639 = vpop.f32.mrf.mxu0
        %v2640 = vadd.f32 0.0, %v2639
        %v2641 = vpop.f32.mrf.mxu0
        %v2642 = vpop.f32.mrf.mxu0
        %v2643 = vadd.f32 0.0, %v2642
        %v2644 = vpop.f32.mrf.mxu0
        %2645 = vdwg.mxu0
        %v2646 = vadd.f32 %v2533, %v2616
        %v2647 = vadd.f32 %v2534, %v2619
        %v2648 = vadd.f32 %v2535, %v2624
        %v2649 = vadd.f32 %v2536, %v2627
        %v2650 = vadd.f32 %v2537, %v2632
        %v2651 = vadd.f32 %v2538, %v2635
        %v2652 = vadd.f32 %v2539, %v2640
        %v2653 = vadd.f32 %v2540, %v2643
        %v2654 = vld [vmem:[%s3 + $0x10] sm:$0xf]
        %v2655 = vld [vmem:[%s3 + $0x14] sm:$0xf]
        %v2656 = vld [vmem:[%s3 + $0x18] sm:$0xf]
        %v2657 = vld [vmem:[%s3 + $0x1c] sm:$0xf]
        %v2658 = vpack.c.bf16 %v1443, %v1442
        %v2659 = vpack.c.bf16 %v1445, %v1444
        %v2660 = vpack.c.bf16 %v1447, %v1446
        %v2661 = vpack.c.bf16 %v1449, %v1448
        %v2666 = vunpack.c.l.b16 %v2654
        %v2667 = vunpack.c.l.b16 %v2655
        %v2668 = vunpack.c.l.b16 %v2656
        %v2669 = vunpack.c.l.b16 %v2657
        %v2670 = vpack.c.b16 %v2667, %v2666
        %v2671 = vpack.c.b16 %v2669, %v2668
        %v2675 = vsel %vm2242, %v2658, 0
        %v2678 = vsel %vm2242, %v2659, 0
        %v2681 = vsel %vm2242, %v2660, 0
        %v2684 = vsel %vm2242, %v2661, 0
        %2686 = vmatprep.subr.bf16.mxu0 0
        %2687 = vmatpush1.bf16.msra.mxu0 0
        %2688 = vmatprep.subr.bf16.mxu0 0
        %2689 = vmatpush1.bf16.msra.mxu0 0
        %2690 = vmatprep.subr.bf16.mxu0 0
        %2691 = vmatpush1.bf16.msra.mxu0 0
        %2692 = vmatprep.subr.bf16.mxu0 0
        %2693 = vmatpush1.bf16.msra.mxu0 0
        %2694 = vmatprep.subr.bf16.mxu0 0
        %2695 = vmatpush1.bf16.msra.mxu0 0
        %2696 = vmatprep.subr.bf16.mxu0 0
        %2697 = vmatpush1.bf16.msra.mxu0 0
        %2698 = vmatprep.subr.bf16.mxu0 0
        %2699 = vmatpush1.bf16.msra.mxu0 %v2671
        %2700 = vmatprep.subr.bf16.mxu0 0
        %2701 = vmatpush1.bf16.msra.mxu0 %v2670
        %2702 = vmatprep.subr.bf16.mxu0 0
        %2703 = vmatpush2.bf16.msra.mxu0 0
        %2704 = vmatprep.subr.bf16.mxu0 0
        %2705 = vmatpush2.bf16.msra.mxu0 0
        %2706 = vmatprep.subr.bf16.mxu0 0
        %2707 = vmatpush2.bf16.msra.mxu0 0
        %2708 = vmatprep.subr.bf16.mxu0 0
        %2709 = vmatpush2.bf16.msra.mxu0 0
        %2710 = vmatprep.subr.bf16.mxu0 0
        %2711 = vmatpush2.bf16.msra.mxu0 0
        %2712 = vmatprep.subr.bf16.mxu0 0
        %2713 = vmatpush2.bf16.msra.mxu0 0
        %2714 = vmatprep.subr.bf16.mxu0 0
        %2715 = vmatpush2.bf16.msra.mxu0 0
        %2716 = vmatprep.subr.bf16.mxu0 0
        %2717 = vmatpush2.bf16.msra.mxu0 0
        %2718 = vmatprep.mubr.bf16.mxu0 0
        %2719 = vmatmul.mubr.bf16.gmra.mxu0 %v2675
        %v2720 = vpop.f32.mrf.mxu0
        %v2721 = vadd.f32 0.0, %v2720
        %v2722 = vpop.f32.mrf.mxu0
        %v2723 = vpop.f32.mrf.mxu0
        %v2724 = vadd.f32 0.0, %v2723
        %v2725 = vpop.f32.mrf.mxu0
        %2726 = vmatprep.mubr.bf16.mxu0 0
        %2727 = vmatmul.mubr.bf16.gmra.mxu0 %v2678
        %v2728 = vpop.f32.mrf.mxu0
        %v2729 = vadd.f32 0.0, %v2728
        %v2730 = vpop.f32.mrf.mxu0
        %v2731 = vpop.f32.mrf.mxu0
        %v2732 = vadd.f32 0.0, %v2731
        %v2733 = vpop.f32.mrf.mxu0
        %2734 = vmatprep.mubr.bf16.mxu0 0
        %2735 = vmatmul.mubr.bf16.gmra.mxu0 %v2681
        %v2736 = vpop.f32.mrf.mxu0
        %v2737 = vadd.f32 0.0, %v2736
        %v2738 = vpop.f32.mrf.mxu0
        %v2739 = vpop.f32.mrf.mxu0
        %v2740 = vadd.f32 0.0, %v2739
        %v2741 = vpop.f32.mrf.mxu0
        %2742 = vmatprep.mubr.bf16.mxu0 0
        %2743 = vmatmul.mubr.bf16.gmra.mxu0 %v2684
        %v2744 = vpop.f32.mrf.mxu0
        %v2745 = vadd.f32 0.0, %v2744
        %v2746 = vpop.f32.mrf.mxu0
        %v2747 = vpop.f32.mrf.mxu0
        %v2748 = vadd.f32 0.0, %v2747
        %v2749 = vpop.f32.mrf.mxu0
        %2750 = vdwg.mxu0
        %v2751 = vadd.f32 %v2646, %v2721
        %v2752 = vadd.f32 %v2647, %v2724
        %v2753 = vadd.f32 %v2648, %v2729
        %v2754 = vadd.f32 %v2649, %v2732
        %v2755 = vadd.f32 %v2650, %v2737
        %v2756 = vadd.f32 %v2651, %v2740
        %v2757 = vadd.f32 %v2652, %v2745
        %v2758 = vadd.f32 %v2653, %v2748
        %v2759 = vld [vmem:[%s3 + $0x30] sm:$0xf]
        %v2760 = vld [vmem:[%s3 + $0x34] sm:$0xf]
        %v2761 = vld [vmem:[%s3 + $0x38] sm:$0xf]
        %v2762 = vld [vmem:[%s3 + $0x3c] sm:$0xf]
        %v2763 = vshrl.u32 %v2658, 16
        %v2765 = vshll.u32 %v2658, 16
        %v2767 = vrot.slane %v2765, 1
        %v2768 = vor.u32 %v2763, %v2767
        %v2769 = vshll.u32 %v2659, 16
        %v2771 = vrot.slane %v2769, 1
        %v2772 = vsel %vm2198, %v2768, %v2771
        %v2773 = vshrl.u32 %v2659, 16
        %v2775 = vor.u32 %v2773, %v2771
        %v2776 = vshll.u32 %v2660, 16
        %v2778 = vrot.slane %v2776, 1
        %v2779 = vsel %vm2198, %v2775, %v2778
        %v2780 = vshrl.u32 %v2660, 16
        %v2782 = vor.u32 %v2780, %v2778
        %v2783 = vshll.u32 %v2661, 16
        %v2785 = vrot.slane %v2783, 1
        %v2786 = vsel %vm2198, %v2782, %v2785
        %v2787 = vshrl.u32 %v2661, 16
        %v2789 = vor.u32 %v2787, %v2785
        %v2794 = vunpack.c.l.b16 %v2759
        %v2795 = vunpack.c.l.b16 %v2760
        %v2796 = vunpack.c.l.b16 %v2761
        %v2797 = vunpack.c.l.b16 %v2762
        %v2798 = vpack.c.b16 %v2795, %v2794
        %v2799 = vpack.c.b16 %v2797, %v2796
        %v2803 = vsel %vm2242, %v2772, 0
        %v2806 = vsel %vm2242, %v2779, 0
        %v2809 = vsel %vm2242, %v2786, 0
        %v2812 = vsel %vm2242, %v2789, 0
        %2814 = vmatprep.subr.bf16.mxu0 0
        %2815 = vmatpush1.bf16.msra.mxu0 0
        %2816 = vmatprep.subr.bf16.mxu0 0
        %2817 = vmatpush1.bf16.msra.mxu0 0
        %2818 = vmatprep.subr.bf16.mxu0 0
        %2819 = vmatpush1.bf16.msra.mxu0 0
        %2820 = vmatprep.subr.bf16.mxu0 0
        %2821 = vmatpush1.bf16.msra.mxu0 0
        %2822 = vmatprep.subr.bf16.mxu0 0
        %2823 = vmatpush1.bf16.msra.mxu0 0
        %2824 = vmatprep.subr.bf16.mxu0 0
        %2825 = vmatpush1.bf16.msra.mxu0 0
        %2826 = vmatprep.subr.bf16.mxu0 0
        %2827 = vmatpush1.bf16.msra.mxu0 %v2799
        %2828 = vmatprep.subr.bf16.mxu0 0
        %2829 = vmatpush1.bf16.msra.mxu0 %v2798
        %2830 = vmatprep.subr.bf16.mxu0 0
        %2831 = vmatpush2.bf16.msra.mxu0 0
        %2832 = vmatprep.subr.bf16.mxu0 0
        %2833 = vmatpush2.bf16.msra.mxu0 0
        %2834 = vmatprep.subr.bf16.mxu0 0
        %2835 = vmatpush2.bf16.msra.mxu0 0
        %2836 = vmatprep.subr.bf16.mxu0 0
        %2837 = vmatpush2.bf16.msra.mxu0 0
        %2838 = vmatprep.subr.bf16.mxu0 0
        %2839 = vmatpush2.bf16.msra.mxu0 0
        %2840 = vmatprep.subr.bf16.mxu0 0
        %2841 = vmatpush2.bf16.msra.mxu0 0
        %2842 = vmatprep.subr.bf16.mxu0 0
        %2843 = vmatpush2.bf16.msra.mxu0 0
        %2844 = vmatprep.subr.bf16.mxu0 0
        %2845 = vmatpush2.bf16.msra.mxu0 0
        %2846 = vmatprep.mubr.bf16.mxu0 0
        %2847 = vmatmul.mubr.bf16.gmra.mxu0 %v2803
        %v2848 = vpop.f32.mrf.mxu0
        %v2849 = vadd.f32 0.0, %v2848
        %v2850 = vpop.f32.mrf.mxu0
        %v2851 = vpop.f32.mrf.mxu0
        %v2852 = vadd.f32 0.0, %v2851
        %v2853 = vpop.f32.mrf.mxu0
        %2854 = vmatprep.mubr.bf16.mxu0 0
        %2855 = vmatmul.mubr.bf16.gmra.mxu0 %v2806
        %v2856 = vpop.f32.mrf.mxu0
        %v2857 = vadd.f32 0.0, %v2856
        %v2858 = vpop.f32.mrf.mxu0
        %v2859 = vpop.f32.mrf.mxu0
        %v2860 = vadd.f32 0.0, %v2859
        %v2861 = vpop.f32.mrf.mxu0
        %2862 = vmatprep.mubr.bf16.mxu0 0
        %2863 = vmatmul.mubr.bf16.gmra.mxu0 %v2809
        %v2864 = vpop.f32.mrf.mxu0
        %v2865 = vadd.f32 0.0, %v2864
        %v2866 = vpop.f32.mrf.mxu0
        %v2867 = vpop.f32.mrf.mxu0
        %v2868 = vadd.f32 0.0, %v2867
        %v2869 = vpop.f32.mrf.mxu0
        %2870 = vmatprep.mubr.bf16.mxu0 0
        %2871 = vmatmul.mubr.bf16.gmra.mxu0 %v2812
        %v2872 = vpop.f32.mrf.mxu0
        %v2873 = vadd.f32 0.0, %v2872
        %v2874 = vpop.f32.mrf.mxu0
        %v2875 = vpop.f32.mrf.mxu0
        %v2876 = vadd.f32 0.0, %v2875
        %v2877 = vpop.f32.mrf.mxu0
        %2878 = vdwg.mxu0
        %v2879 = vadd.f32 %v2751, %v2849
        %v2880 = vadd.f32 %v2752, %v2852
        %v2881 = vadd.f32 %v2753, %v2857
        %v2882 = vadd.f32 %v2754, %v2860
        %v2883 = vadd.f32 %v2755, %v2865
        %v2884 = vadd.f32 %v2756, %v2868
        %v2885 = vadd.f32 %v2757, %v2873
        %v2886 = vadd.f32 %v2758, %v2876
        %v2887 = vld [vmem:[%s3 + $0x90] sm:$0xf]
        %v2888 = vld [vmem:[%s3 + $0x94] sm:$0xf]
        %v2889 = vld [vmem:[%s3 + $0x98] sm:$0xf]
        %v2890 = vld [vmem:[%s3 + $0x9c] sm:$0xf]
        %v2891 = vpack.c.bf16 %v1444, %v1443
        %v2892 = vpack.c.bf16 %v1446, %v1445
        %v2893 = vpack.c.bf16 %v1448, %v1447
        %v2894 = vpack.c.bf16 %v1450, %v1449
        %v2896 = vshrl.u32 %v2891, 16
        %v2898 = vshll.u32 %v2891, 16
        %v2900 = vrot.slane %v2898, 1
        %v2901 = vor.u32 %v2896, %v2900
        %v2903 = vshll.u32 %v2892, 16
        %v2905 = vrot.slane %v2903, 1
        %v2906 = vsel %vm2198, %v2901, %v2905
        %v2907 = vshrl.u32 %v2892, 16
        %v2909 = vor.u32 %v2907, %v2905
        %v2911 = vshll.u32 %v2893, 16
        %v2913 = vrot.slane %v2911, 1
        %v2914 = vsel %vm2198, %v2909, %v2913
        %v2915 = vshrl.u32 %v2893, 16
        %v2917 = vor.u32 %v2915, %v2913
        %v2919 = vshll.u32 %v2894, 16
        %v2921 = vrot.slane %v2919, 1
        %v2922 = vsel %vm2198, %v2917, %v2921
        %v2923 = vshrl.u32 %v2894, 16
        %v2925 = vor.u32 %v2923, %v2921
        %v2930 = vunpack.c.l.b16 %v2887
        %v2931 = vunpack.c.l.b16 %v2888
        %v2932 = vunpack.c.l.b16 %v2889
        %v2933 = vunpack.c.l.b16 %v2890
        %v2934 = vpack.c.b16 %v2931, %v2930
        %v2935 = vpack.c.b16 %v2933, %v2932
        %v2939 = vsel %vm2242, %v2906, 0
        %v2942 = vsel %vm2242, %v2914, 0
        %v2945 = vsel %vm2242, %v2922, 0
        %v2948 = vsel %vm2242, %v2925, 0
        %2950 = vmatprep.subr.bf16.mxu0 0
        %2951 = vmatpush1.bf16.msra.mxu0 0
        %2952 = vmatprep.subr.bf16.mxu0 0
        %2953 = vmatpush1.bf16.msra.mxu0 0
        %2954 = vmatprep.subr.bf16.mxu0 0
        %2955 = vmatpush1.bf16.msra.mxu0 0
        %2956 = vmatprep.subr.bf16.mxu0 0
        %2957 = vmatpush1.bf16.msra.mxu0 0
        %2958 = vmatprep.subr.bf16.mxu0 0
        %2959 = vmatpush1.bf16.msra.mxu0 0
        %2960 = vmatprep.subr.bf16.mxu0 0
        %2961 = vmatpush1.bf16.msra.mxu0 0
        %2962 = vmatprep.subr.bf16.mxu0 0
        %2963 = vmatpush1.bf16.msra.mxu0 %v2935
        %2964 = vmatprep.subr.bf16.mxu0 0
        %2965 = vmatpush1.bf16.msra.mxu0 %v2934
        %2966 = vmatprep.subr.bf16.mxu0 0
        %2967 = vmatpush2.bf16.msra.mxu0 0
        %2968 = vmatprep.subr.bf16.mxu0 0
        %2969 = vmatpush2.bf16.msra.mxu0 0
        %2970 = vmatprep.subr.bf16.mxu0 0
        %2971 = vmatpush2.bf16.msra.mxu0 0
        %2972 = vmatprep.subr.bf16.mxu0 0
        %2973 = vmatpush2.bf16.msra.mxu0 0
        %2974 = vmatprep.subr.bf16.mxu0 0
        %2975 = vmatpush2.bf16.msra.mxu0 0
        %2976 = vmatprep.subr.bf16.mxu0 0
        %2977 = vmatpush2.bf16.msra.mxu0 0
        %2978 = vmatprep.subr.bf16.mxu0 0
        %2979 = vmatpush2.bf16.msra.mxu0 0
        %2980 = vmatprep.subr.bf16.mxu0 0
        %2981 = vmatpush2.bf16.msra.mxu0 0
        %2982 = vmatprep.mubr.bf16.mxu0 0
        %2983 = vmatmul.mubr.bf16.gmra.mxu0 %v2939
        %v2984 = vpop.f32.mrf.mxu0
        %v2985 = vadd.f32 0.0, %v2984
        %v2986 = vpop.f32.mrf.mxu0
        %v2987 = vpop.f32.mrf.mxu0
        %v2988 = vadd.f32 0.0, %v2987
        %v2989 = vpop.f32.mrf.mxu0
        %2990 = vmatprep.mubr.bf16.mxu0 0
        %2991 = vmatmul.mubr.bf16.gmra.mxu0 %v2942
        %v2992 = vpop.f32.mrf.mxu0
        %v2993 = vadd.f32 0.0, %v2992
        %v2994 = vpop.f32.mrf.mxu0
        %v2995 = vpop.f32.mrf.mxu0
        %v2996 = vadd.f32 0.0, %v2995
        %v2997 = vpop.f32.mrf.mxu0
        %2998 = vmatprep.mubr.bf16.mxu0 0
        %2999 = vmatmul.mubr.bf16.gmra.mxu0 %v2945
        %v3000 = vpop.f32.mrf.mxu0
        %v3001 = vadd.f32 0.0, %v3000
        %v3002 = vpop.f32.mrf.mxu0
        %v3003 = vpop.f32.mrf.mxu0
        %v3004 = vadd.f32 0.0, %v3003
        %v3005 = vpop.f32.mrf.mxu0
        %3006 = vmatprep.mubr.bf16.mxu0 0
        %3007 = vmatmul.mubr.bf16.gmra.mxu0 %v2948
        %v3008 = vpop.f32.mrf.mxu0
        %v3009 = vadd.f32 0.0, %v3008
        %v3010 = vpop.f32.mrf.mxu0
        %v3011 = vpop.f32.mrf.mxu0
        %v3012 = vadd.f32 0.0, %v3011
        %v3013 = vpop.f32.mrf.mxu0
        %3014 = vdwg.mxu0
        %v3015 = vadd.f32 %v2879, %v2985
        %v3016 = vadd.f32 %v2880, %v2988
        %v3017 = vadd.f32 %v2881, %v2993
        %v3018 = vadd.f32 %v2882, %v2996
        %v3019 = vadd.f32 %v2883, %v3001
        %v3020 = vadd.f32 %v2884, %v3004
        %v3021 = vadd.f32 %v2885, %v3009
        %v3022 = vadd.f32 %v2886, %v3012
        %v3023 = vld [vmem:[%s3 + $0xb0] sm:$0xf]
        %v3024 = vld [vmem:[%s3 + $0xb4] sm:$0xf]
        %v3025 = vld [vmem:[%s3 + $0xb8] sm:$0xf]
        %v3026 = vld [vmem:[%s3 + $0xbc] sm:$0xf]
        %v3031 = vrot.slane %v2891, 1
        %v3032 = vrot.slane %v2892, 1
        %v3033 = vsel %vm2549, %v3031, %v3032
        %v3034 = vrot.slane %v2893, 1
        %v3035 = vsel %vm2549, %v3032, %v3034
        %v3036 = vrot.slane %v2894, 1
        %v3037 = vsel %vm2549, %v3034, %v3036
        %v3042 = vunpack.c.l.b16 %v3023
        %v3043 = vunpack.c.l.b16 %v3024
        %v3044 = vunpack.c.l.b16 %v3025
        %v3045 = vunpack.c.l.b16 %v3026
        %v3046 = vpack.c.b16 %v3043, %v3042
        %v3047 = vpack.c.b16 %v3045, %v3044
        %v3051 = vsel %vm2242, %v3033, 0
        %v3054 = vsel %vm2242, %v3035, 0
        %v3057 = vsel %vm2242, %v3037, 0
        %v3060 = vsel %vm2242, %v3036, 0
        %3062 = vmatprep.subr.bf16.mxu0 0
        %3063 = vmatpush1.bf16.msra.mxu0 0
        %3064 = vmatprep.subr.bf16.mxu0 0
        %3065 = vmatpush1.bf16.msra.mxu0 0
        %3066 = vmatprep.subr.bf16.mxu0 0
        %3067 = vmatpush1.bf16.msra.mxu0 0
        %3068 = vmatprep.subr.bf16.mxu0 0
        %3069 = vmatpush1.bf16.msra.mxu0 0
        %3070 = vmatprep.subr.bf16.mxu0 0
        %3071 = vmatpush1.bf16.msra.mxu0 0
        %3072 = vmatprep.subr.bf16.mxu0 0
        %3073 = vmatpush1.bf16.msra.mxu0 0
        %3074 = vmatprep.subr.bf16.mxu0 0
        %3075 = vmatpush1.bf16.msra.mxu0 %v3047
        %3076 = vmatprep.subr.bf16.mxu0 0
        %3077 = vmatpush1.bf16.msra.mxu0 %v3046
        %3078 = vmatprep.subr.bf16.mxu0 0
        %3079 = vmatpush2.bf16.msra.mxu0 0
        %3080 = vmatprep.subr.bf16.mxu0 0
        %3081 = vmatpush2.bf16.msra.mxu0 0
        %3082 = vmatprep.subr.bf16.mxu0 0
        %3083 = vmatpush2.bf16.msra.mxu0 0
        %3084 = vmatprep.subr.bf16.mxu0 0
        %3085 = vmatpush2.bf16.msra.mxu0 0
        %3086 = vmatprep.subr.bf16.mxu0 0
        %3087 = vmatpush2.bf16.msra.mxu0 0
        %3088 = vmatprep.subr.bf16.mxu0 0
        %3089 = vmatpush2.bf16.msra.mxu0 0
        %3090 = vmatprep.subr.bf16.mxu0 0
        %3091 = vmatpush2.bf16.msra.mxu0 0
        %3092 = vmatprep.subr.bf16.mxu0 0
        %3093 = vmatpush2.bf16.msra.mxu0 0
        %3094 = vmatprep.mubr.bf16.mxu0 0
        %3095 = vmatmul.mubr.bf16.gmra.mxu0 %v3051
        %v3096 = vpop.f32.mrf.mxu0
        %v3097 = vadd.f32 0.0, %v3096
        %v3098 = vpop.f32.mrf.mxu0
        %v3099 = vpop.f32.mrf.mxu0
        %v3100 = vadd.f32 0.0, %v3099
        %v3101 = vpop.f32.mrf.mxu0
        %3102 = vmatprep.mubr.bf16.mxu0 0
        %3103 = vmatmul.mubr.bf16.gmra.mxu0 %v3054
        %v3104 = vpop.f32.mrf.mxu0
        %v3105 = vadd.f32 0.0, %v3104
        %v3106 = vpop.f32.mrf.mxu0
        %v3107 = vpop.f32.mrf.mxu0
        %v3108 = vadd.f32 0.0, %v3107
        %v3109 = vpop.f32.mrf.mxu0
        %3110 = vmatprep.mubr.bf16.mxu0 0
        %3111 = vmatmul.mubr.bf16.gmra.mxu0 %v3057
        %v3112 = vpop.f32.mrf.mxu0
        %v3113 = vadd.f32 0.0, %v3112
        %v3114 = vpop.f32.mrf.mxu0
        %v3115 = vpop.f32.mrf.mxu0
        %v3116 = vadd.f32 0.0, %v3115
        %v3117 = vpop.f32.mrf.mxu0
        %3118 = vmatprep.mubr.bf16.mxu0 0
        %3119 = vmatmul.mubr.bf16.gmra.mxu0 %v3060
        %v3120 = vpop.f32.mrf.mxu0
        %v3121 = vadd.f32 0.0, %v3120
        %v3122 = vpop.f32.mrf.mxu0
        %v3123 = vpop.f32.mrf.mxu0
        %v3124 = vadd.f32 0.0, %v3123
        %v3125 = vpop.f32.mrf.mxu0
        %3126 = vdwg.mxu0
        %v3127 = vadd.f32 %v3015, %v3097
        %v3128 = vadd.f32 %v3016, %v3100
        %v3129 = vadd.f32 %v3017, %v3105
        %v3130 = vadd.f32 %v3018, %v3108
        %v3131 = vadd.f32 %v3019, %v3113
        %v3132 = vadd.f32 %v3020, %v3116
        %v3133 = vadd.f32 %v3021, %v3121
        %v3134 = vadd.f32 %v3022, %v3124
        %v3135 = vld [vmem:[%s3 + $0x40] sm:$0xf]
        %v3136 = vld [vmem:[%s3 + $0x44] sm:$0xf]
        %v3137 = vld [vmem:[%s3 + $0x48] sm:$0xf]
        %v3138 = vld [vmem:[%s3 + $0x4c] sm:$0xf]
        %v3139 = vpack.c.bf16 %v1825, %v1824
        %v3140 = vpack.c.bf16 %v1827, %v1826
        %v3141 = vpack.c.bf16 %v1829, %v1828
        %v3142 = vpack.c.bf16 %v1831, %v1830
        %v3147 = vunpack.c.l.b16 %v3135
        %v3148 = vunpack.c.l.b16 %v3136
        %v3149 = vunpack.c.l.b16 %v3137
        %v3150 = vunpack.c.l.b16 %v3138
        %v3151 = vpack.c.b16 %v3148, %v3147
        %v3152 = vpack.c.b16 %v3150, %v3149
        %v3156 = vsel %vm2242, %v3139, 0
        %v3159 = vsel %vm2242, %v3140, 0
        %v3162 = vsel %vm2242, %v3141, 0
        %v3165 = vsel %vm2242, %v3142, 0
        %3167 = vmatprep.subr.bf16.mxu0 0
        %3168 = vmatpush1.bf16.msra.mxu0 0
        %3169 = vmatprep.subr.bf16.mxu0 0
        %3170 = vmatpush1.bf16.msra.mxu0 0
        %3171 = vmatprep.subr.bf16.mxu0 0
        %3172 = vmatpush1.bf16.msra.mxu0 0
        %3173 = vmatprep.subr.bf16.mxu0 0
        %3174 = vmatpush1.bf16.msra.mxu0 0
        %3175 = vmatprep.subr.bf16.mxu0 0
        %3176 = vmatpush1.bf16.msra.mxu0 0
        %3177 = vmatprep.subr.bf16.mxu0 0
        %3178 = vmatpush1.bf16.msra.mxu0 0
        %3179 = vmatprep.subr.bf16.mxu0 0
        %3180 = vmatpush1.bf16.msra.mxu0 %v3152
        %3181 = vmatprep.subr.bf16.mxu0 0
        %3182 = vmatpush1.bf16.msra.mxu0 %v3151
        %3183 = vmatprep.subr.bf16.mxu0 0
        %3184 = vmatpush2.bf16.msra.mxu0 0
        %3185 = vmatprep.subr.bf16.mxu0 0
        %3186 = vmatpush2.bf16.msra.mxu0 0
        %3187 = vmatprep.subr.bf16.mxu0 0
        %3188 = vmatpush2.bf16.msra.mxu0 0
        %3189 = vmatprep.subr.bf16.mxu0 0
        %3190 = vmatpush2.bf16.msra.mxu0 0
        %3191 = vmatprep.subr.bf16.mxu0 0
        %3192 = vmatpush2.bf16.msra.mxu0 0
        %3193 = vmatprep.subr.bf16.mxu0 0
        %3194 = vmatpush2.bf16.msra.mxu0 0
        %3195 = vmatprep.subr.bf16.mxu0 0
        %3196 = vmatpush2.bf16.msra.mxu0 0
        %3197 = vmatprep.subr.bf16.mxu0 0
        %3198 = vmatpush2.bf16.msra.mxu0 0
        %3199 = vmatprep.mubr.bf16.mxu0 0
        %3200 = vmatmul.mubr.bf16.gmra.mxu0 %v3156
        %v3201 = vpop.f32.mrf.mxu0
        %v3202 = vadd.f32 0.0, %v3201
        %v3203 = vpop.f32.mrf.mxu0
        %v3204 = vpop.f32.mrf.mxu0
        %v3205 = vadd.f32 0.0, %v3204
        %v3206 = vpop.f32.mrf.mxu0
        %3207 = vmatprep.mubr.bf16.mxu0 0
        %3208 = vmatmul.mubr.bf16.gmra.mxu0 %v3159
        %v3209 = vpop.f32.mrf.mxu0
        %v3210 = vadd.f32 0.0, %v3209
        %v3211 = vpop.f32.mrf.mxu0
        %v3212 = vpop.f32.mrf.mxu0
        %v3213 = vadd.f32 0.0, %v3212
        %v3214 = vpop.f32.mrf.mxu0
        %3215 = vmatprep.mubr.bf16.mxu0 0
        %3216 = vmatmul.mubr.bf16.gmra.mxu0 %v3162
        %v3217 = vpop.f32.mrf.mxu0
        %v3218 = vadd.f32 0.0, %v3217
        %v3219 = vpop.f32.mrf.mxu0
        %v3220 = vpop.f32.mrf.mxu0
        %v3221 = vadd.f32 0.0, %v3220
        %v3222 = vpop.f32.mrf.mxu0
        %3223 = vmatprep.mubr.bf16.mxu0 0
        %3224 = vmatmul.mubr.bf16.gmra.mxu0 %v3165
        %v3225 = vpop.f32.mrf.mxu0
        %v3226 = vadd.f32 0.0, %v3225
        %v3227 = vpop.f32.mrf.mxu0
        %v3228 = vpop.f32.mrf.mxu0
        %v3229 = vadd.f32 0.0, %v3228
        %v3230 = vpop.f32.mrf.mxu0
        %3231 = vdwg.mxu0
        %v3232 = vadd.f32 %v3127, %v3202
        %v3233 = vadd.f32 %v3128, %v3205
        %v3234 = vadd.f32 %v3129, %v3210
        %v3235 = vadd.f32 %v3130, %v3213
        %v3236 = vadd.f32 %v3131, %v3218
        %v3237 = vadd.f32 %v3132, %v3221
        %v3238 = vadd.f32 %v3133, %v3226
        %v3239 = vadd.f32 %v3134, %v3229
        %v3240 = vld [vmem:[%s3 + $0x60] sm:$0xf]
        %v3241 = vld [vmem:[%s3 + $0x64] sm:$0xf]
        %v3242 = vld [vmem:[%s3 + $0x68] sm:$0xf]
        %v3243 = vld [vmem:[%s3 + $0x6c] sm:$0xf]
        %v3244 = vshrl.u32 %v3139, 16
        %v3246 = vshll.u32 %v3139, 16
        %v3248 = vrot.slane %v3246, 1
        %v3249 = vor.u32 %v3244, %v3248
        %v3250 = vshll.u32 %v3140, 16
        %v3252 = vrot.slane %v3250, 1
        %v3253 = vsel %vm2198, %v3249, %v3252
        %v3254 = vshrl.u32 %v3140, 16
        %v3256 = vor.u32 %v3254, %v3252
        %v3257 = vshll.u32 %v3141, 16
        %v3259 = vrot.slane %v3257, 1
        %v3260 = vsel %vm2198, %v3256, %v3259
        %v3261 = vshrl.u32 %v3141, 16
        %v3263 = vor.u32 %v3261, %v3259
        %v3264 = vshll.u32 %v3142, 16
        %v3266 = vrot.slane %v3264, 1
        %v3267 = vsel %vm2198, %v3263, %v3266
        %v3268 = vshrl.u32 %v3142, 16
        %v3270 = vor.u32 %v3268, %v3266
        %v3275 = vunpack.c.l.b16 %v3240
        %v3276 = vunpack.c.l.b16 %v3241
        %v3277 = vunpack.c.l.b16 %v3242
        %v3278 = vunpack.c.l.b16 %v3243
        %v3279 = vpack.c.b16 %v3276, %v3275
        %v3280 = vpack.c.b16 %v3278, %v3277
        %v3284 = vsel %vm2242, %v3253, 0
        %v3287 = vsel %vm2242, %v3260, 0
        %v3290 = vsel %vm2242, %v3267, 0
        %v3293 = vsel %vm2242, %v3270, 0
        %3295 = vmatprep.subr.bf16.mxu0 0
        %3296 = vmatpush1.bf16.msra.mxu0 0
        %3297 = vmatprep.subr.bf16.mxu0 0
        %3298 = vmatpush1.bf16.msra.mxu0 0
        %3299 = vmatprep.subr.bf16.mxu0 0
        %3300 = vmatpush1.bf16.msra.mxu0 0
        %3301 = vmatprep.subr.bf16.mxu0 0
        %3302 = vmatpush1.bf16.msra.mxu0 0
        %3303 = vmatprep.subr.bf16.mxu0 0
        %3304 = vmatpush1.bf16.msra.mxu0 0
        %3305 = vmatprep.subr.bf16.mxu0 0
        %3306 = vmatpush1.bf16.msra.mxu0 0
        %3307 = vmatprep.subr.bf16.mxu0 0
        %3308 = vmatpush1.bf16.msra.mxu0 %v3280
        %3309 = vmatprep.subr.bf16.mxu0 0
        %3310 = vmatpush1.bf16.msra.mxu0 %v3279
        %3311 = vmatprep.subr.bf16.mxu0 0
        %3312 = vmatpush2.bf16.msra.mxu0 0
        %3313 = vmatprep.subr.bf16.mxu0 0
        %3314 = vmatpush2.bf16.msra.mxu0 0
        %3315 = vmatprep.subr.bf16.mxu0 0
        %3316 = vmatpush2.bf16.msra.mxu0 0
        %3317 = vmatprep.subr.bf16.mxu0 0
        %3318 = vmatpush2.bf16.msra.mxu0 0
        %3319 = vmatprep.subr.bf16.mxu0 0
        %3320 = vmatpush2.bf16.msra.mxu0 0
        %3321 = vmatprep.subr.bf16.mxu0 0
        %3322 = vmatpush2.bf16.msra.mxu0 0
        %3323 = vmatprep.subr.bf16.mxu0 0
        %3324 = vmatpush2.bf16.msra.mxu0 0
        %3325 = vmatprep.subr.bf16.mxu0 0
        %3326 = vmatpush2.bf16.msra.mxu0 0
        %3327 = vmatprep.mubr.bf16.mxu0 0
        %3328 = vmatmul.mubr.bf16.gmra.mxu0 %v3284
        %v3329 = vpop.f32.mrf.mxu0
        %v3330 = vadd.f32 0.0, %v3329
        %v3331 = vpop.f32.mrf.mxu0
        %v3332 = vpop.f32.mrf.mxu0
        %v3333 = vadd.f32 0.0, %v3332
        %v3334 = vpop.f32.mrf.mxu0
        %3335 = vmatprep.mubr.bf16.mxu0 0
        %3336 = vmatmul.mubr.bf16.gmra.mxu0 %v3287
        %v3337 = vpop.f32.mrf.mxu0
        %v3338 = vadd.f32 0.0, %v3337
        %v3339 = vpop.f32.mrf.mxu0
        %v3340 = vpop.f32.mrf.mxu0
        %v3341 = vadd.f32 0.0, %v3340
        %v3342 = vpop.f32.mrf.mxu0
        %3343 = vmatprep.mubr.bf16.mxu0 0
        %3344 = vmatmul.mubr.bf16.gmra.mxu0 %v3290
        %v3345 = vpop.f32.mrf.mxu0
        %v3346 = vadd.f32 0.0, %v3345
        %v3347 = vpop.f32.mrf.mxu0
        %v3348 = vpop.f32.mrf.mxu0
        %v3349 = vadd.f32 0.0, %v3348
        %v3350 = vpop.f32.mrf.mxu0
        %3351 = vmatprep.mubr.bf16.mxu0 0
        %3352 = vmatmul.mubr.bf16.gmra.mxu0 %v3293
        %v3353 = vpop.f32.mrf.mxu0
        %v3354 = vadd.f32 0.0, %v3353
        %v3355 = vpop.f32.mrf.mxu0
        %v3356 = vpop.f32.mrf.mxu0
        %v3357 = vadd.f32 0.0, %v3356
        %v3358 = vpop.f32.mrf.mxu0
        %3359 = vdwg.mxu0
        %v3360 = vadd.f32 %v3232, %v3330
        %v3361 = vadd.f32 %v3233, %v3333
        %v3362 = vadd.f32 %v3234, %v3338
        %v3363 = vadd.f32 %v3235, %v3341
        %v3364 = vadd.f32 %v3236, %v3346
        %v3365 = vadd.f32 %v3237, %v3349
        %v3366 = vadd.f32 %v3238, %v3354
        %v3367 = vadd.f32 %v3239, %v3357
        %v3368 = vld [vmem:[%s3 + $0xc0] sm:$0xf]
        %v3369 = vld [vmem:[%s3 + $0xc4] sm:$0xf]
        %v3370 = vld [vmem:[%s3 + $0xc8] sm:$0xf]
        %v3371 = vld [vmem:[%s3 + $0xcc] sm:$0xf]
        %v3372 = vpack.c.bf16 %v1826, %v1825
        %v3373 = vpack.c.bf16 %v1828, %v1827
        %v3374 = vpack.c.bf16 %v1830, %v1829
        %v3375 = vpack.c.bf16 %v1832, %v1831
        %v3377 = vshrl.u32 %v3372, 16
        %v3379 = vshll.u32 %v3372, 16
        %v3381 = vrot.slane %v3379, 1
        %v3382 = vor.u32 %v3377, %v3381
        %v3384 = vshll.u32 %v3373, 16
        %v3386 = vrot.slane %v3384, 1
        %v3387 = vsel %vm2198, %v3382, %v3386
        %v3388 = vshrl.u32 %v3373, 16
        %v3390 = vor.u32 %v3388, %v3386
        %v3392 = vshll.u32 %v3374, 16
        %v3394 = vrot.slane %v3392, 1
        %v3395 = vsel %vm2198, %v3390, %v3394
        %v3396 = vshrl.u32 %v3374, 16
        %v3398 = vor.u32 %v3396, %v3394
        %v3400 = vshll.u32 %v3375, 16
        %v3402 = vrot.slane %v3400, 1
        %v3403 = vsel %vm2198, %v3398, %v3402
        %v3404 = vshrl.u32 %v3375, 16
        %v3406 = vor.u32 %v3404, %v3402
        %v3411 = vunpack.c.l.b16 %v3368
        %v3412 = vunpack.c.l.b16 %v3369
        %v3413 = vunpack.c.l.b16 %v3370
        %v3414 = vunpack.c.l.b16 %v3371
        %v3415 = vpack.c.b16 %v3412, %v3411
        %v3416 = vpack.c.b16 %v3414, %v3413
        %v3420 = vsel %vm2242, %v3387, 0
        %v3423 = vsel %vm2242, %v3395, 0
        %v3426 = vsel %vm2242, %v3403, 0
        %v3429 = vsel %vm2242, %v3406, 0
        %3431 = vmatprep.subr.bf16.mxu0 0
        %3432 = vmatpush1.bf16.msra.mxu0 0
        %3433 = vmatprep.subr.bf16.mxu0 0
        %3434 = vmatpush1.bf16.msra.mxu0 0
        %3435 = vmatprep.subr.bf16.mxu0 0
        %3436 = vmatpush1.bf16.msra.mxu0 0
        %3437 = vmatprep.subr.bf16.mxu0 0
        %3438 = vmatpush1.bf16.msra.mxu0 0
        %3439 = vmatprep.subr.bf16.mxu0 0
        %3440 = vmatpush1.bf16.msra.mxu0 0
        %3441 = vmatprep.subr.bf16.mxu0 0
        %3442 = vmatpush1.bf16.msra.mxu0 0
        %3443 = vmatprep.subr.bf16.mxu0 0
        %3444 = vmatpush1.bf16.msra.mxu0 %v3416
        %3445 = vmatprep.subr.bf16.mxu0 0
        %3446 = vmatpush1.bf16.msra.mxu0 %v3415
        %3447 = vmatprep.subr.bf16.mxu0 0
        %3448 = vmatpush2.bf16.msra.mxu0 0
        %3449 = vmatprep.subr.bf16.mxu0 0
        %3450 = vmatpush2.bf16.msra.mxu0 0
        %3451 = vmatprep.subr.bf16.mxu0 0
        %3452 = vmatpush2.bf16.msra.mxu0 0
        %3453 = vmatprep.subr.bf16.mxu0 0
        %3454 = vmatpush2.bf16.msra.mxu0 0
        %3455 = vmatprep.subr.bf16.mxu0 0
        %3456 = vmatpush2.bf16.msra.mxu0 0
        %3457 = vmatprep.subr.bf16.mxu0 0
        %3458 = vmatpush2.bf16.msra.mxu0 0
        %3459 = vmatprep.subr.bf16.mxu0 0
        %3460 = vmatpush2.bf16.msra.mxu0 0
        %3461 = vmatprep.subr.bf16.mxu0 0
        %3462 = vmatpush2.bf16.msra.mxu0 0
        %3463 = vmatprep.mubr.bf16.mxu0 0
        %3464 = vmatmul.mubr.bf16.gmra.mxu0 %v3420
        %v3465 = vpop.f32.mrf.mxu0
        %v3466 = vadd.f32 0.0, %v3465
        %v3467 = vpop.f32.mrf.mxu0
        %v3468 = vpop.f32.mrf.mxu0
        %v3469 = vadd.f32 0.0, %v3468
        %v3470 = vpop.f32.mrf.mxu0
        %3471 = vmatprep.mubr.bf16.mxu0 0
        %3472 = vmatmul.mubr.bf16.gmra.mxu0 %v3423
        %v3473 = vpop.f32.mrf.mxu0
        %v3474 = vadd.f32 0.0, %v3473
        %v3475 = vpop.f32.mrf.mxu0
        %v3476 = vpop.f32.mrf.mxu0
        %v3477 = vadd.f32 0.0, %v3476
        %v3478 = vpop.f32.mrf.mxu0
        %3479 = vmatprep.mubr.bf16.mxu0 0
        %3480 = vmatmul.mubr.bf16.gmra.mxu0 %v3426
        %v3481 = vpop.f32.mrf.mxu0
        %v3482 = vadd.f32 0.0, %v3481
        %v3483 = vpop.f32.mrf.mxu0
        %v3484 = vpop.f32.mrf.mxu0
        %v3485 = vadd.f32 0.0, %v3484
        %v3486 = vpop.f32.mrf.mxu0
        %3487 = vmatprep.mubr.bf16.mxu0 0
        %3488 = vmatmul.mubr.bf16.gmra.mxu0 %v3429
        %v3489 = vpop.f32.mrf.mxu0
        %v3490 = vadd.f32 0.0, %v3489
        %v3491 = vpop.f32.mrf.mxu0
        %v3492 = vpop.f32.mrf.mxu0
        %v3493 = vadd.f32 0.0, %v3492
        %v3494 = vpop.f32.mrf.mxu0
        %3495 = vdwg.mxu0
        %v3496 = vadd.f32 %v3360, %v3466
        %v3497 = vadd.f32 %v3361, %v3469
        %v3498 = vadd.f32 %v3362, %v3474
        %v3499 = vadd.f32 %v3363, %v3477
        %v3500 = vadd.f32 %v3364, %v3482
        %v3501 = vadd.f32 %v3365, %v3485
        %v3502 = vadd.f32 %v3366, %v3490
        %v3503 = vadd.f32 %v3367, %v3493
        %v3504 = vld [vmem:[%s3 + $0xe0] sm:$0xf]
        %v3505 = vld [vmem:[%s3 + $0xe4] sm:$0xf]
        %v3506 = vld [vmem:[%s3 + $0xe8] sm:$0xf]
        %v3507 = vld [vmem:[%s3 + $0xec] sm:$0xf]
        %v3512 = vrot.slane %v3372, 1
        %v3513 = vrot.slane %v3373, 1
        %v3514 = vsel %vm2549, %v3512, %v3513
        %v3515 = vrot.slane %v3374, 1
        %v3516 = vsel %vm2549, %v3513, %v3515
        %v3517 = vrot.slane %v3375, 1
        %v3518 = vsel %vm2549, %v3515, %v3517
        %v3523 = vunpack.c.l.b16 %v3504
        %v3524 = vunpack.c.l.b16 %v3505
        %v3525 = vunpack.c.l.b16 %v3506
        %v3526 = vunpack.c.l.b16 %v3507
        %v3527 = vpack.c.b16 %v3524, %v3523
        %v3528 = vpack.c.b16 %v3526, %v3525
        %v3532 = vsel %vm2242, %v3514, 0
        %v3535 = vsel %vm2242, %v3516, 0
        %v3538 = vsel %vm2242, %v3518, 0
        %v3541 = vsel %vm2242, %v3517, 0
        %3543 = vmatprep.subr.bf16.mxu0 0
        %3544 = vmatpush1.bf16.msra.mxu0 0
        %3545 = vmatprep.subr.bf16.mxu0 0
        %3546 = vmatpush1.bf16.msra.mxu0 0
        %3547 = vmatprep.subr.bf16.mxu0 0
        %3548 = vmatpush1.bf16.msra.mxu0 0
        %3549 = vmatprep.subr.bf16.mxu0 0
        %3550 = vmatpush1.bf16.msra.mxu0 0
        %3551 = vmatprep.subr.bf16.mxu0 0
        %3552 = vmatpush1.bf16.msra.mxu0 0
        %3553 = vmatprep.subr.bf16.mxu0 0
        %3554 = vmatpush1.bf16.msra.mxu0 0
        %3555 = vmatprep.subr.bf16.mxu0 0
        %3556 = vmatpush1.bf16.msra.mxu0 %v3528
        %3557 = vmatprep.subr.bf16.mxu0 0
        %3558 = vmatpush1.bf16.msra.mxu0 %v3527
        %3559 = vmatprep.subr.bf16.mxu0 0
        %3560 = vmatpush2.bf16.msra.mxu0 0
        %3561 = vmatprep.subr.bf16.mxu0 0
        %3562 = vmatpush2.bf16.msra.mxu0 0
        %3563 = vmatprep.subr.bf16.mxu0 0
        %3564 = vmatpush2.bf16.msra.mxu0 0
        %3565 = vmatprep.subr.bf16.mxu0 0
        %3566 = vmatpush2.bf16.msra.mxu0 0
        %3567 = vmatprep.subr.bf16.mxu0 0
        %3568 = vmatpush2.bf16.msra.mxu0 0
        %3569 = vmatprep.subr.bf16.mxu0 0
        %3570 = vmatpush2.bf16.msra.mxu0 0
        %3571 = vmatprep.subr.bf16.mxu0 0
        %3572 = vmatpush2.bf16.msra.mxu0 0
        %3573 = vmatprep.subr.bf16.mxu0 0
        %3574 = vmatpush2.bf16.msra.mxu0 0
        %3575 = vmatprep.mubr.bf16.mxu0 0
        %3576 = vmatmul.mubr.bf16.gmra.mxu0 %v3532
        %v3577 = vpop.f32.mrf.mxu0
        %v3578 = vadd.f32 0.0, %v3577
        %v3579 = vpop.f32.mrf.mxu0
        %v3580 = vpop.f32.mrf.mxu0
        %v3581 = vadd.f32 0.0, %v3580
        %v3582 = vpop.f32.mrf.mxu0
        %3583 = vmatprep.mubr.bf16.mxu0 0
        %3584 = vmatmul.mubr.bf16.gmra.mxu0 %v3535
        %v3585 = vpop.f32.mrf.mxu0
        %v3586 = vadd.f32 0.0, %v3585
        %v3587 = vpop.f32.mrf.mxu0
        %v3588 = vpop.f32.mrf.mxu0
        %v3589 = vadd.f32 0.0, %v3588
        %v3590 = vpop.f32.mrf.mxu0
        %3591 = vmatprep.mubr.bf16.mxu0 0
        %3592 = vmatmul.mubr.bf16.gmra.mxu0 %v3538
        %v3593 = vpop.f32.mrf.mxu0
        %v3594 = vadd.f32 0.0, %v3593
        %v3595 = vpop.f32.mrf.mxu0
        %v3596 = vpop.f32.mrf.mxu0
        %v3597 = vadd.f32 0.0, %v3596
        %v3598 = vpop.f32.mrf.mxu0
        %3599 = vmatprep.mubr.bf16.mxu0 0
        %3600 = vmatmul.mubr.bf16.gmra.mxu0 %v3541
        %v3601 = vpop.f32.mrf.mxu0
        %v3602 = vadd.f32 0.0, %v3601
        %v3603 = vpop.f32.mrf.mxu0
        %v3604 = vpop.f32.mrf.mxu0
        %v3605 = vadd.f32 0.0, %v3604
        %v3606 = vpop.f32.mrf.mxu0
        %3607 = vdwg.mxu0
        %v3608 = vadd.f32 %v3496, %v3578
        %v3609 = vadd.f32 %v3497, %v3581
        %v3610 = vadd.f32 %v3498, %v3586
        %v3611 = vadd.f32 %v3499, %v3589
        %v3612 = vadd.f32 %v3500, %v3594
        %v3613 = vadd.f32 %v3501, %v3597
        %v3614 = vadd.f32 %v3502, %v3602
        %v3615 = vadd.f32 %v3503, %v3605
        %v3616 = vld [vmem:[%s3 + $0x50] sm:$0xf]
        %v3617 = vld [vmem:[%s3 + $0x54] sm:$0xf]
        %v3618 = vld [vmem:[%s3 + $0x58] sm:$0xf]
        %v3619 = vld [vmem:[%s3 + $0x5c] sm:$0xf]
        %v3620 = vpack.c.bf16 %v2178, %v2177
        %v3621 = vpack.c.bf16 %v2180, %v2179
        %v3622 = vpack.c.bf16 %v2182, %v2181
        %v3623 = vpack.c.bf16 %v2184, %v2183
        %v3628 = vunpack.c.l.b16 %v3616
        %v3629 = vunpack.c.l.b16 %v3617
        %v3630 = vunpack.c.l.b16 %v3618
        %v3631 = vunpack.c.l.b16 %v3619
        %v3632 = vpack.c.b16 %v3629, %v3628
        %v3633 = vpack.c.b16 %v3631, %v3630
        %v3637 = vsel %vm2242, %v3620, 0
        %v3640 = vsel %vm2242, %v3621, 0
        %v3643 = vsel %vm2242, %v3622, 0
        %v3646 = vsel %vm2242, %v3623, 0
        %3648 = vmatprep.subr.bf16.mxu0 0
        %3649 = vmatpush1.bf16.msra.mxu0 0
        %3650 = vmatprep.subr.bf16.mxu0 0
        %3651 = vmatpush1.bf16.msra.mxu0 0
        %3652 = vmatprep.subr.bf16.mxu0 0
        %3653 = vmatpush1.bf16.msra.mxu0 0
        %3654 = vmatprep.subr.bf16.mxu0 0
        %3655 = vmatpush1.bf16.msra.mxu0 0
        %3656 = vmatprep.subr.bf16.mxu0 0
        %3657 = vmatpush1.bf16.msra.mxu0 0
        %3658 = vmatprep.subr.bf16.mxu0 0
        %3659 = vmatpush1.bf16.msra.mxu0 0
        %3660 = vmatprep.subr.bf16.mxu0 0
        %3661 = vmatpush1.bf16.msra.mxu0 %v3633
        %3662 = vmatprep.subr.bf16.mxu0 0
        %3663 = vmatpush1.bf16.msra.mxu0 %v3632
        %3664 = vmatprep.subr.bf16.mxu0 0
        %3665 = vmatpush2.bf16.msra.mxu0 0
        %3666 = vmatprep.subr.bf16.mxu0 0
        %3667 = vmatpush2.bf16.msra.mxu0 0
        %3668 = vmatprep.subr.bf16.mxu0 0
        %3669 = vmatpush2.bf16.msra.mxu0 0
        %3670 = vmatprep.subr.bf16.mxu0 0
        %3671 = vmatpush2.bf16.msra.mxu0 0
        %3672 = vmatprep.subr.bf16.mxu0 0
        %3673 = vmatpush2.bf16.msra.mxu0 0
        %3674 = vmatprep.subr.bf16.mxu0 0
        %3675 = vmatpush2.bf16.msra.mxu0 0
        %3676 = vmatprep.subr.bf16.mxu0 0
        %3677 = vmatpush2.bf16.msra.mxu0 0
        %3678 = vmatprep.subr.bf16.mxu0 0
        %3679 = vmatpush2.bf16.msra.mxu0 0
        %3680 = vmatprep.mubr.bf16.mxu0 0
        %3681 = vmatmul.mubr.bf16.gmra.mxu0 %v3637
        %v3682 = vpop.f32.mrf.mxu0
        %v3683 = vadd.f32 0.0, %v3682
        %v3684 = vpop.f32.mrf.mxu0
        %v3685 = vpop.f32.mrf.mxu0
        %v3686 = vadd.f32 0.0, %v3685
        %v3687 = vpop.f32.mrf.mxu0
        %3688 = vmatprep.mubr.bf16.mxu0 0
        %3689 = vmatmul.mubr.bf16.gmra.mxu0 %v3640
        %v3690 = vpop.f32.mrf.mxu0
        %v3691 = vadd.f32 0.0, %v3690
        %v3692 = vpop.f32.mrf.mxu0
        %v3693 = vpop.f32.mrf.mxu0
        %v3694 = vadd.f32 0.0, %v3693
        %v3695 = vpop.f32.mrf.mxu0
        %3696 = vmatprep.mubr.bf16.mxu0 0
        %3697 = vmatmul.mubr.bf16.gmra.mxu0 %v3643
        %v3698 = vpop.f32.mrf.mxu0
        %v3699 = vadd.f32 0.0, %v3698
        %v3700 = vpop.f32.mrf.mxu0
        %v3701 = vpop.f32.mrf.mxu0
        %v3702 = vadd.f32 0.0, %v3701
        %v3703 = vpop.f32.mrf.mxu0
        %3704 = vmatprep.mubr.bf16.mxu0 0
        %3705 = vmatmul.mubr.bf16.gmra.mxu0 %v3646
        %v3706 = vpop.f32.mrf.mxu0
        %v3707 = vadd.f32 0.0, %v3706
        %v3708 = vpop.f32.mrf.mxu0
        %v3709 = vpop.f32.mrf.mxu0
        %v3710 = vadd.f32 0.0, %v3709
        %v3711 = vpop.f32.mrf.mxu0
        %3712 = vdwg.mxu0
        %v3713 = vadd.f32 %v3608, %v3683
        %v3714 = vadd.f32 %v3609, %v3686
        %v3715 = vadd.f32 %v3610, %v3691
        %v3716 = vadd.f32 %v3611, %v3694
        %v3717 = vadd.f32 %v3612, %v3699
        %v3718 = vadd.f32 %v3613, %v3702
        %v3719 = vadd.f32 %v3614, %v3707
        %v3720 = vadd.f32 %v3615, %v3710
        %v3721 = vld [vmem:[%s3 + $0x70] sm:$0xf]
        %v3722 = vld [vmem:[%s3 + $0x74] sm:$0xf]
        %v3723 = vld [vmem:[%s3 + $0x78] sm:$0xf]
        %v3724 = vld [vmem:[%s3 + $0x7c] sm:$0xf]
        %v3725 = vshrl.u32 %v3620, 16
        %v3727 = vshll.u32 %v3620, 16
        %v3729 = vrot.slane %v3727, 1
        %v3730 = vor.u32 %v3725, %v3729
        %v3731 = vshll.u32 %v3621, 16
        %v3733 = vrot.slane %v3731, 1
        %v3734 = vsel %vm2198, %v3730, %v3733
        %v3735 = vshrl.u32 %v3621, 16
        %v3737 = vor.u32 %v3735, %v3733
        %v3738 = vshll.u32 %v3622, 16
        %v3740 = vrot.slane %v3738, 1
        %v3741 = vsel %vm2198, %v3737, %v3740
        %v3742 = vshrl.u32 %v3622, 16
        %v3744 = vor.u32 %v3742, %v3740
        %v3745 = vshll.u32 %v3623, 16
        %v3747 = vrot.slane %v3745, 1
        %v3748 = vsel %vm2198, %v3744, %v3747
        %v3749 = vshrl.u32 %v3623, 16
        %v3751 = vor.u32 %v3749, %v3747
        %v3756 = vunpack.c.l.b16 %v3721
        %v3757 = vunpack.c.l.b16 %v3722
        %v3758 = vunpack.c.l.b16 %v3723
        %v3759 = vunpack.c.l.b16 %v3724
        %v3760 = vpack.c.b16 %v3757, %v3756
        %v3761 = vpack.c.b16 %v3759, %v3758
        %v3765 = vsel %vm2242, %v3734, 0
        %v3768 = vsel %vm2242, %v3741, 0
        %v3771 = vsel %vm2242, %v3748, 0
        %v3774 = vsel %vm2242, %v3751, 0
        %3776 = vmatprep.subr.bf16.mxu0 0
        %3777 = vmatpush1.bf16.msra.mxu0 0
        %3778 = vmatprep.subr.bf16.mxu0 0
        %3779 = vmatpush1.bf16.msra.mxu0 0
        %3780 = vmatprep.subr.bf16.mxu0 0
        %3781 = vmatpush1.bf16.msra.mxu0 0
        %3782 = vmatprep.subr.bf16.mxu0 0
        %3783 = vmatpush1.bf16.msra.mxu0 0
        %3784 = vmatprep.subr.bf16.mxu0 0
        %3785 = vmatpush1.bf16.msra.mxu0 0
        %3786 = vmatprep.subr.bf16.mxu0 0
        %3787 = vmatpush1.bf16.msra.mxu0 0
        %3788 = vmatprep.subr.bf16.mxu0 0
        %3789 = vmatpush1.bf16.msra.mxu0 %v3761
        %3790 = vmatprep.subr.bf16.mxu0 0
        %3791 = vmatpush1.bf16.msra.mxu0 %v3760
        %3792 = vmatprep.subr.bf16.mxu0 0
        %3793 = vmatpush2.bf16.msra.mxu0 0
        %3794 = vmatprep.subr.bf16.mxu0 0
        %3795 = vmatpush2.bf16.msra.mxu0 0
        %3796 = vmatprep.subr.bf16.mxu0 0
        %3797 = vmatpush2.bf16.msra.mxu0 0
        %3798 = vmatprep.subr.bf16.mxu0 0
        %3799 = vmatpush2.bf16.msra.mxu0 0
        %3800 = vmatprep.subr.bf16.mxu0 0
        %3801 = vmatpush2.bf16.msra.mxu0 0
        %3802 = vmatprep.subr.bf16.mxu0 0
        %3803 = vmatpush2.bf16.msra.mxu0 0
        %3804 = vmatprep.subr.bf16.mxu0 0
        %3805 = vmatpush2.bf16.msra.mxu0 0
        %3806 = vmatprep.subr.bf16.mxu0 0
        %3807 = vmatpush2.bf16.msra.mxu0 0
        %3808 = vmatprep.mubr.bf16.mxu0 0
        %3809 = vmatmul.mubr.bf16.gmra.mxu0 %v3765
        %v3810 = vpop.f32.mrf.mxu0
        %v3811 = vadd.f32 0.0, %v3810
        %v3812 = vpop.f32.mrf.mxu0
        %v3813 = vpop.f32.mrf.mxu0
        %v3814 = vadd.f32 0.0, %v3813
        %v3815 = vpop.f32.mrf.mxu0
        %3816 = vmatprep.mubr.bf16.mxu0 0
        %3817 = vmatmul.mubr.bf16.gmra.mxu0 %v3768
        %v3818 = vpop.f32.mrf.mxu0
        %v3819 = vadd.f32 0.0, %v3818
        %v3820 = vpop.f32.mrf.mxu0
        %v3821 = vpop.f32.mrf.mxu0
        %v3822 = vadd.f32 0.0, %v3821
        %v3823 = vpop.f32.mrf.mxu0
        %3824 = vmatprep.mubr.bf16.mxu0 0
        %3825 = vmatmul.mubr.bf16.gmra.mxu0 %v3771
        %v3826 = vpop.f32.mrf.mxu0
        %v3827 = vadd.f32 0.0, %v3826
        %v3828 = vpop.f32.mrf.mxu0
        %v3829 = vpop.f32.mrf.mxu0
        %v3830 = vadd.f32 0.0, %v3829
        %v3831 = vpop.f32.mrf.mxu0
        %3832 = vmatprep.mubr.bf16.mxu0 0
        %3833 = vmatmul.mubr.bf16.gmra.mxu0 %v3774
        %v3834 = vpop.f32.mrf.mxu0
        %v3835 = vadd.f32 0.0, %v3834
        %v3836 = vpop.f32.mrf.mxu0
        %v3837 = vpop.f32.mrf.mxu0
        %v3838 = vadd.f32 0.0, %v3837
        %v3839 = vpop.f32.mrf.mxu0
        %3840 = vdwg.mxu0
        %v3841 = vadd.f32 %v3713, %v3811
        %v3842 = vadd.f32 %v3714, %v3814
        %v3843 = vadd.f32 %v3715, %v3819
        %v3844 = vadd.f32 %v3716, %v3822
        %v3845 = vadd.f32 %v3717, %v3827
        %v3846 = vadd.f32 %v3718, %v3830
        %v3847 = vadd.f32 %v3719, %v3835
        %v3848 = vadd.f32 %v3720, %v3838
        %v3849 = vld [vmem:[%s3 + $0xd0] sm:$0xf]
        %v3850 = vld [vmem:[%s3 + $0xd4] sm:$0xf]
        %v3851 = vld [vmem:[%s3 + $0xd8] sm:$0xf]
        %v3852 = vld [vmem:[%s3 + $0xdc] sm:$0xf]
        %v3853 = vpack.c.bf16 %v2179, %v2178
        %v3854 = vpack.c.bf16 %v2181, %v2180
        %v3855 = vpack.c.bf16 %v2183, %v2182
        %v3856 = vpack.c.bf16 %v2185, %v2184
        %v3858 = vshrl.u32 %v3853, 16
        %v3860 = vshll.u32 %v3853, 16
        %v3862 = vrot.slane %v3860, 1
        %v3863 = vor.u32 %v3858, %v3862
        %v3865 = vshll.u32 %v3854, 16
        %v3867 = vrot.slane %v3865, 1
        %v3868 = vsel %vm2198, %v3863, %v3867
        %v3869 = vshrl.u32 %v3854, 16
        %v3871 = vor.u32 %v3869, %v3867
        %v3873 = vshll.u32 %v3855, 16
        %v3875 = vrot.slane %v3873, 1
        %v3876 = vsel %vm2198, %v3871, %v3875
        %v3877 = vshrl.u32 %v3855, 16
        %v3879 = vor.u32 %v3877, %v3875
        %v3881 = vshll.u32 %v3856, 16
        %v3883 = vrot.slane %v3881, 1
        %v3884 = vsel %vm2198, %v3879, %v3883
        %v3885 = vshrl.u32 %v3856, 16
        %v3887 = vor.u32 %v3885, %v3883
        %v3892 = vunpack.c.l.b16 %v3849
        %v3893 = vunpack.c.l.b16 %v3850
        %v3894 = vunpack.c.l.b16 %v3851
        %v3895 = vunpack.c.l.b16 %v3852
        %v3896 = vpack.c.b16 %v3893, %v3892
        %v3897 = vpack.c.b16 %v3895, %v3894
        %v3901 = vsel %vm2242, %v3868, 0
        %v3904 = vsel %vm2242, %v3876, 0
        %v3907 = vsel %vm2242, %v3884, 0
        %v3910 = vsel %vm2242, %v3887, 0
        %3912 = vmatprep.subr.bf16.mxu0 0
        %3913 = vmatpush1.bf16.msra.mxu0 0
        %3914 = vmatprep.subr.bf16.mxu0 0
        %3915 = vmatpush1.bf16.msra.mxu0 0
        %3916 = vmatprep.subr.bf16.mxu0 0
        %3917 = vmatpush1.bf16.msra.mxu0 0
        %3918 = vmatprep.subr.bf16.mxu0 0
        %3919 = vmatpush1.bf16.msra.mxu0 0
        %3920 = vmatprep.subr.bf16.mxu0 0
        %3921 = vmatpush1.bf16.msra.mxu0 0
        %3922 = vmatprep.subr.bf16.mxu0 0
        %3923 = vmatpush1.bf16.msra.mxu0 0
        %3924 = vmatprep.subr.bf16.mxu0 0
        %3925 = vmatpush1.bf16.msra.mxu0 %v3897
        %3926 = vmatprep.subr.bf16.mxu0 0
        %3927 = vmatpush1.bf16.msra.mxu0 %v3896
        %3928 = vmatprep.subr.bf16.mxu0 0
        %3929 = vmatpush2.bf16.msra.mxu0 0
        %3930 = vmatprep.subr.bf16.mxu0 0
        %3931 = vmatpush2.bf16.msra.mxu0 0
        %3932 = vmatprep.subr.bf16.mxu0 0
        %3933 = vmatpush2.bf16.msra.mxu0 0
        %3934 = vmatprep.subr.bf16.mxu0 0
        %3935 = vmatpush2.bf16.msra.mxu0 0
        %3936 = vmatprep.subr.bf16.mxu0 0
        %3937 = vmatpush2.bf16.msra.mxu0 0
        %3938 = vmatprep.subr.bf16.mxu0 0
        %3939 = vmatpush2.bf16.msra.mxu0 0
        %3940 = vmatprep.subr.bf16.mxu0 0
        %3941 = vmatpush2.bf16.msra.mxu0 0
        %3942 = vmatprep.subr.bf16.mxu0 0
        %3943 = vmatpush2.bf16.msra.mxu0 0
        %3944 = vmatprep.mubr.bf16.mxu0 0
        %3945 = vmatmul.mubr.bf16.gmra.mxu0 %v3901
        %v3946 = vpop.f32.mrf.mxu0
        %v3947 = vadd.f32 0.0, %v3946
        %v3948 = vpop.f32.mrf.mxu0
        %v3949 = vpop.f32.mrf.mxu0
        %v3950 = vadd.f32 0.0, %v3949
        %v3951 = vpop.f32.mrf.mxu0
        %3952 = vmatprep.mubr.bf16.mxu0 0
        %3953 = vmatmul.mubr.bf16.gmra.mxu0 %v3904
        %v3954 = vpop.f32.mrf.mxu0
        %v3955 = vadd.f32 0.0, %v3954
        %v3956 = vpop.f32.mrf.mxu0
        %v3957 = vpop.f32.mrf.mxu0
        %v3958 = vadd.f32 0.0, %v3957
        %v3959 = vpop.f32.mrf.mxu0
        %3960 = vmatprep.mubr.bf16.mxu0 0
        %3961 = vmatmul.mubr.bf16.gmra.mxu0 %v3907
        %v3962 = vpop.f32.mrf.mxu0
        %v3963 = vadd.f32 0.0, %v3962
        %v3964 = vpop.f32.mrf.mxu0
        %v3965 = vpop.f32.mrf.mxu0
        %v3966 = vadd.f32 0.0, %v3965
        %v3967 = vpop.f32.mrf.mxu0
        %3968 = vmatprep.mubr.bf16.mxu0 0
        %3969 = vmatmul.mubr.bf16.gmra.mxu0 %v3910
        %v3970 = vpop.f32.mrf.mxu0
        %v3971 = vadd.f32 0.0, %v3970
        %v3972 = vpop.f32.mrf.mxu0
        %v3973 = vpop.f32.mrf.mxu0
        %v3974 = vadd.f32 0.0, %v3973
        %v3975 = vpop.f32.mrf.mxu0
        %3976 = vdwg.mxu0
        %v3977 = vadd.f32 %v3841, %v3947
        %v3978 = vadd.f32 %v3842, %v3950
        %v3979 = vadd.f32 %v3843, %v3955
        %v3980 = vadd.f32 %v3844, %v3958
        %v3981 = vadd.f32 %v3845, %v3963
        %v3982 = vadd.f32 %v3846, %v3966
        %v3983 = vadd.f32 %v3847, %v3971
        %v3984 = vadd.f32 %v3848, %v3974
        %v3985 = vld [vmem:[%s3 + $0xf0] sm:$0xf]
        %v3986 = vld [vmem:[%s3 + $0xf4] sm:$0xf]
        %v3987 = vld [vmem:[%s3 + $0xf8] sm:$0xf]
        %v3988 = vld [vmem:[%s3 + $0xfc] sm:$0xf]
        %v3993 = vrot.slane %v3853, 1
        %v3994 = vrot.slane %v3854, 1
        %v3995 = vsel %vm2549, %v3993, %v3994
        %v3996 = vrot.slane %v3855, 1
        %v3997 = vsel %vm2549, %v3994, %v3996
        %v3998 = vrot.slane %v3856, 1
        %v3999 = vsel %vm2549, %v3996, %v3998
        %v4004 = vunpack.c.l.b16 %v3985
        %v4005 = vunpack.c.l.b16 %v3986
        %v4006 = vunpack.c.l.b16 %v3987
        %v4007 = vunpack.c.l.b16 %v3988
        %v4008 = vpack.c.b16 %v4005, %v4004
        %v4009 = vpack.c.b16 %v4007, %v4006
        %v4013 = vsel %vm2242, %v3995, 0
        %v4016 = vsel %vm2242, %v3997, 0
        %v4019 = vsel %vm2242, %v3999, 0
        %v4022 = vsel %vm2242, %v3998, 0
        %4024 = vmatprep.subr.bf16.mxu0 0
        %4025 = vmatpush1.bf16.msra.mxu0 0
        %4026 = vmatprep.subr.bf16.mxu0 0
        %4027 = vmatpush1.bf16.msra.mxu0 0
        %4028 = vmatprep.subr.bf16.mxu0 0
        %4029 = vmatpush1.bf16.msra.mxu0 0
        %4030 = vmatprep.subr.bf16.mxu0 0
        %4031 = vmatpush1.bf16.msra.mxu0 0
        %4032 = vmatprep.subr.bf16.mxu0 0
        %4033 = vmatpush1.bf16.msra.mxu0 0
        %4034 = vmatprep.subr.bf16.mxu0 0
        %4035 = vmatpush1.bf16.msra.mxu0 0
        %4036 = vmatprep.subr.bf16.mxu0 0
        %4037 = vmatpush1.bf16.msra.mxu0 %v4009
        %4038 = vmatprep.subr.bf16.mxu0 0
        %4039 = vmatpush1.bf16.msra.mxu0 %v4008
        %4040 = vmatprep.subr.bf16.mxu0 0
        %4041 = vmatpush2.bf16.msra.mxu0 0
        %4042 = vmatprep.subr.bf16.mxu0 0
        %4043 = vmatpush2.bf16.msra.mxu0 0
        %4044 = vmatprep.subr.bf16.mxu0 0
        %4045 = vmatpush2.bf16.msra.mxu0 0
        %4046 = vmatprep.subr.bf16.mxu0 0
        %4047 = vmatpush2.bf16.msra.mxu0 0
        %4048 = vmatprep.subr.bf16.mxu0 0
        %4049 = vmatpush2.bf16.msra.mxu0 0
        %4050 = vmatprep.subr.bf16.mxu0 0
        %4051 = vmatpush2.bf16.msra.mxu0 0
        %4052 = vmatprep.subr.bf16.mxu0 0
        %4053 = vmatpush2.bf16.msra.mxu0 0
        %4054 = vmatprep.subr.bf16.mxu0 0
        %4055 = vmatpush2.bf16.msra.mxu0 0
        %4056 = vmatprep.mubr.bf16.mxu0 0
        %4057 = vmatmul.mubr.bf16.gmra.mxu0 %v4013
        %v4058 = vpop.f32.mrf.mxu0
        %v4059 = vadd.f32 0.0, %v4058
        %v4060 = vpop.f32.mrf.mxu0
        %v4061 = vpop.f32.mrf.mxu0
        %v4062 = vadd.f32 0.0, %v4061
        %v4063 = vpop.f32.mrf.mxu0
        %4064 = vmatprep.mubr.bf16.mxu0 0
        %4065 = vmatmul.mubr.bf16.gmra.mxu0 %v4016
        %v4066 = vpop.f32.mrf.mxu0
        %v4067 = vadd.f32 0.0, %v4066
        %v4068 = vpop.f32.mrf.mxu0
        %v4069 = vpop.f32.mrf.mxu0
        %v4070 = vadd.f32 0.0, %v4069
        %v4071 = vpop.f32.mrf.mxu0
        %4072 = vmatprep.mubr.bf16.mxu0 0
        %4073 = vmatmul.mubr.bf16.gmra.mxu0 %v4019
        %v4074 = vpop.f32.mrf.mxu0
        %v4075 = vadd.f32 0.0, %v4074
        %v4076 = vpop.f32.mrf.mxu0
        %v4077 = vpop.f32.mrf.mxu0
        %v4078 = vadd.f32 0.0, %v4077
        %v4079 = vpop.f32.mrf.mxu0
        %4080 = vmatprep.mubr.bf16.mxu0 0
        %4081 = vmatmul.mubr.bf16.gmra.mxu0 %v4022
        %v4082 = vpop.f32.mrf.mxu0
        %v4083 = vadd.f32 0.0, %v4082
        %v4084 = vpop.f32.mrf.mxu0
        %v4085 = vpop.f32.mrf.mxu0
        %v4086 = vadd.f32 0.0, %v4085
        %v4087 = vpop.f32.mrf.mxu0
        %4088 = vdwg.mxu0
        %v4089 = vadd.f32 %v3977, %v4059
        %v4090 = vadd.f32 %v3978, %v4062
        %v4091 = vadd.f32 %v3979, %v4067
        %v4092 = vadd.f32 %v3980, %v4070
        %v4093 = vadd.f32 %v3981, %v4075
        %v4094 = vadd.f32 %v3982, %v4078
        %v4095 = vadd.f32 %v3983, %v4083
        %v4096 = vadd.f32 %v3984, %v4086
        %v4097 = vld [vmem:[%s4] sm:$0x1]
        %v4099 = vlaneseq
        %v4100 = vshrl.u32 %v4099, 7
        %v4101 = vsub.s32 0, %v4100
        %v4102 = vrot.slane %v4097, %v4101
        %v4104 = vadd.f32 %v4089, %v4102
        %v4105 = vadd.f32 %v4090, %v4102
        %v4106 = vadd.f32 %v4091, %v4102
        %v4107 = vadd.f32 %v4092, %v4102
        %v4108 = vadd.f32 %v4093, %v4102
        %v4109 = vadd.f32 %v4094, %v4102
        %v4110 = vadd.f32 %v4095, %v4102
        %v4111 = vadd.f32 %v4096, %v4102
        %v4112 = vmax.f32 %v4104, 0.0
        %v4113 = vmax.f32 %v4105, 0.0
        %v4114 = vmax.f32 %v4106, 0.0
        %v4115 = vmax.f32 %v4107, 0.0
        %v4116 = vmax.f32 %v4108, 0.0
        %v4117 = vmax.f32 %v4109, 0.0
        %v4118 = vmax.f32 %v4110, 0.0
        %v4119 = vmax.f32 %v4111, 0.0
        %v4120 = vld [vmem:[%s5] sm:$0xf]
        %v4121 = vld [vmem:[%s5 + $0x4] sm:$0xf]
        %v4122 = vld [vmem:[%s5 + $0x8] sm:$0xf]
        %v4123 = vld [vmem:[%s5 + $0xc] sm:$0xf]
        %v4124 = vld [vmem:[%s5 + $0x10] sm:$0xf]
        %v4125 = vld [vmem:[%s5 + $0x14] sm:$0xf]
        %v4126 = vld [vmem:[%s5 + $0x18] sm:$0xf]
        %v4127 = vld [vmem:[%s5 + $0x1c] sm:$0xf]
        %v4128 = vpack.c.bf16 %v4113, %v4112
        %v4129 = vpack.c.bf16 %v4115, %v4114
        %v4130 = vpack.c.bf16 %v4117, %v4116
        %v4131 = vld [vmem:[%s5 + $0x20] sm:$0xf]
        %v4132 = vld [vmem:[%s5 + $0x24] sm:$0xf]
        %v4133 = vld [vmem:[%s5 + $0x28] sm:$0xf]
        %v4134 = vld [vmem:[%s5 + $0x2c] sm:$0xf]
        %v4135 = vld [vmem:[%s5 + $0x30] sm:$0xf]
        %v4136 = vld [vmem:[%s5 + $0x34] sm:$0xf]
        %v4137 = vld [vmem:[%s5 + $0x38] sm:$0xf]
        %v4138 = vld [vmem:[%s5 + $0x3c] sm:$0xf]
        %v4140 = vshrl.u32 %v4128, 16
        %v4142 = vshll.u32 %v4128, 16
        %v4144 = vrot.slane %v4142, 1
        %v4145 = vor.u32 %v4140, %v4144
        %v4147 = vshll.u32 %v4129, 16
        %v4149 = vrot.slane %v4147, 1
        %v4150 = vsel %vm2198, %v4145, %v4149
        %v4151 = vshrl.u32 %v4129, 16
        %v4153 = vor.u32 %v4151, %v4149
        %v4155 = vshll.u32 %v4130, 16
        %v4157 = vrot.slane %v4155, 1
        %v4158 = vsel %vm2198, %v4153, %v4157
        %v4159 = vshrl.u32 %v4130, 16
        %v4161 = vor.u32 %v4159, %v4157
        %v4170 = vunpack.c.l.b16 %v4131
        %v4171 = vunpack.c.l.b16 %v4132
        %v4172 = vunpack.c.l.b16 %v4133
        %v4173 = vunpack.c.l.b16 %v4134
        %v4174 = vunpack.c.l.b16 %v4135
        %v4175 = vunpack.c.l.b16 %v4136
        %v4176 = vunpack.c.l.b16 %v4137
        %v4177 = vunpack.c.l.b16 %v4138
        %v4178 = vpack.c.b16 %v4171, %v4170
        %v4179 = vpack.c.b16 %v4173, %v4172
        %v4180 = vpack.c.b16 %v4175, %v4174
        %v4181 = vpack.c.b16 %v4177, %v4176
        %v4187 = vsel %vm561, %v4150, 0
        %v4190 = vsel %vm561, %v4158, 0
        %v4193 = vsel %vm561, %v4161, 0
        %4195 = vmatprep.subr.bf16.mxu0 0
        %4196 = vmatpush1.bf16.msra.mxu0 0
        %4197 = vmatprep.subr.bf16.mxu0 0
        %4198 = vmatpush1.bf16.msra.mxu0 0
        %4199 = vmatprep.subr.bf16.mxu0 0
        %4200 = vmatpush1.bf16.msra.mxu0 0
        %4201 = vmatprep.subr.bf16.mxu0 0
        %4202 = vmatpush1.bf16.msra.mxu0 0
        %4203 = vmatprep.subr.bf16.mxu0 0
        %4204 = vmatpush1.bf16.msra.mxu0 %v4181
        %4205 = vmatprep.subr.bf16.mxu0 0
        %4206 = vmatpush1.bf16.msra.mxu0 %v4180
        %4207 = vmatprep.subr.bf16.mxu0 0
        %4208 = vmatpush1.bf16.msra.mxu0 %v4179
        %4209 = vmatprep.subr.bf16.mxu0 0
        %4210 = vmatpush1.bf16.msra.mxu0 %v4178
        %4211 = vmatprep.subr.bf16.mxu0 0
        %4212 = vmatpush2.bf16.msra.mxu0 0
        %4213 = vmatprep.subr.bf16.mxu0 0
        %4214 = vmatpush2.bf16.msra.mxu0 0
        %4215 = vmatprep.subr.bf16.mxu0 0
        %4216 = vmatpush2.bf16.msra.mxu0 0
        %4217 = vmatprep.subr.bf16.mxu0 0
        %4218 = vmatpush2.bf16.msra.mxu0 0
        %4219 = vmatprep.subr.bf16.mxu0 0
        %4220 = vmatpush2.bf16.msra.mxu0 0
        %4221 = vmatprep.subr.bf16.mxu0 0
        %4222 = vmatpush2.bf16.msra.mxu0 0
        %4223 = vmatprep.subr.bf16.mxu0 0
        %4224 = vmatpush2.bf16.msra.mxu0 0
        %4225 = vmatprep.subr.bf16.mxu0 0
        %4226 = vmatpush2.bf16.msra.mxu0 0
        %4227 = vmatprep.mubr.bf16.mxu0 0
        %4228 = vmatmul.mubr.bf16.gmra.mxu0 %v4187
        %v4229 = vpop.f32.mrf.mxu0
        %v4230 = vadd.f32 0.0, %v4229
        %v4231 = vpop.f32.mrf.mxu0
        %v4232 = vpop.f32.mrf.mxu0
        %v4233 = vadd.f32 0.0, %v4232
        %v4234 = vpop.f32.mrf.mxu0
        %4235 = vmatprep.mubr.bf16.mxu0 0
        %4236 = vmatmul.mubr.bf16.gmra.mxu0 %v4190
        %v4237 = vpop.f32.mrf.mxu0
        %v4238 = vadd.f32 0.0, %v4237
        %v4239 = vpop.f32.mrf.mxu0
        %v4240 = vpop.f32.mrf.mxu0
        %v4241 = vadd.f32 0.0, %v4240
        %v4242 = vpop.f32.mrf.mxu0
        %4243 = vmatprep.mubr.bf16.mxu0 0
        %4244 = vmatmul.mubr.bf16.gmra.mxu0 %v4193
        %v4245 = vpop.f32.mrf.mxu0
        %v4246 = vadd.f32 0.0, %v4245
        %v4247 = vpop.f32.mrf.mxu0
        %v4248 = vpop.f32.mrf.mxu0
        %v4249 = vadd.f32 0.0, %v4248
        %v4250 = vpop.f32.mrf.mxu0
        %4251 = vdwg.mxu0
        %v4260 = vunpack.c.l.b16 %v4120
        %v4261 = vunpack.c.l.b16 %v4121
        %v4262 = vunpack.c.l.b16 %v4122
        %v4263 = vunpack.c.l.b16 %v4123
        %v4264 = vunpack.c.l.b16 %v4124
        %v4265 = vunpack.c.l.b16 %v4125
        %v4266 = vunpack.c.l.b16 %v4126
        %v4267 = vunpack.c.l.b16 %v4127
        %v4268 = vpack.c.b16 %v4261, %v4260
        %v4269 = vpack.c.b16 %v4263, %v4262
        %v4270 = vpack.c.b16 %v4265, %v4264
        %v4271 = vpack.c.b16 %v4267, %v4266
        %v4276 = vsel %vm561, %v4128, 0
        %v4278 = vsel %vm561, %v4129, 0
        %v4280 = vsel %vm561, %v4130, 0
        %4282 = vmatprep.subr.bf16.mxu0 0
        %4283 = vmatpush1.bf16.msra.mxu0 0
        %4284 = vmatprep.subr.bf16.mxu0 0
        %4285 = vmatpush1.bf16.msra.mxu0 0
        %4286 = vmatprep.subr.bf16.mxu0 0
        %4287 = vmatpush1.bf16.msra.mxu0 0
        %4288 = vmatprep.subr.bf16.mxu0 0
        %4289 = vmatpush1.bf16.msra.mxu0 0
        %4290 = vmatprep.subr.bf16.mxu0 0
        %4291 = vmatpush1.bf16.msra.mxu0 %v4271
        %4292 = vmatprep.subr.bf16.mxu0 0
        %4293 = vmatpush1.bf16.msra.mxu0 %v4270
        %4294 = vmatprep.subr.bf16.mxu0 0
        %4295 = vmatpush1.bf16.msra.mxu0 %v4269
        %4296 = vmatprep.subr.bf16.mxu0 0
        %4297 = vmatpush1.bf16.msra.mxu0 %v4268
        %4298 = vmatprep.subr.bf16.mxu0 0
        %4299 = vmatpush2.bf16.msra.mxu0 0
        %4300 = vmatprep.subr.bf16.mxu0 0
        %4301 = vmatpush2.bf16.msra.mxu0 0
        %4302 = vmatprep.subr.bf16.mxu0 0
        %4303 = vmatpush2.bf16.msra.mxu0 0
        %4304 = vmatprep.subr.bf16.mxu0 0
        %4305 = vmatpush2.bf16.msra.mxu0 0
        %4306 = vmatprep.subr.bf16.mxu0 0
        %4307 = vmatpush2.bf16.msra.mxu0 0
        %4308 = vmatprep.subr.bf16.mxu0 0
        %4309 = vmatpush2.bf16.msra.mxu0 0
        %4310 = vmatprep.subr.bf16.mxu0 0
        %4311 = vmatpush2.bf16.msra.mxu0 0
        %4312 = vmatprep.subr.bf16.mxu0 0
        %4313 = vmatpush2.bf16.msra.mxu0 0
        %4314 = vmatprep.mubr.bf16.mxu0 0
        %4315 = vmatmul.mubr.bf16.gmra.mxu0 %v4276
        %v4316 = vpop.f32.mrf.mxu0
        %v4317 = vadd.f32 %v4230, %v4316
        %v4318 = vpop.f32.mrf.mxu0
        %v4319 = vpop.f32.mrf.mxu0
        %v4320 = vadd.f32 %v4233, %v4319
        %v4321 = vpop.f32.mrf.mxu0
        %4322 = vmatprep.mubr.bf16.mxu0 0
        %4323 = vmatmul.mubr.bf16.gmra.mxu0 %v4278
        %v4324 = vpop.f32.mrf.mxu0
        %v4325 = vadd.f32 %v4238, %v4324
        %v4326 = vpop.f32.mrf.mxu0
        %v4327 = vpop.f32.mrf.mxu0
        %v4328 = vadd.f32 %v4241, %v4327
        %v4329 = vpop.f32.mrf.mxu0
        %4330 = vmatprep.mubr.bf16.mxu0 0
        %4331 = vmatmul.mubr.bf16.gmra.mxu0 %v4280
        %v4332 = vpop.f32.mrf.mxu0
        %v4333 = vadd.f32 %v4246, %v4332
        %v4334 = vpop.f32.mrf.mxu0
        %v4335 = vpop.f32.mrf.mxu0
        %v4336 = vadd.f32 %v4249, %v4335
        %v4337 = vpop.f32.mrf.mxu0
        %4338 = vdwg.mxu0
        %v4339 = vld [vmem:[%s5 + $0x40] sm:$0xf]
        %v4340 = vld [vmem:[%s5 + $0x44] sm:$0xf]
        %v4341 = vld [vmem:[%s5 + $0x48] sm:$0xf]
        %v4342 = vld [vmem:[%s5 + $0x4c] sm:$0xf]
        %v4343 = vld [vmem:[%s5 + $0x50] sm:$0xf]
        %v4344 = vld [vmem:[%s5 + $0x54] sm:$0xf]
        %v4345 = vld [vmem:[%s5 + $0x58] sm:$0xf]
        %v4346 = vld [vmem:[%s5 + $0x5c] sm:$0xf]
        %v4350 = vrot.slane %v4128, 1
        %v4351 = vrot.slane %v4129, 1
        %v4352 = vsel %vm2549, %v4350, %v4351
        %v4353 = vrot.slane %v4130, 1
        %v4354 = vsel %vm2549, %v4351, %v4353
        %v4363 = vunpack.c.l.b16 %v4339
        %v4364 = vunpack.c.l.b16 %v4340
        %v4365 = vunpack.c.l.b16 %v4341
        %v4366 = vunpack.c.l.b16 %v4342
        %v4367 = vunpack.c.l.b16 %v4343
        %v4368 = vunpack.c.l.b16 %v4344
        %v4369 = vunpack.c.l.b16 %v4345
        %v4370 = vunpack.c.l.b16 %v4346
        %v4371 = vpack.c.b16 %v4364, %v4363
        %v4372 = vpack.c.b16 %v4366, %v4365
        %v4373 = vpack.c.b16 %v4368, %v4367
        %v4374 = vpack.c.b16 %v4370, %v4369
        %v4380 = vsel %vm561, %v4352, 0
        %v4383 = vsel %vm561, %v4354, 0
        %v4386 = vsel %vm561, %v4353, 0
        %4388 = vmatprep.subr.bf16.mxu0 0
        %4389 = vmatpush1.bf16.msra.mxu0 0
        %4390 = vmatprep.subr.bf16.mxu0 0
        %4391 = vmatpush1.bf16.msra.mxu0 0
        %4392 = vmatprep.subr.bf16.mxu0 0
        %4393 = vmatpush1.bf16.msra.mxu0 0
        %4394 = vmatprep.subr.bf16.mxu0 0
        %4395 = vmatpush1.bf16.msra.mxu0 0
        %4396 = vmatprep.subr.bf16.mxu0 0
        %4397 = vmatpush1.bf16.msra.mxu0 %v4374
        %4398 = vmatprep.subr.bf16.mxu0 0
        %4399 = vmatpush1.bf16.msra.mxu0 %v4373
        %4400 = vmatprep.subr.bf16.mxu0 0
        %4401 = vmatpush1.bf16.msra.mxu0 %v4372
        %4402 = vmatprep.subr.bf16.mxu0 0
        %4403 = vmatpush1.bf16.msra.mxu0 %v4371
        %4404 = vmatprep.subr.bf16.mxu0 0
        %4405 = vmatpush2.bf16.msra.mxu0 0
        %4406 = vmatprep.subr.bf16.mxu0 0
        %4407 = vmatpush2.bf16.msra.mxu0 0
        %4408 = vmatprep.subr.bf16.mxu0 0
        %4409 = vmatpush2.bf16.msra.mxu0 0
        %4410 = vmatprep.subr.bf16.mxu0 0
        %4411 = vmatpush2.bf16.msra.mxu0 0
        %4412 = vmatprep.subr.bf16.mxu0 0
        %4413 = vmatpush2.bf16.msra.mxu0 0
        %4414 = vmatprep.subr.bf16.mxu0 0
        %4415 = vmatpush2.bf16.msra.mxu0 0
        %4416 = vmatprep.subr.bf16.mxu0 0
        %4417 = vmatpush2.bf16.msra.mxu0 0
        %4418 = vmatprep.subr.bf16.mxu0 0
        %4419 = vmatpush2.bf16.msra.mxu0 0
        %4420 = vmatprep.mubr.bf16.mxu0 0
        %4421 = vmatmul.mubr.bf16.gmra.mxu0 %v4380
        %v4422 = vpop.f32.mrf.mxu0
        %v4423 = vadd.f32 0.0, %v4422
        %v4424 = vpop.f32.mrf.mxu0
        %v4425 = vpop.f32.mrf.mxu0
        %v4426 = vadd.f32 0.0, %v4425
        %v4427 = vpop.f32.mrf.mxu0
        %4428 = vmatprep.mubr.bf16.mxu0 0
        %4429 = vmatmul.mubr.bf16.gmra.mxu0 %v4383
        %v4430 = vpop.f32.mrf.mxu0
        %v4431 = vadd.f32 0.0, %v4430
        %v4432 = vpop.f32.mrf.mxu0
        %v4433 = vpop.f32.mrf.mxu0
        %v4434 = vadd.f32 0.0, %v4433
        %v4435 = vpop.f32.mrf.mxu0
        %4436 = vmatprep.mubr.bf16.mxu0 0
        %4437 = vmatmul.mubr.bf16.gmra.mxu0 %v4386
        %v4438 = vpop.f32.mrf.mxu0
        %v4439 = vadd.f32 0.0, %v4438
        %v4440 = vpop.f32.mrf.mxu0
        %v4441 = vpop.f32.mrf.mxu0
        %v4442 = vadd.f32 0.0, %v4441
        %v4443 = vpop.f32.mrf.mxu0
        %4444 = vdwg.mxu0
        %v4445 = vadd.f32 %v4317, %v4423
        %v4446 = vadd.f32 %v4320, %v4426
        %v4447 = vadd.f32 %v4325, %v4431
        %v4448 = vadd.f32 %v4328, %v4434
        %v4449 = vadd.f32 %v4333, %v4439
        %v4450 = vadd.f32 %v4336, %v4442
        %v4451 = vld [vmem:[%s5 + $0x60] sm:$0xf]
        %v4452 = vld [vmem:[%s5 + $0x64] sm:$0xf]
        %v4453 = vld [vmem:[%s5 + $0x68] sm:$0xf]
        %v4454 = vld [vmem:[%s5 + $0x6c] sm:$0xf]
        %v4455 = vld [vmem:[%s5 + $0x70] sm:$0xf]
        %v4456 = vld [vmem:[%s5 + $0x74] sm:$0xf]
        %v4457 = vld [vmem:[%s5 + $0x78] sm:$0xf]
        %v4458 = vld [vmem:[%s5 + $0x7c] sm:$0xf]
        %v4459 = vpack.c.bf16 %v4114, %v4113
        %v4460 = vpack.c.bf16 %v4116, %v4115
        %v4461 = vpack.c.bf16 %v4118, %v4117
        %v4463 = vshrl.u32 %v4459, 16
        %v4465 = vshll.u32 %v4459, 16
        %v4467 = vrot.slane %v4465, 1
        %v4468 = vor.u32 %v4463, %v4467
        %v4470 = vshll.u32 %v4460, 16
        %v4472 = vrot.slane %v4470, 1
        %v4473 = vsel %vm2198, %v4468, %v4472
        %v4474 = vshrl.u32 %v4460, 16
        %v4476 = vor.u32 %v4474, %v4472
        %v4478 = vshll.u32 %v4461, 16
        %v4480 = vrot.slane %v4478, 1
        %v4481 = vsel %vm2198, %v4476, %v4480
        %v4482 = vshrl.u32 %v4461, 16
        %v4484 = vor.u32 %v4482, %v4480
        %v4493 = vunpack.c.l.b16 %v4451
        %v4494 = vunpack.c.l.b16 %v4452
        %v4495 = vunpack.c.l.b16 %v4453
        %v4496 = vunpack.c.l.b16 %v4454
        %v4497 = vunpack.c.l.b16 %v4455
        %v4498 = vunpack.c.l.b16 %v4456
        %v4499 = vunpack.c.l.b16 %v4457
        %v4500 = vunpack.c.l.b16 %v4458
        %v4501 = vpack.c.b16 %v4494, %v4493
        %v4502 = vpack.c.b16 %v4496, %v4495
        %v4503 = vpack.c.b16 %v4498, %v4497
        %v4504 = vpack.c.b16 %v4500, %v4499
        %v4510 = vsel %vm561, %v4473, 0
        %v4513 = vsel %vm561, %v4481, 0
        %v4516 = vsel %vm561, %v4484, 0
        %4518 = vmatprep.subr.bf16.mxu0 0
        %4519 = vmatpush1.bf16.msra.mxu0 0
        %4520 = vmatprep.subr.bf16.mxu0 0
        %4521 = vmatpush1.bf16.msra.mxu0 0
        %4522 = vmatprep.subr.bf16.mxu0 0
        %4523 = vmatpush1.bf16.msra.mxu0 0
        %4524 = vmatprep.subr.bf16.mxu0 0
        %4525 = vmatpush1.bf16.msra.mxu0 0
        %4526 = vmatprep.subr.bf16.mxu0 0
        %4527 = vmatpush1.bf16.msra.mxu0 %v4504
        %4528 = vmatprep.subr.bf16.mxu0 0
        %4529 = vmatpush1.bf16.msra.mxu0 %v4503
        %4530 = vmatprep.subr.bf16.mxu0 0
        %4531 = vmatpush1.bf16.msra.mxu0 %v4502
        %4532 = vmatprep.subr.bf16.mxu0 0
        %4533 = vmatpush1.bf16.msra.mxu0 %v4501
        %4534 = vmatprep.subr.bf16.mxu0 0
        %4535 = vmatpush2.bf16.msra.mxu0 0
        %4536 = vmatprep.subr.bf16.mxu0 0
        %4537 = vmatpush2.bf16.msra.mxu0 0
        %4538 = vmatprep.subr.bf16.mxu0 0
        %4539 = vmatpush2.bf16.msra.mxu0 0
        %4540 = vmatprep.subr.bf16.mxu0 0
        %4541 = vmatpush2.bf16.msra.mxu0 0
        %4542 = vmatprep.subr.bf16.mxu0 0
        %4543 = vmatpush2.bf16.msra.mxu0 0
        %4544 = vmatprep.subr.bf16.mxu0 0
        %4545 = vmatpush2.bf16.msra.mxu0 0
        %4546 = vmatprep.subr.bf16.mxu0 0
        %4547 = vmatpush2.bf16.msra.mxu0 0
        %4548 = vmatprep.subr.bf16.mxu0 0
        %4549 = vmatpush2.bf16.msra.mxu0 0
        %4550 = vmatprep.mubr.bf16.mxu0 0
        %4551 = vmatmul.mubr.bf16.gmra.mxu0 %v4510
        %v4552 = vpop.f32.mrf.mxu0
        %v4553 = vadd.f32 0.0, %v4552
        %v4554 = vpop.f32.mrf.mxu0
        %v4555 = vpop.f32.mrf.mxu0
        %v4556 = vadd.f32 0.0, %v4555
        %v4557 = vpop.f32.mrf.mxu0
        %4558 = vmatprep.mubr.bf16.mxu0 0
        %4559 = vmatmul.mubr.bf16.gmra.mxu0 %v4513
        %v4560 = vpop.f32.mrf.mxu0
        %v4561 = vadd.f32 0.0, %v4560
        %v4562 = vpop.f32.mrf.mxu0
        %v4563 = vpop.f32.mrf.mxu0
        %v4564 = vadd.f32 0.0, %v4563
        %v4565 = vpop.f32.mrf.mxu0
        %4566 = vmatprep.mubr.bf16.mxu0 0
        %4567 = vmatmul.mubr.bf16.gmra.mxu0 %v4516
        %v4568 = vpop.f32.mrf.mxu0
        %v4569 = vadd.f32 0.0, %v4568
        %v4570 = vpop.f32.mrf.mxu0
        %v4571 = vpop.f32.mrf.mxu0
        %v4572 = vadd.f32 0.0, %v4571
        %v4573 = vpop.f32.mrf.mxu0
        %4574 = vdwg.mxu0
        %v4575 = vadd.f32 %v4445, %v4553
        %v4576 = vadd.f32 %v4446, %v4556
        %v4577 = vadd.f32 %v4447, %v4561
        %v4578 = vadd.f32 %v4448, %v4564
        %v4579 = vadd.f32 %v4449, %v4569
        %v4580 = vadd.f32 %v4450, %v4572
        %v4581 = vld [vmem:[%s5 + $0x80] sm:$0xf]
        %v4582 = vld [vmem:[%s5 + $0x84] sm:$0xf]
        %v4583 = vld [vmem:[%s5 + $0x88] sm:$0xf]
        %v4584 = vld [vmem:[%s5 + $0x8c] sm:$0xf]
        %v4585 = vld [vmem:[%s5 + $0x90] sm:$0xf]
        %v4586 = vld [vmem:[%s5 + $0x94] sm:$0xf]
        %v4587 = vld [vmem:[%s5 + $0x98] sm:$0xf]
        %v4588 = vld [vmem:[%s5 + $0x9c] sm:$0xf]
        %v4592 = vrot.slane %v4459, 1
        %v4593 = vrot.slane %v4460, 1
        %v4594 = vsel %vm2549, %v4592, %v4593
        %v4595 = vrot.slane %v4461, 1
        %v4596 = vsel %vm2549, %v4593, %v4595
        %v4605 = vunpack.c.l.b16 %v4581
        %v4606 = vunpack.c.l.b16 %v4582
        %v4607 = vunpack.c.l.b16 %v4583
        %v4608 = vunpack.c.l.b16 %v4584
        %v4609 = vunpack.c.l.b16 %v4585
        %v4610 = vunpack.c.l.b16 %v4586
        %v4611 = vunpack.c.l.b16 %v4587
        %v4612 = vunpack.c.l.b16 %v4588
        %v4613 = vpack.c.b16 %v4606, %v4605
        %v4614 = vpack.c.b16 %v4608, %v4607
        %v4615 = vpack.c.b16 %v4610, %v4609
        %v4616 = vpack.c.b16 %v4612, %v4611
        %v4622 = vsel %vm561, %v4594, 0
        %v4625 = vsel %vm561, %v4596, 0
        %v4628 = vsel %vm561, %v4595, 0
        %4630 = vmatprep.subr.bf16.mxu0 0
        %4631 = vmatpush1.bf16.msra.mxu0 0
        %4632 = vmatprep.subr.bf16.mxu0 0
        %4633 = vmatpush1.bf16.msra.mxu0 0
        %4634 = vmatprep.subr.bf16.mxu0 0
        %4635 = vmatpush1.bf16.msra.mxu0 0
        %4636 = vmatprep.subr.bf16.mxu0 0
        %4637 = vmatpush1.bf16.msra.mxu0 0
        %4638 = vmatprep.subr.bf16.mxu0 0
        %4639 = vmatpush1.bf16.msra.mxu0 %v4616
        %4640 = vmatprep.subr.bf16.mxu0 0
        %4641 = vmatpush1.bf16.msra.mxu0 %v4615
        %4642 = vmatprep.subr.bf16.mxu0 0
        %4643 = vmatpush1.bf16.msra.mxu0 %v4614
        %4644 = vmatprep.subr.bf16.mxu0 0
        %4645 = vmatpush1.bf16.msra.mxu0 %v4613
        %4646 = vmatprep.subr.bf16.mxu0 0
        %4647 = vmatpush2.bf16.msra.mxu0 0
        %4648 = vmatprep.subr.bf16.mxu0 0
        %4649 = vmatpush2.bf16.msra.mxu0 0
        %4650 = vmatprep.subr.bf16.mxu0 0
        %4651 = vmatpush2.bf16.msra.mxu0 0
        %4652 = vmatprep.subr.bf16.mxu0 0
        %4653 = vmatpush2.bf16.msra.mxu0 0
        %4654 = vmatprep.subr.bf16.mxu0 0
        %4655 = vmatpush2.bf16.msra.mxu0 0
        %4656 = vmatprep.subr.bf16.mxu0 0
        %4657 = vmatpush2.bf16.msra.mxu0 0
        %4658 = vmatprep.subr.bf16.mxu0 0
        %4659 = vmatpush2.bf16.msra.mxu0 0
        %4660 = vmatprep.subr.bf16.mxu0 0
        %4661 = vmatpush2.bf16.msra.mxu0 0
        %4662 = vmatprep.mubr.bf16.mxu0 0
        %4663 = vmatmul.mubr.bf16.gmra.mxu0 %v4622
        %v4664 = vpop.f32.mrf.mxu0
        %v4665 = vadd.f32 0.0, %v4664
        %v4666 = vpop.f32.mrf.mxu0
        %v4667 = vpop.f32.mrf.mxu0
        %v4668 = vadd.f32 0.0, %v4667
        %v4669 = vpop.f32.mrf.mxu0
        %4670 = vmatprep.mubr.bf16.mxu0 0
        %4671 = vmatmul.mubr.bf16.gmra.mxu0 %v4625
        %v4672 = vpop.f32.mrf.mxu0
        %v4673 = vadd.f32 0.0, %v4672
        %v4674 = vpop.f32.mrf.mxu0
        %v4675 = vpop.f32.mrf.mxu0
        %v4676 = vadd.f32 0.0, %v4675
        %v4677 = vpop.f32.mrf.mxu0
        %4678 = vmatprep.mubr.bf16.mxu0 0
        %4679 = vmatmul.mubr.bf16.gmra.mxu0 %v4628
        %v4680 = vpop.f32.mrf.mxu0
        %v4681 = vadd.f32 0.0, %v4680
        %v4682 = vpop.f32.mrf.mxu0
        %v4683 = vpop.f32.mrf.mxu0
        %v4684 = vadd.f32 0.0, %v4683
        %v4685 = vpop.f32.mrf.mxu0
        %4686 = vdwg.mxu0
        %v4687 = vadd.f32 %v4575, %v4665
        %v4688 = vadd.f32 %v4576, %v4668
        %v4689 = vadd.f32 %v4577, %v4673
        %v4690 = vadd.f32 %v4578, %v4676
        %v4691 = vadd.f32 %v4579, %v4681
        %v4692 = vadd.f32 %v4580, %v4684
        %v4693 = vld [vmem:[%s5 + $0xa0] sm:$0xf]
        %v4694 = vld [vmem:[%s5 + $0xa4] sm:$0xf]
        %v4695 = vld [vmem:[%s5 + $0xa8] sm:$0xf]
        %v4696 = vld [vmem:[%s5 + $0xac] sm:$0xf]
        %v4697 = vld [vmem:[%s5 + $0xb0] sm:$0xf]
        %v4698 = vld [vmem:[%s5 + $0xb4] sm:$0xf]
        %v4699 = vld [vmem:[%s5 + $0xb8] sm:$0xf]
        %v4700 = vld [vmem:[%s5 + $0xbc] sm:$0xf]
        %vm4701 = vsmask.f32 6400
        %v4702 = vrot.slane %v4463, 1
        %v4703 = vrot.slane %v4465, 2
        %v4704 = vor.u32 %v4702, %v4703
        %v4705 = vrot.slane %v4474, 1
        %v4706 = vrot.slane %v4470, 2
        %v4707 = vor.u32 %v4705, %v4706
        %v4708 = vsel %vm4701, %v4704, %v4707
        %v4709 = vrot.slane %v4482, 1
        %v4710 = vrot.slane %v4478, 2
        %v4711 = vor.u32 %v4709, %v4710
        %v4712 = vsel %vm4701, %v4707, %v4711
        %v4721 = vunpack.c.l.b16 %v4693
        %v4722 = vunpack.c.l.b16 %v4694
        %v4723 = vunpack.c.l.b16 %v4695
        %v4724 = vunpack.c.l.b16 %v4696
        %v4725 = vunpack.c.l.b16 %v4697
        %v4726 = vunpack.c.l.b16 %v4698
        %v4727 = vunpack.c.l.b16 %v4699
        %v4728 = vunpack.c.l.b16 %v4700
        %v4729 = vpack.c.b16 %v4722, %v4721
        %v4730 = vpack.c.b16 %v4724, %v4723
        %v4731 = vpack.c.b16 %v4726, %v4725
        %v4732 = vpack.c.b16 %v4728, %v4727
        %v4738 = vsel %vm561, %v4708, 0
        %v4741 = vsel %vm561, %v4712, 0
        %v4744 = vsel %vm561, %v4711, 0
        %4746 = vmatprep.subr.bf16.mxu0 0
        %4747 = vmatpush1.bf16.msra.mxu0 0
        %4748 = vmatprep.subr.bf16.mxu0 0
        %4749 = vmatpush1.bf16.msra.mxu0 0
        %4750 = vmatprep.subr.bf16.mxu0 0
        %4751 = vmatpush1.bf16.msra.mxu0 0
        %4752 = vmatprep.subr.bf16.mxu0 0
        %4753 = vmatpush1.bf16.msra.mxu0 0
        %4754 = vmatprep.subr.bf16.mxu0 0
        %4755 = vmatpush1.bf16.msra.mxu0 %v4732
        %4756 = vmatprep.subr.bf16.mxu0 0
        %4757 = vmatpush1.bf16.msra.mxu0 %v4731
        %4758 = vmatprep.subr.bf16.mxu0 0
        %4759 = vmatpush1.bf16.msra.mxu0 %v4730
        %4760 = vmatprep.subr.bf16.mxu0 0
        %4761 = vmatpush1.bf16.msra.mxu0 %v4729
        %4762 = vmatprep.subr.bf16.mxu0 0
        %4763 = vmatpush2.bf16.msra.mxu0 0
        %4764 = vmatprep.subr.bf16.mxu0 0
        %4765 = vmatpush2.bf16.msra.mxu0 0
        %4766 = vmatprep.subr.bf16.mxu0 0
        %4767 = vmatpush2.bf16.msra.mxu0 0
        %4768 = vmatprep.subr.bf16.mxu0 0
        %4769 = vmatpush2.bf16.msra.mxu0 0
        %4770 = vmatprep.subr.bf16.mxu0 0
        %4771 = vmatpush2.bf16.msra.mxu0 0
        %4772 = vmatprep.subr.bf16.mxu0 0
        %4773 = vmatpush2.bf16.msra.mxu0 0
        %4774 = vmatprep.subr.bf16.mxu0 0
        %4775 = vmatpush2.bf16.msra.mxu0 0
        %4776 = vmatprep.subr.bf16.mxu0 0
        %4777 = vmatpush2.bf16.msra.mxu0 0
        %4778 = vmatprep.mubr.bf16.mxu0 0
        %4779 = vmatmul.mubr.bf16.gmra.mxu0 %v4738
        %v4780 = vpop.f32.mrf.mxu0
        %v4781 = vadd.f32 0.0, %v4780
        %v4782 = vpop.f32.mrf.mxu0
        %v4783 = vpop.f32.mrf.mxu0
        %v4784 = vadd.f32 0.0, %v4783
        %v4785 = vpop.f32.mrf.mxu0
        %4786 = vmatprep.mubr.bf16.mxu0 0
        %4787 = vmatmul.mubr.bf16.gmra.mxu0 %v4741
        %v4788 = vpop.f32.mrf.mxu0
        %v4789 = vadd.f32 0.0, %v4788
        %v4790 = vpop.f32.mrf.mxu0
        %v4791 = vpop.f32.mrf.mxu0
        %v4792 = vadd.f32 0.0, %v4791
        %v4793 = vpop.f32.mrf.mxu0
        %4794 = vmatprep.mubr.bf16.mxu0 0
        %4795 = vmatmul.mubr.bf16.gmra.mxu0 %v4744
        %v4796 = vpop.f32.mrf.mxu0
        %v4797 = vadd.f32 0.0, %v4796
        %v4798 = vpop.f32.mrf.mxu0
        %v4799 = vpop.f32.mrf.mxu0
        %v4800 = vadd.f32 0.0, %v4799
        %v4801 = vpop.f32.mrf.mxu0
        %4802 = vdwg.mxu0
        %v4803 = vadd.f32 %v4687, %v4781
        %v4804 = vadd.f32 %v4688, %v4784
        %v4805 = vadd.f32 %v4689, %v4789
        %v4806 = vadd.f32 %v4690, %v4792
        %v4807 = vadd.f32 %v4691, %v4797
        %v4808 = vadd.f32 %v4692, %v4800
        %v4809 = vld [vmem:[%s5 + $0xc0] sm:$0xf]
        %v4810 = vld [vmem:[%s5 + $0xc4] sm:$0xf]
        %v4811 = vld [vmem:[%s5 + $0xc8] sm:$0xf]
        %v4812 = vld [vmem:[%s5 + $0xcc] sm:$0xf]
        %v4813 = vld [vmem:[%s5 + $0xd0] sm:$0xf]
        %v4814 = vld [vmem:[%s5 + $0xd4] sm:$0xf]
        %v4815 = vld [vmem:[%s5 + $0xd8] sm:$0xf]
        %v4816 = vld [vmem:[%s5 + $0xdc] sm:$0xf]
        %v4817 = vpack.c.bf16 %v4119, %v4118
        %v4819 = vrot.slane %v4817, 1
        %v4820 = vsel %vm2549, %v4353, %v4819
        %v4829 = vunpack.c.l.b16 %v4809
        %v4830 = vunpack.c.l.b16 %v4810
        %v4831 = vunpack.c.l.b16 %v4811
        %v4832 = vunpack.c.l.b16 %v4812
        %v4833 = vunpack.c.l.b16 %v4813
        %v4834 = vunpack.c.l.b16 %v4814
        %v4835 = vunpack.c.l.b16 %v4815
        %v4836 = vunpack.c.l.b16 %v4816
        %v4837 = vpack.c.b16 %v4830, %v4829
        %v4838 = vpack.c.b16 %v4832, %v4831
        %v4839 = vpack.c.b16 %v4834, %v4833
        %v4840 = vpack.c.b16 %v4836, %v4835
        %v4846 = vsel %vm561, %v4820, 0
        %v4849 = vsel %vm561, %v4819, 0
        %4851 = vmatprep.subr.bf16.mxu0 0
        %4852 = vmatpush1.bf16.msra.mxu0 0
        %4853 = vmatprep.subr.bf16.mxu0 0
        %4854 = vmatpush1.bf16.msra.mxu0 0
        %4855 = vmatprep.subr.bf16.mxu0 0
        %4856 = vmatpush1.bf16.msra.mxu0 0
        %4857 = vmatprep.subr.bf16.mxu0 0
        %4858 = vmatpush1.bf16.msra.mxu0 0
        %4859 = vmatprep.subr.bf16.mxu0 0
        %4860 = vmatpush1.bf16.msra.mxu0 %v4840
        %4861 = vmatprep.subr.bf16.mxu0 0
        %4862 = vmatpush1.bf16.msra.mxu0 %v4839
        %4863 = vmatprep.subr.bf16.mxu0 0
        %4864 = vmatpush1.bf16.msra.mxu0 %v4838
        %4865 = vmatprep.subr.bf16.mxu0 0
        %4866 = vmatpush1.bf16.msra.mxu0 %v4837
        %4867 = vmatprep.subr.bf16.mxu0 0
        %4868 = vmatpush2.bf16.msra.mxu0 0
        %4869 = vmatprep.subr.bf16.mxu0 0
        %4870 = vmatpush2.bf16.msra.mxu0 0
        %4871 = vmatprep.subr.bf16.mxu0 0
        %4872 = vmatpush2.bf16.msra.mxu0 0
        %4873 = vmatprep.subr.bf16.mxu0 0
        %4874 = vmatpush2.bf16.msra.mxu0 0
        %4875 = vmatprep.subr.bf16.mxu0 0
        %4876 = vmatpush2.bf16.msra.mxu0 0
        %4877 = vmatprep.subr.bf16.mxu0 0
        %4878 = vmatpush2.bf16.msra.mxu0 0
        %4879 = vmatprep.subr.bf16.mxu0 0
        %4880 = vmatpush2.bf16.msra.mxu0 0
        %4881 = vmatprep.subr.bf16.mxu0 0
        %4882 = vmatpush2.bf16.msra.mxu0 0
        %4883 = vmatprep.mubr.bf16.mxu0 0
        %4884 = vmatmul.mubr.bf16.gmra.mxu0 %v4383
        %v4885 = vpop.f32.mrf.mxu0
        %v4886 = vadd.f32 0.0, %v4885
        %v4887 = vpop.f32.mrf.mxu0
        %v4888 = vpop.f32.mrf.mxu0
        %v4889 = vadd.f32 0.0, %v4888
        %v4890 = vpop.f32.mrf.mxu0
        %4891 = vmatprep.mubr.bf16.mxu0 0
        %4892 = vmatmul.mubr.bf16.gmra.mxu0 %v4846
        %v4893 = vpop.f32.mrf.mxu0
        %v4894 = vadd.f32 0.0, %v4893
        %v4895 = vpop.f32.mrf.mxu0
        %v4896 = vpop.f32.mrf.mxu0
        %v4897 = vadd.f32 0.0, %v4896
        %v4898 = vpop.f32.mrf.mxu0
        %4899 = vmatprep.mubr.bf16.mxu0 0
        %4900 = vmatmul.mubr.bf16.gmra.mxu0 %v4849
        %v4901 = vpop.f32.mrf.mxu0
        %v4902 = vadd.f32 0.0, %v4901
        %v4903 = vpop.f32.mrf.mxu0
        %v4904 = vpop.f32.mrf.mxu0
        %v4905 = vadd.f32 0.0, %v4904
        %v4906 = vpop.f32.mrf.mxu0
        %4907 = vdwg.mxu0
        %v4908 = vadd.f32 %v4803, %v4886
        %v4909 = vadd.f32 %v4804, %v4889
        %v4910 = vadd.f32 %v4805, %v4894
        %v4911 = vadd.f32 %v4806, %v4897
        %v4912 = vadd.f32 %v4807, %v4902
        %v4913 = vadd.f32 %v4808, %v4905
        %v4914 = vld [vmem:[%s5 + $0xe0] sm:$0xf]
        %v4915 = vld [vmem:[%s5 + $0xe4] sm:$0xf]
        %v4916 = vld [vmem:[%s5 + $0xe8] sm:$0xf]
        %v4917 = vld [vmem:[%s5 + $0xec] sm:$0xf]
        %v4918 = vld [vmem:[%s5 + $0xf0] sm:$0xf]
        %v4919 = vld [vmem:[%s5 + $0xf4] sm:$0xf]
        %v4920 = vld [vmem:[%s5 + $0xf8] sm:$0xf]
        %v4921 = vld [vmem:[%s5 + $0xfc] sm:$0xf]
        %v4922 = vrot.slane %v4151, 1
        %v4923 = vrot.slane %v4147, 2
        %v4924 = vor.u32 %v4922, %v4923
        %v4925 = vrot.slane %v4159, 1
        %v4926 = vrot.slane %v4155, 2
        %v4927 = vor.u32 %v4925, %v4926
        %v4928 = vsel %vm4701, %v4924, %v4927
        %v4930 = vshrl.u32 %v4817, 16
        %v4932 = vrot.slane %v4930, 1
        %v4933 = vshll.u32 %v4817, 16
        %v4935 = vrot.slane %v4933, 2
        %v4936 = vor.u32 %v4932, %v4935
        %v4937 = vsel %vm4701, %v4927, %v4936
        %v4946 = vunpack.c.l.b16 %v4914
        %v4947 = vunpack.c.l.b16 %v4915
        %v4948 = vunpack.c.l.b16 %v4916
        %v4949 = vunpack.c.l.b16 %v4917
        %v4950 = vunpack.c.l.b16 %v4918
        %v4951 = vunpack.c.l.b16 %v4919
        %v4952 = vunpack.c.l.b16 %v4920
        %v4953 = vunpack.c.l.b16 %v4921
        %v4954 = vpack.c.b16 %v4947, %v4946
        %v4955 = vpack.c.b16 %v4949, %v4948
        %v4956 = vpack.c.b16 %v4951, %v4950
        %v4957 = vpack.c.b16 %v4953, %v4952
        %v4963 = vsel %vm561, %v4928, 0
        %v4966 = vsel %vm561, %v4937, 0
        %v4969 = vsel %vm561, %v4936, 0
        %4971 = vmatprep.subr.bf16.mxu0 0
        %4972 = vmatpush1.bf16.msra.mxu0 0
        %4973 = vmatprep.subr.bf16.mxu0 0
        %4974 = vmatpush1.bf16.msra.mxu0 0
        %4975 = vmatprep.subr.bf16.mxu0 0
        %4976 = vmatpush1.bf16.msra.mxu0 0
        %4977 = vmatprep.subr.bf16.mxu0 0
        %4978 = vmatpush1.bf16.msra.mxu0 0
        %4979 = vmatprep.subr.bf16.mxu0 0
        %4980 = vmatpush1.bf16.msra.mxu0 %v4957
        %4981 = vmatprep.subr.bf16.mxu0 0
        %4982 = vmatpush1.bf16.msra.mxu0 %v4956
        %4983 = vmatprep.subr.bf16.mxu0 0
        %4984 = vmatpush1.bf16.msra.mxu0 %v4955
        %4985 = vmatprep.subr.bf16.mxu0 0
        %4986 = vmatpush1.bf16.msra.mxu0 %v4954
        %4987 = vmatprep.subr.bf16.mxu0 0
        %4988 = vmatpush2.bf16.msra.mxu0 0
        %4989 = vmatprep.subr.bf16.mxu0 0
        %4990 = vmatpush2.bf16.msra.mxu0 0
        %4991 = vmatprep.subr.bf16.mxu0 0
        %4992 = vmatpush2.bf16.msra.mxu0 0
        %4993 = vmatprep.subr.bf16.mxu0 0
        %4994 = vmatpush2.bf16.msra.mxu0 0
        %4995 = vmatprep.subr.bf16.mxu0 0
        %4996 = vmatpush2.bf16.msra.mxu0 0
        %4997 = vmatprep.subr.bf16.mxu0 0
        %4998 = vmatpush2.bf16.msra.mxu0 0
        %4999 = vmatprep.subr.bf16.mxu0 0
        %5000 = vmatpush2.bf16.msra.mxu0 0
        %5001 = vmatprep.subr.bf16.mxu0 0
        %5002 = vmatpush2.bf16.msra.mxu0 0
        %5003 = vmatprep.mubr.bf16.mxu0 0
        %5004 = vmatmul.mubr.bf16.gmra.mxu0 %v4963
        %v5005 = vpop.f32.mrf.mxu0
        %v5006 = vadd.f32 0.0, %v5005
        %v5007 = vpop.f32.mrf.mxu0
        %v5008 = vpop.f32.mrf.mxu0
        %v5009 = vadd.f32 0.0, %v5008
        %v5010 = vpop.f32.mrf.mxu0
        %5011 = vmatprep.mubr.bf16.mxu0 0
        %5012 = vmatmul.mubr.bf16.gmra.mxu0 %v4966
        %v5013 = vpop.f32.mrf.mxu0
        %v5014 = vadd.f32 0.0, %v5013
        %v5015 = vpop.f32.mrf.mxu0
        %v5016 = vpop.f32.mrf.mxu0
        %v5017 = vadd.f32 0.0, %v5016
        %v5018 = vpop.f32.mrf.mxu0
        %5019 = vmatprep.mubr.bf16.mxu0 0
        %5020 = vmatmul.mubr.bf16.gmra.mxu0 %v4969
        %v5021 = vpop.f32.mrf.mxu0
        %v5022 = vadd.f32 0.0, %v5021
        %v5023 = vpop.f32.mrf.mxu0
        %v5024 = vpop.f32.mrf.mxu0
        %v5025 = vadd.f32 0.0, %v5024
        %v5026 = vpop.f32.mrf.mxu0
        %5027 = vdwg.mxu0
        %v5028 = vadd.f32 %v4908, %v5006
        %v5029 = vadd.f32 %v4909, %v5009
        %v5030 = vadd.f32 %v4910, %v5014
        %v5031 = vadd.f32 %v4911, %v5017
        %v5032 = vadd.f32 %v4912, %v5022
        %v5033 = vadd.f32 %v4913, %v5025
        %v5034 = vld [vmem:[%s5 + $0x100] sm:$0xf]
        %v5035 = vld [vmem:[%s5 + $0x104] sm:$0xf]
        %v5036 = vld [vmem:[%s5 + $0x108] sm:$0xf]
        %v5037 = vld [vmem:[%s5 + $0x10c] sm:$0xf]
        %v5038 = vld [vmem:[%s5 + $0x110] sm:$0xf]
        %v5039 = vld [vmem:[%s5 + $0x114] sm:$0xf]
        %v5040 = vld [vmem:[%s5 + $0x118] sm:$0xf]
        %v5041 = vld [vmem:[%s5 + $0x11c] sm:$0xf]
        %vm5042 = vcmask 1045504
        %v5043 = vrot.slane %v4129, 2
        %v5044 = vrot.slane %v4130, 2
        %v5045 = vsel %vm5042, %v5043, %v5044
        %v5046 = vrot.slane %v4817, 2
        %v5047 = vsel %vm5042, %v5044, %v5046
        %v5056 = vunpack.c.l.b16 %v5034
        %v5057 = vunpack.c.l.b16 %v5035
        %v5058 = vunpack.c.l.b16 %v5036
        %v5059 = vunpack.c.l.b16 %v5037
        %v5060 = vunpack.c.l.b16 %v5038
        %v5061 = vunpack.c.l.b16 %v5039
        %v5062 = vunpack.c.l.b16 %v5040
        %v5063 = vunpack.c.l.b16 %v5041
        %v5064 = vpack.c.b16 %v5057, %v5056
        %v5065 = vpack.c.b16 %v5059, %v5058
        %v5066 = vpack.c.b16 %v5061, %v5060
        %v5067 = vpack.c.b16 %v5063, %v5062
        %v5073 = vsel %vm561, %v5045, 0
        %v5076 = vsel %vm561, %v5047, 0
        %v5079 = vsel %vm561, %v5046, 0
        %5081 = vmatprep.subr.bf16.mxu0 0
        %5082 = vmatpush1.bf16.msra.mxu0 0
        %5083 = vmatprep.subr.bf16.mxu0 0
        %5084 = vmatpush1.bf16.msra.mxu0 0
        %5085 = vmatprep.subr.bf16.mxu0 0
        %5086 = vmatpush1.bf16.msra.mxu0 0
        %5087 = vmatprep.subr.bf16.mxu0 0
        %5088 = vmatpush1.bf16.msra.mxu0 0
        %5089 = vmatprep.subr.bf16.mxu0 0
        %5090 = vmatpush1.bf16.msra.mxu0 %v5067
        %5091 = vmatprep.subr.bf16.mxu0 0
        %5092 = vmatpush1.bf16.msra.mxu0 %v5066
        %5093 = vmatprep.subr.bf16.mxu0 0
        %5094 = vmatpush1.bf16.msra.mxu0 %v5065
        %5095 = vmatprep.subr.bf16.mxu0 0
        %5096 = vmatpush1.bf16.msra.mxu0 %v5064
        %5097 = vmatprep.subr.bf16.mxu0 0
        %5098 = vmatpush2.bf16.msra.mxu0 0
        %5099 = vmatprep.subr.bf16.mxu0 0
        %5100 = vmatpush2.bf16.msra.mxu0 0
        %5101 = vmatprep.subr.bf16.mxu0 0
        %5102 = vmatpush2.bf16.msra.mxu0 0
        %5103 = vmatprep.subr.bf16.mxu0 0
        %5104 = vmatpush2.bf16.msra.mxu0 0
        %5105 = vmatprep.subr.bf16.mxu0 0
        %5106 = vmatpush2.bf16.msra.mxu0 0
        %5107 = vmatprep.subr.bf16.mxu0 0
        %5108 = vmatpush2.bf16.msra.mxu0 0
        %5109 = vmatprep.subr.bf16.mxu0 0
        %5110 = vmatpush2.bf16.msra.mxu0 0
        %5111 = vmatprep.subr.bf16.mxu0 0
        %5112 = vmatpush2.bf16.msra.mxu0 0
        %5113 = vmatprep.mubr.bf16.mxu0 0
        %5114 = vmatmul.mubr.bf16.gmra.mxu0 %v5073
        %v5115 = vpop.f32.mrf.mxu0
        %v5116 = vadd.f32 0.0, %v5115
        %v5117 = vpop.f32.mrf.mxu0
        %v5118 = vpop.f32.mrf.mxu0
        %v5119 = vadd.f32 0.0, %v5118
        %v5120 = vpop.f32.mrf.mxu0
        %5121 = vmatprep.mubr.bf16.mxu0 0
        %5122 = vmatmul.mubr.bf16.gmra.mxu0 %v5076
        %v5123 = vpop.f32.mrf.mxu0
        %v5124 = vadd.f32 0.0, %v5123
        %v5125 = vpop.f32.mrf.mxu0
        %v5126 = vpop.f32.mrf.mxu0
        %v5127 = vadd.f32 0.0, %v5126
        %v5128 = vpop.f32.mrf.mxu0
        %5129 = vmatprep.mubr.bf16.mxu0 0
        %5130 = vmatmul.mubr.bf16.gmra.mxu0 %v5079
        %v5131 = vpop.f32.mrf.mxu0
        %v5132 = vadd.f32 0.0, %v5131
        %v5133 = vpop.f32.mrf.mxu0
        %v5134 = vpop.f32.mrf.mxu0
        %v5135 = vadd.f32 0.0, %v5134
        %v5136 = vpop.f32.mrf.mxu0
        %5137 = vdwg.mxu0
        %v5138 = vadd.f32 %v5028, %v5116
        %v5139 = vadd.f32 %v5029, %v5119
        %v5140 = vadd.f32 %v5030, %v5124
        %v5141 = vadd.f32 %v5031, %v5127
        %v5142 = vadd.f32 %v5032, %v5132
        %v5143 = vadd.f32 %v5033, %v5135
        %v5144 = vld [vmem:[%s6] sm:$0x1]
        %v5146 = vlaneseq
        %v5147 = vshrl.u32 %v5146, 7
        %v5148 = vsub.s32 0, %v5147
        %v5149 = vrot.slane %v5144, %v5148
        %v5151 = vadd.f32 %v5138, %v5149
        %v5152 = vadd.f32 %v5139, %v5149
        %v5153 = vadd.f32 %v5140, %v5149
        %v5154 = vadd.f32 %v5141, %v5149
        %v5155 = vadd.f32 %v5142, %v5149
        %v5156 = vadd.f32 %v5143, %v5149
        %v5157 = vmax.f32 %v5151, 0.0
        %v5158 = vmax.f32 %v5152, 0.0
        %v5159 = vmax.f32 %v5153, 0.0
        %v5160 = vmax.f32 %v5154, 0.0
        %v5161 = vmax.f32 %v5155, 0.0
        %v5162 = vmax.f32 %v5156, 0.0
        %v5163 = vld [vmem:[%s7] sm:$0xf]
        %v5164 = vld [vmem:[%s7 + $0x4] sm:$0xf]
        %v5165 = vld [vmem:[%s7 + $0x8] sm:$0xf]
        %v5166 = vld [vmem:[%s7 + $0xc] sm:$0xf]
        %v5167 = vld [vmem:[%s7 + $0x10] sm:$0xf]
        %v5168 = vld [vmem:[%s7 + $0x14] sm:$0xf]
        %v5169 = vld [vmem:[%s7 + $0x18] sm:$0xf]
        %v5170 = vld [vmem:[%s7 + $0x1c] sm:$0xf]
        %v5171 = vpack.c.bf16 %v5158, %v5157
        %v5172 = vpack.c.bf16 %v5159, %v5159
        %v5173 = vld [vmem:[%s7 + $0x20] sm:$0xf]
        %v5174 = vld [vmem:[%s7 + $0x24] sm:$0xf]
        %v5175 = vld [vmem:[%s7 + $0x28] sm:$0xf]
        %v5176 = vld [vmem:[%s7 + $0x2c] sm:$0xf]
        %v5177 = vld [vmem:[%s7 + $0x30] sm:$0xf]
        %v5178 = vld [vmem:[%s7 + $0x34] sm:$0xf]
        %v5179 = vld [vmem:[%s7 + $0x38] sm:$0xf]
        %v5180 = vld [vmem:[%s7 + $0x3c] sm:$0xf]
        %v5182 = vshrl.u32 %v5171, 16
        %v5184 = vshll.u32 %v5171, 16
        %v5186 = vrot.slane %v5184, 1
        %v5187 = vor.u32 %v5182, %v5186
        %v5189 = vshll.u32 %v5172, 16
        %v5191 = vrot.slane %v5189, 1
        %v5192 = vsel %vm2198, %v5187, %v5191
        %v5193 = vshrl.u32 %v5172, 16
        %v5195 = vor.u32 %v5193, %v5191
        %v5204 = vunpack.c.l.b16 %v5173
        %v5205 = vunpack.c.l.b16 %v5174
        %v5206 = vunpack.c.l.b16 %v5175
        %v5207 = vunpack.c.l.b16 %v5176
        %v5208 = vunpack.c.l.b16 %v5177
        %v5209 = vunpack.c.l.b16 %v5178
        %v5210 = vunpack.c.l.b16 %v5179
        %v5211 = vunpack.c.l.b16 %v5180
        %v5212 = vpack.c.b16 %v5205, %v5204
        %v5213 = vpack.c.b16 %v5207, %v5206
        %v5214 = vpack.c.b16 %v5209, %v5208
        %v5215 = vpack.c.b16 %v5211, %v5210
        %v5221 = vsel %vm561, %v5192, 0
        %v5224 = vsel %vm561, %v5195, 0
        %5226 = vmatprep.subr.bf16.mxu0 0
        %5227 = vmatpush1.bf16.msra.mxu0 0
        %5228 = vmatprep.subr.bf16.mxu0 0
        %5229 = vmatpush1.bf16.msra.mxu0 0
        %5230 = vmatprep.subr.bf16.mxu0 0
        %5231 = vmatpush1.bf16.msra.mxu0 0
        %5232 = vmatprep.subr.bf16.mxu0 0
        %5233 = vmatpush1.bf16.msra.mxu0 0
        %5234 = vmatprep.subr.bf16.mxu0 0
        %5235 = vmatpush1.bf16.msra.mxu0 %v5215
        %5236 = vmatprep.subr.bf16.mxu0 0
        %5237 = vmatpush1.bf16.msra.mxu0 %v5214
        %5238 = vmatprep.subr.bf16.mxu0 0
        %5239 = vmatpush1.bf16.msra.mxu0 %v5213
        %5240 = vmatprep.subr.bf16.mxu0 0
        %5241 = vmatpush1.bf16.msra.mxu0 %v5212
        %5242 = vmatprep.subr.bf16.mxu0 0
        %5243 = vmatpush2.bf16.msra.mxu0 0
        %5244 = vmatprep.subr.bf16.mxu0 0
        %5245 = vmatpush2.bf16.msra.mxu0 0
        %5246 = vmatprep.subr.bf16.mxu0 0
        %5247 = vmatpush2.bf16.msra.mxu0 0
        %5248 = vmatprep.subr.bf16.mxu0 0
        %5249 = vmatpush2.bf16.msra.mxu0 0
        %5250 = vmatprep.subr.bf16.mxu0 0
        %5251 = vmatpush2.bf16.msra.mxu0 0
        %5252 = vmatprep.subr.bf16.mxu0 0
        %5253 = vmatpush2.bf16.msra.mxu0 0
        %5254 = vmatprep.subr.bf16.mxu0 0
        %5255 = vmatpush2.bf16.msra.mxu0 0
        %5256 = vmatprep.subr.bf16.mxu0 0
        %5257 = vmatpush2.bf16.msra.mxu0 0
        %5258 = vmatprep.mubr.bf16.mxu0 0
        %5259 = vmatmul.mubr.bf16.gmra.mxu0 %v5221
        %v5260 = vpop.f32.mrf.mxu0
        %v5261 = vadd.f32 0.0, %v5260
        %v5262 = vpop.f32.mrf.mxu0
        %v5263 = vpop.f32.mrf.mxu0
        %v5264 = vadd.f32 0.0, %v5263
        %v5265 = vpop.f32.mrf.mxu0
        %5266 = vmatprep.mubr.bf16.mxu0 0
        %5267 = vmatmul.mubr.bf16.gmra.mxu0 %v5224
        %v5268 = vpop.f32.mrf.mxu0
        %v5269 = vadd.f32 0.0, %v5268
        %v5270 = vpop.f32.mrf.mxu0
        %v5271 = vpop.f32.mrf.mxu0
        %v5272 = vpop.f32.mrf.mxu0
        %5273 = vdwg.mxu0
        %v5282 = vunpack.c.l.b16 %v5163
        %v5283 = vunpack.c.l.b16 %v5164
        %v5284 = vunpack.c.l.b16 %v5165
        %v5285 = vunpack.c.l.b16 %v5166
        %v5286 = vunpack.c.l.b16 %v5167
        %v5287 = vunpack.c.l.b16 %v5168
        %v5288 = vunpack.c.l.b16 %v5169
        %v5289 = vunpack.c.l.b16 %v5170
        %v5290 = vpack.c.b16 %v5283, %v5282
        %v5291 = vpack.c.b16 %v5285, %v5284
        %v5292 = vpack.c.b16 %v5287, %v5286
        %v5293 = vpack.c.b16 %v5289, %v5288
        %v5298 = vsel %vm561, %v5171, 0
        %v5300 = vsel %vm561, %v5172, 0
        %5302 = vmatprep.subr.bf16.mxu0 0
        %5303 = vmatpush1.bf16.msra.mxu0 0
        %5304 = vmatprep.subr.bf16.mxu0 0
        %5305 = vmatpush1.bf16.msra.mxu0 0
        %5306 = vmatprep.subr.bf16.mxu0 0
        %5307 = vmatpush1.bf16.msra.mxu0 0
        %5308 = vmatprep.subr.bf16.mxu0 0
        %5309 = vmatpush1.bf16.msra.mxu0 0
        %5310 = vmatprep.subr.bf16.mxu0 0
        %5311 = vmatpush1.bf16.msra.mxu0 %v5293
        %5312 = vmatprep.subr.bf16.mxu0 0
        %5313 = vmatpush1.bf16.msra.mxu0 %v5292
        %5314 = vmatprep.subr.bf16.mxu0 0
        %5315 = vmatpush1.bf16.msra.mxu0 %v5291
        %5316 = vmatprep.subr.bf16.mxu0 0
        %5317 = vmatpush1.bf16.msra.mxu0 %v5290
        %5318 = vmatprep.subr.bf16.mxu0 0
        %5319 = vmatpush2.bf16.msra.mxu0 0
        %5320 = vmatprep.subr.bf16.mxu0 0
        %5321 = vmatpush2.bf16.msra.mxu0 0
        %5322 = vmatprep.subr.bf16.mxu0 0
        %5323 = vmatpush2.bf16.msra.mxu0 0
        %5324 = vmatprep.subr.bf16.mxu0 0
        %5325 = vmatpush2.bf16.msra.mxu0 0
        %5326 = vmatprep.subr.bf16.mxu0 0
        %5327 = vmatpush2.bf16.msra.mxu0 0
        %5328 = vmatprep.subr.bf16.mxu0 0
        %5329 = vmatpush2.bf16.msra.mxu0 0
        %5330 = vmatprep.subr.bf16.mxu0 0
        %5331 = vmatpush2.bf16.msra.mxu0 0
        %5332 = vmatprep.subr.bf16.mxu0 0
        %5333 = vmatpush2.bf16.msra.mxu0 0
        %5334 = vmatprep.mubr.bf16.mxu0 0
        %5335 = vmatmul.mubr.bf16.gmra.mxu0 %v5298
        %v5336 = vpop.f32.mrf.mxu0
        %v5337 = vadd.f32 %v5261, %v5336
        %v5338 = vpop.f32.mrf.mxu0
        %v5339 = vpop.f32.mrf.mxu0
        %v5340 = vadd.f32 %v5264, %v5339
        %v5341 = vpop.f32.mrf.mxu0
        %5342 = vmatprep.mubr.bf16.mxu0 0
        %5343 = vmatmul.mubr.bf16.gmra.mxu0 %v5300
        %v5344 = vpop.f32.mrf.mxu0
        %v5345 = vadd.f32 %v5269, %v5344
        %v5346 = vpop.f32.mrf.mxu0
        %v5347 = vpop.f32.mrf.mxu0
        %v5348 = vpop.f32.mrf.mxu0
        %5349 = vdwg.mxu0
        %v5350 = vld [vmem:[%s7 + $0x40] sm:$0xf]
        %v5351 = vld [vmem:[%s7 + $0x44] sm:$0xf]
        %v5352 = vld [vmem:[%s7 + $0x48] sm:$0xf]
        %v5353 = vld [vmem:[%s7 + $0x4c] sm:$0xf]
        %v5354 = vld [vmem:[%s7 + $0x50] sm:$0xf]
        %v5355 = vld [vmem:[%s7 + $0x54] sm:$0xf]
        %v5356 = vld [vmem:[%s7 + $0x58] sm:$0xf]
        %v5357 = vld [vmem:[%s7 + $0x5c] sm:$0xf]
        %v5360 = vrot.slane %v5171, 1
        %v5361 = vrot.slane %v5172, 1
        %v5362 = vsel %vm2549, %v5360, %v5361
        %v5371 = vunpack.c.l.b16 %v5350
        %v5372 = vunpack.c.l.b16 %v5351
        %v5373 = vunpack.c.l.b16 %v5352
        %v5374 = vunpack.c.l.b16 %v5353
        %v5375 = vunpack.c.l.b16 %v5354
        %v5376 = vunpack.c.l.b16 %v5355
        %v5377 = vunpack.c.l.b16 %v5356
        %v5378 = vunpack.c.l.b16 %v5357
        %v5379 = vpack.c.b16 %v5372, %v5371
        %v5380 = vpack.c.b16 %v5374, %v5373
        %v5381 = vpack.c.b16 %v5376, %v5375
        %v5382 = vpack.c.b16 %v5378, %v5377
        %v5388 = vsel %vm561, %v5362, 0
        %v5391 = vsel %vm561, %v5361, 0
        %5393 = vmatprep.subr.bf16.mxu0 0
        %5394 = vmatpush1.bf16.msra.mxu0 0
        %5395 = vmatprep.subr.bf16.mxu0 0
        %5396 = vmatpush1.bf16.msra.mxu0 0
        %5397 = vmatprep.subr.bf16.mxu0 0
        %5398 = vmatpush1.bf16.msra.mxu0 0
        %5399 = vmatprep.subr.bf16.mxu0 0
        %5400 = vmatpush1.bf16.msra.mxu0 0
        %5401 = vmatprep.subr.bf16.mxu0 0
        %5402 = vmatpush1.bf16.msra.mxu0 %v5382
        %5403 = vmatprep.subr.bf16.mxu0 0
        %5404 = vmatpush1.bf16.msra.mxu0 %v5381
        %5405 = vmatprep.subr.bf16.mxu0 0
        %5406 = vmatpush1.bf16.msra.mxu0 %v5380
        %5407 = vmatprep.subr.bf16.mxu0 0
        %5408 = vmatpush1.bf16.msra.mxu0 %v5379
        %5409 = vmatprep.subr.bf16.mxu0 0
        %5410 = vmatpush2.bf16.msra.mxu0 0
        %5411 = vmatprep.subr.bf16.mxu0 0
        %5412 = vmatpush2.bf16.msra.mxu0 0
        %5413 = vmatprep.subr.bf16.mxu0 0
        %5414 = vmatpush2.bf16.msra.mxu0 0
        %5415 = vmatprep.subr.bf16.mxu0 0
        %5416 = vmatpush2.bf16.msra.mxu0 0
        %5417 = vmatprep.subr.bf16.mxu0 0
        %5418 = vmatpush2.bf16.msra.mxu0 0
        %5419 = vmatprep.subr.bf16.mxu0 0
        %5420 = vmatpush2.bf16.msra.mxu0 0
        %5421 = vmatprep.subr.bf16.mxu0 0
        %5422 = vmatpush2.bf16.msra.mxu0 0
        %5423 = vmatprep.subr.bf16.mxu0 0
        %5424 = vmatpush2.bf16.msra.mxu0 0
        %5425 = vmatprep.mubr.bf16.mxu0 0
        %5426 = vmatmul.mubr.bf16.gmra.mxu0 %v5388
        %v5427 = vpop.f32.mrf.mxu0
        %v5428 = vadd.f32 0.0, %v5427
        %v5429 = vpop.f32.mrf.mxu0
        %v5430 = vpop.f32.mrf.mxu0
        %v5431 = vadd.f32 0.0, %v5430
        %v5432 = vpop.f32.mrf.mxu0
        %5433 = vmatprep.mubr.bf16.mxu0 0
        %5434 = vmatmul.mubr.bf16.gmra.mxu0 %v5391
        %v5435 = vpop.f32.mrf.mxu0
        %v5436 = vadd.f32 0.0, %v5435
        %v5437 = vpop.f32.mrf.mxu0
        %v5438 = vpop.f32.mrf.mxu0
        %v5439 = vpop.f32.mrf.mxu0
        %5440 = vdwg.mxu0
        %v5441 = vadd.f32 %v5337, %v5428
        %v5442 = vadd.f32 %v5340, %v5431
        %v5443 = vadd.f32 %v5345, %v5436
        %v5444 = vld [vmem:[%s7 + $0x60] sm:$0xf]
        %v5445 = vld [vmem:[%s7 + $0x64] sm:$0xf]
        %v5446 = vld [vmem:[%s7 + $0x68] sm:$0xf]
        %v5447 = vld [vmem:[%s7 + $0x6c] sm:$0xf]
        %v5448 = vld [vmem:[%s7 + $0x70] sm:$0xf]
        %v5449 = vld [vmem:[%s7 + $0x74] sm:$0xf]
        %v5450 = vld [vmem:[%s7 + $0x78] sm:$0xf]
        %v5451 = vld [vmem:[%s7 + $0x7c] sm:$0xf]
        %v5452 = vpack.c.bf16 %v5159, %v5158
        %v5453 = vpack.c.bf16 %v5160, %v5160
        %v5455 = vshrl.u32 %v5452, 16
        %v5457 = vshll.u32 %v5452, 16
        %v5459 = vrot.slane %v5457, 1
        %v5460 = vor.u32 %v5455, %v5459
        %v5462 = vshll.u32 %v5453, 16
        %v5464 = vrot.slane %v5462, 1
        %v5465 = vsel %vm2198, %v5460, %v5464
        %v5466 = vshrl.u32 %v5453, 16
        %v5468 = vor.u32 %v5466, %v5464
        %v5477 = vunpack.c.l.b16 %v5444
        %v5478 = vunpack.c.l.b16 %v5445
        %v5479 = vunpack.c.l.b16 %v5446
        %v5480 = vunpack.c.l.b16 %v5447
        %v5481 = vunpack.c.l.b16 %v5448
        %v5482 = vunpack.c.l.b16 %v5449
        %v5483 = vunpack.c.l.b16 %v5450
        %v5484 = vunpack.c.l.b16 %v5451
        %v5485 = vpack.c.b16 %v5478, %v5477
        %v5486 = vpack.c.b16 %v5480, %v5479
        %v5487 = vpack.c.b16 %v5482, %v5481
        %v5488 = vpack.c.b16 %v5484, %v5483
        %v5494 = vsel %vm561, %v5465, 0
        %v5497 = vsel %vm561, %v5468, 0
        %5499 = vmatprep.subr.bf16.mxu0 0
        %5500 = vmatpush1.bf16.msra.mxu0 0
        %5501 = vmatprep.subr.bf16.mxu0 0
        %5502 = vmatpush1.bf16.msra.mxu0 0
        %5503 = vmatprep.subr.bf16.mxu0 0
        %5504 = vmatpush1.bf16.msra.mxu0 0
        %5505 = vmatprep.subr.bf16.mxu0 0
        %5506 = vmatpush1.bf16.msra.mxu0 0
        %5507 = vmatprep.subr.bf16.mxu0 0
        %5508 = vmatpush1.bf16.msra.mxu0 %v5488
        %5509 = vmatprep.subr.bf16.mxu0 0
        %5510 = vmatpush1.bf16.msra.mxu0 %v5487
        %5511 = vmatprep.subr.bf16.mxu0 0
        %5512 = vmatpush1.bf16.msra.mxu0 %v5486
        %5513 = vmatprep.subr.bf16.mxu0 0
        %5514 = vmatpush1.bf16.msra.mxu0 %v5485
        %5515 = vmatprep.subr.bf16.mxu0 0
        %5516 = vmatpush2.bf16.msra.mxu0 0
        %5517 = vmatprep.subr.bf16.mxu0 0
        %5518 = vmatpush2.bf16.msra.mxu0 0
        %5519 = vmatprep.subr.bf16.mxu0 0
        %5520 = vmatpush2.bf16.msra.mxu0 0
        %5521 = vmatprep.subr.bf16.mxu0 0
        %5522 = vmatpush2.bf16.msra.mxu0 0
        %5523 = vmatprep.subr.bf16.mxu0 0
        %5524 = vmatpush2.bf16.msra.mxu0 0
        %5525 = vmatprep.subr.bf16.mxu0 0
        %5526 = vmatpush2.bf16.msra.mxu0 0
        %5527 = vmatprep.subr.bf16.mxu0 0
        %5528 = vmatpush2.bf16.msra.mxu0 0
        %5529 = vmatprep.subr.bf16.mxu0 0
        %5530 = vmatpush2.bf16.msra.mxu0 0
        %5531 = vmatprep.mubr.bf16.mxu0 0
        %5532 = vmatmul.mubr.bf16.gmra.mxu0 %v5494
        %v5533 = vpop.f32.mrf.mxu0
        %v5534 = vadd.f32 0.0, %v5533
        %v5535 = vpop.f32.mrf.mxu0
        %v5536 = vpop.f32.mrf.mxu0
        %v5537 = vadd.f32 0.0, %v5536
        %v5538 = vpop.f32.mrf.mxu0
        %5539 = vmatprep.mubr.bf16.mxu0 0
        %5540 = vmatmul.mubr.bf16.gmra.mxu0 %v5497
        %v5541 = vpop.f32.mrf.mxu0
        %v5542 = vadd.f32 0.0, %v5541
        %v5543 = vpop.f32.mrf.mxu0
        %v5544 = vpop.f32.mrf.mxu0
        %v5545 = vpop.f32.mrf.mxu0
        %5546 = vdwg.mxu0
        %v5547 = vadd.f32 %v5441, %v5534
        %v5548 = vadd.f32 %v5442, %v5537
        %v5549 = vadd.f32 %v5443, %v5542
        %v5550 = vld [vmem:[%s7 + $0x80] sm:$0xf]
        %v5551 = vld [vmem:[%s7 + $0x84] sm:$0xf]
        %v5552 = vld [vmem:[%s7 + $0x88] sm:$0xf]
        %v5553 = vld [vmem:[%s7 + $0x8c] sm:$0xf]
        %v5554 = vld [vmem:[%s7 + $0x90] sm:$0xf]
        %v5555 = vld [vmem:[%s7 + $0x94] sm:$0xf]
        %v5556 = vld [vmem:[%s7 + $0x98] sm:$0xf]
        %v5557 = vld [vmem:[%s7 + $0x9c] sm:$0xf]
        %v5560 = vrot.slane %v5452, 1
        %v5561 = vrot.slane %v5453, 1
        %v5562 = vsel %vm2549, %v5560, %v5561
        %v5571 = vunpack.c.l.b16 %v5550
        %v5572 = vunpack.c.l.b16 %v5551
        %v5573 = vunpack.c.l.b16 %v5552
        %v5574 = vunpack.c.l.b16 %v5553
        %v5575 = vunpack.c.l.b16 %v5554
        %v5576 = vunpack.c.l.b16 %v5555
        %v5577 = vunpack.c.l.b16 %v5556
        %v5578 = vunpack.c.l.b16 %v5557
        %v5579 = vpack.c.b16 %v5572, %v5571
        %v5580 = vpack.c.b16 %v5574, %v5573
        %v5581 = vpack.c.b16 %v5576, %v5575
        %v5582 = vpack.c.b16 %v5578, %v5577
        %v5588 = vsel %vm561, %v5562, 0
        %v5591 = vsel %vm561, %v5561, 0
        %5593 = vmatprep.subr.bf16.mxu0 0
        %5594 = vmatpush1.bf16.msra.mxu0 0
        %5595 = vmatprep.subr.bf16.mxu0 0
        %5596 = vmatpush1.bf16.msra.mxu0 0
        %5597 = vmatprep.subr.bf16.mxu0 0
        %5598 = vmatpush1.bf16.msra.mxu0 0
        %5599 = vmatprep.subr.bf16.mxu0 0
        %5600 = vmatpush1.bf16.msra.mxu0 0
        %5601 = vmatprep.subr.bf16.mxu0 0
        %5602 = vmatpush1.bf16.msra.mxu0 %v5582
        %5603 = vmatprep.subr.bf16.mxu0 0
        %5604 = vmatpush1.bf16.msra.mxu0 %v5581
        %5605 = vmatprep.subr.bf16.mxu0 0
        %5606 = vmatpush1.bf16.msra.mxu0 %v5580
        %5607 = vmatprep.subr.bf16.mxu0 0
        %5608 = vmatpush1.bf16.msra.mxu0 %v5579
        %5609 = vmatprep.subr.bf16.mxu0 0
        %5610 = vmatpush2.bf16.msra.mxu0 0
        %5611 = vmatprep.subr.bf16.mxu0 0
        %5612 = vmatpush2.bf16.msra.mxu0 0
        %5613 = vmatprep.subr.bf16.mxu0 0
        %5614 = vmatpush2.bf16.msra.mxu0 0
        %5615 = vmatprep.subr.bf16.mxu0 0
        %5616 = vmatpush2.bf16.msra.mxu0 0
        %5617 = vmatprep.subr.bf16.mxu0 0
        %5618 = vmatpush2.bf16.msra.mxu0 0
        %5619 = vmatprep.subr.bf16.mxu0 0
        %5620 = vmatpush2.bf16.msra.mxu0 0
        %5621 = vmatprep.subr.bf16.mxu0 0
        %5622 = vmatpush2.bf16.msra.mxu0 0
        %5623 = vmatprep.subr.bf16.mxu0 0
        %5624 = vmatpush2.bf16.msra.mxu0 0
        %5625 = vmatprep.mubr.bf16.mxu0 0
        %5626 = vmatmul.mubr.bf16.gmra.mxu0 %v5588
        %v5627 = vpop.f32.mrf.mxu0
        %v5628 = vadd.f32 0.0, %v5627
        %v5629 = vpop.f32.mrf.mxu0
        %v5630 = vpop.f32.mrf.mxu0
        %v5631 = vadd.f32 0.0, %v5630
        %v5632 = vpop.f32.mrf.mxu0
        %5633 = vmatprep.mubr.bf16.mxu0 0
        %5634 = vmatmul.mubr.bf16.gmra.mxu0 %v5591
        %v5635 = vpop.f32.mrf.mxu0
        %v5636 = vadd.f32 0.0, %v5635
        %v5637 = vpop.f32.mrf.mxu0
        %v5638 = vpop.f32.mrf.mxu0
        %v5639 = vpop.f32.mrf.mxu0
        %5640 = vdwg.mxu0
        %v5641 = vadd.f32 %v5547, %v5628
        %v5642 = vadd.f32 %v5548, %v5631
        %v5643 = vadd.f32 %v5549, %v5636
        %v5644 = vld [vmem:[%s7 + $0xa0] sm:$0xf]
        %v5645 = vld [vmem:[%s7 + $0xa4] sm:$0xf]
        %v5646 = vld [vmem:[%s7 + $0xa8] sm:$0xf]
        %v5647 = vld [vmem:[%s7 + $0xac] sm:$0xf]
        %v5648 = vld [vmem:[%s7 + $0xb0] sm:$0xf]
        %v5649 = vld [vmem:[%s7 + $0xb4] sm:$0xf]
        %v5650 = vld [vmem:[%s7 + $0xb8] sm:$0xf]
        %v5651 = vld [vmem:[%s7 + $0xbc] sm:$0xf]
        %v5652 = vrot.slane %v5455, 1
        %v5653 = vrot.slane %v5457, 2
        %v5654 = vor.u32 %v5652, %v5653
        %v5655 = vrot.slane %v5466, 1
        %v5656 = vrot.slane %v5462, 2
        %v5657 = vor.u32 %v5655, %v5656
        %v5658 = vsel %vm4701, %v5654, %v5657
        %v5667 = vunpack.c.l.b16 %v5644
        %v5668 = vunpack.c.l.b16 %v5645
        %v5669 = vunpack.c.l.b16 %v5646
        %v5670 = vunpack.c.l.b16 %v5647
        %v5671 = vunpack.c.l.b16 %v5648
        %v5672 = vunpack.c.l.b16 %v5649
        %v5673 = vunpack.c.l.b16 %v5650
        %v5674 = vunpack.c.l.b16 %v5651
        %v5675 = vpack.c.b16 %v5668, %v5667
        %v5676 = vpack.c.b16 %v5670, %v5669
        %v5677 = vpack.c.b16 %v5672, %v5671
        %v5678 = vpack.c.b16 %v5674, %v5673
        %v5684 = vsel %vm561, %v5658, 0
        %v5687 = vsel %vm561, %v5657, 0
        %5689 = vmatprep.subr.bf16.mxu0 0
        %5690 = vmatpush1.bf16.msra.mxu0 0
        %5691 = vmatprep.subr.bf16.mxu0 0
        %5692 = vmatpush1.bf16.msra.mxu0 0
        %5693 = vmatprep.subr.bf16.mxu0 0
        %5694 = vmatpush1.bf16.msra.mxu0 0
        %5695 = vmatprep.subr.bf16.mxu0 0
        %5696 = vmatpush1.bf16.msra.mxu0 0
        %5697 = vmatprep.subr.bf16.mxu0 0
        %5698 = vmatpush1.bf16.msra.mxu0 %v5678
        %5699 = vmatprep.subr.bf16.mxu0 0
        %5700 = vmatpush1.bf16.msra.mxu0 %v5677
        %5701 = vmatprep.subr.bf16.mxu0 0
        %5702 = vmatpush1.bf16.msra.mxu0 %v5676
        %5703 = vmatprep.subr.bf16.mxu0 0
        %5704 = vmatpush1.bf16.msra.mxu0 %v5675
        %5705 = vmatprep.subr.bf16.mxu0 0
        %5706 = vmatpush2.bf16.msra.mxu0 0
        %5707 = vmatprep.subr.bf16.mxu0 0
        %5708 = vmatpush2.bf16.msra.mxu0 0
        %5709 = vmatprep.subr.bf16.mxu0 0
        %5710 = vmatpush2.bf16.msra.mxu0 0
        %5711 = vmatprep.subr.bf16.mxu0 0
        %5712 = vmatpush2.bf16.msra.mxu0 0
        %5713 = vmatprep.subr.bf16.mxu0 0
        %5714 = vmatpush2.bf16.msra.mxu0 0
        %5715 = vmatprep.subr.bf16.mxu0 0
        %5716 = vmatpush2.bf16.msra.mxu0 0
        %5717 = vmatprep.subr.bf16.mxu0 0
        %5718 = vmatpush2.bf16.msra.mxu0 0
        %5719 = vmatprep.subr.bf16.mxu0 0
        %5720 = vmatpush2.bf16.msra.mxu0 0
        %5721 = vmatprep.mubr.bf16.mxu0 0
        %5722 = vmatmul.mubr.bf16.gmra.mxu0 %v5684
        %v5723 = vpop.f32.mrf.mxu0
        %v5724 = vadd.f32 0.0, %v5723
        %v5725 = vpop.f32.mrf.mxu0
        %v5726 = vpop.f32.mrf.mxu0
        %v5727 = vadd.f32 0.0, %v5726
        %v5728 = vpop.f32.mrf.mxu0
        %5729 = vmatprep.mubr.bf16.mxu0 0
        %5730 = vmatmul.mubr.bf16.gmra.mxu0 %v5687
        %v5731 = vpop.f32.mrf.mxu0
        %v5732 = vadd.f32 0.0, %v5731
        %v5733 = vpop.f32.mrf.mxu0
        %v5734 = vpop.f32.mrf.mxu0
        %v5735 = vpop.f32.mrf.mxu0
        %5736 = vdwg.mxu0
        %v5737 = vadd.f32 %v5641, %v5724
        %v5738 = vadd.f32 %v5642, %v5727
        %v5739 = vadd.f32 %v5643, %v5732
        %v5740 = vld [vmem:[%s7 + $0xc0] sm:$0xf]
        %v5741 = vld [vmem:[%s7 + $0xc4] sm:$0xf]
        %v5742 = vld [vmem:[%s7 + $0xc8] sm:$0xf]
        %v5743 = vld [vmem:[%s7 + $0xcc] sm:$0xf]
        %v5744 = vld [vmem:[%s7 + $0xd0] sm:$0xf]
        %v5745 = vld [vmem:[%s7 + $0xd4] sm:$0xf]
        %v5746 = vld [vmem:[%s7 + $0xd8] sm:$0xf]
        %v5747 = vld [vmem:[%s7 + $0xdc] sm:$0xf]
        %v5748 = vpack.c.bf16 %v5160, %v5159
        %v5749 = vpack.c.bf16 %v5161, %v5161
        %v5752 = vrot.slane %v5748, 1
        %v5753 = vrot.slane %v5749, 1
        %v5754 = vsel %vm2549, %v5752, %v5753
        %v5763 = vunpack.c.l.b16 %v5740
        %v5764 = vunpack.c.l.b16 %v5741
        %v5765 = vunpack.c.l.b16 %v5742
        %v5766 = vunpack.c.l.b16 %v5743
        %v5767 = vunpack.c.l.b16 %v5744
        %v5768 = vunpack.c.l.b16 %v5745
        %v5769 = vunpack.c.l.b16 %v5746
        %v5770 = vunpack.c.l.b16 %v5747
        %v5771 = vpack.c.b16 %v5764, %v5763
        %v5772 = vpack.c.b16 %v5766, %v5765
        %v5773 = vpack.c.b16 %v5768, %v5767
        %v5774 = vpack.c.b16 %v5770, %v5769
        %v5780 = vsel %vm561, %v5754, 0
        %v5783 = vsel %vm561, %v5753, 0
        %5785 = vmatprep.subr.bf16.mxu0 0
        %5786 = vmatpush1.bf16.msra.mxu0 0
        %5787 = vmatprep.subr.bf16.mxu0 0
        %5788 = vmatpush1.bf16.msra.mxu0 0
        %5789 = vmatprep.subr.bf16.mxu0 0
        %5790 = vmatpush1.bf16.msra.mxu0 0
        %5791 = vmatprep.subr.bf16.mxu0 0
        %5792 = vmatpush1.bf16.msra.mxu0 0
        %5793 = vmatprep.subr.bf16.mxu0 0
        %5794 = vmatpush1.bf16.msra.mxu0 %v5774
        %5795 = vmatprep.subr.bf16.mxu0 0
        %5796 = vmatpush1.bf16.msra.mxu0 %v5773
        %5797 = vmatprep.subr.bf16.mxu0 0
        %5798 = vmatpush1.bf16.msra.mxu0 %v5772
        %5799 = vmatprep.subr.bf16.mxu0 0
        %5800 = vmatpush1.bf16.msra.mxu0 %v5771
        %5801 = vmatprep.subr.bf16.mxu0 0
        %5802 = vmatpush2.bf16.msra.mxu0 0
        %5803 = vmatprep.subr.bf16.mxu0 0
        %5804 = vmatpush2.bf16.msra.mxu0 0
        %5805 = vmatprep.subr.bf16.mxu0 0
        %5806 = vmatpush2.bf16.msra.mxu0 0
        %5807 = vmatprep.subr.bf16.mxu0 0
        %5808 = vmatpush2.bf16.msra.mxu0 0
        %5809 = vmatprep.subr.bf16.mxu0 0
        %5810 = vmatpush2.bf16.msra.mxu0 0
        %5811 = vmatprep.subr.bf16.mxu0 0
        %5812 = vmatpush2.bf16.msra.mxu0 0
        %5813 = vmatprep.subr.bf16.mxu0 0
        %5814 = vmatpush2.bf16.msra.mxu0 0
        %5815 = vmatprep.subr.bf16.mxu0 0
        %5816 = vmatpush2.bf16.msra.mxu0 0
        %5817 = vmatprep.mubr.bf16.mxu0 0
        %5818 = vmatmul.mubr.bf16.gmra.mxu0 %v5780
        %v5819 = vpop.f32.mrf.mxu0
        %v5820 = vadd.f32 0.0, %v5819
        %v5821 = vpop.f32.mrf.mxu0
        %v5822 = vpop.f32.mrf.mxu0
        %v5823 = vadd.f32 0.0, %v5822
        %v5824 = vpop.f32.mrf.mxu0
        %5825 = vmatprep.mubr.bf16.mxu0 0
        %5826 = vmatmul.mubr.bf16.gmra.mxu0 %v5783
        %v5827 = vpop.f32.mrf.mxu0
        %v5828 = vadd.f32 0.0, %v5827
        %v5829 = vpop.f32.mrf.mxu0
        %v5830 = vpop.f32.mrf.mxu0
        %v5831 = vpop.f32.mrf.mxu0
        %5832 = vdwg.mxu0
        %v5833 = vadd.f32 %v5737, %v5820
        %v5834 = vadd.f32 %v5738, %v5823
        %v5835 = vadd.f32 %v5739, %v5828
        %v5836 = vld [vmem:[%s7 + $0xe0] sm:$0xf]
        %v5837 = vld [vmem:[%s7 + $0xe4] sm:$0xf]
        %v5838 = vld [vmem:[%s7 + $0xe8] sm:$0xf]
        %v5839 = vld [vmem:[%s7 + $0xec] sm:$0xf]
        %v5840 = vld [vmem:[%s7 + $0xf0] sm:$0xf]
        %v5841 = vld [vmem:[%s7 + $0xf4] sm:$0xf]
        %v5842 = vld [vmem:[%s7 + $0xf8] sm:$0xf]
        %v5843 = vld [vmem:[%s7 + $0xfc] sm:$0xf]
        %v5845 = vshrl.u32 %v5748, 16
        %v5847 = vrot.slane %v5845, 1
        %v5848 = vshll.u32 %v5748, 16
        %v5850 = vrot.slane %v5848, 2
        %v5851 = vor.u32 %v5847, %v5850
        %v5853 = vshrl.u32 %v5749, 16
        %v5855 = vrot.slane %v5853, 1
        %v5856 = vshll.u32 %v5749, 16
        %v5858 = vrot.slane %v5856, 2
        %v5859 = vor.u32 %v5855, %v5858
        %v5860 = vsel %vm4701, %v5851, %v5859
        %v5869 = vunpack.c.l.b16 %v5836
        %v5870 = vunpack.c.l.b16 %v5837
        %v5871 = vunpack.c.l.b16 %v5838
        %v5872 = vunpack.c.l.b16 %v5839
        %v5873 = vunpack.c.l.b16 %v5840
        %v5874 = vunpack.c.l.b16 %v5841
        %v5875 = vunpack.c.l.b16 %v5842
        %v5876 = vunpack.c.l.b16 %v5843
        %v5877 = vpack.c.b16 %v5870, %v5869
        %v5878 = vpack.c.b16 %v5872, %v5871
        %v5879 = vpack.c.b16 %v5874, %v5873
        %v5880 = vpack.c.b16 %v5876, %v5875
        %v5886 = vsel %vm561, %v5860, 0
        %v5889 = vsel %vm561, %v5859, 0
        %5891 = vmatprep.subr.bf16.mxu0 0
        %5892 = vmatpush1.bf16.msra.mxu0 0
        %5893 = vmatprep.subr.bf16.mxu0 0
        %5894 = vmatpush1.bf16.msra.mxu0 0
        %5895 = vmatprep.subr.bf16.mxu0 0
        %5896 = vmatpush1.bf16.msra.mxu0 0
        %5897 = vmatprep.subr.bf16.mxu0 0
        %5898 = vmatpush1.bf16.msra.mxu0 0
        %5899 = vmatprep.subr.bf16.mxu0 0
        %5900 = vmatpush1.bf16.msra.mxu0 %v5880
        %5901 = vmatprep.subr.bf16.mxu0 0
        %5902 = vmatpush1.bf16.msra.mxu0 %v5879
        %5903 = vmatprep.subr.bf16.mxu0 0
        %5904 = vmatpush1.bf16.msra.mxu0 %v5878
        %5905 = vmatprep.subr.bf16.mxu0 0
        %5906 = vmatpush1.bf16.msra.mxu0 %v5877
        %5907 = vmatprep.subr.bf16.mxu0 0
        %5908 = vmatpush2.bf16.msra.mxu0 0
        %5909 = vmatprep.subr.bf16.mxu0 0
        %5910 = vmatpush2.bf16.msra.mxu0 0
        %5911 = vmatprep.subr.bf16.mxu0 0
        %5912 = vmatpush2.bf16.msra.mxu0 0
        %5913 = vmatprep.subr.bf16.mxu0 0
        %5914 = vmatpush2.bf16.msra.mxu0 0
        %5915 = vmatprep.subr.bf16.mxu0 0
        %5916 = vmatpush2.bf16.msra.mxu0 0
        %5917 = vmatprep.subr.bf16.mxu0 0
        %5918 = vmatpush2.bf16.msra.mxu0 0
        %5919 = vmatprep.subr.bf16.mxu0 0
        %5920 = vmatpush2.bf16.msra.mxu0 0
        %5921 = vmatprep.subr.bf16.mxu0 0
        %5922 = vmatpush2.bf16.msra.mxu0 0
        %5923 = vmatprep.mubr.bf16.mxu0 0
        %5924 = vmatmul.mubr.bf16.gmra.mxu0 %v5886
        %v5925 = vpop.f32.mrf.mxu0
        %v5926 = vadd.f32 0.0, %v5925
        %v5927 = vpop.f32.mrf.mxu0
        %v5928 = vpop.f32.mrf.mxu0
        %v5929 = vadd.f32 0.0, %v5928
        %v5930 = vpop.f32.mrf.mxu0
        %5931 = vmatprep.mubr.bf16.mxu0 0
        %5932 = vmatmul.mubr.bf16.gmra.mxu0 %v5889
        %v5933 = vpop.f32.mrf.mxu0
        %v5934 = vadd.f32 0.0, %v5933
        %v5935 = vpop.f32.mrf.mxu0
        %v5936 = vpop.f32.mrf.mxu0
        %v5937 = vpop.f32.mrf.mxu0
        %5938 = vdwg.mxu0
        %v5939 = vadd.f32 %v5833, %v5926
        %v5940 = vadd.f32 %v5834, %v5929
        %v5941 = vadd.f32 %v5835, %v5934
        %v5942 = vld [vmem:[%s7 + $0x100] sm:$0xf]
        %v5943 = vld [vmem:[%s7 + $0x104] sm:$0xf]
        %v5944 = vld [vmem:[%s7 + $0x108] sm:$0xf]
        %v5945 = vld [vmem:[%s7 + $0x10c] sm:$0xf]
        %v5946 = vld [vmem:[%s7 + $0x110] sm:$0xf]
        %v5947 = vld [vmem:[%s7 + $0x114] sm:$0xf]
        %v5948 = vld [vmem:[%s7 + $0x118] sm:$0xf]
        %v5949 = vld [vmem:[%s7 + $0x11c] sm:$0xf]
        %v5950 = vpack.c.bf16 %v5162, %v5161
        %v5952 = vrot.slane %v5748, 2
        %v5953 = vrot.slane %v5950, 2
        %v5954 = vsel %vm5042, %v5952, %v5953
        %v5963 = vunpack.c.l.b16 %v5942
        %v5964 = vunpack.c.l.b16 %v5943
        %v5965 = vunpack.c.l.b16 %v5944
        %v5966 = vunpack.c.l.b16 %v5945
        %v5967 = vunpack.c.l.b16 %v5946
        %v5968 = vunpack.c.l.b16 %v5947
        %v5969 = vunpack.c.l.b16 %v5948
        %v5970 = vunpack.c.l.b16 %v5949
        %v5971 = vpack.c.b16 %v5964, %v5963
        %v5972 = vpack.c.b16 %v5966, %v5965
        %v5973 = vpack.c.b16 %v5968, %v5967
        %v5974 = vpack.c.b16 %v5970, %v5969
        %v5980 = vsel %vm561, %v5954, 0
        %v5983 = vsel %vm561, %v5953, 0
        %5985 = vmatprep.subr.bf16.mxu0 0
        %5986 = vmatpush1.bf16.msra.mxu0 0
        %5987 = vmatprep.subr.bf16.mxu0 0
        %5988 = vmatpush1.bf16.msra.mxu0 0
        %5989 = vmatprep.subr.bf16.mxu0 0
        %5990 = vmatpush1.bf16.msra.mxu0 0
        %5991 = vmatprep.subr.bf16.mxu0 0
        %5992 = vmatpush1.bf16.msra.mxu0 0
        %5993 = vmatprep.subr.bf16.mxu0 0
        %5994 = vmatpush1.bf16.msra.mxu0 %v5974
        %5995 = vmatprep.subr.bf16.mxu0 0
        %5996 = vmatpush1.bf16.msra.mxu0 %v5973
        %5997 = vmatprep.subr.bf16.mxu0 0
        %5998 = vmatpush1.bf16.msra.mxu0 %v5972
        %5999 = vmatprep.subr.bf16.mxu0 0
        %6000 = vmatpush1.bf16.msra.mxu0 %v5971
        %6001 = vmatprep.subr.bf16.mxu0 0
        %6002 = vmatpush2.bf16.msra.mxu0 0
        %6003 = vmatprep.subr.bf16.mxu0 0
        %6004 = vmatpush2.bf16.msra.mxu0 0
        %6005 = vmatprep.subr.bf16.mxu0 0
        %6006 = vmatpush2.bf16.msra.mxu0 0
        %6007 = vmatprep.subr.bf16.mxu0 0
        %6008 = vmatpush2.bf16.msra.mxu0 0
        %6009 = vmatprep.subr.bf16.mxu0 0
        %6010 = vmatpush2.bf16.msra.mxu0 0
        %6011 = vmatprep.subr.bf16.mxu0 0
        %6012 = vmatpush2.bf16.msra.mxu0 0
        %6013 = vmatprep.subr.bf16.mxu0 0
        %6014 = vmatpush2.bf16.msra.mxu0 0
        %6015 = vmatprep.subr.bf16.mxu0 0
        %6016 = vmatpush2.bf16.msra.mxu0 0
        %6017 = vmatprep.mubr.bf16.mxu0 0
        %6018 = vmatmul.mubr.bf16.gmra.mxu0 %v5980
        %v6019 = vpop.f32.mrf.mxu0
        %v6020 = vadd.f32 0.0, %v6019
        %v6021 = vpop.f32.mrf.mxu0
        %v6022 = vpop.f32.mrf.mxu0
        %v6023 = vadd.f32 0.0, %v6022
        %v6024 = vpop.f32.mrf.mxu0
        %6025 = vmatprep.mubr.bf16.mxu0 0
        %6026 = vmatmul.mubr.bf16.gmra.mxu0 %v5983
        %v6027 = vpop.f32.mrf.mxu0
        %v6028 = vadd.f32 0.0, %v6027
        %v6029 = vpop.f32.mrf.mxu0
        %v6030 = vpop.f32.mrf.mxu0
        %v6031 = vpop.f32.mrf.mxu0
        %6032 = vdwg.mxu0
        %v6033 = vadd.f32 %v5939, %v6020
        %v6034 = vadd.f32 %v5940, %v6023
        %v6035 = vadd.f32 %v5941, %v6028
        %v6036 = vld [vmem:[%s8] sm:$0x1]
        %v6038 = vlaneseq
        %v6039 = vshrl.u32 %v6038, 7
        %v6040 = vsub.s32 0, %v6039
        %v6041 = vrot.slane %v6036, %v6040
        %v6043 = vadd.f32 %v6033, %v6041
        %v6044 = vadd.f32 %v6034, %v6041
        %v6045 = vadd.f32 %v6035, %v6041
        %v6046 = vmax.f32 %v6043, 0.0
        %v6047 = vmax.f32 %v6044, 0.0
        %v6048 = vmax.f32 %v6045, 0.0
        %v6049 = vld [vmem:[%s9] sm:$0xf]
        %v6050 = vld [vmem:[%s9 + $0x4] sm:$0xf]
        %v6051 = vld [vmem:[%s9 + $0x8] sm:$0xf]
        %v6052 = vld [vmem:[%s9 + $0xc] sm:$0xf]
        %v6053 = vld [vmem:[%s9 + $0x10] sm:$0xf]
        %v6054 = vld [vmem:[%s9 + $0x14] sm:$0xf]
        %v6055 = vld [vmem:[%s9 + $0x18] sm:$0xf]
        %v6056 = vld [vmem:[%s9 + $0x1c] sm:$0xf]
        %v6057 = vpack.c.bf16 %v6046, %v6046
        %v6058 = vld [vmem:[%s9 + $0x20] sm:$0xf]
        %v6059 = vld [vmem:[%s9 + $0x24] sm:$0xf]
        %v6060 = vld [vmem:[%s9 + $0x28] sm:$0xf]
        %v6061 = vld [vmem:[%s9 + $0x2c] sm:$0xf]
        %v6062 = vld [vmem:[%s9 + $0x30] sm:$0xf]
        %v6063 = vld [vmem:[%s9 + $0x34] sm:$0xf]
        %v6064 = vld [vmem:[%s9 + $0x38] sm:$0xf]
        %v6065 = vld [vmem:[%s9 + $0x3c] sm:$0xf]
        %v6067 = vshrl.u32 %v6057, 16
        %v6077 = vunpack.c.l.b16 %v6058
        %v6078 = vunpack.c.l.b16 %v6059
        %v6079 = vunpack.c.l.b16 %v6060
        %v6080 = vunpack.c.l.b16 %v6061
        %v6081 = vunpack.c.l.b16 %v6062
        %v6082 = vunpack.c.l.b16 %v6063
        %v6083 = vunpack.c.l.b16 %v6064
        %v6084 = vunpack.c.l.b16 %v6065
        %v6085 = vpack.c.b16 %v6078, %v6077
        %v6086 = vpack.c.b16 %v6080, %v6079
        %v6087 = vpack.c.b16 %v6082, %v6081
        %v6088 = vpack.c.b16 %v6084, %v6083
        %v6094 = vsel %vm561, %v6067, 0
        %6096 = vmatprep.subr.bf16.mxu0 0
        %6097 = vmatpush1.bf16.msra.mxu0 0
        %6098 = vmatprep.subr.bf16.mxu0 0
        %6099 = vmatpush1.bf16.msra.mxu0 0
        %6100 = vmatprep.subr.bf16.mxu0 0
        %6101 = vmatpush1.bf16.msra.mxu0 0
        %6102 = vmatprep.subr.bf16.mxu0 0
        %6103 = vmatpush1.bf16.msra.mxu0 0
        %6104 = vmatprep.subr.bf16.mxu0 0
        %6105 = vmatpush1.bf16.msra.mxu0 %v6088
        %6106 = vmatprep.subr.bf16.mxu0 0
        %6107 = vmatpush1.bf16.msra.mxu0 %v6087
        %6108 = vmatprep.subr.bf16.mxu0 0
        %6109 = vmatpush1.bf16.msra.mxu0 %v6086
        %6110 = vmatprep.subr.bf16.mxu0 0
        %6111 = vmatpush1.bf16.msra.mxu0 %v6085
        %6112 = vmatprep.subr.bf16.mxu0 0
        %6113 = vmatpush2.bf16.msra.mxu0 0
        %6114 = vmatprep.subr.bf16.mxu0 0
        %6115 = vmatpush2.bf16.msra.mxu0 0
        %6116 = vmatprep.subr.bf16.mxu0 0
        %6117 = vmatpush2.bf16.msra.mxu0 0
        %6118 = vmatprep.subr.bf16.mxu0 0
        %6119 = vmatpush2.bf16.msra.mxu0 0
        %6120 = vmatprep.subr.bf16.mxu0 0
        %6121 = vmatpush2.bf16.msra.mxu0 0
        %6122 = vmatprep.subr.bf16.mxu0 0
        %6123 = vmatpush2.bf16.msra.mxu0 0
        %6124 = vmatprep.subr.bf16.mxu0 0
        %6125 = vmatpush2.bf16.msra.mxu0 0
        %6126 = vmatprep.subr.bf16.mxu0 0
        %6127 = vmatpush2.bf16.msra.mxu0 0
        %6128 = vmatprep.mubr.bf16.mxu0 0
        %6129 = vmatmul.mubr.bf16.gmra.mxu0 %v6094
        %v6130 = vpop.f32.mrf.mxu0
        %v6131 = vadd.f32 0.0, %v6130
        %v6132 = vpop.f32.mrf.mxu0
        %v6133 = vpop.f32.mrf.mxu0
        %v6134 = vpop.f32.mrf.mxu0
        %6135 = vdwg.mxu0
        %v6144 = vunpack.c.l.b16 %v6049
        %v6145 = vunpack.c.l.b16 %v6050
        %v6146 = vunpack.c.l.b16 %v6051
        %v6147 = vunpack.c.l.b16 %v6052
        %v6148 = vunpack.c.l.b16 %v6053
        %v6149 = vunpack.c.l.b16 %v6054
        %v6150 = vunpack.c.l.b16 %v6055
        %v6151 = vunpack.c.l.b16 %v6056
        %v6152 = vpack.c.b16 %v6145, %v6144
        %v6153 = vpack.c.b16 %v6147, %v6146
        %v6154 = vpack.c.b16 %v6149, %v6148
        %v6155 = vpack.c.b16 %v6151, %v6150
        %v6160 = vsel %vm561, %v6057, 0
        %6162 = vmatprep.subr.bf16.mxu0 0
        %6163 = vmatpush1.bf16.msra.mxu0 0
        %6164 = vmatprep.subr.bf16.mxu0 0
        %6165 = vmatpush1.bf16.msra.mxu0 0
        %6166 = vmatprep.subr.bf16.mxu0 0
        %6167 = vmatpush1.bf16.msra.mxu0 0
        %6168 = vmatprep.subr.bf16.mxu0 0
        %6169 = vmatpush1.bf16.msra.mxu0 0
        %6170 = vmatprep.subr.bf16.mxu0 0
        %6171 = vmatpush1.bf16.msra.mxu0 %v6155
        %6172 = vmatprep.subr.bf16.mxu0 0
        %6173 = vmatpush1.bf16.msra.mxu0 %v6154
        %6174 = vmatprep.subr.bf16.mxu0 0
        %6175 = vmatpush1.bf16.msra.mxu0 %v6153
        %6176 = vmatprep.subr.bf16.mxu0 0
        %6177 = vmatpush1.bf16.msra.mxu0 %v6152
        %6178 = vmatprep.subr.bf16.mxu0 0
        %6179 = vmatpush2.bf16.msra.mxu0 0
        %6180 = vmatprep.subr.bf16.mxu0 0
        %6181 = vmatpush2.bf16.msra.mxu0 0
        %6182 = vmatprep.subr.bf16.mxu0 0
        %6183 = vmatpush2.bf16.msra.mxu0 0
        %6184 = vmatprep.subr.bf16.mxu0 0
        %6185 = vmatpush2.bf16.msra.mxu0 0
        %6186 = vmatprep.subr.bf16.mxu0 0
        %6187 = vmatpush2.bf16.msra.mxu0 0
        %6188 = vmatprep.subr.bf16.mxu0 0
        %6189 = vmatpush2.bf16.msra.mxu0 0
        %6190 = vmatprep.subr.bf16.mxu0 0
        %6191 = vmatpush2.bf16.msra.mxu0 0
        %6192 = vmatprep.subr.bf16.mxu0 0
        %6193 = vmatpush2.bf16.msra.mxu0 0
        %6194 = vmatprep.mubr.bf16.mxu0 0
        %6195 = vmatmul.mubr.bf16.gmra.mxu0 %v6160
        %v6196 = vpop.f32.mrf.mxu0
        %v6197 = vadd.f32 %v6131, %v6196
        %v6198 = vpop.f32.mrf.mxu0
        %v6199 = vpop.f32.mrf.mxu0
        %v6200 = vpop.f32.mrf.mxu0
        %6201 = vdwg.mxu0
        %v6202 = vld [vmem:[%s9 + $0x40] sm:$0xf]
        %v6203 = vld [vmem:[%s9 + $0x44] sm:$0xf]
        %v6204 = vld [vmem:[%s9 + $0x48] sm:$0xf]
        %v6205 = vld [vmem:[%s9 + $0x4c] sm:$0xf]
        %v6206 = vld [vmem:[%s9 + $0x50] sm:$0xf]
        %v6207 = vld [vmem:[%s9 + $0x54] sm:$0xf]
        %v6208 = vld [vmem:[%s9 + $0x58] sm:$0xf]
        %v6209 = vld [vmem:[%s9 + $0x5c] sm:$0xf]
        %v6211 = vrot.slane %v6057, 1
        %v6220 = vunpack.c.l.b16 %v6202
        %v6221 = vunpack.c.l.b16 %v6203
        %v6222 = vunpack.c.l.b16 %v6204
        %v6223 = vunpack.c.l.b16 %v6205
        %v6224 = vunpack.c.l.b16 %v6206
        %v6225 = vunpack.c.l.b16 %v6207
        %v6226 = vunpack.c.l.b16 %v6208
        %v6227 = vunpack.c.l.b16 %v6209
        %v6228 = vpack.c.b16 %v6221, %v6220
        %v6229 = vpack.c.b16 %v6223, %v6222
        %v6230 = vpack.c.b16 %v6225, %v6224
        %v6231 = vpack.c.b16 %v6227, %v6226
        %v6237 = vsel %vm561, %v6211, 0
        %6239 = vmatprep.subr.bf16.mxu0 0
        %6240 = vmatpush1.bf16.msra.mxu0 0
        %6241 = vmatprep.subr.bf16.mxu0 0
        %6242 = vmatpush1.bf16.msra.mxu0 0
        %6243 = vmatprep.subr.bf16.mxu0 0
        %6244 = vmatpush1.bf16.msra.mxu0 0
        %6245 = vmatprep.subr.bf16.mxu0 0
        %6246 = vmatpush1.bf16.msra.mxu0 0
        %6247 = vmatprep.subr.bf16.mxu0 0
        %6248 = vmatpush1.bf16.msra.mxu0 %v6231
        %6249 = vmatprep.subr.bf16.mxu0 0
        %6250 = vmatpush1.bf16.msra.mxu0 %v6230
        %6251 = vmatprep.subr.bf16.mxu0 0
        %6252 = vmatpush1.bf16.msra.mxu0 %v6229
        %6253 = vmatprep.subr.bf16.mxu0 0
        %6254 = vmatpush1.bf16.msra.mxu0 %v6228
        %6255 = vmatprep.subr.bf16.mxu0 0
        %6256 = vmatpush2.bf16.msra.mxu0 0
        %6257 = vmatprep.subr.bf16.mxu0 0
        %6258 = vmatpush2.bf16.msra.mxu0 0
        %6259 = vmatprep.subr.bf16.mxu0 0
        %6260 = vmatpush2.bf16.msra.mxu0 0
        %6261 = vmatprep.subr.bf16.mxu0 0
        %6262 = vmatpush2.bf16.msra.mxu0 0
        %6263 = vmatprep.subr.bf16.mxu0 0
        %6264 = vmatpush2.bf16.msra.mxu0 0
        %6265 = vmatprep.subr.bf16.mxu0 0
        %6266 = vmatpush2.bf16.msra.mxu0 0
        %6267 = vmatprep.subr.bf16.mxu0 0
        %6268 = vmatpush2.bf16.msra.mxu0 0
        %6269 = vmatprep.subr.bf16.mxu0 0
        %6270 = vmatpush2.bf16.msra.mxu0 0
        %6271 = vmatprep.mubr.bf16.mxu0 0
        %6272 = vmatmul.mubr.bf16.gmra.mxu0 %v6237
        %v6273 = vpop.f32.mrf.mxu0
        %v6274 = vadd.f32 0.0, %v6273
        %v6275 = vpop.f32.mrf.mxu0
        %v6276 = vpop.f32.mrf.mxu0
        %v6277 = vpop.f32.mrf.mxu0
        %6278 = vdwg.mxu0
        %v6279 = vadd.f32 %v6197, %v6274
        %v6280 = vld [vmem:[%s9 + $0x60] sm:$0xf]
        %v6281 = vld [vmem:[%s9 + $0x64] sm:$0xf]
        %v6282 = vld [vmem:[%s9 + $0x68] sm:$0xf]
        %v6283 = vld [vmem:[%s9 + $0x6c] sm:$0xf]
        %v6284 = vld [vmem:[%s9 + $0x70] sm:$0xf]
        %v6285 = vld [vmem:[%s9 + $0x74] sm:$0xf]
        %v6286 = vld [vmem:[%s9 + $0x78] sm:$0xf]
        %v6287 = vld [vmem:[%s9 + $0x7c] sm:$0xf]
        %v6288 = vpack.c.bf16 %v6047, %v6047
        %v6290 = vshrl.u32 %v6288, 16
        %v6300 = vunpack.c.l.b16 %v6280
        %v6301 = vunpack.c.l.b16 %v6281
        %v6302 = vunpack.c.l.b16 %v6282
        %v6303 = vunpack.c.l.b16 %v6283
        %v6304 = vunpack.c.l.b16 %v6284
        %v6305 = vunpack.c.l.b16 %v6285
        %v6306 = vunpack.c.l.b16 %v6286
        %v6307 = vunpack.c.l.b16 %v6287
        %v6308 = vpack.c.b16 %v6301, %v6300
        %v6309 = vpack.c.b16 %v6303, %v6302
        %v6310 = vpack.c.b16 %v6305, %v6304
        %v6311 = vpack.c.b16 %v6307, %v6306
        %v6317 = vsel %vm561, %v6290, 0
        %6319 = vmatprep.subr.bf16.mxu0 0
        %6320 = vmatpush1.bf16.msra.mxu0 0
        %6321 = vmatprep.subr.bf16.mxu0 0
        %6322 = vmatpush1.bf16.msra.mxu0 0
        %6323 = vmatprep.subr.bf16.mxu0 0
        %6324 = vmatpush1.bf16.msra.mxu0 0
        %6325 = vmatprep.subr.bf16.mxu0 0
        %6326 = vmatpush1.bf16.msra.mxu0 0
        %6327 = vmatprep.subr.bf16.mxu0 0
        %6328 = vmatpush1.bf16.msra.mxu0 %v6311
        %6329 = vmatprep.subr.bf16.mxu0 0
        %6330 = vmatpush1.bf16.msra.mxu0 %v6310
        %6331 = vmatprep.subr.bf16.mxu0 0
        %6332 = vmatpush1.bf16.msra.mxu0 %v6309
        %6333 = vmatprep.subr.bf16.mxu0 0
        %6334 = vmatpush1.bf16.msra.mxu0 %v6308
        %6335 = vmatprep.subr.bf16.mxu0 0
        %6336 = vmatpush2.bf16.msra.mxu0 0
        %6337 = vmatprep.subr.bf16.mxu0 0
        %6338 = vmatpush2.bf16.msra.mxu0 0
        %6339 = vmatprep.subr.bf16.mxu0 0
        %6340 = vmatpush2.bf16.msra.mxu0 0
        %6341 = vmatprep.subr.bf16.mxu0 0
        %6342 = vmatpush2.bf16.msra.mxu0 0
        %6343 = vmatprep.subr.bf16.mxu0 0
        %6344 = vmatpush2.bf16.msra.mxu0 0
        %6345 = vmatprep.subr.bf16.mxu0 0
        %6346 = vmatpush2.bf16.msra.mxu0 0
        %6347 = vmatprep.subr.bf16.mxu0 0
        %6348 = vmatpush2.bf16.msra.mxu0 0
        %6349 = vmatprep.subr.bf16.mxu0 0
        %6350 = vmatpush2.bf16.msra.mxu0 0
        %6351 = vmatprep.mubr.bf16.mxu0 0
        %6352 = vmatmul.mubr.bf16.gmra.mxu0 %v6317
        %v6353 = vpop.f32.mrf.mxu0
        %v6354 = vadd.f32 0.0, %v6353
        %v6355 = vpop.f32.mrf.mxu0
        %v6356 = vpop.f32.mrf.mxu0
        %v6357 = vpop.f32.mrf.mxu0
        %6358 = vdwg.mxu0
        %v6359 = vadd.f32 %v6279, %v6354
        %v6360 = vld [vmem:[%s9 + $0x80] sm:$0xf]
        %v6361 = vld [vmem:[%s9 + $0x84] sm:$0xf]
        %v6362 = vld [vmem:[%s9 + $0x88] sm:$0xf]
        %v6363 = vld [vmem:[%s9 + $0x8c] sm:$0xf]
        %v6364 = vld [vmem:[%s9 + $0x90] sm:$0xf]
        %v6365 = vld [vmem:[%s9 + $0x94] sm:$0xf]
        %v6366 = vld [vmem:[%s9 + $0x98] sm:$0xf]
        %v6367 = vld [vmem:[%s9 + $0x9c] sm:$0xf]
        %v6369 = vrot.slane %v6288, 1
        %v6378 = vunpack.c.l.b16 %v6360
        %v6379 = vunpack.c.l.b16 %v6361
        %v6380 = vunpack.c.l.b16 %v6362
        %v6381 = vunpack.c.l.b16 %v6363
        %v6382 = vunpack.c.l.b16 %v6364
        %v6383 = vunpack.c.l.b16 %v6365
        %v6384 = vunpack.c.l.b16 %v6366
        %v6385 = vunpack.c.l.b16 %v6367
        %v6386 = vpack.c.b16 %v6379, %v6378
        %v6387 = vpack.c.b16 %v6381, %v6380
        %v6388 = vpack.c.b16 %v6383, %v6382
        %v6389 = vpack.c.b16 %v6385, %v6384
        %v6395 = vsel %vm561, %v6369, 0
        %6397 = vmatprep.subr.bf16.mxu0 0
        %6398 = vmatpush1.bf16.msra.mxu0 0
        %6399 = vmatprep.subr.bf16.mxu0 0
        %6400 = vmatpush1.bf16.msra.mxu0 0
        %6401 = vmatprep.subr.bf16.mxu0 0
        %6402 = vmatpush1.bf16.msra.mxu0 0
        %6403 = vmatprep.subr.bf16.mxu0 0
        %6404 = vmatpush1.bf16.msra.mxu0 0
        %6405 = vmatprep.subr.bf16.mxu0 0
        %6406 = vmatpush1.bf16.msra.mxu0 %v6389
        %6407 = vmatprep.subr.bf16.mxu0 0
        %6408 = vmatpush1.bf16.msra.mxu0 %v6388
        %6409 = vmatprep.subr.bf16.mxu0 0
        %6410 = vmatpush1.bf16.msra.mxu0 %v6387
        %6411 = vmatprep.subr.bf16.mxu0 0
        %6412 = vmatpush1.bf16.msra.mxu0 %v6386
        %6413 = vmatprep.subr.bf16.mxu0 0
        %6414 = vmatpush2.bf16.msra.mxu0 0
        %6415 = vmatprep.subr.bf16.mxu0 0
        %6416 = vmatpush2.bf16.msra.mxu0 0
        %6417 = vmatprep.subr.bf16.mxu0 0
        %6418 = vmatpush2.bf16.msra.mxu0 0
        %6419 = vmatprep.subr.bf16.mxu0 0
        %6420 = vmatpush2.bf16.msra.mxu0 0
        %6421 = vmatprep.subr.bf16.mxu0 0
        %6422 = vmatpush2.bf16.msra.mxu0 0
        %6423 = vmatprep.subr.bf16.mxu0 0
        %6424 = vmatpush2.bf16.msra.mxu0 0
        %6425 = vmatprep.subr.bf16.mxu0 0
        %6426 = vmatpush2.bf16.msra.mxu0 0
        %6427 = vmatprep.subr.bf16.mxu0 0
        %6428 = vmatpush2.bf16.msra.mxu0 0
        %6429 = vmatprep.mubr.bf16.mxu0 0
        %6430 = vmatmul.mubr.bf16.gmra.mxu0 %v6395
        %v6431 = vpop.f32.mrf.mxu0
        %v6432 = vadd.f32 0.0, %v6431
        %v6433 = vpop.f32.mrf.mxu0
        %v6434 = vpop.f32.mrf.mxu0
        %v6435 = vpop.f32.mrf.mxu0
        %6436 = vdwg.mxu0
        %v6437 = vadd.f32 %v6359, %v6432
        %v6438 = vld [vmem:[%s9 + $0xa0] sm:$0xf]
        %v6439 = vld [vmem:[%s9 + $0xa4] sm:$0xf]
        %v6440 = vld [vmem:[%s9 + $0xa8] sm:$0xf]
        %v6441 = vld [vmem:[%s9 + $0xac] sm:$0xf]
        %v6442 = vld [vmem:[%s9 + $0xb0] sm:$0xf]
        %v6443 = vld [vmem:[%s9 + $0xb4] sm:$0xf]
        %v6444 = vld [vmem:[%s9 + $0xb8] sm:$0xf]
        %v6445 = vld [vmem:[%s9 + $0xbc] sm:$0xf]
        %v6446 = vrot.slane %v6290, 1
        %v6455 = vunpack.c.l.b16 %v6438
        %v6456 = vunpack.c.l.b16 %v6439
        %v6457 = vunpack.c.l.b16 %v6440
        %v6458 = vunpack.c.l.b16 %v6441
        %v6459 = vunpack.c.l.b16 %v6442
        %v6460 = vunpack.c.l.b16 %v6443
        %v6461 = vunpack.c.l.b16 %v6444
        %v6462 = vunpack.c.l.b16 %v6445
        %v6463 = vpack.c.b16 %v6456, %v6455
        %v6464 = vpack.c.b16 %v6458, %v6457
        %v6465 = vpack.c.b16 %v6460, %v6459
        %v6466 = vpack.c.b16 %v6462, %v6461
        %v6472 = vsel %vm561, %v6446, 0
        %6474 = vmatprep.subr.bf16.mxu0 0
        %6475 = vmatpush1.bf16.msra.mxu0 0
        %6476 = vmatprep.subr.bf16.mxu0 0
        %6477 = vmatpush1.bf16.msra.mxu0 0
        %6478 = vmatprep.subr.bf16.mxu0 0
        %6479 = vmatpush1.bf16.msra.mxu0 0
        %6480 = vmatprep.subr.bf16.mxu0 0
        %6481 = vmatpush1.bf16.msra.mxu0 0
        %6482 = vmatprep.subr.bf16.mxu0 0
        %6483 = vmatpush1.bf16.msra.mxu0 %v6466
        %6484 = vmatprep.subr.bf16.mxu0 0
        %6485 = vmatpush1.bf16.msra.mxu0 %v6465
        %6486 = vmatprep.subr.bf16.mxu0 0
        %6487 = vmatpush1.bf16.msra.mxu0 %v6464
        %6488 = vmatprep.subr.bf16.mxu0 0
        %6489 = vmatpush1.bf16.msra.mxu0 %v6463
        %6490 = vmatprep.subr.bf16.mxu0 0
        %6491 = vmatpush2.bf16.msra.mxu0 0
        %6492 = vmatprep.subr.bf16.mxu0 0
        %6493 = vmatpush2.bf16.msra.mxu0 0
        %6494 = vmatprep.subr.bf16.mxu0 0
        %6495 = vmatpush2.bf16.msra.mxu0 0
        %6496 = vmatprep.subr.bf16.mxu0 0
        %6497 = vmatpush2.bf16.msra.mxu0 0
        %6498 = vmatprep.subr.bf16.mxu0 0
        %6499 = vmatpush2.bf16.msra.mxu0 0
        %6500 = vmatprep.subr.bf16.mxu0 0
        %6501 = vmatpush2.bf16.msra.mxu0 0
        %6502 = vmatprep.subr.bf16.mxu0 0
        %6503 = vmatpush2.bf16.msra.mxu0 0
        %6504 = vmatprep.subr.bf16.mxu0 0
        %6505 = vmatpush2.bf16.msra.mxu0 0
        %6506 = vmatprep.mubr.bf16.mxu0 0
        %6507 = vmatmul.mubr.bf16.gmra.mxu0 %v6472
        %v6508 = vpop.f32.mrf.mxu0
        %v6509 = vadd.f32 0.0, %v6508
        %v6510 = vpop.f32.mrf.mxu0
        %v6511 = vpop.f32.mrf.mxu0
        %v6512 = vpop.f32.mrf.mxu0
        %6513 = vdwg.mxu0
        %v6514 = vadd.f32 %v6437, %v6509
        %v6515 = vld [vmem:[%s9 + $0xc0] sm:$0xf]
        %v6516 = vld [vmem:[%s9 + $0xc4] sm:$0xf]
        %v6517 = vld [vmem:[%s9 + $0xc8] sm:$0xf]
        %v6518 = vld [vmem:[%s9 + $0xcc] sm:$0xf]
        %v6519 = vld [vmem:[%s9 + $0xd0] sm:$0xf]
        %v6520 = vld [vmem:[%s9 + $0xd4] sm:$0xf]
        %v6521 = vld [vmem:[%s9 + $0xd8] sm:$0xf]
        %v6522 = vld [vmem:[%s9 + $0xdc] sm:$0xf]
        %v6523 = vpack.c.bf16 %v6048, %v6048
        %v6525 = vrot.slane %v6523, 1
        %v6534 = vunpack.c.l.b16 %v6515
        %v6535 = vunpack.c.l.b16 %v6516
        %v6536 = vunpack.c.l.b16 %v6517
        %v6537 = vunpack.c.l.b16 %v6518
        %v6538 = vunpack.c.l.b16 %v6519
        %v6539 = vunpack.c.l.b16 %v6520
        %v6540 = vunpack.c.l.b16 %v6521
        %v6541 = vunpack.c.l.b16 %v6522
        %v6542 = vpack.c.b16 %v6535, %v6534
        %v6543 = vpack.c.b16 %v6537, %v6536
        %v6544 = vpack.c.b16 %v6539, %v6538
        %v6545 = vpack.c.b16 %v6541, %v6540
        %v6551 = vsel %vm561, %v6525, 0
        %6553 = vmatprep.subr.bf16.mxu0 0
        %6554 = vmatpush1.bf16.msra.mxu0 0
        %6555 = vmatprep.subr.bf16.mxu0 0
        %6556 = vmatpush1.bf16.msra.mxu0 0
        %6557 = vmatprep.subr.bf16.mxu0 0
        %6558 = vmatpush1.bf16.msra.mxu0 0
        %6559 = vmatprep.subr.bf16.mxu0 0
        %6560 = vmatpush1.bf16.msra.mxu0 0
        %6561 = vmatprep.subr.bf16.mxu0 0
        %6562 = vmatpush1.bf16.msra.mxu0 %v6545
        %6563 = vmatprep.subr.bf16.mxu0 0
        %6564 = vmatpush1.bf16.msra.mxu0 %v6544
        %6565 = vmatprep.subr.bf16.mxu0 0
        %6566 = vmatpush1.bf16.msra.mxu0 %v6543
        %6567 = vmatprep.subr.bf16.mxu0 0
        %6568 = vmatpush1.bf16.msra.mxu0 %v6542
        %6569 = vmatprep.subr.bf16.mxu0 0
        %6570 = vmatpush2.bf16.msra.mxu0 0
        %6571 = vmatprep.subr.bf16.mxu0 0
        %6572 = vmatpush2.bf16.msra.mxu0 0
        %6573 = vmatprep.subr.bf16.mxu0 0
        %6574 = vmatpush2.bf16.msra.mxu0 0
        %6575 = vmatprep.subr.bf16.mxu0 0
        %6576 = vmatpush2.bf16.msra.mxu0 0
        %6577 = vmatprep.subr.bf16.mxu0 0
        %6578 = vmatpush2.bf16.msra.mxu0 0
        %6579 = vmatprep.subr.bf16.mxu0 0
        %6580 = vmatpush2.bf16.msra.mxu0 0
        %6581 = vmatprep.subr.bf16.mxu0 0
        %6582 = vmatpush2.bf16.msra.mxu0 0
        %6583 = vmatprep.subr.bf16.mxu0 0
        %6584 = vmatpush2.bf16.msra.mxu0 0
        %6585 = vmatprep.mubr.bf16.mxu0 0
        %6586 = vmatmul.mubr.bf16.gmra.mxu0 %v6551
        %v6587 = vpop.f32.mrf.mxu0
        %v6588 = vadd.f32 0.0, %v6587
        %v6589 = vpop.f32.mrf.mxu0
        %v6590 = vpop.f32.mrf.mxu0
        %v6591 = vpop.f32.mrf.mxu0
        %6592 = vdwg.mxu0
        %v6593 = vadd.f32 %v6514, %v6588
        %v6594 = vld [vmem:[%s9 + $0xe0] sm:$0xf]
        %v6595 = vld [vmem:[%s9 + $0xe4] sm:$0xf]
        %v6596 = vld [vmem:[%s9 + $0xe8] sm:$0xf]
        %v6597 = vld [vmem:[%s9 + $0xec] sm:$0xf]
        %v6598 = vld [vmem:[%s9 + $0xf0] sm:$0xf]
        %v6599 = vld [vmem:[%s9 + $0xf4] sm:$0xf]
        %v6600 = vld [vmem:[%s9 + $0xf8] sm:$0xf]
        %v6601 = vld [vmem:[%s9 + $0xfc] sm:$0xf]
        %v6603 = vshrl.u32 %v6523, 16
        %v6605 = vrot.slane %v6603, 1
        %v6614 = vunpack.c.l.b16 %v6594
        %v6615 = vunpack.c.l.b16 %v6595
        %v6616 = vunpack.c.l.b16 %v6596
        %v6617 = vunpack.c.l.b16 %v6597
        %v6618 = vunpack.c.l.b16 %v6598
        %v6619 = vunpack.c.l.b16 %v6599
        %v6620 = vunpack.c.l.b16 %v6600
        %v6621 = vunpack.c.l.b16 %v6601
        %v6622 = vpack.c.b16 %v6615, %v6614
        %v6623 = vpack.c.b16 %v6617, %v6616
        %v6624 = vpack.c.b16 %v6619, %v6618
        %v6625 = vpack.c.b16 %v6621, %v6620
        %v6631 = vsel %vm561, %v6605, 0
        %6633 = vmatprep.subr.bf16.mxu0 0
        %6634 = vmatpush1.bf16.msra.mxu0 0
        %6635 = vmatprep.subr.bf16.mxu0 0
        %6636 = vmatpush1.bf16.msra.mxu0 0
        %6637 = vmatprep.subr.bf16.mxu0 0
        %6638 = vmatpush1.bf16.msra.mxu0 0
        %6639 = vmatprep.subr.bf16.mxu0 0
        %6640 = vmatpush1.bf16.msra.mxu0 0
        %6641 = vmatprep.subr.bf16.mxu0 0
        %6642 = vmatpush1.bf16.msra.mxu0 %v6625
        %6643 = vmatprep.subr.bf16.mxu0 0
        %6644 = vmatpush1.bf16.msra.mxu0 %v6624
        %6645 = vmatprep.subr.bf16.mxu0 0
        %6646 = vmatpush1.bf16.msra.mxu0 %v6623
        %6647 = vmatprep.subr.bf16.mxu0 0
        %6648 = vmatpush1.bf16.msra.mxu0 %v6622
        %6649 = vmatprep.subr.bf16.mxu0 0
        %6650 = vmatpush2.bf16.msra.mxu0 0
        %6651 = vmatprep.subr.bf16.mxu0 0
        %6652 = vmatpush2.bf16.msra.mxu0 0
        %6653 = vmatprep.subr.bf16.mxu0 0
        %6654 = vmatpush2.bf16.msra.mxu0 0
        %6655 = vmatprep.subr.bf16.mxu0 0
        %6656 = vmatpush2.bf16.msra.mxu0 0
        %6657 = vmatprep.subr.bf16.mxu0 0
        %6658 = vmatpush2.bf16.msra.mxu0 0
        %6659 = vmatprep.subr.bf16.mxu0 0
        %6660 = vmatpush2.bf16.msra.mxu0 0
        %6661 = vmatprep.subr.bf16.mxu0 0
        %6662 = vmatpush2.bf16.msra.mxu0 0
        %6663 = vmatprep.subr.bf16.mxu0 0
        %6664 = vmatpush2.bf16.msra.mxu0 0
        %6665 = vmatprep.mubr.bf16.mxu0 0
        %6666 = vmatmul.mubr.bf16.gmra.mxu0 %v6631
        %v6667 = vpop.f32.mrf.mxu0
        %v6668 = vadd.f32 0.0, %v6667
        %v6669 = vpop.f32.mrf.mxu0
        %v6670 = vpop.f32.mrf.mxu0
        %v6671 = vpop.f32.mrf.mxu0
        %6672 = vdwg.mxu0
        %v6673 = vadd.f32 %v6593, %v6668
        %v6674 = vld [vmem:[%s9 + $0x100] sm:$0xf]
        %v6675 = vld [vmem:[%s9 + $0x104] sm:$0xf]
        %v6676 = vld [vmem:[%s9 + $0x108] sm:$0xf]
        %v6677 = vld [vmem:[%s9 + $0x10c] sm:$0xf]
        %v6678 = vld [vmem:[%s9 + $0x110] sm:$0xf]
        %v6679 = vld [vmem:[%s9 + $0x114] sm:$0xf]
        %v6680 = vld [vmem:[%s9 + $0x118] sm:$0xf]
        %v6681 = vld [vmem:[%s9 + $0x11c] sm:$0xf]
        %v6682 = vrot.slane %v6523, 2
        %v6691 = vunpack.c.l.b16 %v6674
        %v6692 = vunpack.c.l.b16 %v6675
        %v6693 = vunpack.c.l.b16 %v6676
        %v6694 = vunpack.c.l.b16 %v6677
        %v6695 = vunpack.c.l.b16 %v6678
        %v6696 = vunpack.c.l.b16 %v6679
        %v6697 = vunpack.c.l.b16 %v6680
        %v6698 = vunpack.c.l.b16 %v6681
        %v6699 = vpack.c.b16 %v6692, %v6691
        %v6700 = vpack.c.b16 %v6694, %v6693
        %v6701 = vpack.c.b16 %v6696, %v6695
        %v6702 = vpack.c.b16 %v6698, %v6697
        %v6708 = vsel %vm561, %v6682, 0
        %6710 = vmatprep.subr.bf16.mxu0 0
        %6711 = vmatpush1.bf16.msra.mxu0 0
        %6712 = vmatprep.subr.bf16.mxu0 0
        %6713 = vmatpush1.bf16.msra.mxu0 0
        %6714 = vmatprep.subr.bf16.mxu0 0
        %6715 = vmatpush1.bf16.msra.mxu0 0
        %6716 = vmatprep.subr.bf16.mxu0 0
        %6717 = vmatpush1.bf16.msra.mxu0 0
        %6718 = vmatprep.subr.bf16.mxu0 0
        %6719 = vmatpush1.bf16.msra.mxu0 %v6702
        %6720 = vmatprep.subr.bf16.mxu0 0
        %6721 = vmatpush1.bf16.msra.mxu0 %v6701
        %6722 = vmatprep.subr.bf16.mxu0 0
        %6723 = vmatpush1.bf16.msra.mxu0 %v6700
        %6724 = vmatprep.subr.bf16.mxu0 0
        %6725 = vmatpush1.bf16.msra.mxu0 %v6699
        %6726 = vmatprep.subr.bf16.mxu0 0
        %6727 = vmatpush2.bf16.msra.mxu0 0
        %6728 = vmatprep.subr.bf16.mxu0 0
        %6729 = vmatpush2.bf16.msra.mxu0 0
        %6730 = vmatprep.subr.bf16.mxu0 0
        %6731 = vmatpush2.bf16.msra.mxu0 0
        %6732 = vmatprep.subr.bf16.mxu0 0
        %6733 = vmatpush2.bf16.msra.mxu0 0
        %6734 = vmatprep.subr.bf16.mxu0 0
        %6735 = vmatpush2.bf16.msra.mxu0 0
        %6736 = vmatprep.subr.bf16.mxu0 0
        %6737 = vmatpush2.bf16.msra.mxu0 0
        %6738 = vmatprep.subr.bf16.mxu0 0
        %6739 = vmatpush2.bf16.msra.mxu0 0
        %6740 = vmatprep.subr.bf16.mxu0 0
        %6741 = vmatpush2.bf16.msra.mxu0 0
        %6742 = vmatprep.mubr.bf16.mxu0 0
        %6743 = vmatmul.mubr.bf16.gmra.mxu0 %v6708
        %v6744 = vpop.f32.mrf.mxu0
        %v6745 = vadd.f32 0.0, %v6744
        %v6746 = vpop.f32.mrf.mxu0
        %v6747 = vpop.f32.mrf.mxu0
        %v6748 = vpop.f32.mrf.mxu0
        %6749 = vdwg.mxu0
        %v6750 = vadd.f32 %v6673, %v6745
        %v6751 = vld [vmem:[%s10] sm:$0x1]
        %v6752 = vadd.f32 %v6750, %v6751
        %v6753 = vmax.f32 %v6752, 0.0
        %v6754 = vld [vmem:[%s11] sm:$0xff]
        %v6755 = vld [vmem:[%s11 + $0x8] sm:$0xff]
        %v6756 = vld [vmem:[%s11 + $0x10] sm:$0xff]
        %v6757 = vld [vmem:[%s11 + $0x18] sm:$0xff]
        %v6758 = vld [vmem:[%s11 + $0x20] sm:$0xff]
        %v6759 = vld [vmem:[%s11 + $0x28] sm:$0xff]
        %v6760 = vld [vmem:[%s11 + $0x30] sm:$0xff]
        %v6761 = vld [vmem:[%s11 + $0x38] sm:$0xff]
        %v6762 = vld [vmem:[%s11 + $0x40] sm:$0xff]
        %v6763 = vld [vmem:[%s11 + $0x48] sm:$0xff]
        %v6764 = vld [vmem:[%s11 + $0x50] sm:$0xff]
        %v6765 = vld [vmem:[%s11 + $0x58] sm:$0xff]
        %v6766 = vld [vmem:[%s11 + $0x60] sm:$0xff]
        %v6767 = vld [vmem:[%s11 + $0x68] sm:$0xff]
        %v6768 = vld [vmem:[%s11 + $0x70] sm:$0xff]
        %v6769 = vld [vmem:[%s11 + $0x78] sm:$0xff]
        %v6770 = vpack.c.bf16 %v6753, %v6753
        %v6771 = vld [vmem:[%s12] sm:$0xf]
        %v6788 = vunpack.c.l.b16 %v6754
        %v6789 = vunpack.c.h.b16 %v6754
        %v6790 = vunpack.c.l.b16 %v6755
        %v6791 = vunpack.c.h.b16 %v6755
        %v6792 = vunpack.c.l.b16 %v6756
        %v6793 = vunpack.c.h.b16 %v6756
        %v6794 = vunpack.c.l.b16 %v6757
        %v6795 = vunpack.c.h.b16 %v6757
        %v6796 = vunpack.c.l.b16 %v6758
        %v6797 = vunpack.c.h.b16 %v6758
        %v6798 = vunpack.c.l.b16 %v6759
        %v6799 = vunpack.c.h.b16 %v6759
        %v6800 = vunpack.c.l.b16 %v6760
        %v6801 = vunpack.c.h.b16 %v6760
        %v6802 = vunpack.c.l.b16 %v6761
        %v6803 = vunpack.c.h.b16 %v6761
        %v6804 = vunpack.c.l.b16 %v6762
        %v6805 = vunpack.c.h.b16 %v6762
        %v6806 = vunpack.c.l.b16 %v6763
        %v6807 = vunpack.c.h.b16 %v6763
        %v6808 = vunpack.c.l.b16 %v6764
        %v6809 = vunpack.c.h.b16 %v6764
        %v6810 = vunpack.c.l.b16 %v6765
        %v6811 = vunpack.c.h.b16 %v6765
        %v6812 = vunpack.c.l.b16 %v6766
        %v6813 = vunpack.c.h.b16 %v6766
        %v6814 = vunpack.c.l.b16 %v6767
        %v6815 = vunpack.c.h.b16 %v6767
        %v6816 = vunpack.c.l.b16 %v6768
        %v6817 = vunpack.c.h.b16 %v6768
        %v6818 = vunpack.c.l.b16 %v6769
        %v6819 = vunpack.c.h.b16 %v6769
        %v6820 = vpack.c.b16 %v6792, %v6788
        %v6821 = vpack.c.b16 %v6793, %v6789
        %v6822 = vpack.c.b16 %v6794, %v6790
        %v6823 = vpack.c.b16 %v6795, %v6791
        %v6824 = vpack.c.b16 %v6800, %v6796
        %v6825 = vpack.c.b16 %v6801, %v6797
        %v6826 = vpack.c.b16 %v6802, %v6798
        %v6827 = vpack.c.b16 %v6803, %v6799
        %v6828 = vpack.c.b16 %v6808, %v6804
        %v6829 = vpack.c.b16 %v6809, %v6805
        %v6830 = vpack.c.b16 %v6810, %v6806
        %v6831 = vpack.c.b16 %v6811, %v6807
        %v6832 = vpack.c.b16 %v6816, %v6812
        %v6833 = vpack.c.b16 %v6817, %v6813
        %v6834 = vpack.c.b16 %v6818, %v6814
        %v6835 = vpack.c.b16 %v6819, %v6815
        %v6853 = vlaneseq
        %v6854 = vshrl.u32 %v6853, 7
        %v6855 = vsub.s32 0, %v6854
        %v6856 = vrot.slane %v6771, %v6855
        %v6857 = vlaneseq
        %v6858 = vshrl.u32 %v6857, 7
        %v6859 = vsub.s32 1, %v6858
        %v6860 = vrot.slane %v6771, %v6859
        %v6861 = vlaneseq
        %v6862 = vshrl.u32 %v6861, 7
        %v6863 = vsub.s32 2, %v6862
        %v6864 = vrot.slane %v6771, %v6863
        %v6865 = vlaneseq
        %v6866 = vshrl.u32 %v6865, 7
        %v6867 = vsub.s32 3, %v6866
        %v6868 = vrot.slane %v6771, %v6867
        %v6874 = vsel %vm561, %v6770, 0
        %6876 = vmatprep.subr.bf16.mxu0 0
        %6877 = vmatpush1.bf16.msra.mxu0 0
        %6878 = vmatprep.subr.bf16.mxu0 0
        %6879 = vmatpush1.bf16.msra.mxu0 0
        %6880 = vmatprep.subr.bf16.mxu0 0
        %6881 = vmatpush1.bf16.msra.mxu0 0
        %6882 = vmatprep.subr.bf16.mxu0 0
        %6883 = vmatpush1.bf16.msra.mxu0 0
        %6884 = vmatprep.subr.bf16.mxu0 %v6833
        %6885 = vmatpush1.bf16.msra.mxu0 %v6832
        %6886 = vmatprep.subr.bf16.mxu0 %v6829
        %6887 = vmatpush1.bf16.msra.mxu0 %v6828
        %6888 = vmatprep.subr.bf16.mxu0 %v6825
        %6889 = vmatpush1.bf16.msra.mxu0 %v6824
        %6890 = vmatprep.subr.bf16.mxu0 %v6821
        %6891 = vmatpush1.bf16.msra.mxu0 %v6820
        %6892 = vmatprep.subr.bf16.mxu0 0
        %6893 = vmatpush2.bf16.msra.mxu0 0
        %6894 = vmatprep.subr.bf16.mxu0 0
        %6895 = vmatpush2.bf16.msra.mxu0 0
        %6896 = vmatprep.subr.bf16.mxu0 0
        %6897 = vmatpush2.bf16.msra.mxu0 0
        %6898 = vmatprep.subr.bf16.mxu0 0
        %6899 = vmatpush2.bf16.msra.mxu0 0
        %6900 = vmatprep.subr.bf16.mxu0 0
        %6901 = vmatpush2.bf16.msra.mxu0 0
        %6902 = vmatprep.subr.bf16.mxu0 0
        %6903 = vmatpush2.bf16.msra.mxu0 0
        %6904 = vmatprep.subr.bf16.mxu0 0
        %6905 = vmatpush2.bf16.msra.mxu0 0
        %6906 = vmatprep.subr.bf16.mxu0 0
        %6907 = vmatpush2.bf16.msra.mxu0 0
        %6908 = vmatprep.mubr.bf16.mxu0 0
        %6909 = vmatmul.mubr.bf16.gmra.mxu0 %v6874
        %v6910 = vpop.f32.mrf.mxu0
        %v6911 = vadd.f32 %v6856, %v6910
        %v6912 = vpop.f32.mrf.mxu0
        %v6913 = vadd.f32 %v6860, %v6912
        %v6914 = vpop.f32.mrf.mxu0
        %v6915 = vpop.f32.mrf.mxu0
        %6916 = vdwg.mxu0
        %6917 = vmatprep.subr.bf16.mxu0 0
        %6918 = vmatpush1.bf16.msra.mxu0 0
        %6919 = vmatprep.subr.bf16.mxu0 0
        %6920 = vmatpush1.bf16.msra.mxu0 0
        %6921 = vmatprep.subr.bf16.mxu0 0
        %6922 = vmatpush1.bf16.msra.mxu0 0
        %6923 = vmatprep.subr.bf16.mxu0 0
        %6924 = vmatpush1.bf16.msra.mxu0 0
        %6925 = vmatprep.subr.bf16.mxu0 %v6835
        %6926 = vmatpush1.bf16.msra.mxu0 %v6834
        %6927 = vmatprep.subr.bf16.mxu0 %v6831
        %6928 = vmatpush1.bf16.msra.mxu0 %v6830
        %6929 = vmatprep.subr.bf16.mxu0 %v6827
        %6930 = vmatpush1.bf16.msra.mxu0 %v6826
        %6931 = vmatprep.subr.bf16.mxu0 %v6823
        %6932 = vmatpush1.bf16.msra.mxu0 %v6822
        %6933 = vmatprep.subr.bf16.mxu0 0
        %6934 = vmatpush2.bf16.msra.mxu0 0
        %6935 = vmatprep.subr.bf16.mxu0 0
        %6936 = vmatpush2.bf16.msra.mxu0 0
        %6937 = vmatprep.subr.bf16.mxu0 0
        %6938 = vmatpush2.bf16.msra.mxu0 0
        %6939 = vmatprep.subr.bf16.mxu0 0
        %6940 = vmatpush2.bf16.msra.mxu0 0
        %6941 = vmatprep.subr.bf16.mxu0 0
        %6942 = vmatpush2.bf16.msra.mxu0 0
        %6943 = vmatprep.subr.bf16.mxu0 0
        %6944 = vmatpush2.bf16.msra.mxu0 0
        %6945 = vmatprep.subr.bf16.mxu0 0
        %6946 = vmatpush2.bf16.msra.mxu0 0
        %6947 = vmatprep.subr.bf16.mxu0 0
        %6948 = vmatpush2.bf16.msra.mxu0 0
        %6949 = vmatprep.mubr.bf16.mxu0 0
        %6950 = vmatmul.mubr.bf16.gmra.mxu0 %v6874
        %v6951 = vpop.f32.mrf.mxu0
        %v6952 = vadd.f32 %v6864, %v6951
        %v6953 = vpop.f32.mrf.mxu0
        %v6954 = vadd.f32 %v6868, %v6953
        %v6955 = vpop.f32.mrf.mxu0
        %v6956 = vpop.f32.mrf.mxu0
        %6957 = vdwg.mxu0
        %v6958 = vmax.f32 %v6911, 0.0
        %v6959 = vmax.f32 %v6913, 0.0
        %v6960 = vmax.f32 %v6952, 0.0
        %v6961 = vmax.f32 %v6954, 0.0
        %v6962 = vpack.c.bf16 %v6958, %v6958
        %v6963 = vpack.c.bf16 %v6959, %v6959
        %v6964 = vpack.c.bf16 %v6960, %v6960
        %v6965 = vpack.c.bf16 %v6961, %v6961
        %v6966 = vld [vmem:[%s13] sm:$0xf]
        %v6967 = vld [vmem:[%s13 + $0x4] sm:$0xf]
        %v6968 = vld [vmem:[%s13 + $0x8] sm:$0xf]
        %v6969 = vld [vmem:[%s13 + $0xc] sm:$0xf]
        %v6970 = vld [vmem:[%s13 + $0x10] sm:$0xf]
        %v6971 = vld [vmem:[%s13 + $0x14] sm:$0xf]
        %v6972 = vld [vmem:[%s13 + $0x18] sm:$0xf]
        %v6973 = vld [vmem:[%s13 + $0x1c] sm:$0xf]
        %v6974 = vld [vmem:[%s13 + $0x20] sm:$0xf]
        %v6975 = vld [vmem:[%s13 + $0x24] sm:$0xf]
        %v6976 = vld [vmem:[%s13 + $0x28] sm:$0xf]
        %v6977 = vld [vmem:[%s13 + $0x2c] sm:$0xf]
        %v6978 = vld [vmem:[%s13 + $0x30] sm:$0xf]
        %v6979 = vld [vmem:[%s13 + $0x34] sm:$0xf]
        %v6980 = vld [vmem:[%s13 + $0x38] sm:$0xf]
        %v6981 = vld [vmem:[%s13 + $0x3c] sm:$0xf]
        %v6982 = vld [vmem:[%s13 + $0x40] sm:$0xf]
        %v6983 = vld [vmem:[%s13 + $0x44] sm:$0xf]
        %v6984 = vld [vmem:[%s13 + $0x48] sm:$0xf]
        %v6985 = vld [vmem:[%s13 + $0x4c] sm:$0xf]
        %v6986 = vld [vmem:[%s13 + $0x50] sm:$0xf]
        %v6987 = vld [vmem:[%s13 + $0x54] sm:$0xf]
        %v6988 = vld [vmem:[%s13 + $0x58] sm:$0xf]
        %v6989 = vld [vmem:[%s13 + $0x5c] sm:$0xf]
        %v6990 = vld [vmem:[%s13 + $0x60] sm:$0xf]
        %v6991 = vld [vmem:[%s13 + $0x64] sm:$0xf]
        %v6992 = vld [vmem:[%s13 + $0x68] sm:$0xf]
        %v6993 = vld [vmem:[%s13 + $0x6c] sm:$0xf]
        %v6994 = vld [vmem:[%s13 + $0x70] sm:$0xf]
        %v6995 = vld [vmem:[%s13 + $0x74] sm:$0xf]
        %v6996 = vld [vmem:[%s13 + $0x78] sm:$0xf]
        %v6997 = vld [vmem:[%s13 + $0x7c] sm:$0xf]
        %v6998 = vld [vmem:[%s13 + $0x80] sm:$0xf]
        %v6999 = vld [vmem:[%s13 + $0x84] sm:$0xf]
        %v7000 = vld [vmem:[%s13 + $0x88] sm:$0xf]
        %v7001 = vld [vmem:[%s13 + $0x8c] sm:$0xf]
        %v7002 = vld [vmem:[%s13 + $0x90] sm:$0xf]
        %v7003 = vld [vmem:[%s13 + $0x94] sm:$0xf]
        %v7004 = vld [vmem:[%s13 + $0x98] sm:$0xf]
        %v7005 = vld [vmem:[%s13 + $0x9c] sm:$0xf]
        %v7006 = vld [vmem:[%s13 + $0xa0] sm:$0xf]
        %v7007 = vld [vmem:[%s13 + $0xa4] sm:$0xf]
        %v7008 = vld [vmem:[%s13 + $0xa8] sm:$0xf]
        %v7009 = vld [vmem:[%s13 + $0xac] sm:$0xf]
        %v7010 = vld [vmem:[%s13 + $0xb0] sm:$0xf]
        %v7011 = vld [vmem:[%s13 + $0xb4] sm:$0xf]
        %v7012 = vld [vmem:[%s13 + $0xb8] sm:$0xf]
        %v7013 = vld [vmem:[%s13 + $0xbc] sm:$0xf]
        %v7014 = vld [vmem:[%s13 + $0xc0] sm:$0xf]
        %v7015 = vld [vmem:[%s13 + $0xc4] sm:$0xf]
        %v7016 = vld [vmem:[%s13 + $0xc8] sm:$0xf]
        %v7017 = vld [vmem:[%s13 + $0xcc] sm:$0xf]
        %v7018 = vld [vmem:[%s13 + $0xd0] sm:$0xf]
        %v7019 = vld [vmem:[%s13 + $0xd4] sm:$0xf]
        %v7020 = vld [vmem:[%s13 + $0xd8] sm:$0xf]
        %v7021 = vld [vmem:[%s13 + $0xdc] sm:$0xf]
        %v7022 = vld [vmem:[%s13 + $0xe0] sm:$0xf]
        %v7023 = vld [vmem:[%s13 + $0xe4] sm:$0xf]
        %v7024 = vld [vmem:[%s13 + $0xe8] sm:$0xf]
        %v7025 = vld [vmem:[%s13 + $0xec] sm:$0xf]
        %v7026 = vld [vmem:[%s13 + $0xf0] sm:$0xf]
        %v7027 = vld [vmem:[%s13 + $0xf4] sm:$0xf]
        %v7028 = vld [vmem:[%s13 + $0xf8] sm:$0xf]
        %v7029 = vld [vmem:[%s13 + $0xfc] sm:$0xf]
        %v7030 = vld [vmem:[%s14] sm:$0x1]
        %v7095 = vunpack.c.l.b16 %v6966
        %v7096 = vunpack.c.l.b16 %v6967
        %v7097 = vunpack.c.l.b16 %v6968
        %v7098 = vunpack.c.l.b16 %v6969
        %v7099 = vunpack.c.l.b16 %v6970
        %v7100 = vunpack.c.l.b16 %v6971
        %v7101 = vunpack.c.l.b16 %v6972
        %v7102 = vunpack.c.l.b16 %v6973
        %v7103 = vunpack.c.l.b16 %v6974
        %v7104 = vunpack.c.l.b16 %v6975
        %v7105 = vunpack.c.l.b16 %v6976
        %v7106 = vunpack.c.l.b16 %v6977
        %v7107 = vunpack.c.l.b16 %v6978
        %v7108 = vunpack.c.l.b16 %v6979
        %v7109 = vunpack.c.l.b16 %v6980
        %v7110 = vunpack.c.l.b16 %v6981
        %v7111 = vunpack.c.l.b16 %v6982
        %v7112 = vunpack.c.l.b16 %v6983
        %v7113 = vunpack.c.l.b16 %v6984
        %v7114 = vunpack.c.l.b16 %v6985
        %v7115 = vunpack.c.l.b16 %v6986
        %v7116 = vunpack.c.l.b16 %v6987
        %v7117 = vunpack.c.l.b16 %v6988
        %v7118 = vunpack.c.l.b16 %v6989
        %v7119 = vunpack.c.l.b16 %v6990
        %v7120 = vunpack.c.l.b16 %v6991
        %v7121 = vunpack.c.l.b16 %v6992
        %v7122 = vunpack.c.l.b16 %v6993
        %v7123 = vunpack.c.l.b16 %v6994
        %v7124 = vunpack.c.l.b16 %v6995
        %v7125 = vunpack.c.l.b16 %v6996
        %v7126 = vunpack.c.l.b16 %v6997
        %v7127 = vunpack.c.l.b16 %v6998
        %v7128 = vunpack.c.l.b16 %v6999
        %v7129 = vunpack.c.l.b16 %v7000
        %v7130 = vunpack.c.l.b16 %v7001
        %v7131 = vunpack.c.l.b16 %v7002
        %v7132 = vunpack.c.l.b16 %v7003
        %v7133 = vunpack.c.l.b16 %v7004
        %v7134 = vunpack.c.l.b16 %v7005
        %v7135 = vunpack.c.l.b16 %v7006
        %v7136 = vunpack.c.l.b16 %v7007
        %v7137 = vunpack.c.l.b16 %v7008
        %v7138 = vunpack.c.l.b16 %v7009
        %v7139 = vunpack.c.l.b16 %v7010
        %v7140 = vunpack.c.l.b16 %v7011
        %v7141 = vunpack.c.l.b16 %v7012
        %v7142 = vunpack.c.l.b16 %v7013
        %v7143 = vunpack.c.l.b16 %v7014
        %v7144 = vunpack.c.l.b16 %v7015
        %v7145 = vunpack.c.l.b16 %v7016
        %v7146 = vunpack.c.l.b16 %v7017
        %v7147 = vunpack.c.l.b16 %v7018
        %v7148 = vunpack.c.l.b16 %v7019
        %v7149 = vunpack.c.l.b16 %v7020
        %v7150 = vunpack.c.l.b16 %v7021
        %v7151 = vunpack.c.l.b16 %v7022
        %v7152 = vunpack.c.l.b16 %v7023
        %v7153 = vunpack.c.l.b16 %v7024
        %v7154 = vunpack.c.l.b16 %v7025
        %v7155 = vunpack.c.l.b16 %v7026
        %v7156 = vunpack.c.l.b16 %v7027
        %v7157 = vunpack.c.l.b16 %v7028
        %v7158 = vunpack.c.l.b16 %v7029
        %v7159 = vpack.c.b16 %v7096, %v7095
        %v7160 = vpack.c.b16 %v7098, %v7097
        %v7161 = vpack.c.b16 %v7100, %v7099
        %v7162 = vpack.c.b16 %v7102, %v7101
        %v7163 = vpack.c.b16 %v7104, %v7103
        %v7164 = vpack.c.b16 %v7106, %v7105
        %v7165 = vpack.c.b16 %v7108, %v7107
        %v7166 = vpack.c.b16 %v7110, %v7109
        %v7167 = vpack.c.b16 %v7112, %v7111
        %v7168 = vpack.c.b16 %v7114, %v7113
        %v7169 = vpack.c.b16 %v7116, %v7115
        %v7170 = vpack.c.b16 %v7118, %v7117
        %v7171 = vpack.c.b16 %v7120, %v7119
        %v7172 = vpack.c.b16 %v7122, %v7121
        %v7173 = vpack.c.b16 %v7124, %v7123
        %v7174 = vpack.c.b16 %v7126, %v7125
        %v7175 = vpack.c.b16 %v7128, %v7127
        %v7176 = vpack.c.b16 %v7130, %v7129
        %v7177 = vpack.c.b16 %v7132, %v7131
        %v7178 = vpack.c.b16 %v7134, %v7133
        %v7179 = vpack.c.b16 %v7136, %v7135
        %v7180 = vpack.c.b16 %v7138, %v7137
        %v7181 = vpack.c.b16 %v7140, %v7139
        %v7182 = vpack.c.b16 %v7142, %v7141
        %v7183 = vpack.c.b16 %v7144, %v7143
        %v7184 = vpack.c.b16 %v7146, %v7145
        %v7185 = vpack.c.b16 %v7148, %v7147
        %v7186 = vpack.c.b16 %v7150, %v7149
        %v7187 = vpack.c.b16 %v7152, %v7151
        %v7188 = vpack.c.b16 %v7154, %v7153
        %v7189 = vpack.c.b16 %v7156, %v7155
        %v7190 = vpack.c.b16 %v7158, %v7157
        %7223 = vmatprep.subr.bf16.mxu0 0
        %7224 = vmatpush1.bf16.msra.mxu0 %v7166
        %7225 = vmatprep.subr.bf16.mxu0 0
        %7226 = vmatpush1.bf16.msra.mxu0 %v7165
        %7227 = vmatprep.subr.bf16.mxu0 0
        %7228 = vmatpush1.bf16.msra.mxu0 %v7164
        %7229 = vmatprep.subr.bf16.mxu0 0
        %7230 = vmatpush1.bf16.msra.mxu0 %v7163
        %7231 = vmatprep.subr.bf16.mxu0 0
        %7232 = vmatpush1.bf16.msra.mxu0 %v7162
        %7233 = vmatprep.subr.bf16.mxu0 0
        %7234 = vmatpush1.bf16.msra.mxu0 %v7161
        %7235 = vmatprep.subr.bf16.mxu0 0
        %7236 = vmatpush1.bf16.msra.mxu0 %v7160
        %7237 = vmatprep.subr.bf16.mxu0 0
        %7238 = vmatpush1.bf16.msra.mxu0 %v7159
        %7239 = vmatprep.subr.bf16.mxu0 0
        %7240 = vmatpush2.bf16.msra.mxu0 %v7174
        %7241 = vmatprep.subr.bf16.mxu0 0
        %7242 = vmatpush2.bf16.msra.mxu0 %v7173
        %7243 = vmatprep.subr.bf16.mxu0 0
        %7244 = vmatpush2.bf16.msra.mxu0 %v7172
        %7245 = vmatprep.subr.bf16.mxu0 0
        %7246 = vmatpush2.bf16.msra.mxu0 %v7171
        %7247 = vmatprep.subr.bf16.mxu0 0
        %7248 = vmatpush2.bf16.msra.mxu0 %v7170
        %7249 = vmatprep.subr.bf16.mxu0 0
        %7250 = vmatpush2.bf16.msra.mxu0 %v7169
        %7251 = vmatprep.subr.bf16.mxu0 0
        %7252 = vmatpush2.bf16.msra.mxu0 %v7168
        %7253 = vmatprep.subr.bf16.mxu0 0
        %7254 = vmatpush2.bf16.msra.mxu0 %v7167
        %7255 = vmatprep.mubr.bf16.mxu0 %v6963
        %7256 = vmatmul.mubr.bf16.gmra.mxu0 %v6962
        %v7257 = vpop.f32.mrf.mxu0
        %v7258 = vadd.f32 %v7030, %v7257
        %v7259 = vpop.f32.mrf.mxu0
        %v7260 = vpop.f32.mrf.mxu0
        %v7261 = vpop.f32.mrf.mxu0
        %7262 = vdwg.mxu0
        %7263 = vmatprep.subr.bf16.mxu0 0
        %7264 = vmatpush1.bf16.msra.mxu0 %v7182
        %7265 = vmatprep.subr.bf16.mxu0 0
        %7266 = vmatpush1.bf16.msra.mxu0 %v7181
        %7267 = vmatprep.subr.bf16.mxu0 0
        %7268 = vmatpush1.bf16.msra.mxu0 %v7180
        %7269 = vmatprep.subr.bf16.mxu0 0
        %7270 = vmatpush1.bf16.msra.mxu0 %v7179
        %7271 = vmatprep.subr.bf16.mxu0 0
        %7272 = vmatpush1.bf16.msra.mxu0 %v7178
        %7273 = vmatprep.subr.bf16.mxu0 0
        %7274 = vmatpush1.bf16.msra.mxu0 %v7177
        %7275 = vmatprep.subr.bf16.mxu0 0
        %7276 = vmatpush1.bf16.msra.mxu0 %v7176
        %7277 = vmatprep.subr.bf16.mxu0 0
        %7278 = vmatpush1.bf16.msra.mxu0 %v7175
        %7279 = vmatprep.subr.bf16.mxu0 0
        %7280 = vmatpush2.bf16.msra.mxu0 %v7190
        %7281 = vmatprep.subr.bf16.mxu0 0
        %7282 = vmatpush2.bf16.msra.mxu0 %v7189
        %7283 = vmatprep.subr.bf16.mxu0 0
        %7284 = vmatpush2.bf16.msra.mxu0 %v7188
        %7285 = vmatprep.subr.bf16.mxu0 0
        %7286 = vmatpush2.bf16.msra.mxu0 %v7187
        %7287 = vmatprep.subr.bf16.mxu0 0
        %7288 = vmatpush2.bf16.msra.mxu0 %v7186
        %7289 = vmatprep.subr.bf16.mxu0 0
        %7290 = vmatpush2.bf16.msra.mxu0 %v7185
        %7291 = vmatprep.subr.bf16.mxu0 0
        %7292 = vmatpush2.bf16.msra.mxu0 %v7184
        %7293 = vmatprep.subr.bf16.mxu0 0
        %7294 = vmatpush2.bf16.msra.mxu0 %v7183
        %7295 = vmatprep.mubr.bf16.mxu0 %v6965
        %7296 = vmatmul.mubr.bf16.gmra.mxu0 %v6964
        %v7297 = vpop.f32.mrf.mxu0
        %v7298 = vadd.f32 %v7258, %v7297
        %v7299 = vpop.f32.mrf.mxu0
        %v7300 = vpop.f32.mrf.mxu0
        %v7301 = vpop.f32.mrf.mxu0
        %7302 = vdwg.mxu0
        %7303 = vst [vmem:[%s486] sm:$0x1] %v7298
        %s7304 = sand.u32 %s357, 1
        %s7305 = scalar_lea.sflag [#allocation3], %s7304
        %s7306 = sand.u32 %s357, 1
        %s7307 = scalar_lea.vmem [#allocation2], %s7306
        // Predicated region
        $region81: #{cnn_dqn_forward.1} parent=79 // pred_check
          %p7308 = pneg %p367
        $region82: #{cnn_dqn_forward.1} parent=79 // pred_check_branch
          %7310 = sbr.rel (%p7308) target = $region84
        $region83: #{cnn_dqn_forward.1} parent=79 // pred_region
          %s7312 = ssub.s32 16, 16
          %7313 = vsyncadd %s7305, %s7312
          %s7314 = smul.addr %s29, 16
          %s7315 = scalar_lea.hbm %s15, %s7314
          %s7317 = sshll.u32 %s7307, 4
          %s7318 = int_to_ptr.vmem [resolvable:$true] %s7317
          %7320 = dma.vmem_to_hbm [thread:$0]  %s7318, 16, %s7315, %s7305
        $region84: #{cnn_dqn_forward.1} parent=79 // pred_fallthru
          _
      $region80: #{cnn_dqn_forward.1} parent=5 // pred_fallthru
        _
      %p7321 = scmp.le.s32.totalorder 2, %s24
      // Predicated region
      $region85: #{cnn_dqn_forward.1} parent=5 // pred_check
        %p7322 = pneg %p7321
      $region86: #{cnn_dqn_forward.1} parent=5 // pred_check_branch
        %7324 = sbr.rel (%p7322) target = $region88
      $region87: #{cnn_dqn_forward.1} parent=5 // pred_region
        %s7325 = ssub.s32 %s24, 2
        // Predicated region
        $region89: #{cnn_dqn_forward.1} parent=87 // pred_check
          %p7326 = pneg %p373
        $region90: #{cnn_dqn_forward.1} parent=87 // pred_check_branch
          %7328 = sbr.rel (%p7326) target = $region92
        $region91: #{cnn_dqn_forward.1} parent=87 // pred_region
          %s7329 = sand.u32 %s358, 1
          %s7330 = scalar_lea.sflag [#allocation3], %s7329
          %s7331 = sand.u32 %s358, 1
          %s7332 = scalar_lea.vmem [#allocation2], %s7331
          %7333 = dma.done %s7330, 16
        $region92: #{cnn_dqn_forward.1} parent=87 // pred_fallthru
          _
      $region88: #{cnn_dqn_forward.1} parent=5 // pred_fallthru
        _
    $region6: #{cnn_dqn_forward.1} parent=1 // loop_footer
      %s28 = sadd.s32 1, %s24
    $region7: #{cnn_dqn_forward.1} parent=1 // loop_footer_branch
      %23 = sbr.rel target = $region3
    $region8: #{cnn_dqn_forward.1} parent=1 // loop_exit
      _
    %7334 = vsyncpa [#allocation3], 1
    %s7335 = scalar_lea.sflag [#allocation3], 1
    %7336 = vsyncpa %s7335, 1

</llo_original>
